<compile_context>
chip_gen: v7x
topology: tpu7x:2x2x1
jax: 0.10.0
libtpu: 0.0.40
codegen_flags: <defaults>
</compile_context>

<pallas_src>
import functools

import numpy as np
import jax
import jax.numpy as jnp
from jax import lax
from jax.experimental import pallas as pl
from jax.experimental.pallas import tpu as pltpu


# --------------------------- per-chip VMEM budget ---------------------------

def _vmem_budget_bytes():
    """Scoped VMEM limit derived from the physical VMEM of the local chip."""
    try:
        info = pltpu.get_tpu_info()
        phys = int(getattr(info, "vmem_capacity_bytes", 64 * 1024 * 1024))
    except Exception:
        phys = 64 * 1024 * 1024          # conservative fallback (v7x physical size)
    return min(96 * 1024 * 1024, (phys * 3) // 4)   # ~48 MiB on v7x, 96 MiB on v5e/v6e


_VMEM_LIMIT = _vmem_budget_bytes()
_BIG_VMEM = _VMEM_LIMIT >= 64 * 1024 * 1024
_N_TILE = 1024 if _BIG_VMEM else 512     # token tile for 1x1 convs / LayerNorm
_Q_TILE = 512 if _BIG_VMEM else 256      # query-token tile for attention


def _mosaic_params(*sem):
    return pltpu.CompilerParams(dimension_semantics=sem, vmem_limit_bytes=_VMEM_LIMIT)


# ----------------------------- Pallas kernels -----------------------------

def _matmul_bias_split_kernel(x_ref, w_ref, b_ref, *o_refs):
    """(1, TN, Cin) bf16 @ (Cin, Cout) bf16 + bias (f32 acc); channel-split outputs."""
    y = jnp.dot(x_ref[0], w_ref[...], preferred_element_type=jnp.float32) + b_ref[...]
    off = 0
    for o_ref in o_refs:
        c = o_ref.shape[-1]
        o_ref[0] = y[:, off:off + c].astype(o_ref.dtype)
        off += c


def fused_pointwise(x_nc, w, b, out_channels, out_dtypes, *, n_tile=None):
    """1x1 conv as a channels-last matmul, tiled over the token axis.

    One pass over x with any number of channel-split outputs (fuses the q and kv
    convolutions into a single kernel).  Weights stay resident in VMEM; activations
    and weights are bf16 on the DMA side, accumulation is f32.
    """
    x_nc = x_nc.astype(jnp.bfloat16)
    w = w.astype(jnp.bfloat16)
    b = b.astype(jnp.float32).reshape(1, -1)
    B, N, Cin = x_nc.shape
    Cout = w.shape[1]
    assert sum(out_channels) == Cout
    n_tile = n_tile or _N_TILE
    tn = N if N <= n_tile else n_tile
    grid = (pl.cdiv(N, tn), B)                     # token-tile axis first (megacore)
    out_shape = tuple(jax.ShapeDtypeStruct((B, N, c), d)
                      for c, d in zip(out_channels, out_dtypes))
    out_specs = tuple(pl.BlockSpec((1, tn, c), lambda ti, bi: (bi, ti, 0))
                      for c in out_channels)
    return pl.pallas_call(
        _matmul_bias_split_kernel,
        out_shape=out_shape,
        grid=grid,
        in_specs=[
            pl.BlockSpec((1, tn, Cin), lambda ti, bi: (bi, ti, 0)),
            pl.BlockSpec((Cin, Cout), lambda ti, bi: (0, 0)),   # resident weight
            pl.BlockSpec((1, Cout), lambda ti, bi: (0, 0)),     # resident bias
        ],
        out_specs=out_specs,
        compiler_params=_mosaic_params("parallel", "parallel"),
    )(x_nc, w, b)


def pointwise_conv(x_nc, w, b, *, n_tile=None):
    return fused_pointwise(x_nc, w, b, (w.shape[1],), (jnp.float32,), n_tile=n_tile)[0]


def _dual_layernorm_kernel(k_ref, v_ref, g_ref, b_ref, ko_ref, vo_ref):
    for x_ref, o_ref in ((k_ref, ko_ref), (v_ref, vo_ref)):
        x = x_ref[0]
        mean = jnp.mean(x, axis=-1, keepdims=True)
        var = jnp.mean(jnp.square(x - mean), axis=-1, keepdims=True)
        o_ref[0] = ((x - mean) * lax.rsqrt(var + 1e-5) * g_ref[...]
                    + b_ref[...]).astype(o_ref.dtype)


def dual_layernorm(k_pool, v_pool, gamma, beta, *, out_dtype=jnp.bfloat16, n_tile=None):
    """LayerNorm over the last dim for BOTH k and v token sets in one pallas_call
    (no concatenate round-trip through HBM).  Emits bf16 for the attention kernel."""
    B, P, C = k_pool.shape
    n_tile = n_tile or _N_TILE
    tn = P if P <= n_tile else n_tile
    grid = (pl.cdiv(P, tn), B)
    tok_spec = pl.BlockSpec((1, tn, C), lambda ti, bi: (bi, ti, 0))
    w_spec = pl.BlockSpec((1, C), lambda ti, bi: (0, 0))
    return pl.pallas_call(
        _dual_layernorm_kernel,
        out_shape=(jax.ShapeDtypeStruct((B, P, C), out_dtype),
                   jax.ShapeDtypeStruct((B, P, C), out_dtype)),
        grid=grid,
        in_specs=[tok_spec, tok_spec, w_spec, w_spec],
        out_specs=(tok_spec, tok_spec),
        compiler_params=_mosaic_params("parallel", "parallel"),
    )(k_pool, v_pool, gamma.reshape(1, C).astype(jnp.float32),
      beta.reshape(1, C).astype(jnp.float32))


def _attn_agg_proj_kernel(q_ref, k_ref, v_ref, m_ref, pb_ref, o_ref, *,
                          num_heads, dh, p_valid):
    """Per (q-tile, batch): multi-head softmax(q k^T) v with the per-head
    (global-map aggregation @ output 1x1 projection) matmul fused in.

    Heads are statically unrolled; each head's PV result is immediately multiplied by
    the matching SUBLANE slice of the fused (C, C) matrix and accumulated in f32, so
    there is no lane-axis concatenate and the final (TQ, C) store is lane-dense.
    The softmax scale is pre-folded into q; padded K rows (lane >= p_valid) are masked
    with a static iota mask; the softmax divide uses the EUP reciprocal."""
    p_pad = k_ref.shape[1]
    tq = q_ref.shape[1]
    c = num_heads * dh
    need_mask = p_valid < p_pad
    if need_mask:
        valid = lax.broadcasted_iota(jnp.int32, (1, p_pad), 1) < p_valid
    acc = jnp.zeros((tq, c), jnp.float32)
    for h in range(num_heads):                      # static unroll over heads
        lo, hi = h * dh, (h + 1) * dh
        qh = q_ref[0, :, lo:hi]                     # bf16 (TQ, dh), scale pre-folded
        kh = k_ref[0, :, lo:hi]                     # bf16 (P_pad, dh)
        vh = v_ref[0, :, lo:hi]                     # bf16 (P_pad, dh)
        s = lax.dot_general(qh, kh, (((1,), (1,)), ((), ())),
                            preferred_element_type=jnp.float32)   # (TQ, P_pad)
        if need_mask:
            s = jnp.where(valid, s, -1e30)
        m = jnp.max(s, axis=-1, keepdims=True)
        e = jnp.exp(s - m)
        p = e * pl.reciprocal(jnp.sum(e, axis=-1, keepdims=True), approx=True)
        pv = jnp.dot(p.astype(jnp.bfloat16), vh,
                     preferred_element_type=jnp.float32)          # (TQ, dh)
        acc = acc + jnp.dot(pv.astype(jnp.bfloat16), m_ref[0, lo:hi, :],
                            preferred_element_type=jnp.float32)   # (TQ, C)
    o_ref[0] = acc + pb_ref[...]


def attention_core(q_nc, ks, vs, m_comb, proj_b, *, num_heads, p_valid, q_tile=None):
    """q_nc: (B, N, C) bf16 head-major (scale folded in); ks/vs: (B, P_pad, C) bf16;
    m_comb: (B, C, C) bf16 fused aggregation+projection matrix; proj_b: (C,)."""
    B, N, C = q_nc.shape
    P = ks.shape[1]
    dh = C // num_heads
    q_tile = q_tile or _Q_TILE
    tq = N if N <= q_tile else q_tile
    grid = (pl.cdiv(N, tq), B)
    kernel = functools.partial(_attn_agg_proj_kernel,
                               num_heads=num_heads, dh=dh, p_valid=p_valid)
    # TODO(synk): for very large P on v7x, switch the resident K/V blocks to a
    # flash-style online-softmax loop (or pl.Buffered(1)) to bound VMEM further.
    return pl.pallas_call(
        kernel,
        out_shape=jax.ShapeDtypeStruct((B, N, C), jnp.float32),
        grid=grid,
        in_specs=[
            pl.BlockSpec((1, tq, C), lambda ti, bi: (bi, ti, 0)),
            pl.BlockSpec((1, P, C), lambda ti, bi: (bi, 0, 0)),   # K resident per batch
            pl.BlockSpec((1, P, C), lambda ti, bi: (bi, 0, 0)),   # V resident per batch
            pl.BlockSpec((1, C, C), lambda ti, bi: (bi, 0, 0)),   # fused agg+proj matrix
            pl.BlockSpec((1, C), lambda ti, bi: (0, 0)),
        ],
        out_specs=pl.BlockSpec((1, tq, C), lambda ti, bi: (bi, ti, 0)),
        compiler_params=_mosaic_params("parallel", "parallel"),
    )(q_nc, ks, vs, m_comb, proj_b.reshape(1, C).astype(jnp.float32))


# ------------------------------ plain-JAX glue ------------------------------

def adaptive_pool_matrix(in_size, out_size):
    """Row-stochastic matrix reproducing F.adaptive_avg_pool2d window boundaries."""
    M = np.zeros((out_size, in_size), np.float32)
    for i in range(out_size):
        start = (i * in_size) // out_size
        end = -((-(i + 1) * in_size) // out_size)
        M[i, start:end] = 1.0 / (end - start)
    return M


def conv_nhwc(x, w_hwio, *, stride=1, padding=0, groups=1):
    return lax.conv_general_dilated(
        x, w_hwio, (stride, stride), ((padding, padding), (padding, padding)),
        dimension_numbers=('NHWC', 'HWIO', 'NHWC'), feature_group_count=groups)


def depthwise_conv3x3(x, w_hwio, b):
    return conv_nhwc(x, w_hwio, padding=1, groups=x.shape[-1]) + b


def max_pool_2x2(x):
    return lax.reduce_window(x, -jnp.inf, lax.max, (1, 2, 2, 1), (1, 2, 2, 1), 'VALID')


def batchnorm(x, p):
    """Inference-mode BatchNorm2d over the channel (last) axis."""
    return (x - p['mean']) * lax.rsqrt(p['var'] + 1e-5) * p['gamma'] + p['beta']


def pooling_attention(x_nhwc, p, d_convs, num_heads, pool_ratios):
    """Glo_tkPoolingAttention.forward (inference; dropout / drop-path = 0)."""
    B, H, W, C = x_nhwc.shape
    dh = C // num_heads
    scale = float(dh) ** -0.5
    HW = H * W
    # bf16 cast fuses into the producing BN fusion -> kernel reads half the bytes.
    x_nc = x_nhwc.reshape(B, HW, C).astype(jnp.bfloat16)

    # --- fused q + kv 1x1 conv: one pass over x, three channel-split outputs.
    # q weights are pre-permuted head-major and pre-scaled (prepare_params); q comes
    # out in bf16 for the attention kernel, k/v in f32 for the XLA pooling branch.
    q_nc, k_nc, v_nc = fused_pointwise(
        x_nc, p['qkv_w'], p['qkv_b'], (C, C, C),
        (jnp.bfloat16, jnp.float32, jnp.float32))
    k_img = k_nc.reshape(B, H, W, C)
    v_img = v_nc.reshape(B, H, W, C)

    # --- multi-ratio adaptive average pooling + residual depthwise 3x3 (shared d_convs).
    # TODO(synk): tiny pooled spatial maps — stays on XLA (einsum / lax.conv).
    def pool_branch(img):
        outs = []
        for r, dc in zip(pool_ratios, d_convs):
            ho, wo = int(round(H / r)), int(round(W / r))   # round(), as in the reference
            Mh = jnp.asarray(adaptive_pool_matrix(H, ho))
            Mw = jnp.asarray(adaptive_pool_matrix(W, wo))
            pooled = jnp.einsum('oh,bhwc,pw->bopc', Mh, img, Mw)
            pooled = pooled + depthwise_conv3x3(pooled, dc['w'], dc['b'])
            outs.append(pooled.reshape(B, ho * wo, C))
        return jnp.concatenate(outs, axis=1)                 # (B, P, C)

    k_pool = pool_branch(k_img)
    v_pool = pool_branch(v_img)
    P = k_pool.shape[1]
    P_pad = -(-P // 128) * 128                               # lane-align pooled tokens
    if P_pad != P:
        pad = ((0, 0), (0, P_pad - P), (0, 0))
        k_pool = jnp.pad(k_pool, pad)
        v_pool = jnp.pad(v_pool, pad)

    # --- single pallas_call LayerNorm over both k and v token sets, bf16 out.
    ks, vs = dual_layernorm(k_pool, v_pool, p['norm_w_r'], p['norm_b_r'])

    # --- global-token query row (1 per head), plain JAX (negligible work), with the
    # padded key rows masked out of the softmax.
    glo = p['glo_hm']                                        # (heads, dh), scale folded
    kh = ks.astype(jnp.float32).reshape(B, P_pad, num_heads, dh)
    vh = vs.astype(jnp.float32).reshape(B, P_pad, num_heads, dh)
    s_g = jnp.einsum('hd,bphd->bhp', glo, kh)
    if P_pad != P:
        s_g = jnp.where(jnp.arange(P_pad) < P, s_g, -jnp.inf)
    a_g = jax.nn.softmax(s_g, axis=-1)
    glob_token = jnp.einsum('bhp,bphd->bhd', a_g, vh)        # (B, heads, dh)

    # global_tokens_to_qk: LayerNorm(1) -> GELU -> Conv1d(dim, 2*dim, 1).
    # (LayerNorm over a size-1 axis is degenerate — faithful to nn.LayerNorm(1).)
    gt = glob_token[..., None]
    mean = jnp.mean(gt, axis=-1, keepdims=True)
    var = jnp.mean(jnp.square(gt - mean), axis=-1, keepdims=True)
    gt_ln = (gt - mean) * lax.rsqrt(var + 1e-5) * p['ln1_w'] + p['ln1_b']
    gt_g = jax.nn.gelu(gt_ln, approximate=False)
    wqk = gt_g.reshape(B, num_heads * dh) @ p['g2qk_w'].T + p['g2qk_b']   # (B, 2C)
    wqk = wqk.reshape(B, num_heads, 2 * dh)
    w_q = wqk[..., :dh] * scale
    w_k = wqk[..., dh:]
    w_attn = jax.nn.softmax(w_q[..., :, None] * w_k[..., None, :], axis=-1)  # (B,h,dh,dh)

    # --- fold (per-head aggregation @ w_attn) and the output 1x1 projection into one
    # (C, C) matrix per batch, without materializing a block-diagonal intermediate.
    pw_h = p['proj_w_hm'].reshape(num_heads, dh, C)
    m_comb = jnp.einsum('bhjw,hwk->bhjk', w_attn, pw_h).reshape(B, C, C)
    m_comb = m_comb.astype(jnp.bfloat16)

    # --- hot path: attention + aggregation + projection in ONE Pallas kernel.
    out_nc = attention_core(q_nc, ks, vs, m_comb, p['proj_b_r'],
                            num_heads=num_heads, p_valid=P)
    return out_nc.reshape(B, H, W, C)


def irb(x_nhwc, p):
    """IRB MLP: 1x1 conv -> hardswish -> depthwise 3x3 -> hardswish -> 1x1 conv."""
    B, H, W, C = x_nhwc.shape
    hidden = p['fc1_w'].shape[1]
    y = pointwise_conv(x_nhwc.reshape(B, H * W, C).astype(jnp.bfloat16),
                       p['fc1_w'], p['fc1_b'])
    y = jax.nn.hard_swish(y).reshape(B, H, W, hidden)
    y = jax.nn.hard_swish(depthwise_conv3x3(y, p['dw_w'], p['dw_b']))
    y = pointwise_conv(y.reshape(B, H * W, hidden).astype(jnp.bfloat16),
                       p['fc2_w'], p['fc2_b'])
    return y.reshape(B, H, W, C)


def basic_block(x, p):
    """BasicBlock(in_ch, dim, stride=1) with the BN->ReLU->1x1-conv shortcut (inference)."""
    # TODO(synk): the 3x3 stem convolutions are left to XLA's conv — no clean Pallas win.
    out = conv_nhwc(jax.nn.relu(batchnorm(x, p['bn1'])), p['conv1_w'], padding=1)
    out = conv_nhwc(jax.nn.relu(batchnorm(out, p['bn2'])), p['conv2_w'], padding=1)
    sc = conv_nhwc(jax.nn.relu(batchnorm(x, p['bn_s'])), p['convs_w'], padding=0)
    return out + sc


def glo_tk_block(x, p, d_convs, num_heads, pool_ratios):
    """Glo_tkBlock: BN -> attention -> residual -> BN -> IRB -> residual (inference)."""
    y = batchnorm(x, p['bn1'])
    y = y + pooling_attention(y, p['attn'], d_convs, num_heads, pool_ratios)
    y = y + irb(batchnorm(y, p['bn2']), p['irb'])
    return y


def glo_tkdown_block_pv(x_nchw, params, *, num_heads, pool_ratios):
    """Forward pass of Glo_tkdown_block_pv: maxpool + BasicBlock stem, then Glo_tkBlock."""
    x = jnp.transpose(x_nchw, (0, 2, 3, 1))                  # NCHW -> NHWC (once)
    x = max_pool_2x2(x)
    x = basic_block(x, params['stem'])
    # The reference loops `out = blk(out_conv, d_convs)` over Attblock, feeding the SAME
    # out_conv to every block and keeping only the last result; the blocks are pure here
    # (inference, dropout/drop-path = 0), so evaluating only the final block is identical.
    out = glo_tk_block(x, params['blocks'][-1], params['d_convs'], num_heads, pool_ratios)
    return jnp.transpose(out, (0, 3, 1, 2))                  # NHWC -> NCHW (once)


# --------------------- one-time parameter preparation ---------------------

def prepare_params(params, dim, num_heads):
    """Head-major permutes, softmax-scale folding, bf16 weight casts, bias reshapes —
    done ONCE outside the jitted forward (perf review: hoist per-call weight prep)."""
    dh = dim // num_heads
    scale = float(dh) ** -0.5
    pos = np.arange(dim)
    orig_idx = (pos % dh) * num_heads + (pos // dh)   # head-major channel <- torch channel

    def prep_attn(a):
        q_w = a['q_w'][:, orig_idx] * scale           # fold softmax scale into q
        q_b = a['q_b'][orig_idx] * scale
        return {
            'qkv_w': jnp.concatenate([q_w, a['kv_w']], axis=1).astype(jnp.bfloat16),
            'qkv_b': jnp.concatenate([q_b, a['kv_b']]).astype(jnp.float32).reshape(1, 3 * dim),
            'proj_w_hm': a['proj_w'][orig_idx, :].astype(jnp.float32),
            'proj_b_r': a['proj_b'].reshape(1, dim).astype(jnp.float32),
            'norm_w_r': a['norm_w'].reshape(1, dim).astype(jnp.float32),
            'norm_b_r': a['norm_b'].reshape(1, dim).astype(jnp.float32),
            'glo_hm': (a['global_tokens'].reshape(dh, num_heads).T * scale).astype(jnp.float32),
            'ln1_w': a['ln1_w'], 'ln1_b': a['ln1_b'],
            'g2qk_w': a['g2qk_w'], 'g2qk_b': a['g2qk_b'],
        }

    def prep_irb(m):
        hidden = m['fc1_w'].shape[1]
        return {
            'fc1_w': m['fc1_w'].astype(jnp.bfloat16),
            'fc1_b': m['fc1_b'].reshape(1, hidden).astype(jnp.float32),
            'dw_w': m['dw_w'], 'dw_b': m['dw_b'],
            'fc2_w': m['fc2_w'].astype(jnp.bfloat16),
            'fc2_b': m['fc2_b'].reshape(1, dim).astype(jnp.float32),
        }

    blocks = [{'bn1': b['bn1'], 'bn2': b['bn2'],
               'attn': prep_attn(b['attn']), 'irb': prep_irb(b['irb'])}
              for b in params['blocks']]
    return {'stem': params['stem'], 'd_convs': params['d_convs'], 'blocks': blocks}


# ------------------------------ parameter init ------------------------------

class _KeyGen:
    def __init__(self, key):
        self._key = key

    def __call__(self):
        self._key, sub = jax.random.split(self._key)
        return sub


def _nrm(key, shape, scale):
    return scale * jax.random.normal(key, shape, jnp.float32)


def _bn_init(kg, c):
    return {'gamma': 1.0 + _nrm(kg(), (c,), 0.05),
            'beta': _nrm(kg(), (c,), 0.05),
            'mean': _nrm(kg(), (c,), 0.05),
            'var': jnp.ones((c,), jnp.float32)}


def _attn_init(kg, dim):
    s = 1.0 / float(np.sqrt(dim))
    return {
        'q_w': _nrm(kg(), (dim, dim), s), 'q_b': _nrm(kg(), (dim,), 0.02),
        'kv_w': _nrm(kg(), (dim, 2 * dim), s), 'kv_b': _nrm(kg(), (2 * dim,), 0.02),
        'proj_w': _nrm(kg(), (dim, dim), s), 'proj_b': _nrm(kg(), (dim,), 0.02),
        'norm_w': 1.0 + _nrm(kg(), (dim,), 0.05), 'norm_b': _nrm(kg(), (dim,), 0.05),
        'global_tokens': _nrm(kg(), (dim,), 1.0),
        'ln1_w': 1.0 + _nrm(kg(), (1,), 0.05), 'ln1_b': 0.5 + _nrm(kg(), (1,), 0.05),
        'g2qk_w': _nrm(kg(), (2 * dim, dim), s), 'g2qk_b': _nrm(kg(), (2 * dim,), 0.02),
    }


def _irb_init(kg, dim, hidden):
    return {
        'fc1_w': _nrm(kg(), (dim, hidden), 1.0 / float(np.sqrt(dim))),
        'fc1_b': _nrm(kg(), (hidden,), 0.02),
        'dw_w': _nrm(kg(), (3, 3, 1, hidden), 1.0 / 3.0),
        'dw_b': _nrm(kg(), (hidden,), 0.02),
        'fc2_w': _nrm(kg(), (hidden, dim), 1.0 / float(np.sqrt(hidden))),
        'fc2_b': _nrm(kg(), (dim,), 0.02),
    }


def init_params(key, in_ch, dim, num_heads, pool_ratios, mlp_ratio, depths):
    kg = _KeyGen(key)
    stem = {
        'bn1': _bn_init(kg, in_ch),
        'conv1_w': _nrm(kg(), (3, 3, in_ch, dim), 1.0 / float(np.sqrt(9 * in_ch))),
        'bn2': _bn_init(kg, dim),
        'conv2_w': _nrm(kg(), (3, 3, dim, dim), 1.0 / float(np.sqrt(9 * dim))),
        'bn_s': _bn_init(kg, in_ch),
        'convs_w': _nrm(kg(), (1, 1, in_ch, dim), 1.0 / float(np.sqrt(in_ch))),
    }
    d_convs = [{'w': _nrm(kg(), (3, 3, 1, dim), 1.0 / 3.0),
                'b': _nrm(kg(), (dim,), 0.02)} for _ in pool_ratios]
    blocks = [{'bn1': _bn_init(kg, dim),
               'attn': _attn_init(kg, dim),
               'bn2': _bn_init(kg, dim),
               'irb': _irb_init(kg, dim, int(dim * mlp_ratio))}
              for _ in range(depths)]
    return {'stem': stem, 'd_convs': d_convs, 'blocks': blocks}


if __name__ == "__main__":
    # NOTE: toy dims (C=8, dh=4) are lane-sparse; the Pallas path is designed for
    # production dims (C >= 128) but remains correct at these small shapes.
    B, in_ch, Hin, Win = 2, 4, 32, 32
    embed_dims, heads, mlp_ratio, depths = 8, 2, 4, 2
    pool_ratios = (1, 2, 3, 6)

    key = jax.random.PRNGKey(0)
    kx, kp = jax.random.split(key)
    x = jax.random.normal(kx, (B, in_ch, Hin, Win), jnp.float32)
    raw_params = init_params(kp, in_ch, embed_dims, heads, pool_ratios, mlp_ratio, depths)
    params = prepare_params(raw_params, embed_dims, heads)   # one-time prep outside jit

    fwd = jax.jit(functools.partial(glo_tkdown_block_pv,
                                    num_heads=heads, pool_ratios=pool_ratios))
    out = jax.block_until_ready(fwd(x, params))

    assert out.shape == (B, embed_dims, Hin // 2, Win // 2), out.shape
    assert bool(jnp.all(jnp.isfinite(out)))
    print("KERNEL_OK")
</pallas_src>

<mosaic_0001>
module attributes {stable_mosaic.version = 11 : i64} {
  func.func @_matmul_bias_split_kernel(%arg0: i32, %arg1: i32, %arg2: memref<1x256x8xbf16, #tpu.memory_space<vmem>>, %arg3: memref<8x24xbf16, #tpu.memory_space<vmem>>, %arg4: memref<1x24xf32, #tpu.memory_space<vmem>>, %arg5: memref<1x256x8xbf16, #tpu.memory_space<vmem>>, %arg6: memref<1x256x8xf32, #tpu.memory_space<vmem>>, %arg7: memref<1x256x8xf32, #tpu.memory_space<vmem>>) attributes {dimension_semantics = [#tpu.dimension_semantics<parallel>, #tpu.dimension_semantics<parallel>], iteration_bounds = array<i64: 1, 2>, scalar_prefetch = 0 : i64, scratch_operands = 0 : i64, tpu.core_type = #tpu.core_type<tc>, window_params = [{transform_indices = @transform_0, window_bounds = array<i64: 1, 256, 8>}, {pipeline_mode = #tpu.pipeline_mode<synchronous>, transform_indices = @transform_1, window_bounds = array<i64: 8, 24>}, {pipeline_mode = #tpu.pipeline_mode<synchronous>, transform_indices = @transform_2, window_bounds = array<i64: 1, 24>}, {transform_indices = @transform_3, window_bounds = array<i64: 1, 256, 8>}, {transform_indices = @transform_4, window_bounds = array<i64: 1, 256, 8>}, {transform_indices = @transform_5, window_bounds = array<i64: 1, 256, 8>}]} {
    %c0 = arith.constant 0 : index
    %c0_0 = arith.constant 0 : index
    %c0_1 = arith.constant 0 : index
    %0 = vector.load %arg2[%c0, %c0_0, %c0_1] : memref<1x256x8xbf16, #tpu.memory_space<vmem>>, vector<1x256x8xbf16>
    %1 = vector.shape_cast %0 : vector<1x256x8xbf16> to vector<256x8xbf16>
    %c0_2 = arith.constant 0 : index
    %c0_3 = arith.constant 0 : index
    %2 = vector.load %arg3[%c0_2, %c0_3] : memref<8x24xbf16, #tpu.memory_space<vmem>>, vector<8x24xbf16>
    %cst = arith.constant dense<0.000000e+00> : vector<256x24xf32>
    %3 = tpu.matmul %1, %2, %cst {dimension_numbers = #tpu.dot_dimension_numbers<[1], [0], [0], [1], [0, 0, 1, 1], [], []>} : vector<256x8xbf16>, vector<8x24xbf16>, vector<256x24xf32> -> vector<256x24xf32>
    %c0_4 = arith.constant 0 : index
    %c0_5 = arith.constant 0 : index
    %4 = vector.load %arg4[%c0_4, %c0_5] : memref<1x24xf32, #tpu.memory_space<vmem>>, vector<1x24xf32>
    %5 = vector.broadcast %4 : vector<1x24xf32> to vector<256x24xf32>
    %6 = arith.addf %3, %5 : vector<256x24xf32>
    %7 = vector.extract_strided_slice %6 {offsets = [0, 0], sizes = [256, 8], strides = [1, 1]} : vector<256x24xf32> to vector<256x8xf32>
    %8 = arith.truncf %7 : vector<256x8xf32> to vector<256x8xbf16>
    %c0_6 = arith.constant 0 : index
    %c0_7 = arith.constant 0 : index
    %c0_8 = arith.constant 0 : index
    %9 = vector.load %arg5[%c0_6, %c0_7, %c0_8] : memref<1x256x8xbf16, #tpu.memory_space<vmem>>, vector<1x256x8xbf16>
    %10 = vector.shape_cast %9 : vector<1x256x8xbf16> to vector<256x8xbf16>
    %11 = vector.shape_cast %8 : vector<256x8xbf16> to vector<1x256x8xbf16>
    tpu.vector_store %arg5[%c0_6, %c0_7, %c0_8], %11 {strides = array<i32>} : memref<1x256x8xbf16, #tpu.memory_space<vmem>>, vector<1x256x8xbf16>,
    %12 = vector.extract_strided_slice %6 {offsets = [0, 8], sizes = [256, 8], strides = [1, 1]} : vector<256x24xf32> to vector<256x8xf32>
    %c0_9 = arith.constant 0 : index
    %c0_10 = arith.constant 0 : index
    %c0_11 = arith.constant 0 : index
    %13 = vector.load %arg6[%c0_9, %c0_10, %c0_11] : memref<1x256x8xf32, #tpu.memory_space<vmem>>, vector<1x256x8xf32>
    %14 = vector.shape_cast %13 : vector<1x256x8xf32> to vector<256x8xf32>
    %15 = vector.shape_cast %12 : vector<256x8xf32> to vector<1x256x8xf32>
    tpu.vector_store %arg6[%c0_9, %c0_10, %c0_11], %15 {strides = array<i32>} : memref<1x256x8xf32, #tpu.memory_space<vmem>>, vector<1x256x8xf32>,
    %16 = vector.extract_strided_slice %6 {offsets = [0, 16], sizes = [256, 8], strides = [1, 1]} : vector<256x24xf32> to vector<256x8xf32>
    %c0_12 = arith.constant 0 : index
    %c0_13 = arith.constant 0 : index
    %c0_14 = arith.constant 0 : index
    %17 = vector.load %arg7[%c0_12, %c0_13, %c0_14] : memref<1x256x8xf32, #tpu.memory_space<vmem>>, vector<1x256x8xf32>
    %18 = vector.shape_cast %17 : vector<1x256x8xf32> to vector<256x8xf32>
    %19 = vector.shape_cast %16 : vector<256x8xf32> to vector<1x256x8xf32>
    tpu.vector_store %arg7[%c0_12, %c0_13, %c0_14], %19 {strides = array<i32>} : memref<1x256x8xf32, #tpu.memory_space<vmem>>, vector<1x256x8xf32>,
    return
  }
  func.func @transform_0(%arg0: i32, %arg1: i32) -> (i32, i32, i32) {
    %c0_i32 = arith.constant 0 : i32
    %c0_i32_0 = arith.constant 0 : i32
    return %arg1, %arg0, %c0_i32 : i32, i32, i32
  }
  func.func @transform_1(%arg0: i32, %arg1: i32) -> (i32, i32) {
    %c0_i32 = arith.constant 0 : i32
    %c0_i32_0 = arith.constant 0 : i32
    %c0_i32_1 = arith.constant 0 : i32
    return %c0_i32, %c0_i32_0 : i32, i32
  }
  func.func @transform_2(%arg0: i32, %arg1: i32) -> (i32, i32) {
    %c0_i32 = arith.constant 0 : i32
    %c0_i32_0 = arith.constant 0 : i32
    %c0_i32_1 = arith.constant 0 : i32
    return %c0_i32, %c0_i32_0 : i32, i32
  }
  func.func @transform_3(%arg0: i32, %arg1: i32) -> (i32, i32, i32) {
    %c0_i32 = arith.constant 0 : i32
    %c0_i32_0 = arith.constant 0 : i32
    return %arg1, %arg0, %c0_i32 : i32, i32, i32
  }
  func.func @transform_4(%arg0: i32, %arg1: i32) -> (i32, i32, i32) {
    %c0_i32 = arith.constant 0 : i32
    %c0_i32_0 = arith.constant 0 : i32
    return %arg1, %arg0, %c0_i32 : i32, i32, i32
  }
  func.func @transform_5(%arg0: i32, %arg1: i32) -> (i32, i32, i32) {
    %c0_i32 = arith.constant 0 : i32
    %c0_i32_0 = arith.constant 0 : i32
    return %arg1, %arg0, %c0_i32 : i32, i32, i32
  }
}

module attributes {stable_mosaic.version = 11 : i64} {
  func.func @_dual_layernorm_kernel(%arg0: i32, %arg1: i32, %arg2: memref<1x384x8xf32, #tpu.memory_space<vmem>>, %arg3: memref<1x384x8xf32, #tpu.memory_space<vmem>>, %arg4: memref<1x8xf32, #tpu.memory_space<vmem>>, %arg5: memref<1x8xf32, #tpu.memory_space<vmem>>, %arg6: memref<1x384x8xbf16, #tpu.memory_space<vmem>>, %arg7: memref<1x384x8xbf16, #tpu.memory_space<vmem>>) attributes {dimension_semantics = [#tpu.dimension_semantics<parallel>, #tpu.dimension_semantics<parallel>], iteration_bounds = array<i64: 1, 2>, scalar_prefetch = 0 : i64, scratch_operands = 0 : i64, tpu.core_type = #tpu.core_type<tc>, window_params = [{transform_indices = @transform_0, window_bounds = array<i64: 1, 384, 8>}, {transform_indices = @transform_1, window_bounds = array<i64: 1, 384, 8>}, {pipeline_mode = #tpu.pipeline_mode<synchronous>, transform_indices = @transform_2, window_bounds = array<i64: 1, 8>}, {pipeline_mode = #tpu.pipeline_mode<synchronous>, transform_indices = @transform_3, window_bounds = array<i64: 1, 8>}, {transform_indices = @transform_4, window_bounds = array<i64: 1, 384, 8>}, {transform_indices = @transform_5, window_bounds = array<i64: 1, 384, 8>}]} {
    %c0 = arith.constant 0 : index
    %c0_0 = arith.constant 0 : index
    %c0_1 = arith.constant 0 : index
    %0 = vector.load %arg2[%c0, %c0_0, %c0_1] : memref<1x384x8xf32, #tpu.memory_space<vmem>>, vector<1x384x8xf32>
    %1 = vector.shape_cast %0 : vector<1x384x8xf32> to vector<384x8xf32>
    %cst = arith.constant dense<0.000000e+00> : vector<384xf32>
    %2 = vector.multi_reduction <add>, %1, %cst [1] : vector<384x8xf32> to vector<384xf32>
    %3 = vector.shape_cast %2 : vector<384xf32> to vector<384x1xf32>
    %cst_2 = arith.constant 8.000000e+00 : f32
    %4 = vector.broadcast %cst_2 : f32 to vector<384x1xf32>
    %5 = arith.divf %3, %4 : vector<384x1xf32>
    %6 = vector.broadcast %5 : vector<384x1xf32> to vector<384x8xf32>
    %7 = arith.subf %1, %6 : vector<384x8xf32>
    %8 = arith.mulf %7, %7 : vector<384x8xf32>
    %cst_3 = arith.constant dense<0.000000e+00> : vector<384xf32>
    %9 = vector.multi_reduction <add>, %8, %cst_3 [1] : vector<384x8xf32> to vector<384xf32>
    %10 = vector.shape_cast %9 : vector<384xf32> to vector<384x1xf32>
    %cst_4 = arith.constant 8.000000e+00 : f32
    %11 = vector.broadcast %cst_4 : f32 to vector<384x1xf32>
    %12 = arith.divf %10, %11 : vector<384x1xf32>
    %13 = vector.broadcast %5 : vector<384x1xf32> to vector<384x8xf32>
    %14 = arith.subf %1, %13 : vector<384x8xf32>
    %cst_5 = arith.constant 9.99999974E-6 : f32
    %15 = vector.broadcast %cst_5 : f32 to vector<384x1xf32>
    %16 = arith.addf %12, %15 : vector<384x1xf32>
    %17 = math.rsqrt %16 : vector<384x1xf32>
    %18 = vector.broadcast %17 : vector<384x1xf32> to vector<384x8xf32>
    %19 = arith.mulf %14, %18 : vector<384x8xf32>
    %c0_6 = arith.constant 0 : index
    %c0_7 = arith.constant 0 : index
    %20 = vector.load %arg4[%c0_6, %c0_7] : memref<1x8xf32, #tpu.memory_space<vmem>>, vector<1x8xf32>
    %21 = vector.broadcast %20 : vector<1x8xf32> to vector<384x8xf32>
    %22 = arith.mulf %19, %21 : vector<384x8xf32>
    %c0_8 = arith.constant 0 : index
    %c0_9 = arith.constant 0 : index
    %23 = vector.load %arg5[%c0_8, %c0_9] : memref<1x8xf32, #tpu.memory_space<vmem>>, vector<1x8xf32>
    %24 = vector.broadcast %23 : vector<1x8xf32> to vector<384x8xf32>
    %25 = arith.addf %22, %24 : vector<384x8xf32>
    %26 = arith.truncf %25 : vector<384x8xf32> to vector<384x8xbf16>
    %c0_10 = arith.constant 0 : index
    %c0_11 = arith.constant 0 : index
    %c0_12 = arith.constant 0 : index
    %27 = vector.load %arg6[%c0_10, %c0_11, %c0_12] : memref<1x384x8xbf16, #tpu.memory_space<vmem>>, vector<1x384x8xbf16>
    %28 = vector.shape_cast %27 : vector<1x384x8xbf16> to vector<384x8xbf16>
    %29 = vector.shape_cast %26 : vector<384x8xbf16> to vector<1x384x8xbf16>
    tpu.vector_store %arg6[%c0_10, %c0_11, %c0_12], %29 {strides = array<i32>} : memref<1x384x8xbf16, #tpu.memory_space<vmem>>, vector<1x384x8xbf16>,
    %c0_13 = arith.constant 0 : index
    %c0_14 = arith.constant 0 : index
    %c0_15 = arith.constant 0 : index
    %30 = vector.load %arg3[%c0_13, %c0_14, %c0_15] : memref<1x384x8xf32, #tpu.memory_space<vmem>>, vector<1x384x8xf32>
    %31 = vector.shape_cast %30 : vector<1x384x8xf32> to vector<384x8xf32>
    %cst_16 = arith.constant dense<0.000000e+00> : vector<384xf32>
    %32 = vector.multi_reduction <add>, %31, %cst_16 [1] : vector<384x8xf32> to vector<384xf32>
    %33 = vector.shape_cast %32 : vector<384xf32> to vector<384x1xf32>
    %cst_17 = arith.constant 8.000000e+00 : f32
    %34 = vector.broadcast %cst_17 : f32 to vector<384x1xf32>
    %35 = arith.divf %33, %34 : vector<384x1xf32>
    %36 = vector.broadcast %35 : vector<384x1xf32> to vector<384x8xf32>
    %37 = arith.subf %31, %36 : vector<384x8xf32>
    %38 = arith.mulf %37, %37 : vector<384x8xf32>
    %cst_18 = arith.constant dense<0.000000e+00> : vector<384xf32>
    %39 = vector.multi_reduction <add>, %38, %cst_18 [1] : vector<384x8xf32> to vector<384xf32>
    %40 = vector.shape_cast %39 : vector<384xf32> to vector<384x1xf32>
    %cst_19 = arith.constant 8.000000e+00 : f32
    %41 = vector.broadcast %cst_19 : f32 to vector<384x1xf32>
    %42 = arith.divf %40, %41 : vector<384x1xf32>
    %43 = vector.broadcast %35 : vector<384x1xf32> to vector<384x8xf32>
    %44 = arith.subf %31, %43 : vector<384x8xf32>
    %cst_20 = arith.constant 9.99999974E-6 : f32
    %45 = vector.broadcast %cst_20 : f32 to vector<384x1xf32>
    %46 = arith.addf %42, %45 : vector<384x1xf32>
    %47 = math.rsqrt %46 : vector<384x1xf32>
    %48 = vector.broadcast %47 : vector<384x1xf32> to vector<384x8xf32>
    %49 = arith.mulf %44, %48 : vector<384x8xf32>
    %c0_21 = arith.constant 0 : index
    %c0_22 = arith.constant 0 : index
    %50 = vector.load %arg4[%c0_21, %c0_22] : memref<1x8xf32, #tpu.memory_space<vmem>>, vector<1x8xf32>
    %51 = vector.broadcast %50 : vector<1x8xf32> to vector<384x8xf32>
    %52 = arith.mulf %49, %51 : vector<384x8xf32>
    %c0_23 = arith.constant 0 : index
    %c0_24 = arith.constant 0 : index
    %53 = vector.load %arg5[%c0_23, %c0_24] : memref<1x8xf32, #tpu.memory_space<vmem>>, vector<1x8xf32>
    %54 = vector.broadcast %53 : vector<1x8xf32> to vector<384x8xf32>
    %55 = arith.addf %52, %54 : vector<384x8xf32>
    %56 = arith.truncf %55 : vector<384x8xf32> to vector<384x8xbf16>
    %c0_25 = arith.constant 0 : index
    %c0_26 = arith.constant 0 : index
    %c0_27 = arith.constant 0 : index
    %57 = vector.load %arg7[%c0_25, %c0_26, %c0_27] : memref<1x384x8xbf16, #tpu.memory_space<vmem>>, vector<1x384x8xbf16>
    %58 = vector.shape_cast %57 : vector<1x384x8xbf16> to vector<384x8xbf16>
    %59 = vector.shape_cast %56 : vector<384x8xbf16> to vector<1x384x8xbf16>
    tpu.vector_store %arg7[%c0_25, %c0_26, %c0_27], %59 {strides = array<i32>} : memref<1x384x8xbf16, #tpu.memory_space<vmem>>, vector<1x384x8xbf16>,
    return
  }
  func.func @transform_0(%arg0: i32, %arg1: i32) -> (i32, i32, i32) {
    %c0_i32 = arith.constant 0 : i32
    %c0_i32_0 = arith.constant 0 : i32
    return %arg1, %arg0, %c0_i32 : i32, i32, i32
  }
  func.func @transform_1(%arg0: i32, %arg1: i32) -> (i32, i32, i32) {
    %c0_i32 = arith.constant 0 : i32
    %c0_i32_0 = arith.constant 0 : i32
    return %arg1, %arg0, %c0_i32 : i32, i32, i32
  }
  func.func @transform_2(%arg0: i32, %arg1: i32) -> (i32, i32) {
    %c0_i32 = arith.constant 0 : i32
    %c0_i32_0 = arith.constant 0 : i32
    %c0_i32_1 = arith.constant 0 : i32
    return %c0_i32, %c0_i32_0 : i32, i32
  }
  func.func @transform_3(%arg0: i32, %arg1: i32) -> (i32, i32) {
    %c0_i32 = arith.constant 0 : i32
    %c0_i32_0 = arith.constant 0 : i32
    %c0_i32_1 = arith.constant 0 : i32
    return %c0_i32, %c0_i32_0 : i32, i32
  }
  func.func @transform_4(%arg0: i32, %arg1: i32) -> (i32, i32, i32) {
    %c0_i32 = arith.constant 0 : i32
    %c0_i32_0 = arith.constant 0 : i32
    return %arg1, %arg0, %c0_i32 : i32, i32, i32
  }
  func.func @transform_5(%arg0: i32, %arg1: i32) -> (i32, i32, i32) {
    %c0_i32 = arith.constant 0 : i32
    %c0_i32_0 = arith.constant 0 : i32
    return %arg1, %arg0, %c0_i32 : i32, i32, i32
  }
}

module attributes {stable_mosaic.version = 11 : i64} {
  func.func @_attn_agg_proj_kernel(%arg0: i32, %arg1: i32, %arg2: memref<1x256x8xbf16, #tpu.memory_space<vmem>>, %arg3: memref<1x384x8xbf16, #tpu.memory_space<vmem>>, %arg4: memref<1x384x8xbf16, #tpu.memory_space<vmem>>, %arg5: memref<1x8x8xbf16, #tpu.memory_space<vmem>>, %arg6: memref<1x8xf32, #tpu.memory_space<vmem>>, %arg7: memref<1x256x8xf32, #tpu.memory_space<vmem>>) attributes {dimension_semantics = [#tpu.dimension_semantics<parallel>, #tpu.dimension_semantics<parallel>], iteration_bounds = array<i64: 1, 2>, scalar_prefetch = 0 : i64, scratch_operands = 0 : i64, tpu.core_type = #tpu.core_type<tc>, window_params = [{transform_indices = @transform_0, window_bounds = array<i64: 1, 256, 8>}, {transform_indices = @transform_1, window_bounds = array<i64: 1, 384, 8>}, {transform_indices = @transform_2, window_bounds = array<i64: 1, 384, 8>}, {transform_indices = @transform_3, window_bounds = array<i64: 1, 8, 8>}, {pipeline_mode = #tpu.pipeline_mode<synchronous>, transform_indices = @transform_4, window_bounds = array<i64: 1, 8>}, {transform_indices = @transform_5, window_bounds = array<i64: 1, 256, 8>}]} {
    %0 = tpu.iota {dimensions = array<i32: 1>} : vector<1x384xi32>
    %c354_i32 = arith.constant 354 : i32
    %1 = vector.broadcast %c354_i32 : i32 to vector<1x384xi32>
    %2 = arith.cmpi slt, %0, %1 : vector<1x384xi32>
    %cst = arith.constant 0.000000e+00 : f32
    %3 = vector.broadcast %cst : f32 to vector<256x8xf32>
    %c0 = arith.constant 0 : index
    %c0_0 = arith.constant 0 : index
    %c0_1 = arith.constant 0 : index
    %4 = vector.load %arg2[%c0, %c0_0, %c0_1] : memref<1x256x8xbf16, #tpu.memory_space<vmem>>, vector<1x256x4xbf16>
    %5 = vector.shape_cast %4 : vector<1x256x4xbf16> to vector<256x4xbf16>
    %c0_2 = arith.constant 0 : index
    %c0_3 = arith.constant 0 : index
    %c0_4 = arith.constant 0 : index
    %6 = vector.load %arg3[%c0_2, %c0_3, %c0_4] : memref<1x384x8xbf16, #tpu.memory_space<vmem>>, vector<1x384x4xbf16>
    %7 = vector.shape_cast %6 : vector<1x384x4xbf16> to vector<384x4xbf16>
    %c0_5 = arith.constant 0 : index
    %c0_6 = arith.constant 0 : index
    %c0_7 = arith.constant 0 : index
    %8 = vector.load %arg4[%c0_5, %c0_6, %c0_7] : memref<1x384x8xbf16, #tpu.memory_space<vmem>>, vector<1x384x4xbf16>
    %9 = vector.shape_cast %8 : vector<1x384x4xbf16> to vector<384x4xbf16>
    %cst_8 = arith.constant dense<0.000000e+00> : vector<256x384xf32>
    %10 = tpu.matmul %5, %7, %cst_8 {dimension_numbers = #tpu.dot_dimension_numbers<[1], [1], [0], [0], [0, 0, 1, 0], [], []>} : vector<256x4xbf16>, vector<384x4xbf16>, vector<256x384xf32> -> vector<256x384xf32>
    %cst_9 = arith.constant -1.000000e+30 : f32
    %11 = vector.shape_cast %2 : vector<1x384xi1> to vector<1x384xi1>
    %12 = vector.broadcast %11 : vector<1x384xi1> to vector<256x384xi1>
    %13 = vector.broadcast %cst_9 : f32 to vector<256x384xf32>
    %14 = arith.select %12, %10, %13 : vector<256x384xi1>, vector<256x384xf32>
    %cst_10 = arith.constant dense<0xFF800000> : vector<256xf32>
    %15 = vector.multi_reduction <maximumf>, %14, %cst_10 [1] : vector<256x384xf32> to vector<256xf32>
    %16 = vector.shape_cast %15 : vector<256xf32> to vector<256x1xf32>
    %17 = vector.broadcast %16 : vector<256x1xf32> to vector<256x384xf32>
    %18 = arith.subf %14, %17 : vector<256x384xf32>
    %19 = math.exp %18 : vector<256x384xf32>
    %cst_11 = arith.constant dense<0.000000e+00> : vector<256xf32>
    %20 = vector.multi_reduction <add>, %19, %cst_11 [1] : vector<256x384xf32> to vector<256xf32>
    %21 = vector.shape_cast %20 : vector<256xf32> to vector<256x1xf32>
    %22 = tpu.reciprocal %21 {approx = true} : vector<256x1xf32> -> vector<256x1xf32>
    %23 = vector.broadcast %22 : vector<256x1xf32> to vector<256x384xf32>
    %24 = arith.mulf %19, %23 : vector<256x384xf32>
    %25 = arith.truncf %24 : vector<256x384xf32> to vector<256x384xbf16>
    %cst_12 = arith.constant dense<0.000000e+00> : vector<256x4xf32>
    %26 = tpu.matmul %25, %9, %cst_12 {dimension_numbers = #tpu.dot_dimension_numbers<[1], [0], [0], [1], [0, 0, 1, 1], [], []>} : vector<256x384xbf16>, vector<384x4xbf16>, vector<256x4xf32> -> vector<256x4xf32>
    %27 = arith.truncf %26 : vector<256x4xf32> to vector<256x4xbf16>
    %c0_13 = arith.constant 0 : index
    %c0_14 = arith.constant 0 : index
    %c0_15 = arith.constant 0 : index
    %28 = vector.load %arg5[%c0_13, %c0_14, %c0_15] : memref<1x8x8xbf16, #tpu.memory_space<vmem>>, vector<1x4x8xbf16>
    %29 = vector.shape_cast %28 : vector<1x4x8xbf16> to vector<4x8xbf16>
    %cst_16 = arith.constant dense<0.000000e+00> : vector<256x8xf32>
    %30 = tpu.matmul %27, %29, %cst_16 {dimension_numbers = #tpu.dot_dimension_numbers<[1], [0], [0], [1], [0, 0, 1, 1], [], []>} : vector<256x4xbf16>, vector<4x8xbf16>, vector<256x8xf32> -> vector<256x8xf32>
    %31 = arith.addf %3, %30 : vector<256x8xf32>
    %c0_17 = arith.constant 0 : index
    %c0_18 = arith.constant 0 : index
    %c4 = arith.constant 4 : index
    %32 = vector.load %arg2[%c0_17, %c0_18, %c4] : memref<1x256x8xbf16, #tpu.memory_space<vmem>>, vector<1x256x4xbf16>
    %33 = vector.shape_cast %32 : vector<1x256x4xbf16> to vector<256x4xbf16>
    %c0_19 = arith.constant 0 : index
    %c0_20 = arith.constant 0 : index
    %c4_21 = arith.constant 4 : index
    %34 = vector.load %arg3[%c0_19, %c0_20, %c4_21] : memref<1x384x8xbf16, #tpu.memory_space<vmem>>, vector<1x384x4xbf16>
    %35 = vector.shape_cast %34 : vector<1x384x4xbf16> to vector<384x4xbf16>
    %c0_22 = arith.constant 0 : index
    %c0_23 = arith.constant 0 : index
    %c4_24 = arith.constant 4 : index
    %36 = vector.load %arg4[%c0_22, %c0_23, %c4_24] : memref<1x384x8xbf16, #tpu.memory_space<vmem>>, vector<1x384x4xbf16>
    %37 = vector.shape_cast %36 : vector<1x384x4xbf16> to vector<384x4xbf16>
    %cst_25 = arith.constant dense<0.000000e+00> : vector<256x384xf32>
    %38 = tpu.matmul %33, %35, %cst_25 {dimension_numbers = #tpu.dot_dimension_numbers<[1], [1], [0], [0], [0, 0, 1, 0], [], []>} : vector<256x4xbf16>, vector<384x4xbf16>, vector<256x384xf32> -> vector<256x384xf32>
    %cst_26 = arith.constant -1.000000e+30 : f32
    %39 = vector.shape_cast %2 : vector<1x384xi1> to vector<1x384xi1>
    %40 = vector.broadcast %39 : vector<1x384xi1> to vector<256x384xi1>
    %41 = vector.broadcast %cst_26 : f32 to vector<256x384xf32>
    %42 = arith.select %40, %38, %41 : vector<256x384xi1>, vector<256x384xf32>
    %cst_27 = arith.constant dense<0xFF800000> : vector<256xf32>
    %43 = vector.multi_reduction <maximumf>, %42, %cst_27 [1] : vector<256x384xf32> to vector<256xf32>
    %44 = vector.shape_cast %43 : vector<256xf32> to vector<256x1xf32>
    %45 = vector.broadcast %44 : vector<256x1xf32> to vector<256x384xf32>
    %46 = arith.subf %42, %45 : vector<256x384xf32>
    %47 = math.exp %46 : vector<256x384xf32>
    %cst_28 = arith.constant dense<0.000000e+00> : vector<256xf32>
    %48 = vector.multi_reduction <add>, %47, %cst_28 [1] : vector<256x384xf32> to vector<256xf32>
    %49 = vector.shape_cast %48 : vector<256xf32> to vector<256x1xf32>
    %50 = tpu.reciprocal %49 {approx = true} : vector<256x1xf32> -> vector<256x1xf32>
    %51 = vector.broadcast %50 : vector<256x1xf32> to vector<256x384xf32>
    %52 = arith.mulf %47, %51 : vector<256x384xf32>
    %53 = arith.truncf %52 : vector<256x384xf32> to vector<256x384xbf16>
    %cst_29 = arith.constant dense<0.000000e+00> : vector<256x4xf32>
    %54 = tpu.matmul %53, %37, %cst_29 {dimension_numbers = #tpu.dot_dimension_numbers<[1], [0], [0], [1], [0, 0, 1, 1], [], []>} : vector<256x384xbf16>, vector<384x4xbf16>, vector<256x4xf32> -> vector<256x4xf32>
    %55 = arith.truncf %54 : vector<256x4xf32> to vector<256x4xbf16>
    %c0_30 = arith.constant 0 : index
    %c4_31 = arith.constant 4 : index
    %c0_32 = arith.constant 0 : index
    %56 = vector.load %arg5[%c0_30, %c4_31, %c0_32] : memref<1x8x8xbf16, #tpu.memory_space<vmem>>, vector<1x4x8xbf16>
    %57 = vector.shape_cast %56 : vector<1x4x8xbf16> to vector<4x8xbf16>
    %cst_33 = arith.constant dense<0.000000e+00> : vector<256x8xf32>
    %58 = tpu.matmul %55, %57, %cst_33 {dimension_numbers = #tpu.dot_dimension_numbers<[1], [0], [0], [1], [0, 0, 1, 1], [], []>} : vector<256x4xbf16>, vector<4x8xbf16>, vector<256x8xf32> -> vector<256x8xf32>
    %59 = arith.addf %31, %58 : vector<256x8xf32>
    %c0_34 = arith.constant 0 : index
    %c0_35 = arith.constant 0 : index
    %60 = vector.load %arg6[%c0_34, %c0_35] : memref<1x8xf32, #tpu.memory_space<vmem>>, vector<1x8xf32>
    %61 = vector.broadcast %60 : vector<1x8xf32> to vector<256x8xf32>
    %62 = arith.addf %59, %61 : vector<256x8xf32>
    %c0_36 = arith.constant 0 : index
    %c0_37 = arith.constant 0 : index
    %c0_38 = arith.constant 0 : index
    %63 = vector.load %arg7[%c0_36, %c0_37, %c0_38] : memref<1x256x8xf32, #tpu.memory_space<vmem>>, vector<1x256x8xf32>
    %64 = vector.shape_cast %63 : vector<1x256x8xf32> to vector<256x8xf32>
    %65 = vector.shape_cast %62 : vector<256x8xf32> to vector<1x256x8xf32>
    tpu.vector_store %arg7[%c0_36, %c0_37, %c0_38], %65 {strides = array<i32>} : memref<1x256x8xf32, #tpu.memory_space<vmem>>, vector<1x256x8xf32>,
    return
  }
  func.func @transform_0(%arg0: i32, %arg1: i32) -> (i32, i32, i32) {
    %c0_i32 = arith.constant 0 : i32
    %c0_i32_0 = arith.constant 0 : i32
    return %arg1, %arg0, %c0_i32 : i32, i32, i32
  }
  func.func @transform_1(%arg0: i32, %arg1: i32) -> (i32, i32, i32) {
    %c0_i32 = arith.constant 0 : i32
    %c0_i32_0 = arith.constant 0 : i32
    %c0_i32_1 = arith.constant 0 : i32
    return %arg1, %c0_i32, %c0_i32_0 : i32, i32, i32
  }
  func.func @transform_2(%arg0: i32, %arg1: i32) -> (i32, i32, i32) {
    %c0_i32 = arith.constant 0 : i32
    %c0_i32_0 = arith.constant 0 : i32
    %c0_i32_1 = arith.constant 0 : i32
    return %arg1, %c0_i32, %c0_i32_0 : i32, i32, i32
  }
  func.func @transform_3(%arg0: i32, %arg1: i32) -> (i32, i32, i32) {
    %c0_i32 = arith.constant 0 : i32
    %c0_i32_0 = arith.constant 0 : i32
    %c0_i32_1 = arith.constant 0 : i32
    return %arg1, %c0_i32, %c0_i32_0 : i32, i32, i32
  }
  func.func @transform_4(%arg0: i32, %arg1: i32) -> (i32, i32) {
    %c0_i32 = arith.constant 0 : i32
    %c0_i32_0 = arith.constant 0 : i32
    %c0_i32_1 = arith.constant 0 : i32
    return %c0_i32, %c0_i32_0 : i32, i32
  }
  func.func @transform_5(%arg0: i32, %arg1: i32) -> (i32, i32, i32) {
    %c0_i32 = arith.constant 0 : i32
    %c0_i32_0 = arith.constant 0 : i32
    return %arg1, %arg0, %c0_i32 : i32, i32, i32
  }
}

module attributes {stable_mosaic.version = 11 : i64} {
  func.func @_matmul_bias_split_kernel(%arg0: i32, %arg1: i32, %arg2: memref<1x256x8xbf16, #tpu.memory_space<vmem>>, %arg3: memref<8x32xbf16, #tpu.memory_space<vmem>>, %arg4: memref<1x32xf32, #tpu.memory_space<vmem>>, %arg5: memref<1x256x32xf32, #tpu.memory_space<vmem>>) attributes {dimension_semantics = [#tpu.dimension_semantics<parallel>, #tpu.dimension_semantics<parallel>], iteration_bounds = array<i64: 1, 2>, scalar_prefetch = 0 : i64, scratch_operands = 0 : i64, tpu.core_type = #tpu.core_type<tc>, window_params = [{transform_indices = @transform_0, window_bounds = array<i64: 1, 256, 8>}, {pipeline_mode = #tpu.pipeline_mode<synchronous>, transform_indices = @transform_1, window_bounds = array<i64: 8, 32>}, {pipeline_mode = #tpu.pipeline_mode<synchronous>, transform_indices = @transform_2, window_bounds = array<i64: 1, 32>}, {transform_indices = @transform_3, window_bounds = array<i64: 1, 256, 32>}]} {
    %c0 = arith.constant 0 : index
    %c0_0 = arith.constant 0 : index
    %c0_1 = arith.constant 0 : index
    %0 = vector.load %arg2[%c0, %c0_0, %c0_1] : memref<1x256x8xbf16, #tpu.memory_space<vmem>>, vector<1x256x8xbf16>
    %1 = vector.shape_cast %0 : vector<1x256x8xbf16> to vector<256x8xbf16>
    %c0_2 = arith.constant 0 : index
    %c0_3 = arith.constant 0 : index
    %2 = vector.load %arg3[%c0_2, %c0_3] : memref<8x32xbf16, #tpu.memory_space<vmem>>, vector<8x32xbf16>
    %cst = arith.constant dense<0.000000e+00> : vector<256x32xf32>
    %3 = tpu.matmul %1, %2, %cst {dimension_numbers = #tpu.dot_dimension_numbers<[1], [0], [0], [1], [0, 0, 1, 1], [], []>} : vector<256x8xbf16>, vector<8x32xbf16>, vector<256x32xf32> -> vector<256x32xf32>
    %c0_4 = arith.constant 0 : index
    %c0_5 = arith.constant 0 : index
    %4 = vector.load %arg4[%c0_4, %c0_5] : memref<1x32xf32, #tpu.memory_space<vmem>>, vector<1x32xf32>
    %5 = vector.broadcast %4 : vector<1x32xf32> to vector<256x32xf32>
    %6 = arith.addf %3, %5 : vector<256x32xf32>
    %c0_6 = arith.constant 0 : index
    %c0_7 = arith.constant 0 : index
    %c0_8 = arith.constant 0 : index
    %7 = vector.load %arg5[%c0_6, %c0_7, %c0_8] : memref<1x256x32xf32, #tpu.memory_space<vmem>>, vector<1x256x32xf32>
    %8 = vector.shape_cast %7 : vector<1x256x32xf32> to vector<256x32xf32>
    %9 = vector.shape_cast %6 : vector<256x32xf32> to vector<1x256x32xf32>
    tpu.vector_store %arg5[%c0_6, %c0_7, %c0_8], %9 {strides = array<i32>} : memref<1x256x32xf32, #tpu.memory_space<vmem>>, vector<1x256x32xf32>,
    return
  }
  func.func @transform_0(%arg0: i32, %arg1: i32) -> (i32, i32, i32) {
    %c0_i32 = arith.constant 0 : i32
    %c0_i32_0 = arith.constant 0 : i32
    return %arg1, %arg0, %c0_i32 : i32, i32, i32
  }
  func.func @transform_1(%arg0: i32, %arg1: i32) -> (i32, i32) {
    %c0_i32 = arith.constant 0 : i32
    %c0_i32_0 = arith.constant 0 : i32
    %c0_i32_1 = arith.constant 0 : i32
    return %c0_i32, %c0_i32_0 : i32, i32
  }
  func.func @transform_2(%arg0: i32, %arg1: i32) -> (i32, i32) {
    %c0_i32 = arith.constant 0 : i32
    %c0_i32_0 = arith.constant 0 : i32
    %c0_i32_1 = arith.constant 0 : i32
    return %c0_i32, %c0_i32_0 : i32, i32
  }
  func.func @transform_3(%arg0: i32, %arg1: i32) -> (i32, i32, i32) {
    %c0_i32 = arith.constant 0 : i32
    %c0_i32_0 = arith.constant 0 : i32
    return %arg1, %arg0, %c0_i32 : i32, i32, i32
  }
}

module attributes {stable_mosaic.version = 11 : i64} {
  func.func @_matmul_bias_split_kernel(%arg0: i32, %arg1: i32, %arg2: memref<1x256x32xbf16, #tpu.memory_space<vmem>>, %arg3: memref<32x8xbf16, #tpu.memory_space<vmem>>, %arg4: memref<1x8xf32, #tpu.memory_space<vmem>>, %arg5: memref<1x256x8xf32, #tpu.memory_space<vmem>>) attributes {dimension_semantics = [#tpu.dimension_semantics<parallel>, #tpu.dimension_semantics<parallel>], iteration_bounds = array<i64: 1, 2>, scalar_prefetch = 0 : i64, scratch_operands = 0 : i64, tpu.core_type = #tpu.core_type<tc>, window_params = [{transform_indices = @transform_0, window_bounds = array<i64: 1, 256, 32>}, {pipeline_mode = #tpu.pipeline_mode<synchronous>, transform_indices = @transform_1, window_bounds = array<i64: 32, 8>}, {pipeline_mode = #tpu.pipeline_mode<synchronous>, transform_indices = @transform_2, window_bounds = array<i64: 1, 8>}, {transform_indices = @transform_3, window_bounds = array<i64: 1, 256, 8>}]} {
    %c0 = arith.constant 0 : index
    %c0_0 = arith.constant 0 : index
    %c0_1 = arith.constant 0 : index
    %0 = vector.load %arg2[%c0, %c0_0, %c0_1] : memref<1x256x32xbf16, #tpu.memory_space<vmem>>, vector<1x256x32xbf16>
    %1 = vector.shape_cast %0 : vector<1x256x32xbf16> to vector<256x32xbf16>
    %c0_2 = arith.constant 0 : index
    %c0_3 = arith.constant 0 : index
    %2 = vector.load %arg3[%c0_2, %c0_3] : memref<32x8xbf16, #tpu.memory_space<vmem>>, vector<32x8xbf16>
    %cst = arith.constant dense<0.000000e+00> : vector<256x8xf32>
    %3 = tpu.matmul %1, %2, %cst {dimension_numbers = #tpu.dot_dimension_numbers<[1], [0], [0], [1], [0, 0, 1, 1], [], []>} : vector<256x32xbf16>, vector<32x8xbf16>, vector<256x8xf32> -> vector<256x8xf32>
    %c0_4 = arith.constant 0 : index
    %c0_5 = arith.constant 0 : index
    %4 = vector.load %arg4[%c0_4, %c0_5] : memref<1x8xf32, #tpu.memory_space<vmem>>, vector<1x8xf32>
    %5 = vector.broadcast %4 : vector<1x8xf32> to vector<256x8xf32>
    %6 = arith.addf %3, %5 : vector<256x8xf32>
    %c0_6 = arith.constant 0 : index
    %c0_7 = arith.constant 0 : index
    %c0_8 = arith.constant 0 : index
    %7 = vector.load %arg5[%c0_6, %c0_7, %c0_8] : memref<1x256x8xf32, #tpu.memory_space<vmem>>, vector<1x256x8xf32>
    %8 = vector.shape_cast %7 : vector<1x256x8xf32> to vector<256x8xf32>
    %9 = vector.shape_cast %6 : vector<256x8xf32> to vector<1x256x8xf32>
    tpu.vector_store %arg5[%c0_6, %c0_7, %c0_8], %9 {strides = array<i32>} : memref<1x256x8xf32, #tpu.memory_space<vmem>>, vector<1x256x8xf32>,
    return
  }
  func.func @transform_0(%arg0: i32, %arg1: i32) -> (i32, i32, i32) {
    %c0_i32 = arith.constant 0 : i32
    %c0_i32_0 = arith.constant 0 : i32
    return %arg1, %arg0, %c0_i32 : i32, i32, i32
  }
  func.func @transform_1(%arg0: i32, %arg1: i32) -> (i32, i32) {
    %c0_i32 = arith.constant 0 : i32
    %c0_i32_0 = arith.constant 0 : i32
    %c0_i32_1 = arith.constant 0 : i32
    return %c0_i32, %c0_i32_0 : i32, i32
  }
  func.func @transform_2(%arg0: i32, %arg1: i32) -> (i32, i32) {
    %c0_i32 = arith.constant 0 : i32
    %c0_i32_0 = arith.constant 0 : i32
    %c0_i32_1 = arith.constant 0 : i32
    return %c0_i32, %c0_i32_0 : i32, i32
  }
  func.func @transform_3(%arg0: i32, %arg1: i32) -> (i32, i32, i32) {
    %c0_i32 = arith.constant 0 : i32
    %c0_i32_0 = arith.constant 0 : i32
    return %arg1, %arg0, %c0_i32 : i32, i32, i32
  }
}

</mosaic_0001>

<llo_original>
// kernel: glo_tkdown_block_pv.5
$region0: #{glo_tkdown_block_pv.5}
  #allocation0 [shape = 'u32[]', space=smem, size = 0x4, offset = 0x4, fixed_abs, tag = 'smem constant byte address 0x4 - core index']
  #allocation1 [shape = 'u32[144,128]{1,0:T(1,128)}', space=vmem, size = 0x12000, scoped, tag = 'internal scratch']
  %s0 = inlined_call_operand.vmem [shape: bf16[2,256,8], index: 0, kind: input, shape index: {}]
  %s1 = inlined_call_operand.vmem [shape: bf16[8,24], index: 1, kind: input, shape index: {}]
  %s2 = inlined_call_operand.vmem [shape: f32[1,24], index: 2, kind: input, shape index: {}]
  %s3 = inlined_call_operand.vmem [shape: bf16[2,256,8], index: 3, kind: output, shape index: {0}]
  %s4 = inlined_call_operand.vmem [shape: f32[2,256,8], index: 4, kind: output, shape index: {1}]
  %s5 = inlined_call_operand.vmem [shape: f32[2,256,8], index: 5, kind: output, shape index: {2}]
  %6 = xla_tuple %s3, %s4, %s5
  %s7 = sld [smem:[#allocation0]]
  $region61: #{glo_tkdown_block_pv.5} parent=0
    _
  %s9 = ssub.s32 1, %s7
  %s10 = scalar_select 0, %s9, %s7
  loop: start=0, step=1, limit=4
  $region2: #{glo_tkdown_block_pv.5} parent=0 // loop_pre_header
    _
  $region3: #{glo_tkdown_block_pv.5} parent=0 // loop_header
    %s12 = sphi 0, %s16
    %p13 = scmp.ge.s32.totalorder %s12, 4
    %s19 = sphi 0, %s31
    %s20 = sphi 0, %s27
    %s21 = sphi 0, %s19
    %s22 = sphi 0, %s20
    %s23 = sphi 0, %s21
    %s24 = sphi 0, %s22
    %s36 = sphi 0, %s38
    %s39 = sphi 0, %s36
    %s40 = sphi 0, %s39
    %s56 = sphi 0, %s40
    %s60 = sphi 0, %s60
    %s62 = sphi 0, %s60
    %s63 = sphi 0, %s62
    %s77 = sphi 0, %s63
    %s81 = sphi 0, %s81
    %s83 = sphi 0, %s81
    %s84 = sphi 0, %s83
    %s98 = sphi 0, %s84
    %s106 = sphi 0, %s108
    %s109 = sphi 0, %s106
    %s110 = sphi 0, %s109
    %s126 = sphi 0, %s110
    %s134 = sphi 0, %s136
    %s137 = sphi 0, %s134
    %s138 = sphi 0, %s137
    %s154 = sphi 0, %s138
    %s162 = sphi 0, %s164
    %s165 = sphi 0, %s162
    %s166 = sphi 0, %s165
    %s182 = sphi 0, %s166
  $region4: #{glo_tkdown_block_pv.5} parent=0 // loop_header_branch
    %15 = sbr.rel (%p13) target = $region8
  $region5: #{glo_tkdown_block_pv.5} parent=0 // loop_body
    %s17 = ssub.s32 %s12, 1
    %s18 = ssub.s32 %s12, 2
    %s25 = sadd.s32 1, %s20
    %p26 = scmp.ge.s32.totalorder %s25, 2
    %s27 = scalar_select %p26, 0, %s25
    %s28 = sadd.s32 1, %s19
    %s29 = scalar_select %p26, %s28, %s19
    %p30 = scmp.ge.s32.totalorder %s29, 1
    %s31 = scalar_select %p30, 0, %s29
    %s32 = ssub.s32 %s20, %s27
    %s33 = ssub.s32 %s19, %s31
    %s34 = sor.u32 %s32, %s33
    %p35 = scmp.eq.s32.totalorder %s34, 0
    %s37 = sadd.s32 %s36, 1
    %s38 = scalar_select %p35, %s36, %s37
    %p41 = pneg %p35
    %p42 = scmp.eq.s32.totalorder %s12, 1
    %p43 = por %p41, %p42
    %p44 = scmp.ne.s32.totalorder %s36, %s39
    %p45 = scmp.eq.s32.totalorder %s12, 0
    %p46 = por %p44, %p45
    %p47 = scmp.ne.s32.totalorder %s36, %s39
    %p48 = scmp.eq.s32.totalorder %s17, 1
    %p49 = por %p47, %p48
    %p50 = scmp.ne.s32.totalorder %s39, %s40
    %p51 = scmp.eq.s32.totalorder %s17, 0
    %p52 = por %p50, %p51
    %p53 = scmp.ne.s32.totalorder %s39, %s40
    %p54 = scmp.eq.s32.totalorder %s18, 1
    %p55 = por %p53, %p54
    %p57 = scmp.ne.s32.totalorder %s40, %s56
    %p58 = scmp.eq.s32.totalorder %s18, 0
    %p59 = por %p57, %p58
    %s61 = sadd.s32 %s60, 1
    %p64 = scmp.eq.s32.totalorder %s12, 1
    %p65 = scmp.ne.s32.totalorder %s60, %s62
    %p66 = scmp.eq.s32.totalorder %s12, 0
    %p67 = por %p65, %p66
    %p68 = scmp.ne.s32.totalorder %s60, %s62
    %p69 = scmp.eq.s32.totalorder %s17, 1
    %p70 = por %p68, %p69
    %p71 = scmp.ne.s32.totalorder %s62, %s63
    %p72 = scmp.eq.s32.totalorder %s17, 0
    %p73 = por %p71, %p72
    %p74 = scmp.ne.s32.totalorder %s62, %s63
    %p75 = scmp.eq.s32.totalorder %s18, 1
    %p76 = por %p74, %p75
    %p78 = scmp.ne.s32.totalorder %s63, %s77
    %p79 = scmp.eq.s32.totalorder %s18, 0
    %p80 = por %p78, %p79
    %s82 = sadd.s32 %s81, 1
    %p85 = scmp.eq.s32.totalorder %s12, 1
    %p86 = scmp.ne.s32.totalorder %s81, %s83
    %p87 = scmp.eq.s32.totalorder %s12, 0
    %p88 = por %p86, %p87
    %p89 = scmp.ne.s32.totalorder %s81, %s83
    %p90 = scmp.eq.s32.totalorder %s17, 1
    %p91 = por %p89, %p90
    %p92 = scmp.ne.s32.totalorder %s83, %s84
    %p93 = scmp.eq.s32.totalorder %s17, 0
    %p94 = por %p92, %p93
    %p95 = scmp.ne.s32.totalorder %s83, %s84
    %p96 = scmp.eq.s32.totalorder %s18, 1
    %p97 = por %p95, %p96
    %p99 = scmp.ne.s32.totalorder %s84, %s98
    %p100 = scmp.eq.s32.totalorder %s18, 0
    %p101 = por %p99, %p100
    %s102 = ssub.s32 %s20, %s27
    %s103 = ssub.s32 %s19, %s31
    %s104 = sor.u32 %s102, %s103
    %p105 = scmp.eq.s32.totalorder %s104, 0
    %s107 = sadd.s32 %s106, 1
    %s108 = scalar_select %p105, %s106, %s107
    %p111 = pneg %p105
    %p112 = scmp.eq.s32.totalorder %s12, 1
    %p113 = por %p111, %p112
    %p114 = scmp.ne.s32.totalorder %s106, %s109
    %p115 = scmp.eq.s32.totalorder %s12, 0
    %p116 = por %p114, %p115
    %p117 = scmp.ne.s32.totalorder %s106, %s109
    %p118 = scmp.eq.s32.totalorder %s17, 1
    %p119 = por %p117, %p118
    %p120 = scmp.ne.s32.totalorder %s109, %s110
    %p121 = scmp.eq.s32.totalorder %s17, 0
    %p122 = por %p120, %p121
    %p123 = scmp.ne.s32.totalorder %s109, %s110
    %p124 = scmp.eq.s32.totalorder %s18, 1
    %p125 = por %p123, %p124
    %p127 = scmp.ne.s32.totalorder %s110, %s126
    %p128 = scmp.eq.s32.totalorder %s18, 0
    %p129 = por %p127, %p128
    %s130 = ssub.s32 %s20, %s27
    %s131 = ssub.s32 %s19, %s31
    %s132 = sor.u32 %s130, %s131
    %p133 = scmp.eq.s32.totalorder %s132, 0
    %s135 = sadd.s32 %s134, 1
    %s136 = scalar_select %p133, %s134, %s135
    %p139 = pneg %p133
    %p140 = scmp.eq.s32.totalorder %s12, 1
    %p141 = por %p139, %p140
    %p142 = scmp.ne.s32.totalorder %s134, %s137
    %p143 = scmp.eq.s32.totalorder %s12, 0
    %p144 = por %p142, %p143
    %p145 = scmp.ne.s32.totalorder %s134, %s137
    %p146 = scmp.eq.s32.totalorder %s17, 1
    %p147 = por %p145, %p146
    %p148 = scmp.ne.s32.totalorder %s137, %s138
    %p149 = scmp.eq.s32.totalorder %s17, 0
    %p150 = por %p148, %p149
    %p151 = scmp.ne.s32.totalorder %s137, %s138
    %p152 = scmp.eq.s32.totalorder %s18, 1
    %p153 = por %p151, %p152
    %p155 = scmp.ne.s32.totalorder %s138, %s154
    %p156 = scmp.eq.s32.totalorder %s18, 0
    %p157 = por %p155, %p156
    %s158 = ssub.s32 %s20, %s27
    %s159 = ssub.s32 %s19, %s31
    %s160 = sor.u32 %s158, %s159
    %p161 = scmp.eq.s32.totalorder %s160, 0
    %s163 = sadd.s32 %s162, 1
    %s164 = scalar_select %p161, %s162, %s163
    %p167 = pneg %p161
    %p168 = scmp.eq.s32.totalorder %s12, 1
    %p169 = por %p167, %p168
    %p170 = scmp.ne.s32.totalorder %s162, %s165
    %p171 = scmp.eq.s32.totalorder %s12, 0
    %p172 = por %p170, %p171
    %p173 = scmp.ne.s32.totalorder %s162, %s165
    %p174 = scmp.eq.s32.totalorder %s17, 1
    %p175 = por %p173, %p174
    %p176 = scmp.ne.s32.totalorder %s165, %s166
    %p177 = scmp.eq.s32.totalorder %s17, 0
    %p178 = por %p176, %p177
    %p179 = scmp.ne.s32.totalorder %s165, %s166
    %p180 = scmp.eq.s32.totalorder %s18, 1
    %p181 = por %p179, %p180
    %p183 = scmp.ne.s32.totalorder %s166, %s182
    %p184 = scmp.eq.s32.totalorder %s18, 0
    %p185 = por %p183, %p184
    %p186 = scmp.le.s32.totalorder 1, %s12
    %p187 = scmp.lt.s32.totalorder %s12, 3
    %p188 = pnand %p186, %p187
    %p189 = pneg %p188
    // Predicated region
    $region9: #{glo_tkdown_block_pv.5} parent=5 // pred_check
      _
    $region10: #{glo_tkdown_block_pv.5} parent=5 // pred_check_branch
      %191 = sbr.rel (%p188) target = $region12
    $region11: #{glo_tkdown_block_pv.5} parent=5 // pred_region
      %s192 = ssub.s32 %s12, 1
      // Predicated region
      $region13: #{glo_tkdown_block_pv.5} parent=11 // pred_check
        %p193 = pneg %p73
      $region14: #{glo_tkdown_block_pv.5} parent=11 // pred_check_branch
        %195 = sbr.rel (%p193) target = $region16
      $region15: #{glo_tkdown_block_pv.5} parent=11 // pred_region
        _
      $region16: #{glo_tkdown_block_pv.5} parent=11 // pred_fallthru
        _
      // Predicated region
      $region17: #{glo_tkdown_block_pv.5} parent=11 // pred_check
        %p196 = pneg %p94
      $region18: #{glo_tkdown_block_pv.5} parent=11 // pred_check_branch
        %198 = sbr.rel (%p196) target = $region20
      $region19: #{glo_tkdown_block_pv.5} parent=11 // pred_region
        _
      $region20: #{glo_tkdown_block_pv.5} parent=11 // pred_fallthru
        _
    $region12: #{glo_tkdown_block_pv.5} parent=5 // pred_fallthru
      _
    %p199 = scmp.lt.s32.totalorder %s12, 2
    // Predicated region
    $region21: #{glo_tkdown_block_pv.5} parent=5 // pred_check
      %p200 = pneg %p199
    $region22: #{glo_tkdown_block_pv.5} parent=5 // pred_check_branch
      %202 = sbr.rel (%p200) target = $region24
    $region23: #{glo_tkdown_block_pv.5} parent=5 // pred_region
      // Predicated region
      $region25: #{glo_tkdown_block_pv.5} parent=23 // pred_check
        %p203 = pneg %p46
      $region26: #{glo_tkdown_block_pv.5} parent=23 // pred_check_branch
        %205 = sbr.rel (%p203) target = $region28
      $region27: #{glo_tkdown_block_pv.5} parent=23 // pred_region
        %s206 = smul.u32 32, %s19
        %p207 = scmp.lt.s32.totalorder %s20, 1
        %s208 = scalar_select %p207, %s20, 1
        %p209 = scmp.lt.s32.totalorder %s206, 31
        %s210 = scalar_select %p209, %s206, 31
        %s211 = smul.addr %s208, 32
        %s212 = sadd.s32 %s210, %s211
        %s213 = smul.addr %s212, 4
        %s214 = scalar_lea.vmem %s0, %s213
        %s215 = smul.u32 32, %s19
      $region28: #{glo_tkdown_block_pv.5} parent=23 // pred_fallthru
        _
    $region24: #{glo_tkdown_block_pv.5} parent=5 // pred_fallthru
      _
    %p216 = scmp.le.s32.totalorder 1, %s12
    %p217 = scmp.lt.s32.totalorder %s12, 3
    %p218 = pnand %p216, %p217
    %p219 = pneg %p218
    // Predicated region
    $region29: #{glo_tkdown_block_pv.5} parent=5 // pred_check
      _
    $region30: #{glo_tkdown_block_pv.5} parent=5 // pred_check_branch
      %221 = sbr.rel (%p218) target = $region32
    $region31: #{glo_tkdown_block_pv.5} parent=5 // pred_region
      %s222 = ssub.s32 %s12, 1
      %s223 = smul.u32 32, %s21
      %p224 = scmp.lt.s32.totalorder %s22, 1
      %s225 = scalar_select %p224, %s22, 1
      %p226 = scmp.lt.s32.totalorder %s223, 31
      %s227 = scalar_select %p226, %s223, 31
      %s228 = smul.addr %s225, 32
      %s229 = sadd.s32 %s227, %s228
      %s230 = smul.addr %s229, 4
      %s231 = scalar_lea.vmem %s0, %s230
      %p232 = pneg %p52
      %p233 = pneg %p49
      %p234 = pneg %p73
      %p235 = pneg %p70
      %p236 = pneg %p94
      %p237 = pneg %p91
      %p238 = pneg %p122
      %p239 = pneg %p119
      %s240 = smul.u32 32, %s21
      %p241 = scmp.lt.s32.totalorder %s22, 1
      %s242 = scalar_select %p241, %s22, 1
      %p243 = scmp.lt.s32.totalorder %s240, 31
      %s244 = scalar_select %p243, %s240, 31
      %s245 = smul.addr %s242, 32
      %s246 = sadd.s32 %s244, %s245
      %s247 = smul.addr %s246, 4
      %s248 = scalar_lea.vmem %s3, %s247
      %p249 = pneg %p150
      %p250 = pneg %p147
      %s251 = smul.u32 32, %s21
      %p252 = scmp.lt.s32.totalorder %s22, 1
      %s253 = scalar_select %p252, %s22, 1
      %p254 = scmp.lt.s32.totalorder %s251, 31
      %s255 = scalar_select %p254, %s251, 31
      %s256 = smul.addr %s253, 32
      %s257 = sadd.s32 %s255, %s256
      %s258 = smul.addr %s257, 8
      %s259 = scalar_lea.vmem %s4, %s258
      %p260 = pneg %p178
      %p261 = pneg %p175
      %s262 = smul.u32 32, %s21
      %p263 = scmp.lt.s32.totalorder %s22, 1
      %s264 = scalar_select %p263, %s22, 1
      %p265 = scmp.lt.s32.totalorder %s262, 31
      %s266 = scalar_select %p265, %s262, 31
      %s267 = smul.addr %s264, 32
      %s268 = sadd.s32 %s266, %s267
      %s269 = smul.addr %s268, 8
      %s270 = scalar_lea.vmem %s5, %s269
      %s271 = smul.u32 32, %s21
      %p272 = scmp.lt.s32.totalorder %s22, 1
      %s273 = scalar_select %p272, %s22, 1
      %p274 = scmp.lt.s32.totalorder %s271, 31
      %s275 = scalar_select %p274, %s271, 31
      %s276 = smul.addr %s273, 32
      %s277 = sadd.s32 %s275, %s276
      %s278 = smul.addr %s277, 4
      %s279 = scalar_lea.vmem %s0, %s278
      %s280 = smul.u32 32, %s21
      %s281 = smul.u32 32, %s21
      %p282 = scmp.lt.s32.totalorder %s22, 1
      %s283 = scalar_select %p282, %s22, 1
      %p284 = scmp.lt.s32.totalorder %s281, 31
      %s285 = scalar_select %p284, %s281, 31
      %s286 = smul.addr %s283, 32
      %s287 = sadd.s32 %s285, %s286
      %s288 = smul.addr %s287, 4
      %s289 = scalar_lea.vmem %s3, %s288
      %s290 = smul.u32 32, %s21
      %s291 = smul.u32 32, %s21
      %p292 = scmp.lt.s32.totalorder %s22, 1
      %s293 = scalar_select %p292, %s22, 1
      %p294 = scmp.lt.s32.totalorder %s291, 31
      %s295 = scalar_select %p294, %s291, 31
      %s296 = smul.addr %s293, 32
      %s297 = sadd.s32 %s295, %s296
      %s298 = smul.addr %s297, 8
      %s299 = scalar_lea.vmem %s4, %s298
      %s300 = smul.u32 32, %s21
      %s301 = smul.u32 32, %s21
      %p302 = scmp.lt.s32.totalorder %s22, 1
      %s303 = scalar_select %p302, %s22, 1
      %p304 = scmp.lt.s32.totalorder %s301, 31
      %s305 = scalar_select %p304, %s301, 31
      %s306 = smul.addr %s303, 32
      %s307 = sadd.s32 %s305, %s306
      %s308 = smul.addr %s307, 8
      %s309 = scalar_lea.vmem %s5, %s308
      %s310 = smul.u32 32, %s21
      %v312 = vld [vmem:[%s279] sm:$0xf]
      %v313 = vld [vmem:[%s279 + $0x4] sm:$0xf]
      %v314 = vld [vmem:[%s279 + $0x8] sm:$0xf]
      %v315 = vld [vmem:[%s279 + $0xc] sm:$0xf]
      %v316 = vld [vmem:[%s279 + $0x10] sm:$0xf]
      %v317 = vld [vmem:[%s279 + $0x14] sm:$0xf]
      %v318 = vld [vmem:[%s279 + $0x18] sm:$0xf]
      %v319 = vld [vmem:[%s279 + $0x1c] sm:$0xf]
      %v320 = vld [vmem:[%s279 + $0x20] sm:$0xf]
      %v321 = vld [vmem:[%s279 + $0x24] sm:$0xf]
      %v322 = vld [vmem:[%s279 + $0x28] sm:$0xf]
      %v323 = vld [vmem:[%s279 + $0x2c] sm:$0xf]
      %v324 = vld [vmem:[%s279 + $0x30] sm:$0xf]
      %v325 = vld [vmem:[%s279 + $0x34] sm:$0xf]
      %v326 = vld [vmem:[%s279 + $0x38] sm:$0xf]
      %v327 = vld [vmem:[%s279 + $0x3c] sm:$0xf]
      %v328 = vld [vmem:[%s279 + $0x40] sm:$0xf]
      %v329 = vld [vmem:[%s279 + $0x44] sm:$0xf]
      %v330 = vld [vmem:[%s279 + $0x48] sm:$0xf]
      %v331 = vld [vmem:[%s279 + $0x4c] sm:$0xf]
      %v332 = vld [vmem:[%s279 + $0x50] sm:$0xf]
      %v333 = vld [vmem:[%s279 + $0x54] sm:$0xf]
      %v334 = vld [vmem:[%s279 + $0x58] sm:$0xf]
      %v335 = vld [vmem:[%s279 + $0x5c] sm:$0xf]
      %v336 = vld [vmem:[%s279 + $0x60] sm:$0xf]
      %v337 = vld [vmem:[%s279 + $0x64] sm:$0xf]
      %v338 = vld [vmem:[%s279 + $0x68] sm:$0xf]
      %v339 = vld [vmem:[%s279 + $0x6c] sm:$0xf]
      %v340 = vld [vmem:[%s279 + $0x70] sm:$0xf]
      %v341 = vld [vmem:[%s279 + $0x74] sm:$0xf]
      %v342 = vld [vmem:[%s279 + $0x78] sm:$0xf]
      %v343 = vld [vmem:[%s279 + $0x7c] sm:$0xf]
      %v344 = vld [vmem:[%s1] sm:$0xf]
      %v345 = vld [vmem:[%s2] sm:$0x1]
      %v347 = vlaneseq
      %v348 = vshrl.u32 %v347, 7
      %v349 = vsub.s32 0, %v348
      %v350 = vrot.slane %v345, %v349
      %v384 = vunpack.c.l.b16 %v312
      %v385 = vunpack.c.l.b16 %v313
      %v386 = vunpack.c.l.b16 %v314
      %v387 = vunpack.c.l.b16 %v315
      %v388 = vunpack.c.l.b16 %v316
      %v389 = vunpack.c.l.b16 %v317
      %v390 = vunpack.c.l.b16 %v318
      %v391 = vunpack.c.l.b16 %v319
      %v392 = vunpack.c.l.b16 %v320
      %v393 = vunpack.c.l.b16 %v321
      %v394 = vunpack.c.l.b16 %v322
      %v395 = vunpack.c.l.b16 %v323
      %v396 = vunpack.c.l.b16 %v324
      %v397 = vunpack.c.l.b16 %v325
      %v398 = vunpack.c.l.b16 %v326
      %v399 = vunpack.c.l.b16 %v327
      %v400 = vunpack.c.l.b16 %v328
      %v401 = vunpack.c.l.b16 %v329
      %v402 = vunpack.c.l.b16 %v330
      %v403 = vunpack.c.l.b16 %v331
      %v404 = vunpack.c.l.b16 %v332
      %v405 = vunpack.c.l.b16 %v333
      %v406 = vunpack.c.l.b16 %v334
      %v407 = vunpack.c.l.b16 %v335
      %v408 = vunpack.c.l.b16 %v336
      %v409 = vunpack.c.l.b16 %v337
      %v410 = vunpack.c.l.b16 %v338
      %v411 = vunpack.c.l.b16 %v339
      %v412 = vunpack.c.l.b16 %v340
      %v413 = vunpack.c.l.b16 %v341
      %v414 = vunpack.c.l.b16 %v342
      %v415 = vunpack.c.l.b16 %v343
      %v416 = vpack.c.b16 %v385, %v384
      %v417 = vpack.c.b16 %v387, %v386
      %v418 = vpack.c.b16 %v389, %v388
      %v419 = vpack.c.b16 %v391, %v390
      %v420 = vpack.c.b16 %v393, %v392
      %v421 = vpack.c.b16 %v395, %v394
      %v422 = vpack.c.b16 %v397, %v396
      %v423 = vpack.c.b16 %v399, %v398
      %v424 = vpack.c.b16 %v401, %v400
      %v425 = vpack.c.b16 %v403, %v402
      %v426 = vpack.c.b16 %v405, %v404
      %v427 = vpack.c.b16 %v407, %v406
      %v428 = vpack.c.b16 %v409, %v408
      %v429 = vpack.c.b16 %v411, %v410
      %v430 = vpack.c.b16 %v413, %v412
      %v431 = vpack.c.b16 %v415, %v414
      %vm432 = vcmask 64512
      %v434 = vsel %vm432, %v416, 0
      %v437 = vsel %vm432, %v417, 0
      %v440 = vsel %vm432, %v418, 0
      %v443 = vsel %vm432, %v419, 0
      %v446 = vsel %vm432, %v420, 0
      %v449 = vsel %vm432, %v421, 0
      %v452 = vsel %vm432, %v422, 0
      %v455 = vsel %vm432, %v423, 0
      %v458 = vsel %vm432, %v424, 0
      %v461 = vsel %vm432, %v425, 0
      %v464 = vsel %vm432, %v426, 0
      %v467 = vsel %vm432, %v427, 0
      %v470 = vsel %vm432, %v428, 0
      %v473 = vsel %vm432, %v429, 0
      %v476 = vsel %vm432, %v430, 0
      %v479 = vsel %vm432, %v431, 0
      %vm481 = vcmask 1043456
      %v483 = vsel %vm481, %v344, 0
      %485 = vmatprep.subr.bf16.mxu0 0
      %486 = vmatpush1.bf16.msra.mxu0 %v483
      %487 = vmatprep.subr.bf16.mxu0 0
      %488 = vmatpush1.bf16.msra.mxu0 0
      %489 = vmatprep.subr.bf16.mxu0 0
      %490 = vmatpush1.bf16.msra.mxu0 0
      %491 = vmatprep.subr.bf16.mxu0 0
      %492 = vmatpush1.bf16.msra.mxu0 0
      %493 = vmatprep.subr.bf16.mxu0 0
      %494 = vmatpush1.bf16.msra.mxu0 0
      %495 = vmatprep.subr.bf16.mxu0 0
      %496 = vmatpush1.bf16.msra.mxu0 0
      %497 = vmatprep.subr.bf16.mxu0 0
      %498 = vmatpush1.bf16.msra.mxu0 0
      %499 = vmatprep.subr.bf16.mxu0 0
      %500 = vmatpush1.bf16.msra.mxu0 0
      %501 = vmatprep.subr.bf16.mxu0 0
      %502 = vmatpush1.bf16.msra.mxu0 0
      %503 = vmatprep.subr.bf16.mxu0 0
      %504 = vmatpush1.bf16.msra.mxu0 0
      %505 = vmatprep.subr.bf16.mxu0 0
      %506 = vmatpush1.bf16.msra.mxu0 0
      %507 = vmatprep.subr.bf16.mxu0 0
      %508 = vmatpush1.bf16.msra.mxu0 0
      %509 = vmatprep.subr.bf16.mxu0 0
      %510 = vmatpush1.bf16.msra.mxu0 0
      %511 = vmatprep.subr.bf16.mxu0 0
      %512 = vmatpush1.bf16.msra.mxu0 0
      %513 = vmatprep.subr.bf16.mxu0 0
      %514 = vmatpush1.bf16.msra.mxu0 0
      %515 = vmatprep.subr.bf16.mxu0 0
      %516 = vmatpush1.bf16.msra.mxu0 0
      %517 = vmatprep.mubr.bf16.mxu0 0
      %518 = vmatmul.mubr.bf16.gmra.mrb[0].mxu0 %v434
      %v519 = vpop.f32.mrb[0].mxu0
      %v520 = vadd.f32 %v350, %v519
      %v521 = vpop.f32.mrb[0].mxu0
      %v522 = vpop.f32.mrb[0].mxu0
      %v523 = vadd.f32 %v350, %v522
      %v524 = vpop.f32.mrb[0].mxu0
      %525 = vmatprep.mubr.bf16.mxu0 0
      %526 = vmatmul.mubr.bf16.gmra.mrb[0].mxu0 %v437
      %v527 = vpop.f32.mrb[0].mxu0
      %v528 = vadd.f32 %v350, %v527
      %v529 = vpop.f32.mrb[0].mxu0
      %v530 = vpop.f32.mrb[0].mxu0
      %v531 = vadd.f32 %v350, %v530
      %v532 = vpop.f32.mrb[0].mxu0
      %533 = vmatprep.mubr.bf16.mxu0 0
      %534 = vmatmul.mubr.bf16.gmra.mrb[0].mxu0 %v440
      %v535 = vpop.f32.mrb[0].mxu0
      %v536 = vadd.f32 %v350, %v535
      %v537 = vpop.f32.mrb[0].mxu0
      %v538 = vpop.f32.mrb[0].mxu0
      %v539 = vadd.f32 %v350, %v538
      %v540 = vpop.f32.mrb[0].mxu0
      %541 = vmatprep.mubr.bf16.mxu0 0
      %542 = vmatmul.mubr.bf16.gmra.mrb[0].mxu0 %v443
      %v543 = vpop.f32.mrb[0].mxu0
      %v544 = vadd.f32 %v350, %v543
      %v545 = vpop.f32.mrb[0].mxu0
      %v546 = vpop.f32.mrb[0].mxu0
      %v547 = vadd.f32 %v350, %v546
      %v548 = vpop.f32.mrb[0].mxu0
      %549 = vmatprep.mubr.bf16.mxu0 0
      %550 = vmatmul.mubr.bf16.gmra.mrb[0].mxu0 %v446
      %v551 = vpop.f32.mrb[0].mxu0
      %v552 = vadd.f32 %v350, %v551
      %v553 = vpop.f32.mrb[0].mxu0
      %v554 = vpop.f32.mrb[0].mxu0
      %v555 = vadd.f32 %v350, %v554
      %v556 = vpop.f32.mrb[0].mxu0
      %557 = vmatprep.mubr.bf16.mxu0 0
      %558 = vmatmul.mubr.bf16.gmra.mrb[0].mxu0 %v449
      %v559 = vpop.f32.mrb[0].mxu0
      %v560 = vadd.f32 %v350, %v559
      %v561 = vpop.f32.mrb[0].mxu0
      %v562 = vpop.f32.mrb[0].mxu0
      %v563 = vadd.f32 %v350, %v562
      %v564 = vpop.f32.mrb[0].mxu0
      %565 = vmatprep.mubr.bf16.mxu0 0
      %566 = vmatmul.mubr.bf16.gmra.mrb[0].mxu0 %v452
      %v567 = vpop.f32.mrb[0].mxu0
      %v568 = vadd.f32 %v350, %v567
      %v569 = vpop.f32.mrb[0].mxu0
      %v570 = vpop.f32.mrb[0].mxu0
      %v571 = vadd.f32 %v350, %v570
      %v572 = vpop.f32.mrb[0].mxu0
      %573 = vmatprep.mubr.bf16.mxu0 0
      %574 = vmatmul.mubr.bf16.gmra.mrb[0].mxu0 %v455
      %v575 = vpop.f32.mrb[0].mxu0
      %v576 = vadd.f32 %v350, %v575
      %v577 = vpop.f32.mrb[0].mxu0
      %v578 = vpop.f32.mrb[0].mxu0
      %v579 = vadd.f32 %v350, %v578
      %v580 = vpop.f32.mrb[0].mxu0
      %581 = vmatprep.mubr.bf16.mxu0 0
      %582 = vmatmul.mubr.bf16.gmra.mrb[0].mxu0 %v458
      %v583 = vpop.f32.mrb[0].mxu0
      %v584 = vadd.f32 %v350, %v583
      %v585 = vpop.f32.mrb[0].mxu0
      %v586 = vpop.f32.mrb[0].mxu0
      %v587 = vadd.f32 %v350, %v586
      %v588 = vpop.f32.mrb[0].mxu0
      %589 = vmatprep.mubr.bf16.mxu0 0
      %590 = vmatmul.mubr.bf16.gmra.mrb[0].mxu0 %v461
      %v591 = vpop.f32.mrb[0].mxu0
      %v592 = vadd.f32 %v350, %v591
      %v593 = vpop.f32.mrb[0].mxu0
      %v594 = vpop.f32.mrb[0].mxu0
      %v595 = vadd.f32 %v350, %v594
      %v596 = vpop.f32.mrb[0].mxu0
      %597 = vmatprep.mubr.bf16.mxu0 0
      %598 = vmatmul.mubr.bf16.gmra.mrb[0].mxu0 %v464
      %v599 = vpop.f32.mrb[0].mxu0
      %v600 = vadd.f32 %v350, %v599
      %v601 = vpop.f32.mrb[0].mxu0
      %v602 = vpop.f32.mrb[0].mxu0
      %v603 = vadd.f32 %v350, %v602
      %v604 = vpop.f32.mrb[0].mxu0
      %605 = vmatprep.mubr.bf16.mxu0 0
      %606 = vmatmul.mubr.bf16.gmra.mrb[0].mxu0 %v467
      %v607 = vpop.f32.mrb[0].mxu0
      %v608 = vadd.f32 %v350, %v607
      %v609 = vpop.f32.mrb[0].mxu0
      %v610 = vpop.f32.mrb[0].mxu0
      %v611 = vadd.f32 %v350, %v610
      %v612 = vpop.f32.mrb[0].mxu0
      %613 = vmatprep.mubr.bf16.mxu0 0
      %614 = vmatmul.mubr.bf16.gmra.mrb[0].mxu0 %v470
      %v615 = vpop.f32.mrb[0].mxu0
      %v616 = vadd.f32 %v350, %v615
      %v617 = vpop.f32.mrb[0].mxu0
      %v618 = vpop.f32.mrb[0].mxu0
      %v619 = vadd.f32 %v350, %v618
      %v620 = vpop.f32.mrb[0].mxu0
      %621 = vmatprep.mubr.bf16.mxu0 0
      %622 = vmatmul.mubr.bf16.gmra.mrb[0].mxu0 %v473
      %v623 = vpop.f32.mrb[0].mxu0
      %v624 = vadd.f32 %v350, %v623
      %v625 = vpop.f32.mrb[0].mxu0
      %v626 = vpop.f32.mrb[0].mxu0
      %v627 = vadd.f32 %v350, %v626
      %v628 = vpop.f32.mrb[0].mxu0
      %629 = vmatprep.mubr.bf16.mxu0 0
      %630 = vmatmul.mubr.bf16.gmra.mrb[0].mxu0 %v476
      %v631 = vpop.f32.mrb[0].mxu0
      %v632 = vadd.f32 %v350, %v631
      %v633 = vpop.f32.mrb[0].mxu0
      %v634 = vpop.f32.mrb[0].mxu0
      %v635 = vadd.f32 %v350, %v634
      %v636 = vpop.f32.mrb[0].mxu0
      %637 = vmatprep.mubr.bf16.mxu0 0
      %638 = vmatmul.mubr.bf16.gmra.mrb[0].mxu0 %v479
      %v639 = vpop.f32.mrb[0].mxu0
      %v640 = vadd.f32 %v350, %v639
      %v641 = vpop.f32.mrb[0].mxu0
      %v642 = vpop.f32.mrb[0].mxu0
      %v643 = vadd.f32 %v350, %v642
      %v644 = vpop.f32.mrb[0].mxu0
      %645 = vdwg.mxu0
      %v646 = vpack.c.bf16 %v523, %v520
      %v647 = vpack.c.bf16 %v531, %v528
      %v648 = vpack.c.bf16 %v539, %v536
      %v649 = vpack.c.bf16 %v547, %v544
      %v650 = vpack.c.bf16 %v555, %v552
      %v651 = vpack.c.bf16 %v563, %v560
      %v652 = vpack.c.bf16 %v571, %v568
      %v653 = vpack.c.bf16 %v579, %v576
      %v654 = vpack.c.bf16 %v587, %v584
      %v655 = vpack.c.bf16 %v595, %v592
      %v656 = vpack.c.bf16 %v603, %v600
      %v657 = vpack.c.bf16 %v611, %v608
      %v658 = vpack.c.bf16 %v619, %v616
      %v659 = vpack.c.bf16 %v627, %v624
      %v660 = vpack.c.bf16 %v635, %v632
      %v661 = vpack.c.bf16 %v643, %v640
      %v678 = vunpack.c.l.b16 %v646
      %v679 = vunpack.c.h.b16 %v646
      %v680 = vunpack.c.l.b16 %v647
      %v681 = vunpack.c.h.b16 %v647
      %v682 = vunpack.c.l.b16 %v648
      %v683 = vunpack.c.h.b16 %v648
      %v684 = vunpack.c.l.b16 %v649
      %v685 = vunpack.c.h.b16 %v649
      %v686 = vunpack.c.l.b16 %v650
      %v687 = vunpack.c.h.b16 %v650
      %v688 = vunpack.c.l.b16 %v651
      %v689 = vunpack.c.h.b16 %v651
      %v690 = vunpack.c.l.b16 %v652
      %v691 = vunpack.c.h.b16 %v652
      %v692 = vunpack.c.l.b16 %v653
      %v693 = vunpack.c.h.b16 %v653
      %v694 = vunpack.c.l.b16 %v654
      %v695 = vunpack.c.h.b16 %v654
      %v696 = vunpack.c.l.b16 %v655
      %v697 = vunpack.c.h.b16 %v655
      %v698 = vunpack.c.l.b16 %v656
      %v699 = vunpack.c.h.b16 %v656
      %v700 = vunpack.c.l.b16 %v657
      %v701 = vunpack.c.h.b16 %v657
      %v702 = vunpack.c.l.b16 %v658
      %v703 = vunpack.c.h.b16 %v658
      %v704 = vunpack.c.l.b16 %v659
      %v705 = vunpack.c.h.b16 %v659
      %v706 = vunpack.c.l.b16 %v660
      %v707 = vunpack.c.h.b16 %v660
      %v708 = vunpack.c.l.b16 %v661
      %v709 = vunpack.c.h.b16 %v661
      %v710 = vpack.c.b16 %v678, %v678
      %v711 = vpack.c.b16 %v679, %v679
      %v712 = vpack.c.b16 %v680, %v680
      %v713 = vpack.c.b16 %v681, %v681
      %v714 = vpack.c.b16 %v682, %v682
      %v715 = vpack.c.b16 %v683, %v683
      %v716 = vpack.c.b16 %v684, %v684
      %v717 = vpack.c.b16 %v685, %v685
      %v718 = vpack.c.b16 %v686, %v686
      %v719 = vpack.c.b16 %v687, %v687
      %v720 = vpack.c.b16 %v688, %v688
      %v721 = vpack.c.b16 %v689, %v689
      %v722 = vpack.c.b16 %v690, %v690
      %v723 = vpack.c.b16 %v691, %v691
      %v724 = vpack.c.b16 %v692, %v692
      %v725 = vpack.c.b16 %v693, %v693
      %v726 = vpack.c.b16 %v694, %v694
      %v727 = vpack.c.b16 %v695, %v695
      %v728 = vpack.c.b16 %v696, %v696
      %v729 = vpack.c.b16 %v697, %v697
      %v730 = vpack.c.b16 %v698, %v698
      %v731 = vpack.c.b16 %v699, %v699
      %v732 = vpack.c.b16 %v700, %v700
      %v733 = vpack.c.b16 %v701, %v701
      %v734 = vpack.c.b16 %v702, %v702
      %v735 = vpack.c.b16 %v703, %v703
      %v736 = vpack.c.b16 %v704, %v704
      %v737 = vpack.c.b16 %v705, %v705
      %v738 = vpack.c.b16 %v706, %v706
      %v739 = vpack.c.b16 %v707, %v707
      %v740 = vpack.c.b16 %v708, %v708
      %v741 = vpack.c.b16 %v709, %v709
      %vm774 = vcmask 60416
      %775 = vst.msk [vmem:[%s289] sm:$0xf] %vm774, %v710
      %776 = vst.msk [vmem:[%s289 + $0x4] sm:$0xf] %vm774, %v711
      %777 = vst.msk [vmem:[%s289 + $0x8] sm:$0xf] %vm774, %v712
      %778 = vst.msk [vmem:[%s289 + $0xc] sm:$0xf] %vm774, %v713
      %779 = vst.msk [vmem:[%s289 + $0x10] sm:$0xf] %vm774, %v714
      %780 = vst.msk [vmem:[%s289 + $0x14] sm:$0xf] %vm774, %v715
      %781 = vst.msk [vmem:[%s289 + $0x18] sm:$0xf] %vm774, %v716
      %782 = vst.msk [vmem:[%s289 + $0x1c] sm:$0xf] %vm774, %v717
      %783 = vst.msk [vmem:[%s289 + $0x20] sm:$0xf] %vm774, %v718
      %784 = vst.msk [vmem:[%s289 + $0x24] sm:$0xf] %vm774, %v719
      %785 = vst.msk [vmem:[%s289 + $0x28] sm:$0xf] %vm774, %v720
      %786 = vst.msk [vmem:[%s289 + $0x2c] sm:$0xf] %vm774, %v721
      %787 = vst.msk [vmem:[%s289 + $0x30] sm:$0xf] %vm774, %v722
      %788 = vst.msk [vmem:[%s289 + $0x34] sm:$0xf] %vm774, %v723
      %789 = vst.msk [vmem:[%s289 + $0x38] sm:$0xf] %vm774, %v724
      %790 = vst.msk [vmem:[%s289 + $0x3c] sm:$0xf] %vm774, %v725
      %791 = vst.msk [vmem:[%s289 + $0x40] sm:$0xf] %vm774, %v726
      %792 = vst.msk [vmem:[%s289 + $0x44] sm:$0xf] %vm774, %v727
      %793 = vst.msk [vmem:[%s289 + $0x48] sm:$0xf] %vm774, %v728
      %794 = vst.msk [vmem:[%s289 + $0x4c] sm:$0xf] %vm774, %v729
      %795 = vst.msk [vmem:[%s289 + $0x50] sm:$0xf] %vm774, %v730
      %796 = vst.msk [vmem:[%s289 + $0x54] sm:$0xf] %vm774, %v731
      %797 = vst.msk [vmem:[%s289 + $0x58] sm:$0xf] %vm774, %v732
      %798 = vst.msk [vmem:[%s289 + $0x5c] sm:$0xf] %vm774, %v733
      %799 = vst.msk [vmem:[%s289 + $0x60] sm:$0xf] %vm774, %v734
      %800 = vst.msk [vmem:[%s289 + $0x64] sm:$0xf] %vm774, %v735
      %801 = vst.msk [vmem:[%s289 + $0x68] sm:$0xf] %vm774, %v736
      %802 = vst.msk [vmem:[%s289 + $0x6c] sm:$0xf] %vm774, %v737
      %803 = vst.msk [vmem:[%s289 + $0x70] sm:$0xf] %vm774, %v738
      %804 = vst.msk [vmem:[%s289 + $0x74] sm:$0xf] %vm774, %v739
      %805 = vst.msk [vmem:[%s289 + $0x78] sm:$0xf] %vm774, %v740
      %806 = vst.msk [vmem:[%s289 + $0x7c] sm:$0xf] %vm774, %v741
      %839 = vrot.lane.b32.xlu0 %v520, 120
      %v840 = vpop.permute.xlu0 %839
      %841 = vrot.lane.b32.xlu0 %v523, 120
      %v842 = vpop.permute.xlu0 %841
      %843 = vrot.lane.b32.xlu0 %v528, 120
      %v844 = vpop.permute.xlu0 %843
      %845 = vrot.lane.b32.xlu0 %v531, 120
      %v846 = vpop.permute.xlu0 %845
      %847 = vrot.lane.b32.xlu0 %v536, 120
      %v848 = vpop.permute.xlu0 %847
      %849 = vrot.lane.b32.xlu0 %v539, 120
      %v850 = vpop.permute.xlu0 %849
      %851 = vrot.lane.b32.xlu0 %v544, 120
      %v852 = vpop.permute.xlu0 %851
      %853 = vrot.lane.b32.xlu0 %v547, 120
      %v854 = vpop.permute.xlu0 %853
      %855 = vrot.lane.b32.xlu0 %v552, 120
      %v856 = vpop.permute.xlu0 %855
      %857 = vrot.lane.b32.xlu0 %v555, 120
      %v858 = vpop.permute.xlu0 %857
      %859 = vrot.lane.b32.xlu0 %v560, 120
      %v860 = vpop.permute.xlu0 %859
      %861 = vrot.lane.b32.xlu0 %v563, 120
      %v862 = vpop.permute.xlu0 %861
      %863 = vrot.lane.b32.xlu0 %v568, 120
      %v864 = vpop.permute.xlu0 %863
      %865 = vrot.lane.b32.xlu0 %v571, 120
      %v866 = vpop.permute.xlu0 %865
      %867 = vrot.lane.b32.xlu0 %v576, 120
      %v868 = vpop.permute.xlu0 %867
      %869 = vrot.lane.b32.xlu0 %v579, 120
      %v870 = vpop.permute.xlu0 %869
      %871 = vrot.lane.b32.xlu0 %v584, 120
      %v872 = vpop.permute.xlu0 %871
      %873 = vrot.lane.b32.xlu0 %v587, 120
      %v874 = vpop.permute.xlu0 %873
      %875 = vrot.lane.b32.xlu0 %v592, 120
      %v876 = vpop.permute.xlu0 %875
      %877 = vrot.lane.b32.xlu0 %v595, 120
      %v878 = vpop.permute.xlu0 %877
      %879 = vrot.lane.b32.xlu0 %v600, 120
      %v880 = vpop.permute.xlu0 %879
      %881 = vrot.lane.b32.xlu0 %v603, 120
      %v882 = vpop.permute.xlu0 %881
      %883 = vrot.lane.b32.xlu0 %v608, 120
      %v884 = vpop.permute.xlu0 %883
      %885 = vrot.lane.b32.xlu0 %v611, 120
      %v886 = vpop.permute.xlu0 %885
      %887 = vrot.lane.b32.xlu0 %v616, 120
      %v888 = vpop.permute.xlu0 %887
      %889 = vrot.lane.b32.xlu0 %v619, 120
      %v890 = vpop.permute.xlu0 %889
      %891 = vrot.lane.b32.xlu0 %v624, 120
      %v892 = vpop.permute.xlu0 %891
      %893 = vrot.lane.b32.xlu0 %v627, 120
      %v894 = vpop.permute.xlu0 %893
      %895 = vrot.lane.b32.xlu0 %v632, 120
      %v896 = vpop.permute.xlu0 %895
      %897 = vrot.lane.b32.xlu0 %v635, 120
      %v898 = vpop.permute.xlu0 %897
      %899 = vrot.lane.b32.xlu0 %v640, 120
      %v900 = vpop.permute.xlu0 %899
      %901 = vrot.lane.b32.xlu0 %v643, 120
      %v902 = vpop.permute.xlu0 %901
      %935 = vst.msk [vmem:[%s299] sm:$0xff] %vm432, %v840
      %936 = vst.msk [vmem:[%s299 + $0x8] sm:$0xff] %vm432, %v842
      %937 = vst.msk [vmem:[%s299 + $0x10] sm:$0xff] %vm432, %v844
      %938 = vst.msk [vmem:[%s299 + $0x18] sm:$0xff] %vm432, %v846
      %939 = vst.msk [vmem:[%s299 + $0x20] sm:$0xff] %vm432, %v848
      %940 = vst.msk [vmem:[%s299 + $0x28] sm:$0xff] %vm432, %v850
      %941 = vst.msk [vmem:[%s299 + $0x30] sm:$0xff] %vm432, %v852
      %942 = vst.msk [vmem:[%s299 + $0x38] sm:$0xff] %vm432, %v854
      %943 = vst.msk [vmem:[%s299 + $0x40] sm:$0xff] %vm432, %v856
      %944 = vst.msk [vmem:[%s299 + $0x48] sm:$0xff] %vm432, %v858
      %945 = vst.msk [vmem:[%s299 + $0x50] sm:$0xff] %vm432, %v860
      %946 = vst.msk [vmem:[%s299 + $0x58] sm:$0xff] %vm432, %v862
      %947 = vst.msk [vmem:[%s299 + $0x60] sm:$0xff] %vm432, %v864
      %948 = vst.msk [vmem:[%s299 + $0x68] sm:$0xff] %vm432, %v866
      %949 = vst.msk [vmem:[%s299 + $0x70] sm:$0xff] %vm432, %v868
      %950 = vst.msk [vmem:[%s299 + $0x78] sm:$0xff] %vm432, %v870
      %951 = vst.msk [vmem:[%s299 + $0x80] sm:$0xff] %vm432, %v872
      %952 = vst.msk [vmem:[%s299 + $0x88] sm:$0xff] %vm432, %v874
      %953 = vst.msk [vmem:[%s299 + $0x90] sm:$0xff] %vm432, %v876
      %954 = vst.msk [vmem:[%s299 + $0x98] sm:$0xff] %vm432, %v878
      %955 = vst.msk [vmem:[%s299 + $0xa0] sm:$0xff] %vm432, %v880
      %956 = vst.msk [vmem:[%s299 + $0xa8] sm:$0xff] %vm432, %v882
      %957 = vst.msk [vmem:[%s299 + $0xb0] sm:$0xff] %vm432, %v884
      %958 = vst.msk [vmem:[%s299 + $0xb8] sm:$0xff] %vm432, %v886
      %959 = vst.msk [vmem:[%s299 + $0xc0] sm:$0xff] %vm432, %v888
      %960 = vst.msk [vmem:[%s299 + $0xc8] sm:$0xff] %vm432, %v890
      %961 = vst.msk [vmem:[%s299 + $0xd0] sm:$0xff] %vm432, %v892
      %962 = vst.msk [vmem:[%s299 + $0xd8] sm:$0xff] %vm432, %v894
      %963 = vst.msk [vmem:[%s299 + $0xe0] sm:$0xff] %vm432, %v896
      %964 = vst.msk [vmem:[%s299 + $0xe8] sm:$0xff] %vm432, %v898
      %965 = vst.msk [vmem:[%s299 + $0xf0] sm:$0xff] %vm432, %v900
      %966 = vst.msk [vmem:[%s299 + $0xf8] sm:$0xff] %vm432, %v902
      %967 = vrot.lane.b32.xlu0 %v520, 112
      %v968 = vpop.permute.xlu0 %967
      %969 = vrot.lane.b32.xlu0 %v523, 112
      %v970 = vpop.permute.xlu0 %969
      %971 = vrot.lane.b32.xlu0 %v528, 112
      %v972 = vpop.permute.xlu0 %971
      %973 = vrot.lane.b32.xlu0 %v531, 112
      %v974 = vpop.permute.xlu0 %973
      %975 = vrot.lane.b32.xlu0 %v536, 112
      %v976 = vpop.permute.xlu0 %975
      %977 = vrot.lane.b32.xlu0 %v539, 112
      %v978 = vpop.permute.xlu0 %977
      %979 = vrot.lane.b32.xlu0 %v544, 112
      %v980 = vpop.permute.xlu0 %979
      %981 = vrot.lane.b32.xlu0 %v547, 112
      %v982 = vpop.permute.xlu0 %981
      %983 = vrot.lane.b32.xlu0 %v552, 112
      %v984 = vpop.permute.xlu0 %983
      %985 = vrot.lane.b32.xlu0 %v555, 112
      %v986 = vpop.permute.xlu0 %985
      %987 = vrot.lane.b32.xlu0 %v560, 112
      %v988 = vpop.permute.xlu0 %987
      %989 = vrot.lane.b32.xlu0 %v563, 112
      %v990 = vpop.permute.xlu0 %989
      %991 = vrot.lane.b32.xlu0 %v568, 112
      %v992 = vpop.permute.xlu0 %991
      %993 = vrot.lane.b32.xlu0 %v571, 112
      %v994 = vpop.permute.xlu0 %993
      %995 = vrot.lane.b32.xlu0 %v576, 112
      %v996 = vpop.permute.xlu0 %995
      %997 = vrot.lane.b32.xlu0 %v579, 112
      %v998 = vpop.permute.xlu0 %997
      %999 = vrot.lane.b32.xlu0 %v584, 112
      %v1000 = vpop.permute.xlu0 %999
      %1001 = vrot.lane.b32.xlu0 %v587, 112
      %v1002 = vpop.permute.xlu0 %1001
      %1003 = vrot.lane.b32.xlu0 %v592, 112
      %v1004 = vpop.permute.xlu0 %1003
      %1005 = vrot.lane.b32.xlu0 %v595, 112
      %v1006 = vpop.permute.xlu0 %1005
      %1007 = vrot.lane.b32.xlu0 %v600, 112
      %v1008 = vpop.permute.xlu0 %1007
      %1009 = vrot.lane.b32.xlu0 %v603, 112
      %v1010 = vpop.permute.xlu0 %1009
      %1011 = vrot.lane.b32.xlu0 %v608, 112
      %v1012 = vpop.permute.xlu0 %1011
      %1013 = vrot.lane.b32.xlu0 %v611, 112
      %v1014 = vpop.permute.xlu0 %1013
      %1015 = vrot.lane.b32.xlu0 %v616, 112
      %v1016 = vpop.permute.xlu0 %1015
      %1017 = vrot.lane.b32.xlu0 %v619, 112
      %v1018 = vpop.permute.xlu0 %1017
      %1019 = vrot.lane.b32.xlu0 %v624, 112
      %v1020 = vpop.permute.xlu0 %1019
      %1021 = vrot.lane.b32.xlu0 %v627, 112
      %v1022 = vpop.permute.xlu0 %1021
      %1023 = vrot.lane.b32.xlu0 %v632, 112
      %v1024 = vpop.permute.xlu0 %1023
      %1025 = vrot.lane.b32.xlu0 %v635, 112
      %v1026 = vpop.permute.xlu0 %1025
      %1027 = vrot.lane.b32.xlu0 %v640, 112
      %v1028 = vpop.permute.xlu0 %1027
      %1029 = vrot.lane.b32.xlu0 %v643, 112
      %v1030 = vpop.permute.xlu0 %1029
      %1063 = vst.msk [vmem:[%s309] sm:$0xff] %vm432, %v968
      %1064 = vst.msk [vmem:[%s309 + $0x8] sm:$0xff] %vm432, %v970
      %1065 = vst.msk [vmem:[%s309 + $0x10] sm:$0xff] %vm432, %v972
      %1066 = vst.msk [vmem:[%s309 + $0x18] sm:$0xff] %vm432, %v974
      %1067 = vst.msk [vmem:[%s309 + $0x20] sm:$0xff] %vm432, %v976
      %1068 = vst.msk [vmem:[%s309 + $0x28] sm:$0xff] %vm432, %v978
      %1069 = vst.msk [vmem:[%s309 + $0x30] sm:$0xff] %vm432, %v980
      %1070 = vst.msk [vmem:[%s309 + $0x38] sm:$0xff] %vm432, %v982
      %1071 = vst.msk [vmem:[%s309 + $0x40] sm:$0xff] %vm432, %v984
      %1072 = vst.msk [vmem:[%s309 + $0x48] sm:$0xff] %vm432, %v986
      %1073 = vst.msk [vmem:[%s309 + $0x50] sm:$0xff] %vm432, %v988
      %1074 = vst.msk [vmem:[%s309 + $0x58] sm:$0xff] %vm432, %v990
      %1075 = vst.msk [vmem:[%s309 + $0x60] sm:$0xff] %vm432, %v992
      %1076 = vst.msk [vmem:[%s309 + $0x68] sm:$0xff] %vm432, %v994
      %1077 = vst.msk [vmem:[%s309 + $0x70] sm:$0xff] %vm432, %v996
      %1078 = vst.msk [vmem:[%s309 + $0x78] sm:$0xff] %vm432, %v998
      %1079 = vst.msk [vmem:[%s309 + $0x80] sm:$0xff] %vm432, %v1000
      %1080 = vst.msk [vmem:[%s309 + $0x88] sm:$0xff] %vm432, %v1002
      %1081 = vst.msk [vmem:[%s309 + $0x90] sm:$0xff] %vm432, %v1004
      %1082 = vst.msk [vmem:[%s309 + $0x98] sm:$0xff] %vm432, %v1006
      %1083 = vst.msk [vmem:[%s309 + $0xa0] sm:$0xff] %vm432, %v1008
      %1084 = vst.msk [vmem:[%s309 + $0xa8] sm:$0xff] %vm432, %v1010
      %1085 = vst.msk [vmem:[%s309 + $0xb0] sm:$0xff] %vm432, %v1012
      %1086 = vst.msk [vmem:[%s309 + $0xb8] sm:$0xff] %vm432, %v1014
      %1087 = vst.msk [vmem:[%s309 + $0xc0] sm:$0xff] %vm432, %v1016
      %1088 = vst.msk [vmem:[%s309 + $0xc8] sm:$0xff] %vm432, %v1018
      %1089 = vst.msk [vmem:[%s309 + $0xd0] sm:$0xff] %vm432, %v1020
      %1090 = vst.msk [vmem:[%s309 + $0xd8] sm:$0xff] %vm432, %v1022
      %1091 = vst.msk [vmem:[%s309 + $0xe0] sm:$0xff] %vm432, %v1024
      %1092 = vst.msk [vmem:[%s309 + $0xe8] sm:$0xff] %vm432, %v1026
      %1093 = vst.msk [vmem:[%s309 + $0xf0] sm:$0xff] %vm432, %v1028
      %1094 = vst.msk [vmem:[%s309 + $0xf8] sm:$0xff] %vm432, %v1030
      %s1095 = smul.u32 32, %s21
      %p1096 = scmp.lt.s32.totalorder %s22, 1
      %s1097 = scalar_select %p1096, %s22, 1
      %p1098 = scmp.lt.s32.totalorder %s1095, 31
      %s1099 = scalar_select %p1098, %s1095, 31
      %s1100 = smul.addr %s1097, 32
      %s1101 = sadd.s32 %s1099, %s1100
      %s1102 = smul.addr %s1101, 4
      %s1103 = scalar_lea.vmem %s3, %s1102
      %s1104 = smul.u32 32, %s21
      %p1105 = scmp.lt.s32.totalorder %s22, 1
      %s1106 = scalar_select %p1105, %s22, 1
      %p1107 = scmp.lt.s32.totalorder %s1104, 31
      %s1108 = scalar_select %p1107, %s1104, 31
      %s1109 = smul.addr %s1106, 32
      %s1110 = sadd.s32 %s1108, %s1109
      %s1111 = smul.addr %s1110, 8
      %s1112 = scalar_lea.vmem %s4, %s1111
      %s1113 = smul.u32 32, %s21
      %p1114 = scmp.lt.s32.totalorder %s22, 1
      %s1115 = scalar_select %p1114, %s22, 1
      %p1116 = scmp.lt.s32.totalorder %s1113, 31
      %s1117 = scalar_select %p1116, %s1113, 31
      %s1118 = smul.addr %s1115, 32
      %s1119 = sadd.s32 %s1117, %s1118
      %s1120 = smul.addr %s1119, 8
      %s1121 = scalar_lea.vmem %s5, %s1120
      // Predicated region
      $region33: #{glo_tkdown_block_pv.5} parent=31 // pred_check
        %p1122 = pneg %p119
      $region34: #{glo_tkdown_block_pv.5} parent=31 // pred_check_branch
        %1124 = sbr.rel (%p1122) target = $region36
      $region35: #{glo_tkdown_block_pv.5} parent=31 // pred_region
        %s1125 = smul.u32 32, %s21
      $region36: #{glo_tkdown_block_pv.5} parent=31 // pred_fallthru
        _
      // Predicated region
      $region37: #{glo_tkdown_block_pv.5} parent=31 // pred_check
        %p1126 = pneg %p147
      $region38: #{glo_tkdown_block_pv.5} parent=31 // pred_check_branch
        %1128 = sbr.rel (%p1126) target = $region40
      $region39: #{glo_tkdown_block_pv.5} parent=31 // pred_region
        %s1129 = smul.u32 32, %s21
      $region40: #{glo_tkdown_block_pv.5} parent=31 // pred_fallthru
        _
      // Predicated region
      $region41: #{glo_tkdown_block_pv.5} parent=31 // pred_check
        %p1130 = pneg %p175
      $region42: #{glo_tkdown_block_pv.5} parent=31 // pred_check_branch
        %1132 = sbr.rel (%p1130) target = $region44
      $region43: #{glo_tkdown_block_pv.5} parent=31 // pred_region
        %s1133 = smul.u32 32, %s21
      $region44: #{glo_tkdown_block_pv.5} parent=31 // pred_fallthru
        _
    $region32: #{glo_tkdown_block_pv.5} parent=5 // pred_fallthru
      _
    %p1134 = scmp.le.s32.totalorder 2, %s12
    // Predicated region
    $region45: #{glo_tkdown_block_pv.5} parent=5 // pred_check
      %p1135 = pneg %p1134
    $region46: #{glo_tkdown_block_pv.5} parent=5 // pred_check_branch
      %1137 = sbr.rel (%p1135) target = $region48
    $region47: #{glo_tkdown_block_pv.5} parent=5 // pred_region
      %s1138 = ssub.s32 %s12, 2
      // Predicated region
      $region49: #{glo_tkdown_block_pv.5} parent=47 // pred_check
        %p1139 = pneg %p125
      $region50: #{glo_tkdown_block_pv.5} parent=47 // pred_check_branch
        %1141 = sbr.rel (%p1139) target = $region52
      $region51: #{glo_tkdown_block_pv.5} parent=47 // pred_region
        %s1142 = smul.u32 32, %s23
        %p1143 = scmp.lt.s32.totalorder %s24, 1
        %s1144 = scalar_select %p1143, %s24, 1
        %p1145 = scmp.lt.s32.totalorder %s1142, 31
        %s1146 = scalar_select %p1145, %s1142, 31
        %s1147 = smul.addr %s1144, 32
        %s1148 = sadd.s32 %s1146, %s1147
        %s1149 = smul.addr %s1148, 4
        %s1150 = scalar_lea.vmem %s3, %s1149
      $region52: #{glo_tkdown_block_pv.5} parent=47 // pred_fallthru
        _
      // Predicated region
      $region53: #{glo_tkdown_block_pv.5} parent=47 // pred_check
        %p1151 = pneg %p153
      $region54: #{glo_tkdown_block_pv.5} parent=47 // pred_check_branch
        %1153 = sbr.rel (%p1151) target = $region56
      $region55: #{glo_tkdown_block_pv.5} parent=47 // pred_region
        %s1154 = smul.u32 32, %s23
        %p1155 = scmp.lt.s32.totalorder %s24, 1
        %s1156 = scalar_select %p1155, %s24, 1
        %p1157 = scmp.lt.s32.totalorder %s1154, 31
        %s1158 = scalar_select %p1157, %s1154, 31
        %s1159 = smul.addr %s1156, 32
        %s1160 = sadd.s32 %s1158, %s1159
        %s1161 = smul.addr %s1160, 8
        %s1162 = scalar_lea.vmem %s4, %s1161
      $region56: #{glo_tkdown_block_pv.5} parent=47 // pred_fallthru
        _
      // Predicated region
      $region57: #{glo_tkdown_block_pv.5} parent=47 // pred_check
        %p1163 = pneg %p181
      $region58: #{glo_tkdown_block_pv.5} parent=47 // pred_check_branch
        %1165 = sbr.rel (%p1163) target = $region60
      $region59: #{glo_tkdown_block_pv.5} parent=47 // pred_region
        %s1166 = smul.u32 32, %s23
        %p1167 = scmp.lt.s32.totalorder %s24, 1
        %s1168 = scalar_select %p1167, %s24, 1
        %p1169 = scmp.lt.s32.totalorder %s1166, 31
        %s1170 = scalar_select %p1169, %s1166, 31
        %s1171 = smul.addr %s1168, 32
        %s1172 = sadd.s32 %s1170, %s1171
        %s1173 = smul.addr %s1172, 8
        %s1174 = scalar_lea.vmem %s5, %s1173
      $region60: #{glo_tkdown_block_pv.5} parent=47 // pred_fallthru
        _
    $region48: #{glo_tkdown_block_pv.5} parent=5 // pred_fallthru
      _
  $region6: #{glo_tkdown_block_pv.5} parent=0 // loop_footer
    %s16 = sadd.s32 1, %s12
  $region7: #{glo_tkdown_block_pv.5} parent=0 // loop_footer_branch
    %11 = sbr.rel target = $region3
  $region8: #{glo_tkdown_block_pv.5} parent=0 // loop_exit
    _

// kernel: sub.7
$region0: #{sub.7}
  #allocation0 [shape = 's32[1]{0}', space=sflag, size = 0x4, scoped, tag = 'scoped memory for sub.7']
  %s0 = inlined_call_operand.vmem [shape: f32[2,2,4], index: 0, kind: input, shape index: {}, may-alias: {0,1}]
  %s1 = inlined_call_operand.vmem [shape: f32[2,2,4], index: 1, kind: input, shape index: {}, may-alias: {0,1}]
  %s2 = inlined_call_operand.vmem [shape: f32[2,2,4], index: 2, kind: output, shape index: {}]
  %v3 = vld [vmem:[%s0] sm:$0xf]
  %v4 = vld [vmem:[%s1] sm:$0xf]
  %5 = xla_tuple %v3, %v4
  %6 = xla_tuple %5
  %v7 = vsub.f32 %v3, %v4
  %8 = xla_tuple %v7
  %9 = vst [vmem:[%s2] sm:$0xf] %v7
  %s10 = scalar_lea.vmem %s0, 4
  %v11 = vld [vmem:[%s10] sm:$0xf]
  %s12 = scalar_lea.vmem %s1, 4
  %v13 = vld [vmem:[%s12] sm:$0xf]
  %14 = xla_tuple %v11, %v13
  %15 = xla_tuple %14
  %v16 = vsub.f32 %v11, %v13
  %17 = xla_tuple %v16
  %s18 = scalar_lea.vmem %s2, 4
  %19 = vst [vmem:[%s18] sm:$0xf] %v16

// kernel: glo_tkdown_block_pv.6
$region0: #{glo_tkdown_block_pv.6}
  #allocation0 [shape = 'u32[]', space=smem, size = 0x4, offset = 0x4, fixed_abs, tag = 'smem constant byte address 0x4 - core index']
  #allocation1 [shape = 'u32[144,128]{1,0:T(1,128)}', space=vmem, size = 0x12000, scoped, tag = 'internal scratch']
  %s0 = inlined_call_operand.vmem [shape: f32[2,384,8], index: 0, kind: input, shape index: {}]
  %s1 = inlined_call_operand.vmem [shape: f32[2,384,8], index: 1, kind: input, shape index: {}]
  %s2 = inlined_call_operand.vmem [shape: f32[1,8], index: 2, kind: input, shape index: {}]
  %s3 = inlined_call_operand.vmem [shape: f32[1,8], index: 3, kind: input, shape index: {}]
  %s4 = inlined_call_operand.vmem [shape: bf16[2,384,8], index: 4, kind: output, shape index: {0}]
  %s5 = inlined_call_operand.vmem [shape: bf16[2,384,8], index: 5, kind: output, shape index: {1}]
  %6 = xla_tuple %s4, %s5
  %s7 = sld [smem:[#allocation0]]
  $region57: #{glo_tkdown_block_pv.6} parent=0
    _
  %s9 = ssub.s32 1, %s7
  %s10 = scalar_select 0, %s9, %s7
  loop: start=0, step=1, limit=4
  $region2: #{glo_tkdown_block_pv.6} parent=0 // loop_pre_header
    _
  $region3: #{glo_tkdown_block_pv.6} parent=0 // loop_header
    %s12 = sphi 0, %s16
    %p13 = scmp.ge.s32.totalorder %s12, 4
    %s19 = sphi 0, %s31
    %s20 = sphi 0, %s27
    %s21 = sphi 0, %s19
    %s22 = sphi 0, %s20
    %s23 = sphi 0, %s21
    %s24 = sphi 0, %s22
    %s36 = sphi 0, %s38
    %s39 = sphi 0, %s36
    %s40 = sphi 0, %s39
    %s56 = sphi 0, %s40
    %s64 = sphi 0, %s66
    %s67 = sphi 0, %s64
    %s68 = sphi 0, %s67
    %s84 = sphi 0, %s68
    %s88 = sphi 0, %s88
    %s90 = sphi 0, %s88
    %s91 = sphi 0, %s90
    %s105 = sphi 0, %s91
    %s109 = sphi 0, %s109
    %s111 = sphi 0, %s109
    %s112 = sphi 0, %s111
    %s126 = sphi 0, %s112
    %s134 = sphi 0, %s136
    %s137 = sphi 0, %s134
    %s138 = sphi 0, %s137
    %s154 = sphi 0, %s138
    %s162 = sphi 0, %s164
    %s165 = sphi 0, %s162
    %s166 = sphi 0, %s165
    %s182 = sphi 0, %s166
  $region4: #{glo_tkdown_block_pv.6} parent=0 // loop_header_branch
    %15 = sbr.rel (%p13) target = $region8
  $region5: #{glo_tkdown_block_pv.6} parent=0 // loop_body
    %s17 = ssub.s32 %s12, 1
    %s18 = ssub.s32 %s12, 2
    %s25 = sadd.s32 1, %s20
    %p26 = scmp.ge.s32.totalorder %s25, 2
    %s27 = scalar_select %p26, 0, %s25
    %s28 = sadd.s32 1, %s19
    %s29 = scalar_select %p26, %s28, %s19
    %p30 = scmp.ge.s32.totalorder %s29, 1
    %s31 = scalar_select %p30, 0, %s29
    %s32 = ssub.s32 %s20, %s27
    %s33 = ssub.s32 %s19, %s31
    %s34 = sor.u32 %s32, %s33
    %p35 = scmp.eq.s32.totalorder %s34, 0
    %s37 = sadd.s32 %s36, 1
    %s38 = scalar_select %p35, %s36, %s37
    %p41 = pneg %p35
    %p42 = scmp.eq.s32.totalorder %s12, 1
    %p43 = por %p41, %p42
    %p44 = scmp.ne.s32.totalorder %s36, %s39
    %p45 = scmp.eq.s32.totalorder %s12, 0
    %p46 = por %p44, %p45
    %p47 = scmp.ne.s32.totalorder %s36, %s39
    %p48 = scmp.eq.s32.totalorder %s17, 1
    %p49 = por %p47, %p48
    %p50 = scmp.ne.s32.totalorder %s39, %s40
    %p51 = scmp.eq.s32.totalorder %s17, 0
    %p52 = por %p50, %p51
    %p53 = scmp.ne.s32.totalorder %s39, %s40
    %p54 = scmp.eq.s32.totalorder %s18, 1
    %p55 = por %p53, %p54
    %p57 = scmp.ne.s32.totalorder %s40, %s56
    %p58 = scmp.eq.s32.totalorder %s18, 0
    %p59 = por %p57, %p58
    %s60 = ssub.s32 %s20, %s27
    %s61 = ssub.s32 %s19, %s31
    %s62 = sor.u32 %s60, %s61
    %p63 = scmp.eq.s32.totalorder %s62, 0
    %s65 = sadd.s32 %s64, 1
    %s66 = scalar_select %p63, %s64, %s65
    %p69 = pneg %p63
    %p70 = scmp.eq.s32.totalorder %s12, 1
    %p71 = por %p69, %p70
    %p72 = scmp.ne.s32.totalorder %s64, %s67
    %p73 = scmp.eq.s32.totalorder %s12, 0
    %p74 = por %p72, %p73
    %p75 = scmp.ne.s32.totalorder %s64, %s67
    %p76 = scmp.eq.s32.totalorder %s17, 1
    %p77 = por %p75, %p76
    %p78 = scmp.ne.s32.totalorder %s67, %s68
    %p79 = scmp.eq.s32.totalorder %s17, 0
    %p80 = por %p78, %p79
    %p81 = scmp.ne.s32.totalorder %s67, %s68
    %p82 = scmp.eq.s32.totalorder %s18, 1
    %p83 = por %p81, %p82
    %p85 = scmp.ne.s32.totalorder %s68, %s84
    %p86 = scmp.eq.s32.totalorder %s18, 0
    %p87 = por %p85, %p86
    %s89 = sadd.s32 %s88, 1
    %p92 = scmp.eq.s32.totalorder %s12, 1
    %p93 = scmp.ne.s32.totalorder %s88, %s90
    %p94 = scmp.eq.s32.totalorder %s12, 0
    %p95 = por %p93, %p94
    %p96 = scmp.ne.s32.totalorder %s88, %s90
    %p97 = scmp.eq.s32.totalorder %s17, 1
    %p98 = por %p96, %p97
    %p99 = scmp.ne.s32.totalorder %s90, %s91
    %p100 = scmp.eq.s32.totalorder %s17, 0
    %p101 = por %p99, %p100
    %p102 = scmp.ne.s32.totalorder %s90, %s91
    %p103 = scmp.eq.s32.totalorder %s18, 1
    %p104 = por %p102, %p103
    %p106 = scmp.ne.s32.totalorder %s91, %s105
    %p107 = scmp.eq.s32.totalorder %s18, 0
    %p108 = por %p106, %p107
    %s110 = sadd.s32 %s109, 1
    %p113 = scmp.eq.s32.totalorder %s12, 1
    %p114 = scmp.ne.s32.totalorder %s109, %s111
    %p115 = scmp.eq.s32.totalorder %s12, 0
    %p116 = por %p114, %p115
    %p117 = scmp.ne.s32.totalorder %s109, %s111
    %p118 = scmp.eq.s32.totalorder %s17, 1
    %p119 = por %p117, %p118
    %p120 = scmp.ne.s32.totalorder %s111, %s112
    %p121 = scmp.eq.s32.totalorder %s17, 0
    %p122 = por %p120, %p121
    %p123 = scmp.ne.s32.totalorder %s111, %s112
    %p124 = scmp.eq.s32.totalorder %s18, 1
    %p125 = por %p123, %p124
    %p127 = scmp.ne.s32.totalorder %s112, %s126
    %p128 = scmp.eq.s32.totalorder %s18, 0
    %p129 = por %p127, %p128
    %s130 = ssub.s32 %s20, %s27
    %s131 = ssub.s32 %s19, %s31
    %s132 = sor.u32 %s130, %s131
    %p133 = scmp.eq.s32.totalorder %s132, 0
    %s135 = sadd.s32 %s134, 1
    %s136 = scalar_select %p133, %s134, %s135
    %p139 = pneg %p133
    %p140 = scmp.eq.s32.totalorder %s12, 1
    %p141 = por %p139, %p140
    %p142 = scmp.ne.s32.totalorder %s134, %s137
    %p143 = scmp.eq.s32.totalorder %s12, 0
    %p144 = por %p142, %p143
    %p145 = scmp.ne.s32.totalorder %s134, %s137
    %p146 = scmp.eq.s32.totalorder %s17, 1
    %p147 = por %p145, %p146
    %p148 = scmp.ne.s32.totalorder %s137, %s138
    %p149 = scmp.eq.s32.totalorder %s17, 0
    %p150 = por %p148, %p149
    %p151 = scmp.ne.s32.totalorder %s137, %s138
    %p152 = scmp.eq.s32.totalorder %s18, 1
    %p153 = por %p151, %p152
    %p155 = scmp.ne.s32.totalorder %s138, %s154
    %p156 = scmp.eq.s32.totalorder %s18, 0
    %p157 = por %p155, %p156
    %s158 = ssub.s32 %s20, %s27
    %s159 = ssub.s32 %s19, %s31
    %s160 = sor.u32 %s158, %s159
    %p161 = scmp.eq.s32.totalorder %s160, 0
    %s163 = sadd.s32 %s162, 1
    %s164 = scalar_select %p161, %s162, %s163
    %p167 = pneg %p161
    %p168 = scmp.eq.s32.totalorder %s12, 1
    %p169 = por %p167, %p168
    %p170 = scmp.ne.s32.totalorder %s162, %s165
    %p171 = scmp.eq.s32.totalorder %s12, 0
    %p172 = por %p170, %p171
    %p173 = scmp.ne.s32.totalorder %s162, %s165
    %p174 = scmp.eq.s32.totalorder %s17, 1
    %p175 = por %p173, %p174
    %p176 = scmp.ne.s32.totalorder %s165, %s166
    %p177 = scmp.eq.s32.totalorder %s17, 0
    %p178 = por %p176, %p177
    %p179 = scmp.ne.s32.totalorder %s165, %s166
    %p180 = scmp.eq.s32.totalorder %s18, 1
    %p181 = por %p179, %p180
    %p183 = scmp.ne.s32.totalorder %s166, %s182
    %p184 = scmp.eq.s32.totalorder %s18, 0
    %p185 = por %p183, %p184
    %p186 = scmp.le.s32.totalorder 1, %s12
    %p187 = scmp.lt.s32.totalorder %s12, 3
    %p188 = pnand %p186, %p187
    %p189 = pneg %p188
    // Predicated region
    $region9: #{glo_tkdown_block_pv.6} parent=5 // pred_check
      _
    $region10: #{glo_tkdown_block_pv.6} parent=5 // pred_check_branch
      %191 = sbr.rel (%p188) target = $region12
    $region11: #{glo_tkdown_block_pv.6} parent=5 // pred_region
      %s192 = ssub.s32 %s12, 1
      // Predicated region
      $region13: #{glo_tkdown_block_pv.6} parent=11 // pred_check
        %p193 = pneg %p101
      $region14: #{glo_tkdown_block_pv.6} parent=11 // pred_check_branch
        %195 = sbr.rel (%p193) target = $region16
      $region15: #{glo_tkdown_block_pv.6} parent=11 // pred_region
        _
      $region16: #{glo_tkdown_block_pv.6} parent=11 // pred_fallthru
        _
      // Predicated region
      $region17: #{glo_tkdown_block_pv.6} parent=11 // pred_check
        %p196 = pneg %p122
      $region18: #{glo_tkdown_block_pv.6} parent=11 // pred_check_branch
        %198 = sbr.rel (%p196) target = $region20
      $region19: #{glo_tkdown_block_pv.6} parent=11 // pred_region
        _
      $region20: #{glo_tkdown_block_pv.6} parent=11 // pred_fallthru
        _
    $region12: #{glo_tkdown_block_pv.6} parent=5 // pred_fallthru
      _
    %p199 = scmp.lt.s32.totalorder %s12, 2
    // Predicated region
    $region21: #{glo_tkdown_block_pv.6} parent=5 // pred_check
      %p200 = pneg %p199
    $region22: #{glo_tkdown_block_pv.6} parent=5 // pred_check_branch
      %202 = sbr.rel (%p200) target = $region24
    $region23: #{glo_tkdown_block_pv.6} parent=5 // pred_region
      // Predicated region
      $region25: #{glo_tkdown_block_pv.6} parent=23 // pred_check
        %p203 = pneg %p46
      $region26: #{glo_tkdown_block_pv.6} parent=23 // pred_check_branch
        %205 = sbr.rel (%p203) target = $region28
      $region27: #{glo_tkdown_block_pv.6} parent=23 // pred_region
        %s206 = smul.u32 48, %s19
        %p207 = scmp.lt.s32.totalorder %s20, 1
        %s208 = scalar_select %p207, %s20, 1
        %p209 = scmp.lt.s32.totalorder %s206, 47
        %s210 = scalar_select %p209, %s206, 47
        %s211 = smul.addr %s208, 48
        %s212 = sadd.s32 %s210, %s211
        %s213 = smul.addr %s212, 8
        %s214 = scalar_lea.vmem %s0, %s213
        %s215 = smul.u32 48, %s19
      $region28: #{glo_tkdown_block_pv.6} parent=23 // pred_fallthru
        _
      // Predicated region
      $region29: #{glo_tkdown_block_pv.6} parent=23 // pred_check
        %p216 = pneg %p74
      $region30: #{glo_tkdown_block_pv.6} parent=23 // pred_check_branch
        %218 = sbr.rel (%p216) target = $region32
      $region31: #{glo_tkdown_block_pv.6} parent=23 // pred_region
        %s219 = smul.u32 48, %s19
        %p220 = scmp.lt.s32.totalorder %s20, 1
        %s221 = scalar_select %p220, %s20, 1
        %p222 = scmp.lt.s32.totalorder %s219, 47
        %s223 = scalar_select %p222, %s219, 47
        %s224 = smul.addr %s221, 48
        %s225 = sadd.s32 %s223, %s224
        %s226 = smul.addr %s225, 8
        %s227 = scalar_lea.vmem %s1, %s226
        %s228 = smul.u32 48, %s19
      $region32: #{glo_tkdown_block_pv.6} parent=23 // pred_fallthru
        _
    $region24: #{glo_tkdown_block_pv.6} parent=5 // pred_fallthru
      _
    %p229 = scmp.le.s32.totalorder 1, %s12
    %p230 = scmp.lt.s32.totalorder %s12, 3
    %p231 = pnand %p229, %p230
    %p232 = pneg %p231
    // Predicated region
    $region33: #{glo_tkdown_block_pv.6} parent=5 // pred_check
      _
    $region34: #{glo_tkdown_block_pv.6} parent=5 // pred_check_branch
      %234 = sbr.rel (%p231) target = $region36
    $region35: #{glo_tkdown_block_pv.6} parent=5 // pred_region
      %s235 = ssub.s32 %s12, 1
      %s236 = smul.u32 48, %s21
      %p237 = scmp.lt.s32.totalorder %s22, 1
      %s238 = scalar_select %p237, %s22, 1
      %p239 = scmp.lt.s32.totalorder %s236, 47
      %s240 = scalar_select %p239, %s236, 47
      %s241 = smul.addr %s238, 48
      %s242 = sadd.s32 %s240, %s241
      %s243 = smul.addr %s242, 8
      %s244 = scalar_lea.vmem %s0, %s243
      %p245 = pneg %p52
      %p246 = pneg %p49
      %s247 = smul.u32 48, %s21
      %p248 = scmp.lt.s32.totalorder %s22, 1
      %s249 = scalar_select %p248, %s22, 1
      %p250 = scmp.lt.s32.totalorder %s247, 47
      %s251 = scalar_select %p250, %s247, 47
      %s252 = smul.addr %s249, 48
      %s253 = sadd.s32 %s251, %s252
      %s254 = smul.addr %s253, 8
      %s255 = scalar_lea.vmem %s1, %s254
      %p256 = pneg %p80
      %p257 = pneg %p77
      %p258 = pneg %p101
      %p259 = pneg %p98
      %p260 = pneg %p122
      %p261 = pneg %p119
      %p262 = pneg %p150
      %p263 = pneg %p147
      %s264 = smul.u32 48, %s21
      %p265 = scmp.lt.s32.totalorder %s22, 1
      %s266 = scalar_select %p265, %s22, 1
      %p267 = scmp.lt.s32.totalorder %s264, 47
      %s268 = scalar_select %p267, %s264, 47
      %s269 = smul.addr %s266, 48
      %s270 = sadd.s32 %s268, %s269
      %s271 = smul.addr %s270, 4
      %s272 = scalar_lea.vmem %s4, %s271
      %p273 = pneg %p178
      %p274 = pneg %p175
      %s275 = smul.u32 48, %s21
      %p276 = scmp.lt.s32.totalorder %s22, 1
      %s277 = scalar_select %p276, %s22, 1
      %p278 = scmp.lt.s32.totalorder %s275, 47
      %s279 = scalar_select %p278, %s275, 47
      %s280 = smul.addr %s277, 48
      %s281 = sadd.s32 %s279, %s280
      %s282 = smul.addr %s281, 4
      %s283 = scalar_lea.vmem %s5, %s282
      %s284 = smul.u32 48, %s21
      %p285 = scmp.lt.s32.totalorder %s22, 1
      %s286 = scalar_select %p285, %s22, 1
      %p287 = scmp.lt.s32.totalorder %s284, 47
      %s288 = scalar_select %p287, %s284, 47
      %s289 = smul.addr %s286, 48
      %s290 = sadd.s32 %s288, %s289
      %s291 = smul.addr %s290, 8
      %s292 = scalar_lea.vmem %s0, %s291
      %s293 = smul.u32 48, %s21
      %s294 = smul.u32 48, %s21
      %p295 = scmp.lt.s32.totalorder %s22, 1
      %s296 = scalar_select %p295, %s22, 1
      %p297 = scmp.lt.s32.totalorder %s294, 47
      %s298 = scalar_select %p297, %s294, 47
      %s299 = smul.addr %s296, 48
      %s300 = sadd.s32 %s298, %s299
      %s301 = smul.addr %s300, 8
      %s302 = scalar_lea.vmem %s1, %s301
      %s303 = smul.u32 48, %s21
      %s304 = smul.u32 48, %s21
      %p305 = scmp.lt.s32.totalorder %s22, 1
      %s306 = scalar_select %p305, %s22, 1
      %p307 = scmp.lt.s32.totalorder %s304, 47
      %s308 = scalar_select %p307, %s304, 47
      %s309 = smul.addr %s306, 48
      %s310 = sadd.s32 %s308, %s309
      %s311 = smul.addr %s310, 4
      %s312 = scalar_lea.vmem %s4, %s311
      %s313 = smul.u32 48, %s21
      %s314 = smul.u32 48, %s21
      %p315 = scmp.lt.s32.totalorder %s22, 1
      %s316 = scalar_select %p315, %s22, 1
      %p317 = scmp.lt.s32.totalorder %s314, 47
      %s318 = scalar_select %p317, %s314, 47
      %s319 = smul.addr %s316, 48
      %s320 = sadd.s32 %s318, %s319
      %s321 = smul.addr %s320, 4
      %s322 = scalar_lea.vmem %s5, %s321
      %s323 = smul.u32 48, %s21
      %v324 = vld [vmem:[%s292] sm:$0xff]
      %v325 = vld [vmem:[%s292 + $0x8] sm:$0xff]
      %v326 = vld [vmem:[%s292 + $0x10] sm:$0xff]
      %v327 = vld [vmem:[%s292 + $0x18] sm:$0xff]
      %v328 = vld [vmem:[%s292 + $0x20] sm:$0xff]
      %v329 = vld [vmem:[%s292 + $0x28] sm:$0xff]
      %v330 = vld [vmem:[%s292 + $0x30] sm:$0xff]
      %v331 = vld [vmem:[%s292 + $0x38] sm:$0xff]
      %v332 = vld [vmem:[%s292 + $0x40] sm:$0xff]
      %v333 = vld [vmem:[%s292 + $0x48] sm:$0xff]
      %v334 = vld [vmem:[%s292 + $0x50] sm:$0xff]
      %v335 = vld [vmem:[%s292 + $0x58] sm:$0xff]
      %v336 = vld [vmem:[%s292 + $0x60] sm:$0xff]
      %v337 = vld [vmem:[%s292 + $0x68] sm:$0xff]
      %v338 = vld [vmem:[%s292 + $0x70] sm:$0xff]
      %v339 = vld [vmem:[%s292 + $0x78] sm:$0xff]
      %v340 = vld [vmem:[%s292 + $0x80] sm:$0xff]
      %v341 = vld [vmem:[%s292 + $0x88] sm:$0xff]
      %v342 = vld [vmem:[%s292 + $0x90] sm:$0xff]
      %v343 = vld [vmem:[%s292 + $0x98] sm:$0xff]
      %v344 = vld [vmem:[%s292 + $0xa0] sm:$0xff]
      %v345 = vld [vmem:[%s292 + $0xa8] sm:$0xff]
      %v346 = vld [vmem:[%s292 + $0xb0] sm:$0xff]
      %v347 = vld [vmem:[%s292 + $0xb8] sm:$0xff]
      %v348 = vld [vmem:[%s292 + $0xc0] sm:$0xff]
      %v349 = vld [vmem:[%s292 + $0xc8] sm:$0xff]
      %v350 = vld [vmem:[%s292 + $0xd0] sm:$0xff]
      %v351 = vld [vmem:[%s292 + $0xd8] sm:$0xff]
      %v352 = vld [vmem:[%s292 + $0xe0] sm:$0xff]
      %v353 = vld [vmem:[%s292 + $0xe8] sm:$0xff]
      %v354 = vld [vmem:[%s292 + $0xf0] sm:$0xff]
      %v355 = vld [vmem:[%s292 + $0xf8] sm:$0xff]
      %v356 = vld [vmem:[%s292 + $0x100] sm:$0xff]
      %v357 = vld [vmem:[%s292 + $0x108] sm:$0xff]
      %v358 = vld [vmem:[%s292 + $0x110] sm:$0xff]
      %v359 = vld [vmem:[%s292 + $0x118] sm:$0xff]
      %v360 = vld [vmem:[%s292 + $0x120] sm:$0xff]
      %v361 = vld [vmem:[%s292 + $0x128] sm:$0xff]
      %v362 = vld [vmem:[%s292 + $0x130] sm:$0xff]
      %v363 = vld [vmem:[%s292 + $0x138] sm:$0xff]
      %v364 = vld [vmem:[%s292 + $0x140] sm:$0xff]
      %v365 = vld [vmem:[%s292 + $0x148] sm:$0xff]
      %v366 = vld [vmem:[%s292 + $0x150] sm:$0xff]
      %v367 = vld [vmem:[%s292 + $0x158] sm:$0xff]
      %v368 = vld [vmem:[%s292 + $0x160] sm:$0xff]
      %v369 = vld [vmem:[%s292 + $0x168] sm:$0xff]
      %v370 = vld [vmem:[%s292 + $0x170] sm:$0xff]
      %v371 = vld [vmem:[%s292 + $0x178] sm:$0xff]
      %vm372 = vcmask 64512
      %v373 = vsel %vm372, %v324, 0.0
      %374 = vadd.xlane.f32.xlu0 %v373
      %v375 = vpop.xlane.xlu0 %374
      %v376 = vsel %vm372, %v325, 0.0
      %377 = vadd.xlane.f32.xlu0 %v376
      %v378 = vpop.xlane.xlu0 %377
      %v379 = vsel %vm372, %v326, 0.0
      %380 = vadd.xlane.f32.xlu0 %v379
      %v381 = vpop.xlane.xlu0 %380
      %v382 = vsel %vm372, %v327, 0.0
      %383 = vadd.xlane.f32.xlu0 %v382
      %v384 = vpop.xlane.xlu0 %383
      %v385 = vsel %vm372, %v328, 0.0
      %386 = vadd.xlane.f32.xlu0 %v385
      %v387 = vpop.xlane.xlu0 %386
      %v388 = vsel %vm372, %v329, 0.0
      %389 = vadd.xlane.f32.xlu0 %v388
      %v390 = vpop.xlane.xlu0 %389
      %v391 = vsel %vm372, %v330, 0.0
      %392 = vadd.xlane.f32.xlu0 %v391
      %v393 = vpop.xlane.xlu0 %392
      %v394 = vsel %vm372, %v331, 0.0
      %395 = vadd.xlane.f32.xlu0 %v394
      %v396 = vpop.xlane.xlu0 %395
      %v397 = vsel %vm372, %v332, 0.0
      %398 = vadd.xlane.f32.xlu0 %v397
      %v399 = vpop.xlane.xlu0 %398
      %v400 = vsel %vm372, %v333, 0.0
      %401 = vadd.xlane.f32.xlu0 %v400
      %v402 = vpop.xlane.xlu0 %401
      %v403 = vsel %vm372, %v334, 0.0
      %404 = vadd.xlane.f32.xlu0 %v403
      %v405 = vpop.xlane.xlu0 %404
      %v406 = vsel %vm372, %v335, 0.0
      %407 = vadd.xlane.f32.xlu0 %v406
      %v408 = vpop.xlane.xlu0 %407
      %v409 = vsel %vm372, %v336, 0.0
      %410 = vadd.xlane.f32.xlu0 %v409
      %v411 = vpop.xlane.xlu0 %410
      %v412 = vsel %vm372, %v337, 0.0
      %413 = vadd.xlane.f32.xlu0 %v412
      %v414 = vpop.xlane.xlu0 %413
      %v415 = vsel %vm372, %v338, 0.0
      %416 = vadd.xlane.f32.xlu0 %v415
      %v417 = vpop.xlane.xlu0 %416
      %v418 = vsel %vm372, %v339, 0.0
      %419 = vadd.xlane.f32.xlu0 %v418
      %v420 = vpop.xlane.xlu0 %419
      %v421 = vsel %vm372, %v340, 0.0
      %422 = vadd.xlane.f32.xlu0 %v421
      %v423 = vpop.xlane.xlu0 %422
      %v424 = vsel %vm372, %v341, 0.0
      %425 = vadd.xlane.f32.xlu0 %v424
      %v426 = vpop.xlane.xlu0 %425
      %v427 = vsel %vm372, %v342, 0.0
      %428 = vadd.xlane.f32.xlu0 %v427
      %v429 = vpop.xlane.xlu0 %428
      %v430 = vsel %vm372, %v343, 0.0
      %431 = vadd.xlane.f32.xlu0 %v430
      %v432 = vpop.xlane.xlu0 %431
      %v433 = vsel %vm372, %v344, 0.0
      %434 = vadd.xlane.f32.xlu0 %v433
      %v435 = vpop.xlane.xlu0 %434
      %v436 = vsel %vm372, %v345, 0.0
      %437 = vadd.xlane.f32.xlu0 %v436
      %v438 = vpop.xlane.xlu0 %437
      %v439 = vsel %vm372, %v346, 0.0
      %440 = vadd.xlane.f32.xlu0 %v439
      %v441 = vpop.xlane.xlu0 %440
      %v442 = vsel %vm372, %v347, 0.0
      %443 = vadd.xlane.f32.xlu0 %v442
      %v444 = vpop.xlane.xlu0 %443
      %v445 = vsel %vm372, %v348, 0.0
      %446 = vadd.xlane.f32.xlu0 %v445
      %v447 = vpop.xlane.xlu0 %446
      %v448 = vsel %vm372, %v349, 0.0
      %449 = vadd.xlane.f32.xlu0 %v448
      %v450 = vpop.xlane.xlu0 %449
      %v451 = vsel %vm372, %v350, 0.0
      %452 = vadd.xlane.f32.xlu0 %v451
      %v453 = vpop.xlane.xlu0 %452
      %v454 = vsel %vm372, %v351, 0.0
      %455 = vadd.xlane.f32.xlu0 %v454
      %v456 = vpop.xlane.xlu0 %455
      %v457 = vsel %vm372, %v352, 0.0
      %458 = vadd.xlane.f32.xlu0 %v457
      %v459 = vpop.xlane.xlu0 %458
      %v460 = vsel %vm372, %v353, 0.0
      %461 = vadd.xlane.f32.xlu0 %v460
      %v462 = vpop.xlane.xlu0 %461
      %v463 = vsel %vm372, %v354, 0.0
      %464 = vadd.xlane.f32.xlu0 %v463
      %v465 = vpop.xlane.xlu0 %464
      %v466 = vsel %vm372, %v355, 0.0
      %467 = vadd.xlane.f32.xlu0 %v466
      %v468 = vpop.xlane.xlu0 %467
      %v469 = vsel %vm372, %v356, 0.0
      %470 = vadd.xlane.f32.xlu0 %v469
      %v471 = vpop.xlane.xlu0 %470
      %v472 = vsel %vm372, %v357, 0.0
      %473 = vadd.xlane.f32.xlu0 %v472
      %v474 = vpop.xlane.xlu0 %473
      %v475 = vsel %vm372, %v358, 0.0
      %476 = vadd.xlane.f32.xlu0 %v475
      %v477 = vpop.xlane.xlu0 %476
      %v478 = vsel %vm372, %v359, 0.0
      %479 = vadd.xlane.f32.xlu0 %v478
      %v480 = vpop.xlane.xlu0 %479
      %v481 = vsel %vm372, %v360, 0.0
      %482 = vadd.xlane.f32.xlu0 %v481
      %v483 = vpop.xlane.xlu0 %482
      %v484 = vsel %vm372, %v361, 0.0
      %485 = vadd.xlane.f32.xlu0 %v484
      %v486 = vpop.xlane.xlu0 %485
      %v487 = vsel %vm372, %v362, 0.0
      %488 = vadd.xlane.f32.xlu0 %v487
      %v489 = vpop.xlane.xlu0 %488
      %v490 = vsel %vm372, %v363, 0.0
      %491 = vadd.xlane.f32.xlu0 %v490
      %v492 = vpop.xlane.xlu0 %491
      %v493 = vsel %vm372, %v364, 0.0
      %494 = vadd.xlane.f32.xlu0 %v493
      %v495 = vpop.xlane.xlu0 %494
      %v496 = vsel %vm372, %v365, 0.0
      %497 = vadd.xlane.f32.xlu0 %v496
      %v498 = vpop.xlane.xlu0 %497
      %v499 = vsel %vm372, %v366, 0.0
      %500 = vadd.xlane.f32.xlu0 %v499
      %v501 = vpop.xlane.xlu0 %500
      %v502 = vsel %vm372, %v367, 0.0
      %503 = vadd.xlane.f32.xlu0 %v502
      %v504 = vpop.xlane.xlu0 %503
      %v505 = vsel %vm372, %v368, 0.0
      %506 = vadd.xlane.f32.xlu0 %v505
      %v507 = vpop.xlane.xlu0 %506
      %v508 = vsel %vm372, %v369, 0.0
      %509 = vadd.xlane.f32.xlu0 %v508
      %v510 = vpop.xlane.xlu0 %509
      %v511 = vsel %vm372, %v370, 0.0
      %512 = vadd.xlane.f32.xlu0 %v511
      %v513 = vpop.xlane.xlu0 %512
      %v514 = vsel %vm372, %v371, 0.0
      %515 = vadd.xlane.f32.xlu0 %v514
      %v516 = vpop.xlane.xlu0 %515
      %v517 = vrcp.pop 8.0
      %v518 = vmul.f32 %v375, %v517
      %v519 = vmul.f32 %v378, %v517
      %v520 = vmul.f32 %v381, %v517
      %v521 = vmul.f32 %v384, %v517
      %v522 = vmul.f32 %v387, %v517
      %v523 = vmul.f32 %v390, %v517
      %v524 = vmul.f32 %v393, %v517
      %v525 = vmul.f32 %v396, %v517
      %v526 = vmul.f32 %v399, %v517
      %v527 = vmul.f32 %v402, %v517
      %v528 = vmul.f32 %v405, %v517
      %v529 = vmul.f32 %v408, %v517
      %v530 = vmul.f32 %v411, %v517
      %v531 = vmul.f32 %v414, %v517
      %v532 = vmul.f32 %v417, %v517
      %v533 = vmul.f32 %v420, %v517
      %v534 = vmul.f32 %v423, %v517
      %v535 = vmul.f32 %v426, %v517
      %v536 = vmul.f32 %v429, %v517
      %v537 = vmul.f32 %v432, %v517
      %v538 = vmul.f32 %v435, %v517
      %v539 = vmul.f32 %v438, %v517
      %v540 = vmul.f32 %v441, %v517
      %v541 = vmul.f32 %v444, %v517
      %v542 = vmul.f32 %v447, %v517
      %v543 = vmul.f32 %v450, %v517
      %v544 = vmul.f32 %v453, %v517
      %v545 = vmul.f32 %v456, %v517
      %v546 = vmul.f32 %v459, %v517
      %v547 = vmul.f32 %v462, %v517
      %v548 = vmul.f32 %v465, %v517
      %v549 = vmul.f32 %v468, %v517
      %v550 = vmul.f32 %v471, %v517
      %v551 = vmul.f32 %v474, %v517
      %v552 = vmul.f32 %v477, %v517
      %v553 = vmul.f32 %v480, %v517
      %v554 = vmul.f32 %v483, %v517
      %v555 = vmul.f32 %v486, %v517
      %v556 = vmul.f32 %v489, %v517
      %v557 = vmul.f32 %v492, %v517
      %v558 = vmul.f32 %v495, %v517
      %v559 = vmul.f32 %v498, %v517
      %v560 = vmul.f32 %v501, %v517
      %v561 = vmul.f32 %v504, %v517
      %v562 = vmul.f32 %v507, %v517
      %v563 = vmul.f32 %v510, %v517
      %v564 = vmul.f32 %v513, %v517
      %v565 = vmul.f32 %v516, %v517
      %v566 = vsub.f32 %v324, %v518
      %v567 = vsub.f32 %v325, %v519
      %v568 = vsub.f32 %v326, %v520
      %v569 = vsub.f32 %v327, %v521
      %v570 = vsub.f32 %v328, %v522
      %v571 = vsub.f32 %v329, %v523
      %v572 = vsub.f32 %v330, %v524
      %v573 = vsub.f32 %v331, %v525
      %v574 = vsub.f32 %v332, %v526
      %v575 = vsub.f32 %v333, %v527
      %v576 = vsub.f32 %v334, %v528
      %v577 = vsub.f32 %v335, %v529
      %v578 = vsub.f32 %v336, %v530
      %v579 = vsub.f32 %v337, %v531
      %v580 = vsub.f32 %v338, %v532
      %v581 = vsub.f32 %v339, %v533
      %v582 = vsub.f32 %v340, %v534
      %v583 = vsub.f32 %v341, %v535
      %v584 = vsub.f32 %v342, %v536
      %v585 = vsub.f32 %v343, %v537
      %v586 = vsub.f32 %v344, %v538
      %v587 = vsub.f32 %v345, %v539
      %v588 = vsub.f32 %v346, %v540
      %v589 = vsub.f32 %v347, %v541
      %v590 = vsub.f32 %v348, %v542
      %v591 = vsub.f32 %v349, %v543
      %v592 = vsub.f32 %v350, %v544
      %v593 = vsub.f32 %v351, %v545
      %v594 = vsub.f32 %v352, %v546
      %v595 = vsub.f32 %v353, %v547
      %v596 = vsub.f32 %v354, %v548
      %v597 = vsub.f32 %v355, %v549
      %v598 = vsub.f32 %v356, %v550
      %v599 = vsub.f32 %v357, %v551
      %v600 = vsub.f32 %v358, %v552
      %v601 = vsub.f32 %v359, %v553
      %v602 = vsub.f32 %v360, %v554
      %v603 = vsub.f32 %v361, %v555
      %v604 = vsub.f32 %v362, %v556
      %v605 = vsub.f32 %v363, %v557
      %v606 = vsub.f32 %v364, %v558
      %v607 = vsub.f32 %v365, %v559
      %v608 = vsub.f32 %v366, %v560
      %v609 = vsub.f32 %v367, %v561
      %v610 = vsub.f32 %v368, %v562
      %v611 = vsub.f32 %v369, %v563
      %v612 = vsub.f32 %v370, %v564
      %v613 = vsub.f32 %v371, %v565
      %v614 = vmul.f32 %v566, %v566
      %v615 = vmul.f32 %v567, %v567
      %v616 = vmul.f32 %v568, %v568
      %v617 = vmul.f32 %v569, %v569
      %v618 = vmul.f32 %v570, %v570
      %v619 = vmul.f32 %v571, %v571
      %v620 = vmul.f32 %v572, %v572
      %v621 = vmul.f32 %v573, %v573
      %v622 = vmul.f32 %v574, %v574
      %v623 = vmul.f32 %v575, %v575
      %v624 = vmul.f32 %v576, %v576
      %v625 = vmul.f32 %v577, %v577
      %v626 = vmul.f32 %v578, %v578
      %v627 = vmul.f32 %v579, %v579
      %v628 = vmul.f32 %v580, %v580
      %v629 = vmul.f32 %v581, %v581
      %v630 = vmul.f32 %v582, %v582
      %v631 = vmul.f32 %v583, %v583
      %v632 = vmul.f32 %v584, %v584
      %v633 = vmul.f32 %v585, %v585
      %v634 = vmul.f32 %v586, %v586
      %v635 = vmul.f32 %v587, %v587
      %v636 = vmul.f32 %v588, %v588
      %v637 = vmul.f32 %v589, %v589
      %v638 = vmul.f32 %v590, %v590
      %v639 = vmul.f32 %v591, %v591
      %v640 = vmul.f32 %v592, %v592
      %v641 = vmul.f32 %v593, %v593
      %v642 = vmul.f32 %v594, %v594
      %v643 = vmul.f32 %v595, %v595
      %v644 = vmul.f32 %v596, %v596
      %v645 = vmul.f32 %v597, %v597
      %v646 = vmul.f32 %v598, %v598
      %v647 = vmul.f32 %v599, %v599
      %v648 = vmul.f32 %v600, %v600
      %v649 = vmul.f32 %v601, %v601
      %v650 = vmul.f32 %v602, %v602
      %v651 = vmul.f32 %v603, %v603
      %v652 = vmul.f32 %v604, %v604
      %v653 = vmul.f32 %v605, %v605
      %v654 = vmul.f32 %v606, %v606
      %v655 = vmul.f32 %v607, %v607
      %v656 = vmul.f32 %v608, %v608
      %v657 = vmul.f32 %v609, %v609
      %v658 = vmul.f32 %v610, %v610
      %v659 = vmul.f32 %v611, %v611
      %v660 = vmul.f32 %v612, %v612
      %v661 = vmul.f32 %v613, %v613
      %v662 = vsel %vm372, %v614, 0.0
      %663 = vadd.xlane.f32.xlu0 %v662
      %v664 = vpop.xlane.xlu0 %663
      %v665 = vsel %vm372, %v615, 0.0
      %666 = vadd.xlane.f32.xlu0 %v665
      %v667 = vpop.xlane.xlu0 %666
      %v668 = vsel %vm372, %v616, 0.0
      %669 = vadd.xlane.f32.xlu0 %v668
      %v670 = vpop.xlane.xlu0 %669
      %v671 = vsel %vm372, %v617, 0.0
      %672 = vadd.xlane.f32.xlu0 %v671
      %v673 = vpop.xlane.xlu0 %672
      %v674 = vsel %vm372, %v618, 0.0
      %675 = vadd.xlane.f32.xlu0 %v674
      %v676 = vpop.xlane.xlu0 %675
      %v677 = vsel %vm372, %v619, 0.0
      %678 = vadd.xlane.f32.xlu0 %v677
      %v679 = vpop.xlane.xlu0 %678
      %v680 = vsel %vm372, %v620, 0.0
      %681 = vadd.xlane.f32.xlu0 %v680
      %v682 = vpop.xlane.xlu0 %681
      %v683 = vsel %vm372, %v621, 0.0
      %684 = vadd.xlane.f32.xlu0 %v683
      %v685 = vpop.xlane.xlu0 %684
      %v686 = vsel %vm372, %v622, 0.0
      %687 = vadd.xlane.f32.xlu0 %v686
      %v688 = vpop.xlane.xlu0 %687
      %v689 = vsel %vm372, %v623, 0.0
      %690 = vadd.xlane.f32.xlu0 %v689
      %v691 = vpop.xlane.xlu0 %690
      %v692 = vsel %vm372, %v624, 0.0
      %693 = vadd.xlane.f32.xlu0 %v692
      %v694 = vpop.xlane.xlu0 %693
      %v695 = vsel %vm372, %v625, 0.0
      %696 = vadd.xlane.f32.xlu0 %v695
      %v697 = vpop.xlane.xlu0 %696
      %v698 = vsel %vm372, %v626, 0.0
      %699 = vadd.xlane.f32.xlu0 %v698
      %v700 = vpop.xlane.xlu0 %699
      %v701 = vsel %vm372, %v627, 0.0
      %702 = vadd.xlane.f32.xlu0 %v701
      %v703 = vpop.xlane.xlu0 %702
      %v704 = vsel %vm372, %v628, 0.0
      %705 = vadd.xlane.f32.xlu0 %v704
      %v706 = vpop.xlane.xlu0 %705
      %v707 = vsel %vm372, %v629, 0.0
      %708 = vadd.xlane.f32.xlu0 %v707
      %v709 = vpop.xlane.xlu0 %708
      %v710 = vsel %vm372, %v630, 0.0
      %711 = vadd.xlane.f32.xlu0 %v710
      %v712 = vpop.xlane.xlu0 %711
      %v713 = vsel %vm372, %v631, 0.0
      %714 = vadd.xlane.f32.xlu0 %v713
      %v715 = vpop.xlane.xlu0 %714
      %v716 = vsel %vm372, %v632, 0.0
      %717 = vadd.xlane.f32.xlu0 %v716
      %v718 = vpop.xlane.xlu0 %717
      %v719 = vsel %vm372, %v633, 0.0
      %720 = vadd.xlane.f32.xlu0 %v719
      %v721 = vpop.xlane.xlu0 %720
      %v722 = vsel %vm372, %v634, 0.0
      %723 = vadd.xlane.f32.xlu0 %v722
      %v724 = vpop.xlane.xlu0 %723
      %v725 = vsel %vm372, %v635, 0.0
      %726 = vadd.xlane.f32.xlu0 %v725
      %v727 = vpop.xlane.xlu0 %726
      %v728 = vsel %vm372, %v636, 0.0
      %729 = vadd.xlane.f32.xlu0 %v728
      %v730 = vpop.xlane.xlu0 %729
      %v731 = vsel %vm372, %v637, 0.0
      %732 = vadd.xlane.f32.xlu0 %v731
      %v733 = vpop.xlane.xlu0 %732
      %v734 = vsel %vm372, %v638, 0.0
      %735 = vadd.xlane.f32.xlu0 %v734
      %v736 = vpop.xlane.xlu0 %735
      %v737 = vsel %vm372, %v639, 0.0
      %738 = vadd.xlane.f32.xlu0 %v737
      %v739 = vpop.xlane.xlu0 %738
      %v740 = vsel %vm372, %v640, 0.0
      %741 = vadd.xlane.f32.xlu0 %v740
      %v742 = vpop.xlane.xlu0 %741
      %v743 = vsel %vm372, %v641, 0.0
      %744 = vadd.xlane.f32.xlu0 %v743
      %v745 = vpop.xlane.xlu0 %744
      %v746 = vsel %vm372, %v642, 0.0
      %747 = vadd.xlane.f32.xlu0 %v746
      %v748 = vpop.xlane.xlu0 %747
      %v749 = vsel %vm372, %v643, 0.0
      %750 = vadd.xlane.f32.xlu0 %v749
      %v751 = vpop.xlane.xlu0 %750
      %v752 = vsel %vm372, %v644, 0.0
      %753 = vadd.xlane.f32.xlu0 %v752
      %v754 = vpop.xlane.xlu0 %753
      %v755 = vsel %vm372, %v645, 0.0
      %756 = vadd.xlane.f32.xlu0 %v755
      %v757 = vpop.xlane.xlu0 %756
      %v758 = vsel %vm372, %v646, 0.0
      %759 = vadd.xlane.f32.xlu0 %v758
      %v760 = vpop.xlane.xlu0 %759
      %v761 = vsel %vm372, %v647, 0.0
      %762 = vadd.xlane.f32.xlu0 %v761
      %v763 = vpop.xlane.xlu0 %762
      %v764 = vsel %vm372, %v648, 0.0
      %765 = vadd.xlane.f32.xlu0 %v764
      %v766 = vpop.xlane.xlu0 %765
      %v767 = vsel %vm372, %v649, 0.0
      %768 = vadd.xlane.f32.xlu0 %v767
      %v769 = vpop.xlane.xlu0 %768
      %v770 = vsel %vm372, %v650, 0.0
      %771 = vadd.xlane.f32.xlu0 %v770
      %v772 = vpop.xlane.xlu0 %771
      %v773 = vsel %vm372, %v651, 0.0
      %774 = vadd.xlane.f32.xlu0 %v773
      %v775 = vpop.xlane.xlu0 %774
      %v776 = vsel %vm372, %v652, 0.0
      %777 = vadd.xlane.f32.xlu0 %v776
      %v778 = vpop.xlane.xlu0 %777
      %v779 = vsel %vm372, %v653, 0.0
      %780 = vadd.xlane.f32.xlu0 %v779
      %v781 = vpop.xlane.xlu0 %780
      %v782 = vsel %vm372, %v654, 0.0
      %783 = vadd.xlane.f32.xlu0 %v782
      %v784 = vpop.xlane.xlu0 %783
      %v785 = vsel %vm372, %v655, 0.0
      %786 = vadd.xlane.f32.xlu0 %v785
      %v787 = vpop.xlane.xlu0 %786
      %v788 = vsel %vm372, %v656, 0.0
      %789 = vadd.xlane.f32.xlu0 %v788
      %v790 = vpop.xlane.xlu0 %789
      %v791 = vsel %vm372, %v657, 0.0
      %792 = vadd.xlane.f32.xlu0 %v791
      %v793 = vpop.xlane.xlu0 %792
      %v794 = vsel %vm372, %v658, 0.0
      %795 = vadd.xlane.f32.xlu0 %v794
      %v796 = vpop.xlane.xlu0 %795
      %v797 = vsel %vm372, %v659, 0.0
      %798 = vadd.xlane.f32.xlu0 %v797
      %v799 = vpop.xlane.xlu0 %798
      %v800 = vsel %vm372, %v660, 0.0
      %801 = vadd.xlane.f32.xlu0 %v800
      %v802 = vpop.xlane.xlu0 %801
      %v803 = vsel %vm372, %v661, 0.0
      %804 = vadd.xlane.f32.xlu0 %v803
      %v805 = vpop.xlane.xlu0 %804
      %v806 = vmul.f32 %v664, %v517
      %v807 = vmul.f32 %v667, %v517
      %v808 = vmul.f32 %v670, %v517
      %v809 = vmul.f32 %v673, %v517
      %v810 = vmul.f32 %v676, %v517
      %v811 = vmul.f32 %v679, %v517
      %v812 = vmul.f32 %v682, %v517
      %v813 = vmul.f32 %v685, %v517
      %v814 = vmul.f32 %v688, %v517
      %v815 = vmul.f32 %v691, %v517
      %v816 = vmul.f32 %v694, %v517
      %v817 = vmul.f32 %v697, %v517
      %v818 = vmul.f32 %v700, %v517
      %v819 = vmul.f32 %v703, %v517
      %v820 = vmul.f32 %v706, %v517
      %v821 = vmul.f32 %v709, %v517
      %v822 = vmul.f32 %v712, %v517
      %v823 = vmul.f32 %v715, %v517
      %v824 = vmul.f32 %v718, %v517
      %v825 = vmul.f32 %v721, %v517
      %v826 = vmul.f32 %v724, %v517
      %v827 = vmul.f32 %v727, %v517
      %v828 = vmul.f32 %v730, %v517
      %v829 = vmul.f32 %v733, %v517
      %v830 = vmul.f32 %v736, %v517
      %v831 = vmul.f32 %v739, %v517
      %v832 = vmul.f32 %v742, %v517
      %v833 = vmul.f32 %v745, %v517
      %v834 = vmul.f32 %v748, %v517
      %v835 = vmul.f32 %v751, %v517
      %v836 = vmul.f32 %v754, %v517
      %v837 = vmul.f32 %v757, %v517
      %v838 = vmul.f32 %v760, %v517
      %v839 = vmul.f32 %v763, %v517
      %v840 = vmul.f32 %v766, %v517
      %v841 = vmul.f32 %v769, %v517
      %v842 = vmul.f32 %v772, %v517
      %v843 = vmul.f32 %v775, %v517
      %v844 = vmul.f32 %v778, %v517
      %v845 = vmul.f32 %v781, %v517
      %v846 = vmul.f32 %v784, %v517
      %v847 = vmul.f32 %v787, %v517
      %v848 = vmul.f32 %v790, %v517
      %v849 = vmul.f32 %v793, %v517
      %v850 = vmul.f32 %v796, %v517
      %v851 = vmul.f32 %v799, %v517
      %v852 = vmul.f32 %v802, %v517
      %v853 = vmul.f32 %v805, %v517
      %v854 = vadd.f32 %v806, 1e-05
      %v855 = vadd.f32 %v807, 1e-05
      %v856 = vadd.f32 %v808, 1e-05
      %v857 = vadd.f32 %v809, 1e-05
      %v858 = vadd.f32 %v810, 1e-05
      %v859 = vadd.f32 %v811, 1e-05
      %v860 = vadd.f32 %v812, 1e-05
      %v861 = vadd.f32 %v813, 1e-05
      %v862 = vadd.f32 %v814, 1e-05
      %v863 = vadd.f32 %v815, 1e-05
      %v864 = vadd.f32 %v816, 1e-05
      %v865 = vadd.f32 %v817, 1e-05
      %v866 = vadd.f32 %v818, 1e-05
      %v867 = vadd.f32 %v819, 1e-05
      %v868 = vadd.f32 %v820, 1e-05
      %v869 = vadd.f32 %v821, 1e-05
      %v870 = vadd.f32 %v822, 1e-05
      %v871 = vadd.f32 %v823, 1e-05
      %v872 = vadd.f32 %v824, 1e-05
      %v873 = vadd.f32 %v825, 1e-05
      %v874 = vadd.f32 %v826, 1e-05
      %v875 = vadd.f32 %v827, 1e-05
      %v876 = vadd.f32 %v828, 1e-05
      %v877 = vadd.f32 %v829, 1e-05
      %v878 = vadd.f32 %v830, 1e-05
      %v879 = vadd.f32 %v831, 1e-05
      %v880 = vadd.f32 %v832, 1e-05
      %v881 = vadd.f32 %v833, 1e-05
      %v882 = vadd.f32 %v834, 1e-05
      %v883 = vadd.f32 %v835, 1e-05
      %v884 = vadd.f32 %v836, 1e-05
      %v885 = vadd.f32 %v837, 1e-05
      %v886 = vadd.f32 %v838, 1e-05
      %v887 = vadd.f32 %v839, 1e-05
      %v888 = vadd.f32 %v840, 1e-05
      %v889 = vadd.f32 %v841, 1e-05
      %v890 = vadd.f32 %v842, 1e-05
      %v891 = vadd.f32 %v843, 1e-05
      %v892 = vadd.f32 %v844, 1e-05
      %v893 = vadd.f32 %v845, 1e-05
      %v894 = vadd.f32 %v846, 1e-05
      %v895 = vadd.f32 %v847, 1e-05
      %v896 = vadd.f32 %v848, 1e-05
      %v897 = vadd.f32 %v849, 1e-05
      %v898 = vadd.f32 %v850, 1e-05
      %v899 = vadd.f32 %v851, 1e-05
      %v900 = vadd.f32 %v852, 1e-05
      %v901 = vadd.f32 %v853, 1e-05
      %v902 = vrsqrt.pop %v854
      %v903 = vrsqrt.pop %v855
      %v904 = vrsqrt.pop %v856
      %v905 = vrsqrt.pop %v857
      %v906 = vrsqrt.pop %v858
      %v907 = vrsqrt.pop %v859
      %v908 = vrsqrt.pop %v860
      %v909 = vrsqrt.pop %v861
      %v910 = vrsqrt.pop %v862
      %v911 = vrsqrt.pop %v863
      %v912 = vrsqrt.pop %v864
      %v913 = vrsqrt.pop %v865
      %v914 = vrsqrt.pop %v866
      %v915 = vrsqrt.pop %v867
      %v916 = vrsqrt.pop %v868
      %v917 = vrsqrt.pop %v869
      %v918 = vrsqrt.pop %v870
      %v919 = vrsqrt.pop %v871
      %v920 = vrsqrt.pop %v872
      %v921 = vrsqrt.pop %v873
      %v922 = vrsqrt.pop %v874
      %v923 = vrsqrt.pop %v875
      %v924 = vrsqrt.pop %v876
      %v925 = vrsqrt.pop %v877
      %v926 = vrsqrt.pop %v878
      %v927 = vrsqrt.pop %v879
      %v928 = vrsqrt.pop %v880
      %v929 = vrsqrt.pop %v881
      %v930 = vrsqrt.pop %v882
      %v931 = vrsqrt.pop %v883
      %v932 = vrsqrt.pop %v884
      %v933 = vrsqrt.pop %v885
      %v934 = vrsqrt.pop %v886
      %v935 = vrsqrt.pop %v887
      %v936 = vrsqrt.pop %v888
      %v937 = vrsqrt.pop %v889
      %v938 = vrsqrt.pop %v890
      %v939 = vrsqrt.pop %v891
      %v940 = vrsqrt.pop %v892
      %v941 = vrsqrt.pop %v893
      %v942 = vrsqrt.pop %v894
      %v943 = vrsqrt.pop %v895
      %v944 = vrsqrt.pop %v896
      %v945 = vrsqrt.pop %v897
      %v946 = vrsqrt.pop %v898
      %v947 = vrsqrt.pop %v899
      %v948 = vrsqrt.pop %v900
      %v949 = vrsqrt.pop %v901
      %v950 = vmul.f32 %v566, %v902
      %v951 = vmul.f32 %v567, %v903
      %v952 = vmul.f32 %v568, %v904
      %v953 = vmul.f32 %v569, %v905
      %v954 = vmul.f32 %v570, %v906
      %v955 = vmul.f32 %v571, %v907
      %v956 = vmul.f32 %v572, %v908
      %v957 = vmul.f32 %v573, %v909
      %v958 = vmul.f32 %v574, %v910
      %v959 = vmul.f32 %v575, %v911
      %v960 = vmul.f32 %v576, %v912
      %v961 = vmul.f32 %v577, %v913
      %v962 = vmul.f32 %v578, %v914
      %v963 = vmul.f32 %v579, %v915
      %v964 = vmul.f32 %v580, %v916
      %v965 = vmul.f32 %v581, %v917
      %v966 = vmul.f32 %v582, %v918
      %v967 = vmul.f32 %v583, %v919
      %v968 = vmul.f32 %v584, %v920
      %v969 = vmul.f32 %v585, %v921
      %v970 = vmul.f32 %v586, %v922
      %v971 = vmul.f32 %v587, %v923
      %v972 = vmul.f32 %v588, %v924
      %v973 = vmul.f32 %v589, %v925
      %v974 = vmul.f32 %v590, %v926
      %v975 = vmul.f32 %v591, %v927
      %v976 = vmul.f32 %v592, %v928
      %v977 = vmul.f32 %v593, %v929
      %v978 = vmul.f32 %v594, %v930
      %v979 = vmul.f32 %v595, %v931
      %v980 = vmul.f32 %v596, %v932
      %v981 = vmul.f32 %v597, %v933
      %v982 = vmul.f32 %v598, %v934
      %v983 = vmul.f32 %v599, %v935
      %v984 = vmul.f32 %v600, %v936
      %v985 = vmul.f32 %v601, %v937
      %v986 = vmul.f32 %v602, %v938
      %v987 = vmul.f32 %v603, %v939
      %v988 = vmul.f32 %v604, %v940
      %v989 = vmul.f32 %v605, %v941
      %v990 = vmul.f32 %v606, %v942
      %v991 = vmul.f32 %v607, %v943
      %v992 = vmul.f32 %v608, %v944
      %v993 = vmul.f32 %v609, %v945
      %v994 = vmul.f32 %v610, %v946
      %v995 = vmul.f32 %v611, %v947
      %v996 = vmul.f32 %v612, %v948
      %v997 = vmul.f32 %v613, %v949
      %v998 = vld [vmem:[%s2] sm:$0x1]
      %v1000 = vlaneseq
      %v1001 = vshrl.u32 %v1000, 7
      %v1002 = vsub.s32 0, %v1001
      %v1003 = vrot.slane %v998, %v1002
      %v1005 = vmul.f32 %v950, %v1003
      %v1006 = vmul.f32 %v951, %v1003
      %v1007 = vmul.f32 %v952, %v1003
      %v1008 = vmul.f32 %v953, %v1003
      %v1009 = vmul.f32 %v954, %v1003
      %v1010 = vmul.f32 %v955, %v1003
      %v1011 = vmul.f32 %v956, %v1003
      %v1012 = vmul.f32 %v957, %v1003
      %v1013 = vmul.f32 %v958, %v1003
      %v1014 = vmul.f32 %v959, %v1003
      %v1015 = vmul.f32 %v960, %v1003
      %v1016 = vmul.f32 %v961, %v1003
      %v1017 = vmul.f32 %v962, %v1003
      %v1018 = vmul.f32 %v963, %v1003
      %v1019 = vmul.f32 %v964, %v1003
      %v1020 = vmul.f32 %v965, %v1003
      %v1021 = vmul.f32 %v966, %v1003
      %v1022 = vmul.f32 %v967, %v1003
      %v1023 = vmul.f32 %v968, %v1003
      %v1024 = vmul.f32 %v969, %v1003
      %v1025 = vmul.f32 %v970, %v1003
      %v1026 = vmul.f32 %v971, %v1003
      %v1027 = vmul.f32 %v972, %v1003
      %v1028 = vmul.f32 %v973, %v1003
      %v1029 = vmul.f32 %v974, %v1003
      %v1030 = vmul.f32 %v975, %v1003
      %v1031 = vmul.f32 %v976, %v1003
      %v1032 = vmul.f32 %v977, %v1003
      %v1033 = vmul.f32 %v978, %v1003
      %v1034 = vmul.f32 %v979, %v1003
      %v1035 = vmul.f32 %v980, %v1003
      %v1036 = vmul.f32 %v981, %v1003
      %v1037 = vmul.f32 %v982, %v1003
      %v1038 = vmul.f32 %v983, %v1003
      %v1039 = vmul.f32 %v984, %v1003
      %v1040 = vmul.f32 %v985, %v1003
      %v1041 = vmul.f32 %v986, %v1003
      %v1042 = vmul.f32 %v987, %v1003
      %v1043 = vmul.f32 %v988, %v1003
      %v1044 = vmul.f32 %v989, %v1003
      %v1045 = vmul.f32 %v990, %v1003
      %v1046 = vmul.f32 %v991, %v1003
      %v1047 = vmul.f32 %v992, %v1003
      %v1048 = vmul.f32 %v993, %v1003
      %v1049 = vmul.f32 %v994, %v1003
      %v1050 = vmul.f32 %v995, %v1003
      %v1051 = vmul.f32 %v996, %v1003
      %v1052 = vmul.f32 %v997, %v1003
      %v1053 = vld [vmem:[%s3] sm:$0x1]
      %v1055 = vlaneseq
      %v1056 = vshrl.u32 %v1055, 7
      %v1057 = vsub.s32 0, %v1056
      %v1058 = vrot.slane %v1053, %v1057
      %v1060 = vadd.f32 %v1005, %v1058
      %v1061 = vadd.f32 %v1006, %v1058
      %v1062 = vadd.f32 %v1007, %v1058
      %v1063 = vadd.f32 %v1008, %v1058
      %v1064 = vadd.f32 %v1009, %v1058
      %v1065 = vadd.f32 %v1010, %v1058
      %v1066 = vadd.f32 %v1011, %v1058
      %v1067 = vadd.f32 %v1012, %v1058
      %v1068 = vadd.f32 %v1013, %v1058
      %v1069 = vadd.f32 %v1014, %v1058
      %v1070 = vadd.f32 %v1015, %v1058
      %v1071 = vadd.f32 %v1016, %v1058
      %v1072 = vadd.f32 %v1017, %v1058
      %v1073 = vadd.f32 %v1018, %v1058
      %v1074 = vadd.f32 %v1019, %v1058
      %v1075 = vadd.f32 %v1020, %v1058
      %v1076 = vadd.f32 %v1021, %v1058
      %v1077 = vadd.f32 %v1022, %v1058
      %v1078 = vadd.f32 %v1023, %v1058
      %v1079 = vadd.f32 %v1024, %v1058
      %v1080 = vadd.f32 %v1025, %v1058
      %v1081 = vadd.f32 %v1026, %v1058
      %v1082 = vadd.f32 %v1027, %v1058
      %v1083 = vadd.f32 %v1028, %v1058
      %v1084 = vadd.f32 %v1029, %v1058
      %v1085 = vadd.f32 %v1030, %v1058
      %v1086 = vadd.f32 %v1031, %v1058
      %v1087 = vadd.f32 %v1032, %v1058
      %v1088 = vadd.f32 %v1033, %v1058
      %v1089 = vadd.f32 %v1034, %v1058
      %v1090 = vadd.f32 %v1035, %v1058
      %v1091 = vadd.f32 %v1036, %v1058
      %v1092 = vadd.f32 %v1037, %v1058
      %v1093 = vadd.f32 %v1038, %v1058
      %v1094 = vadd.f32 %v1039, %v1058
      %v1095 = vadd.f32 %v1040, %v1058
      %v1096 = vadd.f32 %v1041, %v1058
      %v1097 = vadd.f32 %v1042, %v1058
      %v1098 = vadd.f32 %v1043, %v1058
      %v1099 = vadd.f32 %v1044, %v1058
      %v1100 = vadd.f32 %v1045, %v1058
      %v1101 = vadd.f32 %v1046, %v1058
      %v1102 = vadd.f32 %v1047, %v1058
      %v1103 = vadd.f32 %v1048, %v1058
      %v1104 = vadd.f32 %v1049, %v1058
      %v1105 = vadd.f32 %v1050, %v1058
      %v1106 = vadd.f32 %v1051, %v1058
      %v1107 = vadd.f32 %v1052, %v1058
      %v1108 = vpack.c.bf16 %v1061, %v1060
      %v1109 = vpack.c.bf16 %v1063, %v1062
      %v1110 = vpack.c.bf16 %v1065, %v1064
      %v1111 = vpack.c.bf16 %v1067, %v1066
      %v1112 = vpack.c.bf16 %v1069, %v1068
      %v1113 = vpack.c.bf16 %v1071, %v1070
      %v1114 = vpack.c.bf16 %v1073, %v1072
      %v1115 = vpack.c.bf16 %v1075, %v1074
      %v1116 = vpack.c.bf16 %v1077, %v1076
      %v1117 = vpack.c.bf16 %v1079, %v1078
      %v1118 = vpack.c.bf16 %v1081, %v1080
      %v1119 = vpack.c.bf16 %v1083, %v1082
      %v1120 = vpack.c.bf16 %v1085, %v1084
      %v1121 = vpack.c.bf16 %v1087, %v1086
      %v1122 = vpack.c.bf16 %v1089, %v1088
      %v1123 = vpack.c.bf16 %v1091, %v1090
      %v1124 = vpack.c.bf16 %v1093, %v1092
      %v1125 = vpack.c.bf16 %v1095, %v1094
      %v1126 = vpack.c.bf16 %v1097, %v1096
      %v1127 = vpack.c.bf16 %v1099, %v1098
      %v1128 = vpack.c.bf16 %v1101, %v1100
      %v1129 = vpack.c.bf16 %v1103, %v1102
      %v1130 = vpack.c.bf16 %v1105, %v1104
      %v1131 = vpack.c.bf16 %v1107, %v1106
      %v1156 = vunpack.c.l.b16 %v1108
      %v1157 = vunpack.c.h.b16 %v1108
      %v1158 = vunpack.c.l.b16 %v1109
      %v1159 = vunpack.c.h.b16 %v1109
      %v1160 = vunpack.c.l.b16 %v1110
      %v1161 = vunpack.c.h.b16 %v1110
      %v1162 = vunpack.c.l.b16 %v1111
      %v1163 = vunpack.c.h.b16 %v1111
      %v1164 = vunpack.c.l.b16 %v1112
      %v1165 = vunpack.c.h.b16 %v1112
      %v1166 = vunpack.c.l.b16 %v1113
      %v1167 = vunpack.c.h.b16 %v1113
      %v1168 = vunpack.c.l.b16 %v1114
      %v1169 = vunpack.c.h.b16 %v1114
      %v1170 = vunpack.c.l.b16 %v1115
      %v1171 = vunpack.c.h.b16 %v1115
      %v1172 = vunpack.c.l.b16 %v1116
      %v1173 = vunpack.c.h.b16 %v1116
      %v1174 = vunpack.c.l.b16 %v1117
      %v1175 = vunpack.c.h.b16 %v1117
      %v1176 = vunpack.c.l.b16 %v1118
      %v1177 = vunpack.c.h.b16 %v1118
      %v1178 = vunpack.c.l.b16 %v1119
      %v1179 = vunpack.c.h.b16 %v1119
      %v1180 = vunpack.c.l.b16 %v1120
      %v1181 = vunpack.c.h.b16 %v1120
      %v1182 = vunpack.c.l.b16 %v1121
      %v1183 = vunpack.c.h.b16 %v1121
      %v1184 = vunpack.c.l.b16 %v1122
      %v1185 = vunpack.c.h.b16 %v1122
      %v1186 = vunpack.c.l.b16 %v1123
      %v1187 = vunpack.c.h.b16 %v1123
      %v1188 = vunpack.c.l.b16 %v1124
      %v1189 = vunpack.c.h.b16 %v1124
      %v1190 = vunpack.c.l.b16 %v1125
      %v1191 = vunpack.c.h.b16 %v1125
      %v1192 = vunpack.c.l.b16 %v1126
      %v1193 = vunpack.c.h.b16 %v1126
      %v1194 = vunpack.c.l.b16 %v1127
      %v1195 = vunpack.c.h.b16 %v1127
      %v1196 = vunpack.c.l.b16 %v1128
      %v1197 = vunpack.c.h.b16 %v1128
      %v1198 = vunpack.c.l.b16 %v1129
      %v1199 = vunpack.c.h.b16 %v1129
      %v1200 = vunpack.c.l.b16 %v1130
      %v1201 = vunpack.c.h.b16 %v1130
      %v1202 = vunpack.c.l.b16 %v1131
      %v1203 = vunpack.c.h.b16 %v1131
      %v1204 = vpack.c.b16 %v1156, %v1156
      %v1205 = vpack.c.b16 %v1157, %v1157
      %v1206 = vpack.c.b16 %v1158, %v1158
      %v1207 = vpack.c.b16 %v1159, %v1159
      %v1208 = vpack.c.b16 %v1160, %v1160
      %v1209 = vpack.c.b16 %v1161, %v1161
      %v1210 = vpack.c.b16 %v1162, %v1162
      %v1211 = vpack.c.b16 %v1163, %v1163
      %v1212 = vpack.c.b16 %v1164, %v1164
      %v1213 = vpack.c.b16 %v1165, %v1165
      %v1214 = vpack.c.b16 %v1166, %v1166
      %v1215 = vpack.c.b16 %v1167, %v1167
      %v1216 = vpack.c.b16 %v1168, %v1168
      %v1217 = vpack.c.b16 %v1169, %v1169
      %v1218 = vpack.c.b16 %v1170, %v1170
      %v1219 = vpack.c.b16 %v1171, %v1171
      %v1220 = vpack.c.b16 %v1172, %v1172
      %v1221 = vpack.c.b16 %v1173, %v1173
      %v1222 = vpack.c.b16 %v1174, %v1174
      %v1223 = vpack.c.b16 %v1175, %v1175
      %v1224 = vpack.c.b16 %v1176, %v1176
      %v1225 = vpack.c.b16 %v1177, %v1177
      %v1226 = vpack.c.b16 %v1178, %v1178
      %v1227 = vpack.c.b16 %v1179, %v1179
      %v1228 = vpack.c.b16 %v1180, %v1180
      %v1229 = vpack.c.b16 %v1181, %v1181
      %v1230 = vpack.c.b16 %v1182, %v1182
      %v1231 = vpack.c.b16 %v1183, %v1183
      %v1232 = vpack.c.b16 %v1184, %v1184
      %v1233 = vpack.c.b16 %v1185, %v1185
      %v1234 = vpack.c.b16 %v1186, %v1186
      %v1235 = vpack.c.b16 %v1187, %v1187
      %v1236 = vpack.c.b16 %v1188, %v1188
      %v1237 = vpack.c.b16 %v1189, %v1189
      %v1238 = vpack.c.b16 %v1190, %v1190
      %v1239 = vpack.c.b16 %v1191, %v1191
      %v1240 = vpack.c.b16 %v1192, %v1192
      %v1241 = vpack.c.b16 %v1193, %v1193
      %v1242 = vpack.c.b16 %v1194, %v1194
      %v1243 = vpack.c.b16 %v1195, %v1195
      %v1244 = vpack.c.b16 %v1196, %v1196
      %v1245 = vpack.c.b16 %v1197, %v1197
      %v1246 = vpack.c.b16 %v1198, %v1198
      %v1247 = vpack.c.b16 %v1199, %v1199
      %v1248 = vpack.c.b16 %v1200, %v1200
      %v1249 = vpack.c.b16 %v1201, %v1201
      %v1250 = vpack.c.b16 %v1202, %v1202
      %v1251 = vpack.c.b16 %v1203, %v1203
      %vm1300 = vcmask 60416
      %1301 = vst.msk [vmem:[%s312] sm:$0xf] %vm1300, %v1204
      %1302 = vst.msk [vmem:[%s312 + $0x4] sm:$0xf] %vm1300, %v1205
      %1303 = vst.msk [vmem:[%s312 + $0x8] sm:$0xf] %vm1300, %v1206
      %1304 = vst.msk [vmem:[%s312 + $0xc] sm:$0xf] %vm1300, %v1207
      %1305 = vst.msk [vmem:[%s312 + $0x10] sm:$0xf] %vm1300, %v1208
      %1306 = vst.msk [vmem:[%s312 + $0x14] sm:$0xf] %vm1300, %v1209
      %1307 = vst.msk [vmem:[%s312 + $0x18] sm:$0xf] %vm1300, %v1210
      %1308 = vst.msk [vmem:[%s312 + $0x1c] sm:$0xf] %vm1300, %v1211
      %1309 = vst.msk [vmem:[%s312 + $0x20] sm:$0xf] %vm1300, %v1212
      %1310 = vst.msk [vmem:[%s312 + $0x24] sm:$0xf] %vm1300, %v1213
      %1311 = vst.msk [vmem:[%s312 + $0x28] sm:$0xf] %vm1300, %v1214
      %1312 = vst.msk [vmem:[%s312 + $0x2c] sm:$0xf] %vm1300, %v1215
      %1313 = vst.msk [vmem:[%s312 + $0x30] sm:$0xf] %vm1300, %v1216
      %1314 = vst.msk [vmem:[%s312 + $0x34] sm:$0xf] %vm1300, %v1217
      %1315 = vst.msk [vmem:[%s312 + $0x38] sm:$0xf] %vm1300, %v1218
      %1316 = vst.msk [vmem:[%s312 + $0x3c] sm:$0xf] %vm1300, %v1219
      %1317 = vst.msk [vmem:[%s312 + $0x40] sm:$0xf] %vm1300, %v1220
      %1318 = vst.msk [vmem:[%s312 + $0x44] sm:$0xf] %vm1300, %v1221
      %1319 = vst.msk [vmem:[%s312 + $0x48] sm:$0xf] %vm1300, %v1222
      %1320 = vst.msk [vmem:[%s312 + $0x4c] sm:$0xf] %vm1300, %v1223
      %1321 = vst.msk [vmem:[%s312 + $0x50] sm:$0xf] %vm1300, %v1224
      %1322 = vst.msk [vmem:[%s312 + $0x54] sm:$0xf] %vm1300, %v1225
      %1323 = vst.msk [vmem:[%s312 + $0x58] sm:$0xf] %vm1300, %v1226
      %1324 = vst.msk [vmem:[%s312 + $0x5c] sm:$0xf] %vm1300, %v1227
      %1325 = vst.msk [vmem:[%s312 + $0x60] sm:$0xf] %vm1300, %v1228
      %1326 = vst.msk [vmem:[%s312 + $0x64] sm:$0xf] %vm1300, %v1229
      %1327 = vst.msk [vmem:[%s312 + $0x68] sm:$0xf] %vm1300, %v1230
      %1328 = vst.msk [vmem:[%s312 + $0x6c] sm:$0xf] %vm1300, %v1231
      %1329 = vst.msk [vmem:[%s312 + $0x70] sm:$0xf] %vm1300, %v1232
      %1330 = vst.msk [vmem:[%s312 + $0x74] sm:$0xf] %vm1300, %v1233
      %1331 = vst.msk [vmem:[%s312 + $0x78] sm:$0xf] %vm1300, %v1234
      %1332 = vst.msk [vmem:[%s312 + $0x7c] sm:$0xf] %vm1300, %v1235
      %1333 = vst.msk [vmem:[%s312 + $0x80] sm:$0xf] %vm1300, %v1236
      %1334 = vst.msk [vmem:[%s312 + $0x84] sm:$0xf] %vm1300, %v1237
      %1335 = vst.msk [vmem:[%s312 + $0x88] sm:$0xf] %vm1300, %v1238
      %1336 = vst.msk [vmem:[%s312 + $0x8c] sm:$0xf] %vm1300, %v1239
      %1337 = vst.msk [vmem:[%s312 + $0x90] sm:$0xf] %vm1300, %v1240
      %1338 = vst.msk [vmem:[%s312 + $0x94] sm:$0xf] %vm1300, %v1241
      %1339 = vst.msk [vmem:[%s312 + $0x98] sm:$0xf] %vm1300, %v1242
      %1340 = vst.msk [vmem:[%s312 + $0x9c] sm:$0xf] %vm1300, %v1243
      %1341 = vst.msk [vmem:[%s312 + $0xa0] sm:$0xf] %vm1300, %v1244
      %1342 = vst.msk [vmem:[%s312 + $0xa4] sm:$0xf] %vm1300, %v1245
      %1343 = vst.msk [vmem:[%s312 + $0xa8] sm:$0xf] %vm1300, %v1246
      %1344 = vst.msk [vmem:[%s312 + $0xac] sm:$0xf] %vm1300, %v1247
      %1345 = vst.msk [vmem:[%s312 + $0xb0] sm:$0xf] %vm1300, %v1248
      %1346 = vst.msk [vmem:[%s312 + $0xb4] sm:$0xf] %vm1300, %v1249
      %1347 = vst.msk [vmem:[%s312 + $0xb8] sm:$0xf] %vm1300, %v1250
      %1348 = vst.msk [vmem:[%s312 + $0xbc] sm:$0xf] %vm1300, %v1251
      %v1349 = vld [vmem:[%s302] sm:$0xff]
      %v1350 = vld [vmem:[%s302 + $0x8] sm:$0xff]
      %v1351 = vld [vmem:[%s302 + $0x10] sm:$0xff]
      %v1352 = vld [vmem:[%s302 + $0x18] sm:$0xff]
      %v1353 = vld [vmem:[%s302 + $0x20] sm:$0xff]
      %v1354 = vld [vmem:[%s302 + $0x28] sm:$0xff]
      %v1355 = vld [vmem:[%s302 + $0x30] sm:$0xff]
      %v1356 = vld [vmem:[%s302 + $0x38] sm:$0xff]
      %v1357 = vld [vmem:[%s302 + $0x40] sm:$0xff]
      %v1358 = vld [vmem:[%s302 + $0x48] sm:$0xff]
      %v1359 = vld [vmem:[%s302 + $0x50] sm:$0xff]
      %v1360 = vld [vmem:[%s302 + $0x58] sm:$0xff]
      %v1361 = vld [vmem:[%s302 + $0x60] sm:$0xff]
      %v1362 = vld [vmem:[%s302 + $0x68] sm:$0xff]
      %v1363 = vld [vmem:[%s302 + $0x70] sm:$0xff]
      %v1364 = vld [vmem:[%s302 + $0x78] sm:$0xff]
      %v1365 = vld [vmem:[%s302 + $0x80] sm:$0xff]
      %v1366 = vld [vmem:[%s302 + $0x88] sm:$0xff]
      %v1367 = vld [vmem:[%s302 + $0x90] sm:$0xff]
      %v1368 = vld [vmem:[%s302 + $0x98] sm:$0xff]
      %v1369 = vld [vmem:[%s302 + $0xa0] sm:$0xff]
      %v1370 = vld [vmem:[%s302 + $0xa8] sm:$0xff]
      %v1371 = vld [vmem:[%s302 + $0xb0] sm:$0xff]
      %v1372 = vld [vmem:[%s302 + $0xb8] sm:$0xff]
      %v1373 = vld [vmem:[%s302 + $0xc0] sm:$0xff]
      %v1374 = vld [vmem:[%s302 + $0xc8] sm:$0xff]
      %v1375 = vld [vmem:[%s302 + $0xd0] sm:$0xff]
      %v1376 = vld [vmem:[%s302 + $0xd8] sm:$0xff]
      %v1377 = vld [vmem:[%s302 + $0xe0] sm:$0xff]
      %v1378 = vld [vmem:[%s302 + $0xe8] sm:$0xff]
      %v1379 = vld [vmem:[%s302 + $0xf0] sm:$0xff]
      %v1380 = vld [vmem:[%s302 + $0xf8] sm:$0xff]
      %v1381 = vld [vmem:[%s302 + $0x100] sm:$0xff]
      %v1382 = vld [vmem:[%s302 + $0x108] sm:$0xff]
      %v1383 = vld [vmem:[%s302 + $0x110] sm:$0xff]
      %v1384 = vld [vmem:[%s302 + $0x118] sm:$0xff]
      %v1385 = vld [vmem:[%s302 + $0x120] sm:$0xff]
      %v1386 = vld [vmem:[%s302 + $0x128] sm:$0xff]
      %v1387 = vld [vmem:[%s302 + $0x130] sm:$0xff]
      %v1388 = vld [vmem:[%s302 + $0x138] sm:$0xff]
      %v1389 = vld [vmem:[%s302 + $0x140] sm:$0xff]
      %v1390 = vld [vmem:[%s302 + $0x148] sm:$0xff]
      %v1391 = vld [vmem:[%s302 + $0x150] sm:$0xff]
      %v1392 = vld [vmem:[%s302 + $0x158] sm:$0xff]
      %v1393 = vld [vmem:[%s302 + $0x160] sm:$0xff]
      %v1394 = vld [vmem:[%s302 + $0x168] sm:$0xff]
      %v1395 = vld [vmem:[%s302 + $0x170] sm:$0xff]
      %v1396 = vld [vmem:[%s302 + $0x178] sm:$0xff]
      %v1397 = vsel %vm372, %v1349, 0.0
      %1398 = vadd.xlane.f32.xlu0 %v1397
      %v1399 = vpop.xlane.xlu0 %1398
      %v1400 = vsel %vm372, %v1350, 0.0
      %1401 = vadd.xlane.f32.xlu0 %v1400
      %v1402 = vpop.xlane.xlu0 %1401
      %v1403 = vsel %vm372, %v1351, 0.0
      %1404 = vadd.xlane.f32.xlu0 %v1403
      %v1405 = vpop.xlane.xlu0 %1404
      %v1406 = vsel %vm372, %v1352, 0.0
      %1407 = vadd.xlane.f32.xlu0 %v1406
      %v1408 = vpop.xlane.xlu0 %1407
      %v1409 = vsel %vm372, %v1353, 0.0
      %1410 = vadd.xlane.f32.xlu0 %v1409
      %v1411 = vpop.xlane.xlu0 %1410
      %v1412 = vsel %vm372, %v1354, 0.0
      %1413 = vadd.xlane.f32.xlu0 %v1412
      %v1414 = vpop.xlane.xlu0 %1413
      %v1415 = vsel %vm372, %v1355, 0.0
      %1416 = vadd.xlane.f32.xlu0 %v1415
      %v1417 = vpop.xlane.xlu0 %1416
      %v1418 = vsel %vm372, %v1356, 0.0
      %1419 = vadd.xlane.f32.xlu0 %v1418
      %v1420 = vpop.xlane.xlu0 %1419
      %v1421 = vsel %vm372, %v1357, 0.0
      %1422 = vadd.xlane.f32.xlu0 %v1421
      %v1423 = vpop.xlane.xlu0 %1422
      %v1424 = vsel %vm372, %v1358, 0.0
      %1425 = vadd.xlane.f32.xlu0 %v1424
      %v1426 = vpop.xlane.xlu0 %1425
      %v1427 = vsel %vm372, %v1359, 0.0
      %1428 = vadd.xlane.f32.xlu0 %v1427
      %v1429 = vpop.xlane.xlu0 %1428
      %v1430 = vsel %vm372, %v1360, 0.0
      %1431 = vadd.xlane.f32.xlu0 %v1430
      %v1432 = vpop.xlane.xlu0 %1431
      %v1433 = vsel %vm372, %v1361, 0.0
      %1434 = vadd.xlane.f32.xlu0 %v1433
      %v1435 = vpop.xlane.xlu0 %1434
      %v1436 = vsel %vm372, %v1362, 0.0
      %1437 = vadd.xlane.f32.xlu0 %v1436
      %v1438 = vpop.xlane.xlu0 %1437
      %v1439 = vsel %vm372, %v1363, 0.0
      %1440 = vadd.xlane.f32.xlu0 %v1439
      %v1441 = vpop.xlane.xlu0 %1440
      %v1442 = vsel %vm372, %v1364, 0.0
      %1443 = vadd.xlane.f32.xlu0 %v1442
      %v1444 = vpop.xlane.xlu0 %1443
      %v1445 = vsel %vm372, %v1365, 0.0
      %1446 = vadd.xlane.f32.xlu0 %v1445
      %v1447 = vpop.xlane.xlu0 %1446
      %v1448 = vsel %vm372, %v1366, 0.0
      %1449 = vadd.xlane.f32.xlu0 %v1448
      %v1450 = vpop.xlane.xlu0 %1449
      %v1451 = vsel %vm372, %v1367, 0.0
      %1452 = vadd.xlane.f32.xlu0 %v1451
      %v1453 = vpop.xlane.xlu0 %1452
      %v1454 = vsel %vm372, %v1368, 0.0
      %1455 = vadd.xlane.f32.xlu0 %v1454
      %v1456 = vpop.xlane.xlu0 %1455
      %v1457 = vsel %vm372, %v1369, 0.0
      %1458 = vadd.xlane.f32.xlu0 %v1457
      %v1459 = vpop.xlane.xlu0 %1458
      %v1460 = vsel %vm372, %v1370, 0.0
      %1461 = vadd.xlane.f32.xlu0 %v1460
      %v1462 = vpop.xlane.xlu0 %1461
      %v1463 = vsel %vm372, %v1371, 0.0
      %1464 = vadd.xlane.f32.xlu0 %v1463
      %v1465 = vpop.xlane.xlu0 %1464
      %v1466 = vsel %vm372, %v1372, 0.0
      %1467 = vadd.xlane.f32.xlu0 %v1466
      %v1468 = vpop.xlane.xlu0 %1467
      %v1469 = vsel %vm372, %v1373, 0.0
      %1470 = vadd.xlane.f32.xlu0 %v1469
      %v1471 = vpop.xlane.xlu0 %1470
      %v1472 = vsel %vm372, %v1374, 0.0
      %1473 = vadd.xlane.f32.xlu0 %v1472
      %v1474 = vpop.xlane.xlu0 %1473
      %v1475 = vsel %vm372, %v1375, 0.0
      %1476 = vadd.xlane.f32.xlu0 %v1475
      %v1477 = vpop.xlane.xlu0 %1476
      %v1478 = vsel %vm372, %v1376, 0.0
      %1479 = vadd.xlane.f32.xlu0 %v1478
      %v1480 = vpop.xlane.xlu0 %1479
      %v1481 = vsel %vm372, %v1377, 0.0
      %1482 = vadd.xlane.f32.xlu0 %v1481
      %v1483 = vpop.xlane.xlu0 %1482
      %v1484 = vsel %vm372, %v1378, 0.0
      %1485 = vadd.xlane.f32.xlu0 %v1484
      %v1486 = vpop.xlane.xlu0 %1485
      %v1487 = vsel %vm372, %v1379, 0.0
      %1488 = vadd.xlane.f32.xlu0 %v1487
      %v1489 = vpop.xlane.xlu0 %1488
      %v1490 = vsel %vm372, %v1380, 0.0
      %1491 = vadd.xlane.f32.xlu0 %v1490
      %v1492 = vpop.xlane.xlu0 %1491
      %v1493 = vsel %vm372, %v1381, 0.0
      %1494 = vadd.xlane.f32.xlu0 %v1493
      %v1495 = vpop.xlane.xlu0 %1494
      %v1496 = vsel %vm372, %v1382, 0.0
      %1497 = vadd.xlane.f32.xlu0 %v1496
      %v1498 = vpop.xlane.xlu0 %1497
      %v1499 = vsel %vm372, %v1383, 0.0
      %1500 = vadd.xlane.f32.xlu0 %v1499
      %v1501 = vpop.xlane.xlu0 %1500
      %v1502 = vsel %vm372, %v1384, 0.0
      %1503 = vadd.xlane.f32.xlu0 %v1502
      %v1504 = vpop.xlane.xlu0 %1503
      %v1505 = vsel %vm372, %v1385, 0.0
      %1506 = vadd.xlane.f32.xlu0 %v1505
      %v1507 = vpop.xlane.xlu0 %1506
      %v1508 = vsel %vm372, %v1386, 0.0
      %1509 = vadd.xlane.f32.xlu0 %v1508
      %v1510 = vpop.xlane.xlu0 %1509
      %v1511 = vsel %vm372, %v1387, 0.0
      %1512 = vadd.xlane.f32.xlu0 %v1511
      %v1513 = vpop.xlane.xlu0 %1512
      %v1514 = vsel %vm372, %v1388, 0.0
      %1515 = vadd.xlane.f32.xlu0 %v1514
      %v1516 = vpop.xlane.xlu0 %1515
      %v1517 = vsel %vm372, %v1389, 0.0
      %1518 = vadd.xlane.f32.xlu0 %v1517
      %v1519 = vpop.xlane.xlu0 %1518
      %v1520 = vsel %vm372, %v1390, 0.0
      %1521 = vadd.xlane.f32.xlu0 %v1520
      %v1522 = vpop.xlane.xlu0 %1521
      %v1523 = vsel %vm372, %v1391, 0.0
      %1524 = vadd.xlane.f32.xlu0 %v1523
      %v1525 = vpop.xlane.xlu0 %1524
      %v1526 = vsel %vm372, %v1392, 0.0
      %1527 = vadd.xlane.f32.xlu0 %v1526
      %v1528 = vpop.xlane.xlu0 %1527
      %v1529 = vsel %vm372, %v1393, 0.0
      %1530 = vadd.xlane.f32.xlu0 %v1529
      %v1531 = vpop.xlane.xlu0 %1530
      %v1532 = vsel %vm372, %v1394, 0.0
      %1533 = vadd.xlane.f32.xlu0 %v1532
      %v1534 = vpop.xlane.xlu0 %1533
      %v1535 = vsel %vm372, %v1395, 0.0
      %1536 = vadd.xlane.f32.xlu0 %v1535
      %v1537 = vpop.xlane.xlu0 %1536
      %v1538 = vsel %vm372, %v1396, 0.0
      %1539 = vadd.xlane.f32.xlu0 %v1538
      %v1540 = vpop.xlane.xlu0 %1539
      %v1541 = vmul.f32 %v1399, %v517
      %v1542 = vmul.f32 %v1402, %v517
      %v1543 = vmul.f32 %v1405, %v517
      %v1544 = vmul.f32 %v1408, %v517
      %v1545 = vmul.f32 %v1411, %v517
      %v1546 = vmul.f32 %v1414, %v517
      %v1547 = vmul.f32 %v1417, %v517
      %v1548 = vmul.f32 %v1420, %v517
      %v1549 = vmul.f32 %v1423, %v517
      %v1550 = vmul.f32 %v1426, %v517
      %v1551 = vmul.f32 %v1429, %v517
      %v1552 = vmul.f32 %v1432, %v517
      %v1553 = vmul.f32 %v1435, %v517
      %v1554 = vmul.f32 %v1438, %v517
      %v1555 = vmul.f32 %v1441, %v517
      %v1556 = vmul.f32 %v1444, %v517
      %v1557 = vmul.f32 %v1447, %v517
      %v1558 = vmul.f32 %v1450, %v517
      %v1559 = vmul.f32 %v1453, %v517
      %v1560 = vmul.f32 %v1456, %v517
      %v1561 = vmul.f32 %v1459, %v517
      %v1562 = vmul.f32 %v1462, %v517
      %v1563 = vmul.f32 %v1465, %v517
      %v1564 = vmul.f32 %v1468, %v517
      %v1565 = vmul.f32 %v1471, %v517
      %v1566 = vmul.f32 %v1474, %v517
      %v1567 = vmul.f32 %v1477, %v517
      %v1568 = vmul.f32 %v1480, %v517
      %v1569 = vmul.f32 %v1483, %v517
      %v1570 = vmul.f32 %v1486, %v517
      %v1571 = vmul.f32 %v1489, %v517
      %v1572 = vmul.f32 %v1492, %v517
      %v1573 = vmul.f32 %v1495, %v517
      %v1574 = vmul.f32 %v1498, %v517
      %v1575 = vmul.f32 %v1501, %v517
      %v1576 = vmul.f32 %v1504, %v517
      %v1577 = vmul.f32 %v1507, %v517
      %v1578 = vmul.f32 %v1510, %v517
      %v1579 = vmul.f32 %v1513, %v517
      %v1580 = vmul.f32 %v1516, %v517
      %v1581 = vmul.f32 %v1519, %v517
      %v1582 = vmul.f32 %v1522, %v517
      %v1583 = vmul.f32 %v1525, %v517
      %v1584 = vmul.f32 %v1528, %v517
      %v1585 = vmul.f32 %v1531, %v517
      %v1586 = vmul.f32 %v1534, %v517
      %v1587 = vmul.f32 %v1537, %v517
      %v1588 = vmul.f32 %v1540, %v517
      %v1589 = vsub.f32 %v1349, %v1541
      %v1590 = vsub.f32 %v1350, %v1542
      %v1591 = vsub.f32 %v1351, %v1543
      %v1592 = vsub.f32 %v1352, %v1544
      %v1593 = vsub.f32 %v1353, %v1545
      %v1594 = vsub.f32 %v1354, %v1546
      %v1595 = vsub.f32 %v1355, %v1547
      %v1596 = vsub.f32 %v1356, %v1548
      %v1597 = vsub.f32 %v1357, %v1549
      %v1598 = vsub.f32 %v1358, %v1550
      %v1599 = vsub.f32 %v1359, %v1551
      %v1600 = vsub.f32 %v1360, %v1552
      %v1601 = vsub.f32 %v1361, %v1553
      %v1602 = vsub.f32 %v1362, %v1554
      %v1603 = vsub.f32 %v1363, %v1555
      %v1604 = vsub.f32 %v1364, %v1556
      %v1605 = vsub.f32 %v1365, %v1557
      %v1606 = vsub.f32 %v1366, %v1558
      %v1607 = vsub.f32 %v1367, %v1559
      %v1608 = vsub.f32 %v1368, %v1560
      %v1609 = vsub.f32 %v1369, %v1561
      %v1610 = vsub.f32 %v1370, %v1562
      %v1611 = vsub.f32 %v1371, %v1563
      %v1612 = vsub.f32 %v1372, %v1564
      %v1613 = vsub.f32 %v1373, %v1565
      %v1614 = vsub.f32 %v1374, %v1566
      %v1615 = vsub.f32 %v1375, %v1567
      %v1616 = vsub.f32 %v1376, %v1568
      %v1617 = vsub.f32 %v1377, %v1569
      %v1618 = vsub.f32 %v1378, %v1570
      %v1619 = vsub.f32 %v1379, %v1571
      %v1620 = vsub.f32 %v1380, %v1572
      %v1621 = vsub.f32 %v1381, %v1573
      %v1622 = vsub.f32 %v1382, %v1574
      %v1623 = vsub.f32 %v1383, %v1575
      %v1624 = vsub.f32 %v1384, %v1576
      %v1625 = vsub.f32 %v1385, %v1577
      %v1626 = vsub.f32 %v1386, %v1578
      %v1627 = vsub.f32 %v1387, %v1579
      %v1628 = vsub.f32 %v1388, %v1580
      %v1629 = vsub.f32 %v1389, %v1581
      %v1630 = vsub.f32 %v1390, %v1582
      %v1631 = vsub.f32 %v1391, %v1583
      %v1632 = vsub.f32 %v1392, %v1584
      %v1633 = vsub.f32 %v1393, %v1585
      %v1634 = vsub.f32 %v1394, %v1586
      %v1635 = vsub.f32 %v1395, %v1587
      %v1636 = vsub.f32 %v1396, %v1588
      %v1637 = vmul.f32 %v1589, %v1589
      %v1638 = vmul.f32 %v1590, %v1590
      %v1639 = vmul.f32 %v1591, %v1591
      %v1640 = vmul.f32 %v1592, %v1592
      %v1641 = vmul.f32 %v1593, %v1593
      %v1642 = vmul.f32 %v1594, %v1594
      %v1643 = vmul.f32 %v1595, %v1595
      %v1644 = vmul.f32 %v1596, %v1596
      %v1645 = vmul.f32 %v1597, %v1597
      %v1646 = vmul.f32 %v1598, %v1598
      %v1647 = vmul.f32 %v1599, %v1599
      %v1648 = vmul.f32 %v1600, %v1600
      %v1649 = vmul.f32 %v1601, %v1601
      %v1650 = vmul.f32 %v1602, %v1602
      %v1651 = vmul.f32 %v1603, %v1603
      %v1652 = vmul.f32 %v1604, %v1604
      %v1653 = vmul.f32 %v1605, %v1605
      %v1654 = vmul.f32 %v1606, %v1606
      %v1655 = vmul.f32 %v1607, %v1607
      %v1656 = vmul.f32 %v1608, %v1608
      %v1657 = vmul.f32 %v1609, %v1609
      %v1658 = vmul.f32 %v1610, %v1610
      %v1659 = vmul.f32 %v1611, %v1611
      %v1660 = vmul.f32 %v1612, %v1612
      %v1661 = vmul.f32 %v1613, %v1613
      %v1662 = vmul.f32 %v1614, %v1614
      %v1663 = vmul.f32 %v1615, %v1615
      %v1664 = vmul.f32 %v1616, %v1616
      %v1665 = vmul.f32 %v1617, %v1617
      %v1666 = vmul.f32 %v1618, %v1618
      %v1667 = vmul.f32 %v1619, %v1619
      %v1668 = vmul.f32 %v1620, %v1620
      %v1669 = vmul.f32 %v1621, %v1621
      %v1670 = vmul.f32 %v1622, %v1622
      %v1671 = vmul.f32 %v1623, %v1623
      %v1672 = vmul.f32 %v1624, %v1624
      %v1673 = vmul.f32 %v1625, %v1625
      %v1674 = vmul.f32 %v1626, %v1626
      %v1675 = vmul.f32 %v1627, %v1627
      %v1676 = vmul.f32 %v1628, %v1628
      %v1677 = vmul.f32 %v1629, %v1629
      %v1678 = vmul.f32 %v1630, %v1630
      %v1679 = vmul.f32 %v1631, %v1631
      %v1680 = vmul.f32 %v1632, %v1632
      %v1681 = vmul.f32 %v1633, %v1633
      %v1682 = vmul.f32 %v1634, %v1634
      %v1683 = vmul.f32 %v1635, %v1635
      %v1684 = vmul.f32 %v1636, %v1636
      %v1685 = vsel %vm372, %v1637, 0.0
      %1686 = vadd.xlane.f32.xlu0 %v1685
      %v1687 = vpop.xlane.xlu0 %1686
      %v1688 = vsel %vm372, %v1638, 0.0
      %1689 = vadd.xlane.f32.xlu0 %v1688
      %v1690 = vpop.xlane.xlu0 %1689
      %v1691 = vsel %vm372, %v1639, 0.0
      %1692 = vadd.xlane.f32.xlu0 %v1691
      %v1693 = vpop.xlane.xlu0 %1692
      %v1694 = vsel %vm372, %v1640, 0.0
      %1695 = vadd.xlane.f32.xlu0 %v1694
      %v1696 = vpop.xlane.xlu0 %1695
      %v1697 = vsel %vm372, %v1641, 0.0
      %1698 = vadd.xlane.f32.xlu0 %v1697
      %v1699 = vpop.xlane.xlu0 %1698
      %v1700 = vsel %vm372, %v1642, 0.0
      %1701 = vadd.xlane.f32.xlu0 %v1700
      %v1702 = vpop.xlane.xlu0 %1701
      %v1703 = vsel %vm372, %v1643, 0.0
      %1704 = vadd.xlane.f32.xlu0 %v1703
      %v1705 = vpop.xlane.xlu0 %1704
      %v1706 = vsel %vm372, %v1644, 0.0
      %1707 = vadd.xlane.f32.xlu0 %v1706
      %v1708 = vpop.xlane.xlu0 %1707
      %v1709 = vsel %vm372, %v1645, 0.0
      %1710 = vadd.xlane.f32.xlu0 %v1709
      %v1711 = vpop.xlane.xlu0 %1710
      %v1712 = vsel %vm372, %v1646, 0.0
      %1713 = vadd.xlane.f32.xlu0 %v1712
      %v1714 = vpop.xlane.xlu0 %1713
      %v1715 = vsel %vm372, %v1647, 0.0
      %1716 = vadd.xlane.f32.xlu0 %v1715
      %v1717 = vpop.xlane.xlu0 %1716
      %v1718 = vsel %vm372, %v1648, 0.0
      %1719 = vadd.xlane.f32.xlu0 %v1718
      %v1720 = vpop.xlane.xlu0 %1719
      %v1721 = vsel %vm372, %v1649, 0.0
      %1722 = vadd.xlane.f32.xlu0 %v1721
      %v1723 = vpop.xlane.xlu0 %1722
      %v1724 = vsel %vm372, %v1650, 0.0
      %1725 = vadd.xlane.f32.xlu0 %v1724
      %v1726 = vpop.xlane.xlu0 %1725
      %v1727 = vsel %vm372, %v1651, 0.0
      %1728 = vadd.xlane.f32.xlu0 %v1727
      %v1729 = vpop.xlane.xlu0 %1728
      %v1730 = vsel %vm372, %v1652, 0.0
      %1731 = vadd.xlane.f32.xlu0 %v1730
      %v1732 = vpop.xlane.xlu0 %1731
      %v1733 = vsel %vm372, %v1653, 0.0
      %1734 = vadd.xlane.f32.xlu0 %v1733
      %v1735 = vpop.xlane.xlu0 %1734
      %v1736 = vsel %vm372, %v1654, 0.0
      %1737 = vadd.xlane.f32.xlu0 %v1736
      %v1738 = vpop.xlane.xlu0 %1737
      %v1739 = vsel %vm372, %v1655, 0.0
      %1740 = vadd.xlane.f32.xlu0 %v1739
      %v1741 = vpop.xlane.xlu0 %1740
      %v1742 = vsel %vm372, %v1656, 0.0
      %1743 = vadd.xlane.f32.xlu0 %v1742
      %v1744 = vpop.xlane.xlu0 %1743
      %v1745 = vsel %vm372, %v1657, 0.0
      %1746 = vadd.xlane.f32.xlu0 %v1745
      %v1747 = vpop.xlane.xlu0 %1746
      %v1748 = vsel %vm372, %v1658, 0.0
      %1749 = vadd.xlane.f32.xlu0 %v1748
      %v1750 = vpop.xlane.xlu0 %1749
      %v1751 = vsel %vm372, %v1659, 0.0
      %1752 = vadd.xlane.f32.xlu0 %v1751
      %v1753 = vpop.xlane.xlu0 %1752
      %v1754 = vsel %vm372, %v1660, 0.0
      %1755 = vadd.xlane.f32.xlu0 %v1754
      %v1756 = vpop.xlane.xlu0 %1755
      %v1757 = vsel %vm372, %v1661, 0.0
      %1758 = vadd.xlane.f32.xlu0 %v1757
      %v1759 = vpop.xlane.xlu0 %1758
      %v1760 = vsel %vm372, %v1662, 0.0
      %1761 = vadd.xlane.f32.xlu0 %v1760
      %v1762 = vpop.xlane.xlu0 %1761
      %v1763 = vsel %vm372, %v1663, 0.0
      %1764 = vadd.xlane.f32.xlu0 %v1763
      %v1765 = vpop.xlane.xlu0 %1764
      %v1766 = vsel %vm372, %v1664, 0.0
      %1767 = vadd.xlane.f32.xlu0 %v1766
      %v1768 = vpop.xlane.xlu0 %1767
      %v1769 = vsel %vm372, %v1665, 0.0
      %1770 = vadd.xlane.f32.xlu0 %v1769
      %v1771 = vpop.xlane.xlu0 %1770
      %v1772 = vsel %vm372, %v1666, 0.0
      %1773 = vadd.xlane.f32.xlu0 %v1772
      %v1774 = vpop.xlane.xlu0 %1773
      %v1775 = vsel %vm372, %v1667, 0.0
      %1776 = vadd.xlane.f32.xlu0 %v1775
      %v1777 = vpop.xlane.xlu0 %1776
      %v1778 = vsel %vm372, %v1668, 0.0
      %1779 = vadd.xlane.f32.xlu0 %v1778
      %v1780 = vpop.xlane.xlu0 %1779
      %v1781 = vsel %vm372, %v1669, 0.0
      %1782 = vadd.xlane.f32.xlu0 %v1781
      %v1783 = vpop.xlane.xlu0 %1782
      %v1784 = vsel %vm372, %v1670, 0.0
      %1785 = vadd.xlane.f32.xlu0 %v1784
      %v1786 = vpop.xlane.xlu0 %1785
      %v1787 = vsel %vm372, %v1671, 0.0
      %1788 = vadd.xlane.f32.xlu0 %v1787
      %v1789 = vpop.xlane.xlu0 %1788
      %v1790 = vsel %vm372, %v1672, 0.0
      %1791 = vadd.xlane.f32.xlu0 %v1790
      %v1792 = vpop.xlane.xlu0 %1791
      %v1793 = vsel %vm372, %v1673, 0.0
      %1794 = vadd.xlane.f32.xlu0 %v1793
      %v1795 = vpop.xlane.xlu0 %1794
      %v1796 = vsel %vm372, %v1674, 0.0
      %1797 = vadd.xlane.f32.xlu0 %v1796
      %v1798 = vpop.xlane.xlu0 %1797
      %v1799 = vsel %vm372, %v1675, 0.0
      %1800 = vadd.xlane.f32.xlu0 %v1799
      %v1801 = vpop.xlane.xlu0 %1800
      %v1802 = vsel %vm372, %v1676, 0.0
      %1803 = vadd.xlane.f32.xlu0 %v1802
      %v1804 = vpop.xlane.xlu0 %1803
      %v1805 = vsel %vm372, %v1677, 0.0
      %1806 = vadd.xlane.f32.xlu0 %v1805
      %v1807 = vpop.xlane.xlu0 %1806
      %v1808 = vsel %vm372, %v1678, 0.0
      %1809 = vadd.xlane.f32.xlu0 %v1808
      %v1810 = vpop.xlane.xlu0 %1809
      %v1811 = vsel %vm372, %v1679, 0.0
      %1812 = vadd.xlane.f32.xlu0 %v1811
      %v1813 = vpop.xlane.xlu0 %1812
      %v1814 = vsel %vm372, %v1680, 0.0
      %1815 = vadd.xlane.f32.xlu0 %v1814
      %v1816 = vpop.xlane.xlu0 %1815
      %v1817 = vsel %vm372, %v1681, 0.0
      %1818 = vadd.xlane.f32.xlu0 %v1817
      %v1819 = vpop.xlane.xlu0 %1818
      %v1820 = vsel %vm372, %v1682, 0.0
      %1821 = vadd.xlane.f32.xlu0 %v1820
      %v1822 = vpop.xlane.xlu0 %1821
      %v1823 = vsel %vm372, %v1683, 0.0
      %1824 = vadd.xlane.f32.xlu0 %v1823
      %v1825 = vpop.xlane.xlu0 %1824
      %v1826 = vsel %vm372, %v1684, 0.0
      %1827 = vadd.xlane.f32.xlu0 %v1826
      %v1828 = vpop.xlane.xlu0 %1827
      %v1829 = vmul.f32 %v1687, %v517
      %v1830 = vmul.f32 %v1690, %v517
      %v1831 = vmul.f32 %v1693, %v517
      %v1832 = vmul.f32 %v1696, %v517
      %v1833 = vmul.f32 %v1699, %v517
      %v1834 = vmul.f32 %v1702, %v517
      %v1835 = vmul.f32 %v1705, %v517
      %v1836 = vmul.f32 %v1708, %v517
      %v1837 = vmul.f32 %v1711, %v517
      %v1838 = vmul.f32 %v1714, %v517
      %v1839 = vmul.f32 %v1717, %v517
      %v1840 = vmul.f32 %v1720, %v517
      %v1841 = vmul.f32 %v1723, %v517
      %v1842 = vmul.f32 %v1726, %v517
      %v1843 = vmul.f32 %v1729, %v517
      %v1844 = vmul.f32 %v1732, %v517
      %v1845 = vmul.f32 %v1735, %v517
      %v1846 = vmul.f32 %v1738, %v517
      %v1847 = vmul.f32 %v1741, %v517
      %v1848 = vmul.f32 %v1744, %v517
      %v1849 = vmul.f32 %v1747, %v517
      %v1850 = vmul.f32 %v1750, %v517
      %v1851 = vmul.f32 %v1753, %v517
      %v1852 = vmul.f32 %v1756, %v517
      %v1853 = vmul.f32 %v1759, %v517
      %v1854 = vmul.f32 %v1762, %v517
      %v1855 = vmul.f32 %v1765, %v517
      %v1856 = vmul.f32 %v1768, %v517
      %v1857 = vmul.f32 %v1771, %v517
      %v1858 = vmul.f32 %v1774, %v517
      %v1859 = vmul.f32 %v1777, %v517
      %v1860 = vmul.f32 %v1780, %v517
      %v1861 = vmul.f32 %v1783, %v517
      %v1862 = vmul.f32 %v1786, %v517
      %v1863 = vmul.f32 %v1789, %v517
      %v1864 = vmul.f32 %v1792, %v517
      %v1865 = vmul.f32 %v1795, %v517
      %v1866 = vmul.f32 %v1798, %v517
      %v1867 = vmul.f32 %v1801, %v517
      %v1868 = vmul.f32 %v1804, %v517
      %v1869 = vmul.f32 %v1807, %v517
      %v1870 = vmul.f32 %v1810, %v517
      %v1871 = vmul.f32 %v1813, %v517
      %v1872 = vmul.f32 %v1816, %v517
      %v1873 = vmul.f32 %v1819, %v517
      %v1874 = vmul.f32 %v1822, %v517
      %v1875 = vmul.f32 %v1825, %v517
      %v1876 = vmul.f32 %v1828, %v517
      %v1877 = vadd.f32 %v1829, 1e-05
      %v1878 = vadd.f32 %v1830, 1e-05
      %v1879 = vadd.f32 %v1831, 1e-05
      %v1880 = vadd.f32 %v1832, 1e-05
      %v1881 = vadd.f32 %v1833, 1e-05
      %v1882 = vadd.f32 %v1834, 1e-05
      %v1883 = vadd.f32 %v1835, 1e-05
      %v1884 = vadd.f32 %v1836, 1e-05
      %v1885 = vadd.f32 %v1837, 1e-05
      %v1886 = vadd.f32 %v1838, 1e-05
      %v1887 = vadd.f32 %v1839, 1e-05
      %v1888 = vadd.f32 %v1840, 1e-05
      %v1889 = vadd.f32 %v1841, 1e-05
      %v1890 = vadd.f32 %v1842, 1e-05
      %v1891 = vadd.f32 %v1843, 1e-05
      %v1892 = vadd.f32 %v1844, 1e-05
      %v1893 = vadd.f32 %v1845, 1e-05
      %v1894 = vadd.f32 %v1846, 1e-05
      %v1895 = vadd.f32 %v1847, 1e-05
      %v1896 = vadd.f32 %v1848, 1e-05
      %v1897 = vadd.f32 %v1849, 1e-05
      %v1898 = vadd.f32 %v1850, 1e-05
      %v1899 = vadd.f32 %v1851, 1e-05
      %v1900 = vadd.f32 %v1852, 1e-05
      %v1901 = vadd.f32 %v1853, 1e-05
      %v1902 = vadd.f32 %v1854, 1e-05
      %v1903 = vadd.f32 %v1855, 1e-05
      %v1904 = vadd.f32 %v1856, 1e-05
      %v1905 = vadd.f32 %v1857, 1e-05
      %v1906 = vadd.f32 %v1858, 1e-05
      %v1907 = vadd.f32 %v1859, 1e-05
      %v1908 = vadd.f32 %v1860, 1e-05
      %v1909 = vadd.f32 %v1861, 1e-05
      %v1910 = vadd.f32 %v1862, 1e-05
      %v1911 = vadd.f32 %v1863, 1e-05
      %v1912 = vadd.f32 %v1864, 1e-05
      %v1913 = vadd.f32 %v1865, 1e-05
      %v1914 = vadd.f32 %v1866, 1e-05
      %v1915 = vadd.f32 %v1867, 1e-05
      %v1916 = vadd.f32 %v1868, 1e-05
      %v1917 = vadd.f32 %v1869, 1e-05
      %v1918 = vadd.f32 %v1870, 1e-05
      %v1919 = vadd.f32 %v1871, 1e-05
      %v1920 = vadd.f32 %v1872, 1e-05
      %v1921 = vadd.f32 %v1873, 1e-05
      %v1922 = vadd.f32 %v1874, 1e-05
      %v1923 = vadd.f32 %v1875, 1e-05
      %v1924 = vadd.f32 %v1876, 1e-05
      %v1925 = vrsqrt.pop %v1877
      %v1926 = vrsqrt.pop %v1878
      %v1927 = vrsqrt.pop %v1879
      %v1928 = vrsqrt.pop %v1880
      %v1929 = vrsqrt.pop %v1881
      %v1930 = vrsqrt.pop %v1882
      %v1931 = vrsqrt.pop %v1883
      %v1932 = vrsqrt.pop %v1884
      %v1933 = vrsqrt.pop %v1885
      %v1934 = vrsqrt.pop %v1886
      %v1935 = vrsqrt.pop %v1887
      %v1936 = vrsqrt.pop %v1888
      %v1937 = vrsqrt.pop %v1889
      %v1938 = vrsqrt.pop %v1890
      %v1939 = vrsqrt.pop %v1891
      %v1940 = vrsqrt.pop %v1892
      %v1941 = vrsqrt.pop %v1893
      %v1942 = vrsqrt.pop %v1894
      %v1943 = vrsqrt.pop %v1895
      %v1944 = vrsqrt.pop %v1896
      %v1945 = vrsqrt.pop %v1897
      %v1946 = vrsqrt.pop %v1898
      %v1947 = vrsqrt.pop %v1899
      %v1948 = vrsqrt.pop %v1900
      %v1949 = vrsqrt.pop %v1901
      %v1950 = vrsqrt.pop %v1902
      %v1951 = vrsqrt.pop %v1903
      %v1952 = vrsqrt.pop %v1904
      %v1953 = vrsqrt.pop %v1905
      %v1954 = vrsqrt.pop %v1906
      %v1955 = vrsqrt.pop %v1907
      %v1956 = vrsqrt.pop %v1908
      %v1957 = vrsqrt.pop %v1909
      %v1958 = vrsqrt.pop %v1910
      %v1959 = vrsqrt.pop %v1911
      %v1960 = vrsqrt.pop %v1912
      %v1961 = vrsqrt.pop %v1913
      %v1962 = vrsqrt.pop %v1914
      %v1963 = vrsqrt.pop %v1915
      %v1964 = vrsqrt.pop %v1916
      %v1965 = vrsqrt.pop %v1917
      %v1966 = vrsqrt.pop %v1918
      %v1967 = vrsqrt.pop %v1919
      %v1968 = vrsqrt.pop %v1920
      %v1969 = vrsqrt.pop %v1921
      %v1970 = vrsqrt.pop %v1922
      %v1971 = vrsqrt.pop %v1923
      %v1972 = vrsqrt.pop %v1924
      %v1973 = vmul.f32 %v1589, %v1925
      %v1974 = vmul.f32 %v1590, %v1926
      %v1975 = vmul.f32 %v1591, %v1927
      %v1976 = vmul.f32 %v1592, %v1928
      %v1977 = vmul.f32 %v1593, %v1929
      %v1978 = vmul.f32 %v1594, %v1930
      %v1979 = vmul.f32 %v1595, %v1931
      %v1980 = vmul.f32 %v1596, %v1932
      %v1981 = vmul.f32 %v1597, %v1933
      %v1982 = vmul.f32 %v1598, %v1934
      %v1983 = vmul.f32 %v1599, %v1935
      %v1984 = vmul.f32 %v1600, %v1936
      %v1985 = vmul.f32 %v1601, %v1937
      %v1986 = vmul.f32 %v1602, %v1938
      %v1987 = vmul.f32 %v1603, %v1939
      %v1988 = vmul.f32 %v1604, %v1940
      %v1989 = vmul.f32 %v1605, %v1941
      %v1990 = vmul.f32 %v1606, %v1942
      %v1991 = vmul.f32 %v1607, %v1943
      %v1992 = vmul.f32 %v1608, %v1944
      %v1993 = vmul.f32 %v1609, %v1945
      %v1994 = vmul.f32 %v1610, %v1946
      %v1995 = vmul.f32 %v1611, %v1947
      %v1996 = vmul.f32 %v1612, %v1948
      %v1997 = vmul.f32 %v1613, %v1949
      %v1998 = vmul.f32 %v1614, %v1950
      %v1999 = vmul.f32 %v1615, %v1951
      %v2000 = vmul.f32 %v1616, %v1952
      %v2001 = vmul.f32 %v1617, %v1953
      %v2002 = vmul.f32 %v1618, %v1954
      %v2003 = vmul.f32 %v1619, %v1955
      %v2004 = vmul.f32 %v1620, %v1956
      %v2005 = vmul.f32 %v1621, %v1957
      %v2006 = vmul.f32 %v1622, %v1958
      %v2007 = vmul.f32 %v1623, %v1959
      %v2008 = vmul.f32 %v1624, %v1960
      %v2009 = vmul.f32 %v1625, %v1961
      %v2010 = vmul.f32 %v1626, %v1962
      %v2011 = vmul.f32 %v1627, %v1963
      %v2012 = vmul.f32 %v1628, %v1964
      %v2013 = vmul.f32 %v1629, %v1965
      %v2014 = vmul.f32 %v1630, %v1966
      %v2015 = vmul.f32 %v1631, %v1967
      %v2016 = vmul.f32 %v1632, %v1968
      %v2017 = vmul.f32 %v1633, %v1969
      %v2018 = vmul.f32 %v1634, %v1970
      %v2019 = vmul.f32 %v1635, %v1971
      %v2020 = vmul.f32 %v1636, %v1972
      %v2021 = vld [vmem:[%s2] sm:$0x1]
      %v2023 = vlaneseq
      %v2024 = vshrl.u32 %v2023, 7
      %v2025 = vsub.s32 0, %v2024
      %v2026 = vrot.slane %v2021, %v2025
      %v2028 = vmul.f32 %v1973, %v2026
      %v2029 = vmul.f32 %v1974, %v2026
      %v2030 = vmul.f32 %v1975, %v2026
      %v2031 = vmul.f32 %v1976, %v2026
      %v2032 = vmul.f32 %v1977, %v2026
      %v2033 = vmul.f32 %v1978, %v2026
      %v2034 = vmul.f32 %v1979, %v2026
      %v2035 = vmul.f32 %v1980, %v2026
      %v2036 = vmul.f32 %v1981, %v2026
      %v2037 = vmul.f32 %v1982, %v2026
      %v2038 = vmul.f32 %v1983, %v2026
      %v2039 = vmul.f32 %v1984, %v2026
      %v2040 = vmul.f32 %v1985, %v2026
      %v2041 = vmul.f32 %v1986, %v2026
      %v2042 = vmul.f32 %v1987, %v2026
      %v2043 = vmul.f32 %v1988, %v2026
      %v2044 = vmul.f32 %v1989, %v2026
      %v2045 = vmul.f32 %v1990, %v2026
      %v2046 = vmul.f32 %v1991, %v2026
      %v2047 = vmul.f32 %v1992, %v2026
      %v2048 = vmul.f32 %v1993, %v2026
      %v2049 = vmul.f32 %v1994, %v2026
      %v2050 = vmul.f32 %v1995, %v2026
      %v2051 = vmul.f32 %v1996, %v2026
      %v2052 = vmul.f32 %v1997, %v2026
      %v2053 = vmul.f32 %v1998, %v2026
      %v2054 = vmul.f32 %v1999, %v2026
      %v2055 = vmul.f32 %v2000, %v2026
      %v2056 = vmul.f32 %v2001, %v2026
      %v2057 = vmul.f32 %v2002, %v2026
      %v2058 = vmul.f32 %v2003, %v2026
      %v2059 = vmul.f32 %v2004, %v2026
      %v2060 = vmul.f32 %v2005, %v2026
      %v2061 = vmul.f32 %v2006, %v2026
      %v2062 = vmul.f32 %v2007, %v2026
      %v2063 = vmul.f32 %v2008, %v2026
      %v2064 = vmul.f32 %v2009, %v2026
      %v2065 = vmul.f32 %v2010, %v2026
      %v2066 = vmul.f32 %v2011, %v2026
      %v2067 = vmul.f32 %v2012, %v2026
      %v2068 = vmul.f32 %v2013, %v2026
      %v2069 = vmul.f32 %v2014, %v2026
      %v2070 = vmul.f32 %v2015, %v2026
      %v2071 = vmul.f32 %v2016, %v2026
      %v2072 = vmul.f32 %v2017, %v2026
      %v2073 = vmul.f32 %v2018, %v2026
      %v2074 = vmul.f32 %v2019, %v2026
      %v2075 = vmul.f32 %v2020, %v2026
      %v2076 = vld [vmem:[%s3] sm:$0x1]
      %v2078 = vlaneseq
      %v2079 = vshrl.u32 %v2078, 7
      %v2080 = vsub.s32 0, %v2079
      %v2081 = vrot.slane %v2076, %v2080
      %v2083 = vadd.f32 %v2028, %v2081
      %v2084 = vadd.f32 %v2029, %v2081
      %v2085 = vadd.f32 %v2030, %v2081
      %v2086 = vadd.f32 %v2031, %v2081
      %v2087 = vadd.f32 %v2032, %v2081
      %v2088 = vadd.f32 %v2033, %v2081
      %v2089 = vadd.f32 %v2034, %v2081
      %v2090 = vadd.f32 %v2035, %v2081
      %v2091 = vadd.f32 %v2036, %v2081
      %v2092 = vadd.f32 %v2037, %v2081
      %v2093 = vadd.f32 %v2038, %v2081
      %v2094 = vadd.f32 %v2039, %v2081
      %v2095 = vadd.f32 %v2040, %v2081
      %v2096 = vadd.f32 %v2041, %v2081
      %v2097 = vadd.f32 %v2042, %v2081
      %v2098 = vadd.f32 %v2043, %v2081
      %v2099 = vadd.f32 %v2044, %v2081
      %v2100 = vadd.f32 %v2045, %v2081
      %v2101 = vadd.f32 %v2046, %v2081
      %v2102 = vadd.f32 %v2047, %v2081
      %v2103 = vadd.f32 %v2048, %v2081
      %v2104 = vadd.f32 %v2049, %v2081
      %v2105 = vadd.f32 %v2050, %v2081
      %v2106 = vadd.f32 %v2051, %v2081
      %v2107 = vadd.f32 %v2052, %v2081
      %v2108 = vadd.f32 %v2053, %v2081
      %v2109 = vadd.f32 %v2054, %v2081
      %v2110 = vadd.f32 %v2055, %v2081
      %v2111 = vadd.f32 %v2056, %v2081
      %v2112 = vadd.f32 %v2057, %v2081
      %v2113 = vadd.f32 %v2058, %v2081
      %v2114 = vadd.f32 %v2059, %v2081
      %v2115 = vadd.f32 %v2060, %v2081
      %v2116 = vadd.f32 %v2061, %v2081
      %v2117 = vadd.f32 %v2062, %v2081
      %v2118 = vadd.f32 %v2063, %v2081
      %v2119 = vadd.f32 %v2064, %v2081
      %v2120 = vadd.f32 %v2065, %v2081
      %v2121 = vadd.f32 %v2066, %v2081
      %v2122 = vadd.f32 %v2067, %v2081
      %v2123 = vadd.f32 %v2068, %v2081
      %v2124 = vadd.f32 %v2069, %v2081
      %v2125 = vadd.f32 %v2070, %v2081
      %v2126 = vadd.f32 %v2071, %v2081
      %v2127 = vadd.f32 %v2072, %v2081
      %v2128 = vadd.f32 %v2073, %v2081
      %v2129 = vadd.f32 %v2074, %v2081
      %v2130 = vadd.f32 %v2075, %v2081
      %v2131 = vpack.c.bf16 %v2084, %v2083
      %v2132 = vpack.c.bf16 %v2086, %v2085
      %v2133 = vpack.c.bf16 %v2088, %v2087
      %v2134 = vpack.c.bf16 %v2090, %v2089
      %v2135 = vpack.c.bf16 %v2092, %v2091
      %v2136 = vpack.c.bf16 %v2094, %v2093
      %v2137 = vpack.c.bf16 %v2096, %v2095
      %v2138 = vpack.c.bf16 %v2098, %v2097
      %v2139 = vpack.c.bf16 %v2100, %v2099
      %v2140 = vpack.c.bf16 %v2102, %v2101
      %v2141 = vpack.c.bf16 %v2104, %v2103
      %v2142 = vpack.c.bf16 %v2106, %v2105
      %v2143 = vpack.c.bf16 %v2108, %v2107
      %v2144 = vpack.c.bf16 %v2110, %v2109
      %v2145 = vpack.c.bf16 %v2112, %v2111
      %v2146 = vpack.c.bf16 %v2114, %v2113
      %v2147 = vpack.c.bf16 %v2116, %v2115
      %v2148 = vpack.c.bf16 %v2118, %v2117
      %v2149 = vpack.c.bf16 %v2120, %v2119
      %v2150 = vpack.c.bf16 %v2122, %v2121
      %v2151 = vpack.c.bf16 %v2124, %v2123
      %v2152 = vpack.c.bf16 %v2126, %v2125
      %v2153 = vpack.c.bf16 %v2128, %v2127
      %v2154 = vpack.c.bf16 %v2130, %v2129
      %v2179 = vunpack.c.l.b16 %v2131
      %v2180 = vunpack.c.h.b16 %v2131
      %v2181 = vunpack.c.l.b16 %v2132
      %v2182 = vunpack.c.h.b16 %v2132
      %v2183 = vunpack.c.l.b16 %v2133
      %v2184 = vunpack.c.h.b16 %v2133
      %v2185 = vunpack.c.l.b16 %v2134
      %v2186 = vunpack.c.h.b16 %v2134
      %v2187 = vunpack.c.l.b16 %v2135
      %v2188 = vunpack.c.h.b16 %v2135
      %v2189 = vunpack.c.l.b16 %v2136
      %v2190 = vunpack.c.h.b16 %v2136
      %v2191 = vunpack.c.l.b16 %v2137
      %v2192 = vunpack.c.h.b16 %v2137
      %v2193 = vunpack.c.l.b16 %v2138
      %v2194 = vunpack.c.h.b16 %v2138
      %v2195 = vunpack.c.l.b16 %v2139
      %v2196 = vunpack.c.h.b16 %v2139
      %v2197 = vunpack.c.l.b16 %v2140
      %v2198 = vunpack.c.h.b16 %v2140
      %v2199 = vunpack.c.l.b16 %v2141
      %v2200 = vunpack.c.h.b16 %v2141
      %v2201 = vunpack.c.l.b16 %v2142
      %v2202 = vunpack.c.h.b16 %v2142
      %v2203 = vunpack.c.l.b16 %v2143
      %v2204 = vunpack.c.h.b16 %v2143
      %v2205 = vunpack.c.l.b16 %v2144
      %v2206 = vunpack.c.h.b16 %v2144
      %v2207 = vunpack.c.l.b16 %v2145
      %v2208 = vunpack.c.h.b16 %v2145
      %v2209 = vunpack.c.l.b16 %v2146
      %v2210 = vunpack.c.h.b16 %v2146
      %v2211 = vunpack.c.l.b16 %v2147
      %v2212 = vunpack.c.h.b16 %v2147
      %v2213 = vunpack.c.l.b16 %v2148
      %v2214 = vunpack.c.h.b16 %v2148
      %v2215 = vunpack.c.l.b16 %v2149
      %v2216 = vunpack.c.h.b16 %v2149
      %v2217 = vunpack.c.l.b16 %v2150
      %v2218 = vunpack.c.h.b16 %v2150
      %v2219 = vunpack.c.l.b16 %v2151
      %v2220 = vunpack.c.h.b16 %v2151
      %v2221 = vunpack.c.l.b16 %v2152
      %v2222 = vunpack.c.h.b16 %v2152
      %v2223 = vunpack.c.l.b16 %v2153
      %v2224 = vunpack.c.h.b16 %v2153
      %v2225 = vunpack.c.l.b16 %v2154
      %v2226 = vunpack.c.h.b16 %v2154
      %v2227 = vpack.c.b16 %v2179, %v2179
      %v2228 = vpack.c.b16 %v2180, %v2180
      %v2229 = vpack.c.b16 %v2181, %v2181
      %v2230 = vpack.c.b16 %v2182, %v2182
      %v2231 = vpack.c.b16 %v2183, %v2183
      %v2232 = vpack.c.b16 %v2184, %v2184
      %v2233 = vpack.c.b16 %v2185, %v2185
      %v2234 = vpack.c.b16 %v2186, %v2186
      %v2235 = vpack.c.b16 %v2187, %v2187
      %v2236 = vpack.c.b16 %v2188, %v2188
      %v2237 = vpack.c.b16 %v2189, %v2189
      %v2238 = vpack.c.b16 %v2190, %v2190
      %v2239 = vpack.c.b16 %v2191, %v2191
      %v2240 = vpack.c.b16 %v2192, %v2192
      %v2241 = vpack.c.b16 %v2193, %v2193
      %v2242 = vpack.c.b16 %v2194, %v2194
      %v2243 = vpack.c.b16 %v2195, %v2195
      %v2244 = vpack.c.b16 %v2196, %v2196
      %v2245 = vpack.c.b16 %v2197, %v2197
      %v2246 = vpack.c.b16 %v2198, %v2198
      %v2247 = vpack.c.b16 %v2199, %v2199
      %v2248 = vpack.c.b16 %v2200, %v2200
      %v2249 = vpack.c.b16 %v2201, %v2201
      %v2250 = vpack.c.b16 %v2202, %v2202
      %v2251 = vpack.c.b16 %v2203, %v2203
      %v2252 = vpack.c.b16 %v2204, %v2204
      %v2253 = vpack.c.b16 %v2205, %v2205
      %v2254 = vpack.c.b16 %v2206, %v2206
      %v2255 = vpack.c.b16 %v2207, %v2207
      %v2256 = vpack.c.b16 %v2208, %v2208
      %v2257 = vpack.c.b16 %v2209, %v2209
      %v2258 = vpack.c.b16 %v2210, %v2210
      %v2259 = vpack.c.b16 %v2211, %v2211
      %v2260 = vpack.c.b16 %v2212, %v2212
      %v2261 = vpack.c.b16 %v2213, %v2213
      %v2262 = vpack.c.b16 %v2214, %v2214
      %v2263 = vpack.c.b16 %v2215, %v2215
      %v2264 = vpack.c.b16 %v2216, %v2216
      %v2265 = vpack.c.b16 %v2217, %v2217
      %v2266 = vpack.c.b16 %v2218, %v2218
      %v2267 = vpack.c.b16 %v2219, %v2219
      %v2268 = vpack.c.b16 %v2220, %v2220
      %v2269 = vpack.c.b16 %v2221, %v2221
      %v2270 = vpack.c.b16 %v2222, %v2222
      %v2271 = vpack.c.b16 %v2223, %v2223
      %v2272 = vpack.c.b16 %v2224, %v2224
      %v2273 = vpack.c.b16 %v2225, %v2225
      %v2274 = vpack.c.b16 %v2226, %v2226
      %2323 = vst.msk [vmem:[%s322] sm:$0xf] %vm1300, %v2227
      %2324 = vst.msk [vmem:[%s322 + $0x4] sm:$0xf] %vm1300, %v2228
      %2325 = vst.msk [vmem:[%s322 + $0x8] sm:$0xf] %vm1300, %v2229
      %2326 = vst.msk [vmem:[%s322 + $0xc] sm:$0xf] %vm1300, %v2230
      %2327 = vst.msk [vmem:[%s322 + $0x10] sm:$0xf] %vm1300, %v2231
      %2328 = vst.msk [vmem:[%s322 + $0x14] sm:$0xf] %vm1300, %v2232
      %2329 = vst.msk [vmem:[%s322 + $0x18] sm:$0xf] %vm1300, %v2233
      %2330 = vst.msk [vmem:[%s322 + $0x1c] sm:$0xf] %vm1300, %v2234
      %2331 = vst.msk [vmem:[%s322 + $0x20] sm:$0xf] %vm1300, %v2235
      %2332 = vst.msk [vmem:[%s322 + $0x24] sm:$0xf] %vm1300, %v2236
      %2333 = vst.msk [vmem:[%s322 + $0x28] sm:$0xf] %vm1300, %v2237
      %2334 = vst.msk [vmem:[%s322 + $0x2c] sm:$0xf] %vm1300, %v2238
      %2335 = vst.msk [vmem:[%s322 + $0x30] sm:$0xf] %vm1300, %v2239
      %2336 = vst.msk [vmem:[%s322 + $0x34] sm:$0xf] %vm1300, %v2240
      %2337 = vst.msk [vmem:[%s322 + $0x38] sm:$0xf] %vm1300, %v2241
      %2338 = vst.msk [vmem:[%s322 + $0x3c] sm:$0xf] %vm1300, %v2242
      %2339 = vst.msk [vmem:[%s322 + $0x40] sm:$0xf] %vm1300, %v2243
      %2340 = vst.msk [vmem:[%s322 + $0x44] sm:$0xf] %vm1300, %v2244
      %2341 = vst.msk [vmem:[%s322 + $0x48] sm:$0xf] %vm1300, %v2245
      %2342 = vst.msk [vmem:[%s322 + $0x4c] sm:$0xf] %vm1300, %v2246
      %2343 = vst.msk [vmem:[%s322 + $0x50] sm:$0xf] %vm1300, %v2247
      %2344 = vst.msk [vmem:[%s322 + $0x54] sm:$0xf] %vm1300, %v2248
      %2345 = vst.msk [vmem:[%s322 + $0x58] sm:$0xf] %vm1300, %v2249
      %2346 = vst.msk [vmem:[%s322 + $0x5c] sm:$0xf] %vm1300, %v2250
      %2347 = vst.msk [vmem:[%s322 + $0x60] sm:$0xf] %vm1300, %v2251
      %2348 = vst.msk [vmem:[%s322 + $0x64] sm:$0xf] %vm1300, %v2252
      %2349 = vst.msk [vmem:[%s322 + $0x68] sm:$0xf] %vm1300, %v2253
      %2350 = vst.msk [vmem:[%s322 + $0x6c] sm:$0xf] %vm1300, %v2254
      %2351 = vst.msk [vmem:[%s322 + $0x70] sm:$0xf] %vm1300, %v2255
      %2352 = vst.msk [vmem:[%s322 + $0x74] sm:$0xf] %vm1300, %v2256
      %2353 = vst.msk [vmem:[%s322 + $0x78] sm:$0xf] %vm1300, %v2257
      %2354 = vst.msk [vmem:[%s322 + $0x7c] sm:$0xf] %vm1300, %v2258
      %2355 = vst.msk [vmem:[%s322 + $0x80] sm:$0xf] %vm1300, %v2259
      %2356 = vst.msk [vmem:[%s322 + $0x84] sm:$0xf] %vm1300, %v2260
      %2357 = vst.msk [vmem:[%s322 + $0x88] sm:$0xf] %vm1300, %v2261
      %2358 = vst.msk [vmem:[%s322 + $0x8c] sm:$0xf] %vm1300, %v2262
      %2359 = vst.msk [vmem:[%s322 + $0x90] sm:$0xf] %vm1300, %v2263
      %2360 = vst.msk [vmem:[%s322 + $0x94] sm:$0xf] %vm1300, %v2264
      %2361 = vst.msk [vmem:[%s322 + $0x98] sm:$0xf] %vm1300, %v2265
      %2362 = vst.msk [vmem:[%s322 + $0x9c] sm:$0xf] %vm1300, %v2266
      %2363 = vst.msk [vmem:[%s322 + $0xa0] sm:$0xf] %vm1300, %v2267
      %2364 = vst.msk [vmem:[%s322 + $0xa4] sm:$0xf] %vm1300, %v2268
      %2365 = vst.msk [vmem:[%s322 + $0xa8] sm:$0xf] %vm1300, %v2269
      %2366 = vst.msk [vmem:[%s322 + $0xac] sm:$0xf] %vm1300, %v2270
      %2367 = vst.msk [vmem:[%s322 + $0xb0] sm:$0xf] %vm1300, %v2271
      %2368 = vst.msk [vmem:[%s322 + $0xb4] sm:$0xf] %vm1300, %v2272
      %2369 = vst.msk [vmem:[%s322 + $0xb8] sm:$0xf] %vm1300, %v2273
      %2370 = vst.msk [vmem:[%s322 + $0xbc] sm:$0xf] %vm1300, %v2274
      %s2371 = smul.u32 48, %s21
      %p2372 = scmp.lt.s32.totalorder %s22, 1
      %s2373 = scalar_select %p2372, %s22, 1
      %p2374 = scmp.lt.s32.totalorder %s2371, 47
      %s2375 = scalar_select %p2374, %s2371, 47
      %s2376 = smul.addr %s2373, 48
      %s2377 = sadd.s32 %s2375, %s2376
      %s2378 = smul.addr %s2377, 4
      %s2379 = scalar_lea.vmem %s4, %s2378
      %s2380 = smul.u32 48, %s21
      %p2381 = scmp.lt.s32.totalorder %s22, 1
      %s2382 = scalar_select %p2381, %s22, 1
      %p2383 = scmp.lt.s32.totalorder %s2380, 47
      %s2384 = scalar_select %p2383, %s2380, 47
      %s2385 = smul.addr %s2382, 48
      %s2386 = sadd.s32 %s2384, %s2385
      %s2387 = smul.addr %s2386, 4
      %s2388 = scalar_lea.vmem %s5, %s2387
      // Predicated region
      $region37: #{glo_tkdown_block_pv.6} parent=35 // pred_check
        %p2389 = pneg %p147
      $region38: #{glo_tkdown_block_pv.6} parent=35 // pred_check_branch
        %2391 = sbr.rel (%p2389) target = $region40
      $region39: #{glo_tkdown_block_pv.6} parent=35 // pred_region
        %s2392 = smul.u32 48, %s21
      $region40: #{glo_tkdown_block_pv.6} parent=35 // pred_fallthru
        _
      // Predicated region
      $region41: #{glo_tkdown_block_pv.6} parent=35 // pred_check
        %p2393 = pneg %p175
      $region42: #{glo_tkdown_block_pv.6} parent=35 // pred_check_branch
        %2395 = sbr.rel (%p2393) target = $region44
      $region43: #{glo_tkdown_block_pv.6} parent=35 // pred_region
        %s2396 = smul.u32 48, %s21
      $region44: #{glo_tkdown_block_pv.6} parent=35 // pred_fallthru
        _
    $region36: #{glo_tkdown_block_pv.6} parent=5 // pred_fallthru
      _
    %p2397 = scmp.le.s32.totalorder 2, %s12
    // Predicated region
    $region45: #{glo_tkdown_block_pv.6} parent=5 // pred_check
      %p2398 = pneg %p2397
    $region46: #{glo_tkdown_block_pv.6} parent=5 // pred_check_branch
      %2400 = sbr.rel (%p2398) target = $region48
    $region47: #{glo_tkdown_block_pv.6} parent=5 // pred_region
      %s2401 = ssub.s32 %s12, 2
      // Predicated region
      $region49: #{glo_tkdown_block_pv.6} parent=47 // pred_check
        %p2402 = pneg %p153
      $region50: #{glo_tkdown_block_pv.6} parent=47 // pred_check_branch
        %2404 = sbr.rel (%p2402) target = $region52
      $region51: #{glo_tkdown_block_pv.6} parent=47 // pred_region
        %s2405 = smul.u32 48, %s23
        %p2406 = scmp.lt.s32.totalorder %s24, 1
        %s2407 = scalar_select %p2406, %s24, 1
        %p2408 = scmp.lt.s32.totalorder %s2405, 47
        %s2409 = scalar_select %p2408, %s2405, 47
        %s2410 = smul.addr %s2407, 48
        %s2411 = sadd.s32 %s2409, %s2410
        %s2412 = smul.addr %s2411, 4
        %s2413 = scalar_lea.vmem %s4, %s2412
      $region52: #{glo_tkdown_block_pv.6} parent=47 // pred_fallthru
        _
      // Predicated region
      $region53: #{glo_tkdown_block_pv.6} parent=47 // pred_check
        %p2414 = pneg %p181
      $region54: #{glo_tkdown_block_pv.6} parent=47 // pred_check_branch
        %2416 = sbr.rel (%p2414) target = $region56
      $region55: #{glo_tkdown_block_pv.6} parent=47 // pred_region
        %s2417 = smul.u32 48, %s23
        %p2418 = scmp.lt.s32.totalorder %s24, 1
        %s2419 = scalar_select %p2418, %s24, 1
        %p2420 = scmp.lt.s32.totalorder %s2417, 47
        %s2421 = scalar_select %p2420, %s2417, 47
        %s2422 = smul.addr %s2419, 48
        %s2423 = sadd.s32 %s2421, %s2422
        %s2424 = smul.addr %s2423, 4
        %s2425 = scalar_lea.vmem %s5, %s2424
      $region56: #{glo_tkdown_block_pv.6} parent=47 // pred_fallthru
        _
    $region48: #{glo_tkdown_block_pv.6} parent=5 // pred_fallthru
      _
  $region6: #{glo_tkdown_block_pv.6} parent=0 // loop_footer
    %s16 = sadd.s32 1, %s12
  $region7: #{glo_tkdown_block_pv.6} parent=0 // loop_footer_branch
    %11 = sbr.rel target = $region3
  $region8: #{glo_tkdown_block_pv.6} parent=0 // loop_exit
    _

// kernel: glo_tkdown_block_pv.8
$region0: #{glo_tkdown_block_pv.8}
  #allocation0 [shape = 'u32[]', space=smem, size = 0x4, offset = 0x4, fixed_abs, tag = 'smem constant byte address 0x4 - core index']
  #allocation1 [shape = 'u32[144,128]{1,0:T(1,128)}', space=vmem, size = 0x12000, scoped, tag = 'internal scratch']
  %s0 = inlined_call_operand.vmem [shape: bf16[2,256,8], index: 0, kind: input, shape index: {}]
  %s1 = inlined_call_operand.vmem [shape: bf16[8,32], index: 1, kind: input, shape index: {}]
  %s2 = inlined_call_operand.vmem [shape: f32[1,32], index: 2, kind: input, shape index: {}]
  %s3 = inlined_call_operand.vmem [shape: f32[2,256,32], index: 3, kind: output, shape index: {}]
  %s4 = sld [smem:[#allocation0]]
  $region45: #{glo_tkdown_block_pv.8} parent=0
    _
  %s6 = ssub.s32 1, %s4
  %s7 = scalar_select 0, %s6, %s4
  loop: start=0, step=1, limit=4
  $region2: #{glo_tkdown_block_pv.8} parent=0 // loop_pre_header
    _
  $region3: #{glo_tkdown_block_pv.8} parent=0 // loop_header
    %s9 = sphi 0, %s13
    %p10 = scmp.ge.s32.totalorder %s9, 4
    %s16 = sphi 0, %s28
    %s17 = sphi 0, %s24
    %s18 = sphi 0, %s16
    %s19 = sphi 0, %s17
    %s20 = sphi 0, %s18
    %s21 = sphi 0, %s19
    %s33 = sphi 0, %s35
    %s36 = sphi 0, %s33
    %s37 = sphi 0, %s36
    %s53 = sphi 0, %s37
    %s57 = sphi 0, %s57
    %s59 = sphi 0, %s57
    %s60 = sphi 0, %s59
    %s74 = sphi 0, %s60
    %s78 = sphi 0, %s78
    %s80 = sphi 0, %s78
    %s81 = sphi 0, %s80
    %s95 = sphi 0, %s81
    %s103 = sphi 0, %s105
    %s106 = sphi 0, %s103
    %s107 = sphi 0, %s106
    %s123 = sphi 0, %s107
  $region4: #{glo_tkdown_block_pv.8} parent=0 // loop_header_branch
    %12 = sbr.rel (%p10) target = $region8
  $region5: #{glo_tkdown_block_pv.8} parent=0 // loop_body
    %s14 = ssub.s32 %s9, 1
    %s15 = ssub.s32 %s9, 2
    %s22 = sadd.s32 1, %s17
    %p23 = scmp.ge.s32.totalorder %s22, 2
    %s24 = scalar_select %p23, 0, %s22
    %s25 = sadd.s32 1, %s16
    %s26 = scalar_select %p23, %s25, %s16
    %p27 = scmp.ge.s32.totalorder %s26, 1
    %s28 = scalar_select %p27, 0, %s26
    %s29 = ssub.s32 %s17, %s24
    %s30 = ssub.s32 %s16, %s28
    %s31 = sor.u32 %s29, %s30
    %p32 = scmp.eq.s32.totalorder %s31, 0
    %s34 = sadd.s32 %s33, 1
    %s35 = scalar_select %p32, %s33, %s34
    %p38 = pneg %p32
    %p39 = scmp.eq.s32.totalorder %s9, 1
    %p40 = por %p38, %p39
    %p41 = scmp.ne.s32.totalorder %s33, %s36
    %p42 = scmp.eq.s32.totalorder %s9, 0
    %p43 = por %p41, %p42
    %p44 = scmp.ne.s32.totalorder %s33, %s36
    %p45 = scmp.eq.s32.totalorder %s14, 1
    %p46 = por %p44, %p45
    %p47 = scmp.ne.s32.totalorder %s36, %s37
    %p48 = scmp.eq.s32.totalorder %s14, 0
    %p49 = por %p47, %p48
    %p50 = scmp.ne.s32.totalorder %s36, %s37
    %p51 = scmp.eq.s32.totalorder %s15, 1
    %p52 = por %p50, %p51
    %p54 = scmp.ne.s32.totalorder %s37, %s53
    %p55 = scmp.eq.s32.totalorder %s15, 0
    %p56 = por %p54, %p55
    %s58 = sadd.s32 %s57, 1
    %p61 = scmp.eq.s32.totalorder %s9, 1
    %p62 = scmp.ne.s32.totalorder %s57, %s59
    %p63 = scmp.eq.s32.totalorder %s9, 0
    %p64 = por %p62, %p63
    %p65 = scmp.ne.s32.totalorder %s57, %s59
    %p66 = scmp.eq.s32.totalorder %s14, 1
    %p67 = por %p65, %p66
    %p68 = scmp.ne.s32.totalorder %s59, %s60
    %p69 = scmp.eq.s32.totalorder %s14, 0
    %p70 = por %p68, %p69
    %p71 = scmp.ne.s32.totalorder %s59, %s60
    %p72 = scmp.eq.s32.totalorder %s15, 1
    %p73 = por %p71, %p72
    %p75 = scmp.ne.s32.totalorder %s60, %s74
    %p76 = scmp.eq.s32.totalorder %s15, 0
    %p77 = por %p75, %p76
    %s79 = sadd.s32 %s78, 1
    %p82 = scmp.eq.s32.totalorder %s9, 1
    %p83 = scmp.ne.s32.totalorder %s78, %s80
    %p84 = scmp.eq.s32.totalorder %s9, 0
    %p85 = por %p83, %p84
    %p86 = scmp.ne.s32.totalorder %s78, %s80
    %p87 = scmp.eq.s32.totalorder %s14, 1
    %p88 = por %p86, %p87
    %p89 = scmp.ne.s32.totalorder %s80, %s81
    %p90 = scmp.eq.s32.totalorder %s14, 0
    %p91 = por %p89, %p90
    %p92 = scmp.ne.s32.totalorder %s80, %s81
    %p93 = scmp.eq.s32.totalorder %s15, 1
    %p94 = por %p92, %p93
    %p96 = scmp.ne.s32.totalorder %s81, %s95
    %p97 = scmp.eq.s32.totalorder %s15, 0
    %p98 = por %p96, %p97
    %s99 = ssub.s32 %s17, %s24
    %s100 = ssub.s32 %s16, %s28
    %s101 = sor.u32 %s99, %s100
    %p102 = scmp.eq.s32.totalorder %s101, 0
    %s104 = sadd.s32 %s103, 1
    %s105 = scalar_select %p102, %s103, %s104
    %p108 = pneg %p102
    %p109 = scmp.eq.s32.totalorder %s9, 1
    %p110 = por %p108, %p109
    %p111 = scmp.ne.s32.totalorder %s103, %s106
    %p112 = scmp.eq.s32.totalorder %s9, 0
    %p113 = por %p111, %p112
    %p114 = scmp.ne.s32.totalorder %s103, %s106
    %p115 = scmp.eq.s32.totalorder %s14, 1
    %p116 = por %p114, %p115
    %p117 = scmp.ne.s32.totalorder %s106, %s107
    %p118 = scmp.eq.s32.totalorder %s14, 0
    %p119 = por %p117, %p118
    %p120 = scmp.ne.s32.totalorder %s106, %s107
    %p121 = scmp.eq.s32.totalorder %s15, 1
    %p122 = por %p120, %p121
    %p124 = scmp.ne.s32.totalorder %s107, %s123
    %p125 = scmp.eq.s32.totalorder %s15, 0
    %p126 = por %p124, %p125
    %p127 = scmp.le.s32.totalorder 1, %s9
    %p128 = scmp.lt.s32.totalorder %s9, 3
    %p129 = pnand %p127, %p128
    %p130 = pneg %p129
    // Predicated region
    $region9: #{glo_tkdown_block_pv.8} parent=5 // pred_check
      _
    $region10: #{glo_tkdown_block_pv.8} parent=5 // pred_check_branch
      %132 = sbr.rel (%p129) target = $region12
    $region11: #{glo_tkdown_block_pv.8} parent=5 // pred_region
      %s133 = ssub.s32 %s9, 1
      // Predicated region
      $region13: #{glo_tkdown_block_pv.8} parent=11 // pred_check
        %p134 = pneg %p70
      $region14: #{glo_tkdown_block_pv.8} parent=11 // pred_check_branch
        %136 = sbr.rel (%p134) target = $region16
      $region15: #{glo_tkdown_block_pv.8} parent=11 // pred_region
        _
      $region16: #{glo_tkdown_block_pv.8} parent=11 // pred_fallthru
        _
      // Predicated region
      $region17: #{glo_tkdown_block_pv.8} parent=11 // pred_check
        %p137 = pneg %p91
      $region18: #{glo_tkdown_block_pv.8} parent=11 // pred_check_branch
        %139 = sbr.rel (%p137) target = $region20
      $region19: #{glo_tkdown_block_pv.8} parent=11 // pred_region
        _
      $region20: #{glo_tkdown_block_pv.8} parent=11 // pred_fallthru
        _
    $region12: #{glo_tkdown_block_pv.8} parent=5 // pred_fallthru
      _
    %p140 = scmp.lt.s32.totalorder %s9, 2
    // Predicated region
    $region21: #{glo_tkdown_block_pv.8} parent=5 // pred_check
      %p141 = pneg %p140
    $region22: #{glo_tkdown_block_pv.8} parent=5 // pred_check_branch
      %143 = sbr.rel (%p141) target = $region24
    $region23: #{glo_tkdown_block_pv.8} parent=5 // pred_region
      // Predicated region
      $region25: #{glo_tkdown_block_pv.8} parent=23 // pred_check
        %p144 = pneg %p43
      $region26: #{glo_tkdown_block_pv.8} parent=23 // pred_check_branch
        %146 = sbr.rel (%p144) target = $region28
      $region27: #{glo_tkdown_block_pv.8} parent=23 // pred_region
        %s147 = smul.u32 32, %s16
        %p148 = scmp.lt.s32.totalorder %s17, 1
        %s149 = scalar_select %p148, %s17, 1
        %p150 = scmp.lt.s32.totalorder %s147, 31
        %s151 = scalar_select %p150, %s147, 31
        %s152 = smul.addr %s149, 32
        %s153 = sadd.s32 %s151, %s152
        %s154 = smul.addr %s153, 4
        %s155 = scalar_lea.vmem %s0, %s154
        %s156 = smul.u32 32, %s16
      $region28: #{glo_tkdown_block_pv.8} parent=23 // pred_fallthru
        _
    $region24: #{glo_tkdown_block_pv.8} parent=5 // pred_fallthru
      _
    %p157 = scmp.le.s32.totalorder 1, %s9
    %p158 = scmp.lt.s32.totalorder %s9, 3
    %p159 = pnand %p157, %p158
    %p160 = pneg %p159
    // Predicated region
    $region29: #{glo_tkdown_block_pv.8} parent=5 // pred_check
      _
    $region30: #{glo_tkdown_block_pv.8} parent=5 // pred_check_branch
      %162 = sbr.rel (%p159) target = $region32
    $region31: #{glo_tkdown_block_pv.8} parent=5 // pred_region
      %s163 = ssub.s32 %s9, 1
      %s164 = smul.u32 32, %s18
      %p165 = scmp.lt.s32.totalorder %s19, 1
      %s166 = scalar_select %p165, %s19, 1
      %p167 = scmp.lt.s32.totalorder %s164, 31
      %s168 = scalar_select %p167, %s164, 31
      %s169 = smul.addr %s166, 32
      %s170 = sadd.s32 %s168, %s169
      %s171 = smul.addr %s170, 4
      %s172 = scalar_lea.vmem %s0, %s171
      %p173 = pneg %p49
      %p174 = pneg %p46
      %p175 = pneg %p70
      %p176 = pneg %p67
      %p177 = pneg %p91
      %p178 = pneg %p88
      %p179 = pneg %p119
      %p180 = pneg %p116
      %s181 = smul.u32 32, %s18
      %p182 = scmp.lt.s32.totalorder %s19, 1
      %s183 = scalar_select %p182, %s19, 1
      %p184 = scmp.lt.s32.totalorder %s181, 31
      %s185 = scalar_select %p184, %s181, 31
      %s186 = smul.addr %s183, 32
      %s187 = sadd.s32 %s185, %s186
      %s188 = smul.addr %s187, 8
      %s189 = scalar_lea.vmem %s3, %s188
      %s190 = smul.u32 32, %s18
      %p191 = scmp.lt.s32.totalorder %s19, 1
      %s192 = scalar_select %p191, %s19, 1
      %p193 = scmp.lt.s32.totalorder %s190, 31
      %s194 = scalar_select %p193, %s190, 31
      %s195 = smul.addr %s192, 32
      %s196 = sadd.s32 %s194, %s195
      %s197 = smul.addr %s196, 4
      %s198 = scalar_lea.vmem %s0, %s197
      %s199 = smul.u32 32, %s18
      %s200 = smul.u32 32, %s18
      %p201 = scmp.lt.s32.totalorder %s19, 1
      %s202 = scalar_select %p201, %s19, 1
      %p203 = scmp.lt.s32.totalorder %s200, 31
      %s204 = scalar_select %p203, %s200, 31
      %s205 = smul.addr %s202, 32
      %s206 = sadd.s32 %s204, %s205
      %s207 = smul.addr %s206, 8
      %s208 = scalar_lea.vmem %s3, %s207
      %s209 = smul.u32 32, %s18
      %v211 = vld [vmem:[%s198] sm:$0xf]
      %v212 = vld [vmem:[%s198 + $0x4] sm:$0xf]
      %v213 = vld [vmem:[%s198 + $0x8] sm:$0xf]
      %v214 = vld [vmem:[%s198 + $0xc] sm:$0xf]
      %v215 = vld [vmem:[%s198 + $0x10] sm:$0xf]
      %v216 = vld [vmem:[%s198 + $0x14] sm:$0xf]
      %v217 = vld [vmem:[%s198 + $0x18] sm:$0xf]
      %v218 = vld [vmem:[%s198 + $0x1c] sm:$0xf]
      %v219 = vld [vmem:[%s198 + $0x20] sm:$0xf]
      %v220 = vld [vmem:[%s198 + $0x24] sm:$0xf]
      %v221 = vld [vmem:[%s198 + $0x28] sm:$0xf]
      %v222 = vld [vmem:[%s198 + $0x2c] sm:$0xf]
      %v223 = vld [vmem:[%s198 + $0x30] sm:$0xf]
      %v224 = vld [vmem:[%s198 + $0x34] sm:$0xf]
      %v225 = vld [vmem:[%s198 + $0x38] sm:$0xf]
      %v226 = vld [vmem:[%s198 + $0x3c] sm:$0xf]
      %v227 = vld [vmem:[%s198 + $0x40] sm:$0xf]
      %v228 = vld [vmem:[%s198 + $0x44] sm:$0xf]
      %v229 = vld [vmem:[%s198 + $0x48] sm:$0xf]
      %v230 = vld [vmem:[%s198 + $0x4c] sm:$0xf]
      %v231 = vld [vmem:[%s198 + $0x50] sm:$0xf]
      %v232 = vld [vmem:[%s198 + $0x54] sm:$0xf]
      %v233 = vld [vmem:[%s198 + $0x58] sm:$0xf]
      %v234 = vld [vmem:[%s198 + $0x5c] sm:$0xf]
      %v235 = vld [vmem:[%s198 + $0x60] sm:$0xf]
      %v236 = vld [vmem:[%s198 + $0x64] sm:$0xf]
      %v237 = vld [vmem:[%s198 + $0x68] sm:$0xf]
      %v238 = vld [vmem:[%s198 + $0x6c] sm:$0xf]
      %v239 = vld [vmem:[%s198 + $0x70] sm:$0xf]
      %v240 = vld [vmem:[%s198 + $0x74] sm:$0xf]
      %v241 = vld [vmem:[%s198 + $0x78] sm:$0xf]
      %v242 = vld [vmem:[%s198 + $0x7c] sm:$0xf]
      %v243 = vld [vmem:[%s1] sm:$0xf]
      %v244 = vld [vmem:[%s2] sm:$0x1]
      %v246 = vlaneseq
      %v247 = vshrl.u32 %v246, 7
      %v248 = vsub.s32 0, %v247
      %v249 = vrot.slane %v244, %v248
      %v283 = vunpack.c.l.b16 %v211
      %v284 = vunpack.c.l.b16 %v212
      %v285 = vunpack.c.l.b16 %v213
      %v286 = vunpack.c.l.b16 %v214
      %v287 = vunpack.c.l.b16 %v215
      %v288 = vunpack.c.l.b16 %v216
      %v289 = vunpack.c.l.b16 %v217
      %v290 = vunpack.c.l.b16 %v218
      %v291 = vunpack.c.l.b16 %v219
      %v292 = vunpack.c.l.b16 %v220
      %v293 = vunpack.c.l.b16 %v221
      %v294 = vunpack.c.l.b16 %v222
      %v295 = vunpack.c.l.b16 %v223
      %v296 = vunpack.c.l.b16 %v224
      %v297 = vunpack.c.l.b16 %v225
      %v298 = vunpack.c.l.b16 %v226
      %v299 = vunpack.c.l.b16 %v227
      %v300 = vunpack.c.l.b16 %v228
      %v301 = vunpack.c.l.b16 %v229
      %v302 = vunpack.c.l.b16 %v230
      %v303 = vunpack.c.l.b16 %v231
      %v304 = vunpack.c.l.b16 %v232
      %v305 = vunpack.c.l.b16 %v233
      %v306 = vunpack.c.l.b16 %v234
      %v307 = vunpack.c.l.b16 %v235
      %v308 = vunpack.c.l.b16 %v236
      %v309 = vunpack.c.l.b16 %v237
      %v310 = vunpack.c.l.b16 %v238
      %v311 = vunpack.c.l.b16 %v239
      %v312 = vunpack.c.l.b16 %v240
      %v313 = vunpack.c.l.b16 %v241
      %v314 = vunpack.c.l.b16 %v242
      %v315 = vpack.c.b16 %v284, %v283
      %v316 = vpack.c.b16 %v286, %v285
      %v317 = vpack.c.b16 %v288, %v287
      %v318 = vpack.c.b16 %v290, %v289
      %v319 = vpack.c.b16 %v292, %v291
      %v320 = vpack.c.b16 %v294, %v293
      %v321 = vpack.c.b16 %v296, %v295
      %v322 = vpack.c.b16 %v298, %v297
      %v323 = vpack.c.b16 %v300, %v299
      %v324 = vpack.c.b16 %v302, %v301
      %v325 = vpack.c.b16 %v304, %v303
      %v326 = vpack.c.b16 %v306, %v305
      %v327 = vpack.c.b16 %v308, %v307
      %v328 = vpack.c.b16 %v310, %v309
      %v329 = vpack.c.b16 %v312, %v311
      %v330 = vpack.c.b16 %v314, %v313
      %vm331 = vcmask 64512
      %v333 = vsel %vm331, %v315, 0
      %v336 = vsel %vm331, %v316, 0
      %v339 = vsel %vm331, %v317, 0
      %v342 = vsel %vm331, %v318, 0
      %v345 = vsel %vm331, %v319, 0
      %v348 = vsel %vm331, %v320, 0
      %v351 = vsel %vm331, %v321, 0
      %v354 = vsel %vm331, %v322, 0
      %v357 = vsel %vm331, %v323, 0
      %v360 = vsel %vm331, %v324, 0
      %v363 = vsel %vm331, %v325, 0
      %v366 = vsel %vm331, %v326, 0
      %v369 = vsel %vm331, %v327, 0
      %v372 = vsel %vm331, %v328, 0
      %v375 = vsel %vm331, %v329, 0
      %v378 = vsel %vm331, %v330, 0
      %vm380 = vcmask 1043456
      %v382 = vsel %vm380, %v243, 0
      %384 = vmatprep.subr.bf16.mxu0 0
      %385 = vmatpush1.bf16.msra.mxu0 %v382
      %386 = vmatprep.subr.bf16.mxu0 0
      %387 = vmatpush1.bf16.msra.mxu0 0
      %388 = vmatprep.subr.bf16.mxu0 0
      %389 = vmatpush1.bf16.msra.mxu0 0
      %390 = vmatprep.subr.bf16.mxu0 0
      %391 = vmatpush1.bf16.msra.mxu0 0
      %392 = vmatprep.subr.bf16.mxu0 0
      %393 = vmatpush1.bf16.msra.mxu0 0
      %394 = vmatprep.subr.bf16.mxu0 0
      %395 = vmatpush1.bf16.msra.mxu0 0
      %396 = vmatprep.subr.bf16.mxu0 0
      %397 = vmatpush1.bf16.msra.mxu0 0
      %398 = vmatprep.subr.bf16.mxu0 0
      %399 = vmatpush1.bf16.msra.mxu0 0
      %400 = vmatprep.subr.bf16.mxu0 0
      %401 = vmatpush1.bf16.msra.mxu0 0
      %402 = vmatprep.subr.bf16.mxu0 0
      %403 = vmatpush1.bf16.msra.mxu0 0
      %404 = vmatprep.subr.bf16.mxu0 0
      %405 = vmatpush1.bf16.msra.mxu0 0
      %406 = vmatprep.subr.bf16.mxu0 0
      %407 = vmatpush1.bf16.msra.mxu0 0
      %408 = vmatprep.subr.bf16.mxu0 0
      %409 = vmatpush1.bf16.msra.mxu0 0
      %410 = vmatprep.subr.bf16.mxu0 0
      %411 = vmatpush1.bf16.msra.mxu0 0
      %412 = vmatprep.subr.bf16.mxu0 0
      %413 = vmatpush1.bf16.msra.mxu0 0
      %414 = vmatprep.subr.bf16.mxu0 0
      %415 = vmatpush1.bf16.msra.mxu0 0
      %416 = vmatprep.mubr.bf16.mxu0 0
      %417 = vmatmul.mubr.bf16.gmra.mrb[0].mxu0 %v333
      %v418 = vpop.f32.mrb[0].mxu0
      %v419 = vadd.f32 %v249, %v418
      %v420 = vpop.f32.mrb[0].mxu0
      %v421 = vpop.f32.mrb[0].mxu0
      %v422 = vadd.f32 %v249, %v421
      %v423 = vpop.f32.mrb[0].mxu0
      %424 = vmatprep.mubr.bf16.mxu0 0
      %425 = vmatmul.mubr.bf16.gmra.mrb[0].mxu0 %v336
      %v426 = vpop.f32.mrb[0].mxu0
      %v427 = vadd.f32 %v249, %v426
      %v428 = vpop.f32.mrb[0].mxu0
      %v429 = vpop.f32.mrb[0].mxu0
      %v430 = vadd.f32 %v249, %v429
      %v431 = vpop.f32.mrb[0].mxu0
      %432 = vmatprep.mubr.bf16.mxu0 0
      %433 = vmatmul.mubr.bf16.gmra.mrb[0].mxu0 %v339
      %v434 = vpop.f32.mrb[0].mxu0
      %v435 = vadd.f32 %v249, %v434
      %v436 = vpop.f32.mrb[0].mxu0
      %v437 = vpop.f32.mrb[0].mxu0
      %v438 = vadd.f32 %v249, %v437
      %v439 = vpop.f32.mrb[0].mxu0
      %440 = vmatprep.mubr.bf16.mxu0 0
      %441 = vmatmul.mubr.bf16.gmra.mrb[0].mxu0 %v342
      %v442 = vpop.f32.mrb[0].mxu0
      %v443 = vadd.f32 %v249, %v442
      %v444 = vpop.f32.mrb[0].mxu0
      %v445 = vpop.f32.mrb[0].mxu0
      %v446 = vadd.f32 %v249, %v445
      %v447 = vpop.f32.mrb[0].mxu0
      %448 = vmatprep.mubr.bf16.mxu0 0
      %449 = vmatmul.mubr.bf16.gmra.mrb[0].mxu0 %v345
      %v450 = vpop.f32.mrb[0].mxu0
      %v451 = vadd.f32 %v249, %v450
      %v452 = vpop.f32.mrb[0].mxu0
      %v453 = vpop.f32.mrb[0].mxu0
      %v454 = vadd.f32 %v249, %v453
      %v455 = vpop.f32.mrb[0].mxu0
      %456 = vmatprep.mubr.bf16.mxu0 0
      %457 = vmatmul.mubr.bf16.gmra.mrb[0].mxu0 %v348
      %v458 = vpop.f32.mrb[0].mxu0
      %v459 = vadd.f32 %v249, %v458
      %v460 = vpop.f32.mrb[0].mxu0
      %v461 = vpop.f32.mrb[0].mxu0
      %v462 = vadd.f32 %v249, %v461
      %v463 = vpop.f32.mrb[0].mxu0
      %464 = vmatprep.mubr.bf16.mxu0 0
      %465 = vmatmul.mubr.bf16.gmra.mrb[0].mxu0 %v351
      %v466 = vpop.f32.mrb[0].mxu0
      %v467 = vadd.f32 %v249, %v466
      %v468 = vpop.f32.mrb[0].mxu0
      %v469 = vpop.f32.mrb[0].mxu0
      %v470 = vadd.f32 %v249, %v469
      %v471 = vpop.f32.mrb[0].mxu0
      %472 = vmatprep.mubr.bf16.mxu0 0
      %473 = vmatmul.mubr.bf16.gmra.mrb[0].mxu0 %v354
      %v474 = vpop.f32.mrb[0].mxu0
      %v475 = vadd.f32 %v249, %v474
      %v476 = vpop.f32.mrb[0].mxu0
      %v477 = vpop.f32.mrb[0].mxu0
      %v478 = vadd.f32 %v249, %v477
      %v479 = vpop.f32.mrb[0].mxu0
      %480 = vmatprep.mubr.bf16.mxu0 0
      %481 = vmatmul.mubr.bf16.gmra.mrb[0].mxu0 %v357
      %v482 = vpop.f32.mrb[0].mxu0
      %v483 = vadd.f32 %v249, %v482
      %v484 = vpop.f32.mrb[0].mxu0
      %v485 = vpop.f32.mrb[0].mxu0
      %v486 = vadd.f32 %v249, %v485
      %v487 = vpop.f32.mrb[0].mxu0
      %488 = vmatprep.mubr.bf16.mxu0 0
      %489 = vmatmul.mubr.bf16.gmra.mrb[0].mxu0 %v360
      %v490 = vpop.f32.mrb[0].mxu0
      %v491 = vadd.f32 %v249, %v490
      %v492 = vpop.f32.mrb[0].mxu0
      %v493 = vpop.f32.mrb[0].mxu0
      %v494 = vadd.f32 %v249, %v493
      %v495 = vpop.f32.mrb[0].mxu0
      %496 = vmatprep.mubr.bf16.mxu0 0
      %497 = vmatmul.mubr.bf16.gmra.mrb[0].mxu0 %v363
      %v498 = vpop.f32.mrb[0].mxu0
      %v499 = vadd.f32 %v249, %v498
      %v500 = vpop.f32.mrb[0].mxu0
      %v501 = vpop.f32.mrb[0].mxu0
      %v502 = vadd.f32 %v249, %v501
      %v503 = vpop.f32.mrb[0].mxu0
      %504 = vmatprep.mubr.bf16.mxu0 0
      %505 = vmatmul.mubr.bf16.gmra.mrb[0].mxu0 %v366
      %v506 = vpop.f32.mrb[0].mxu0
      %v507 = vadd.f32 %v249, %v506
      %v508 = vpop.f32.mrb[0].mxu0
      %v509 = vpop.f32.mrb[0].mxu0
      %v510 = vadd.f32 %v249, %v509
      %v511 = vpop.f32.mrb[0].mxu0
      %512 = vmatprep.mubr.bf16.mxu0 0
      %513 = vmatmul.mubr.bf16.gmra.mrb[0].mxu0 %v369
      %v514 = vpop.f32.mrb[0].mxu0
      %v515 = vadd.f32 %v249, %v514
      %v516 = vpop.f32.mrb[0].mxu0
      %v517 = vpop.f32.mrb[0].mxu0
      %v518 = vadd.f32 %v249, %v517
      %v519 = vpop.f32.mrb[0].mxu0
      %520 = vmatprep.mubr.bf16.mxu0 0
      %521 = vmatmul.mubr.bf16.gmra.mrb[0].mxu0 %v372
      %v522 = vpop.f32.mrb[0].mxu0
      %v523 = vadd.f32 %v249, %v522
      %v524 = vpop.f32.mrb[0].mxu0
      %v525 = vpop.f32.mrb[0].mxu0
      %v526 = vadd.f32 %v249, %v525
      %v527 = vpop.f32.mrb[0].mxu0
      %528 = vmatprep.mubr.bf16.mxu0 0
      %529 = vmatmul.mubr.bf16.gmra.mrb[0].mxu0 %v375
      %v530 = vpop.f32.mrb[0].mxu0
      %v531 = vadd.f32 %v249, %v530
      %v532 = vpop.f32.mrb[0].mxu0
      %v533 = vpop.f32.mrb[0].mxu0
      %v534 = vadd.f32 %v249, %v533
      %v535 = vpop.f32.mrb[0].mxu0
      %536 = vmatprep.mubr.bf16.mxu0 0
      %537 = vmatmul.mubr.bf16.gmra.mrb[0].mxu0 %v378
      %v538 = vpop.f32.mrb[0].mxu0
      %v539 = vadd.f32 %v249, %v538
      %v540 = vpop.f32.mrb[0].mxu0
      %v541 = vpop.f32.mrb[0].mxu0
      %v542 = vadd.f32 %v249, %v541
      %v543 = vpop.f32.mrb[0].mxu0
      %544 = vdwg.mxu0
      %vm545 = vcmask 261120
      %546 = vst.msk [vmem:[%s208] sm:$0xff] %vm545, %v419
      %547 = vst.msk [vmem:[%s208 + $0x8] sm:$0xff] %vm545, %v422
      %548 = vst.msk [vmem:[%s208 + $0x10] sm:$0xff] %vm545, %v427
      %549 = vst.msk [vmem:[%s208 + $0x18] sm:$0xff] %vm545, %v430
      %550 = vst.msk [vmem:[%s208 + $0x20] sm:$0xff] %vm545, %v435
      %551 = vst.msk [vmem:[%s208 + $0x28] sm:$0xff] %vm545, %v438
      %552 = vst.msk [vmem:[%s208 + $0x30] sm:$0xff] %vm545, %v443
      %553 = vst.msk [vmem:[%s208 + $0x38] sm:$0xff] %vm545, %v446
      %554 = vst.msk [vmem:[%s208 + $0x40] sm:$0xff] %vm545, %v451
      %555 = vst.msk [vmem:[%s208 + $0x48] sm:$0xff] %vm545, %v454
      %556 = vst.msk [vmem:[%s208 + $0x50] sm:$0xff] %vm545, %v459
      %557 = vst.msk [vmem:[%s208 + $0x58] sm:$0xff] %vm545, %v462
      %558 = vst.msk [vmem:[%s208 + $0x60] sm:$0xff] %vm545, %v467
      %559 = vst.msk [vmem:[%s208 + $0x68] sm:$0xff] %vm545, %v470
      %560 = vst.msk [vmem:[%s208 + $0x70] sm:$0xff] %vm545, %v475
      %561 = vst.msk [vmem:[%s208 + $0x78] sm:$0xff] %vm545, %v478
      %562 = vst.msk [vmem:[%s208 + $0x80] sm:$0xff] %vm545, %v483
      %563 = vst.msk [vmem:[%s208 + $0x88] sm:$0xff] %vm545, %v486
      %564 = vst.msk [vmem:[%s208 + $0x90] sm:$0xff] %vm545, %v491
      %565 = vst.msk [vmem:[%s208 + $0x98] sm:$0xff] %vm545, %v494
      %566 = vst.msk [vmem:[%s208 + $0xa0] sm:$0xff] %vm545, %v499
      %567 = vst.msk [vmem:[%s208 + $0xa8] sm:$0xff] %vm545, %v502
      %568 = vst.msk [vmem:[%s208 + $0xb0] sm:$0xff] %vm545, %v507
      %569 = vst.msk [vmem:[%s208 + $0xb8] sm:$0xff] %vm545, %v510
      %570 = vst.msk [vmem:[%s208 + $0xc0] sm:$0xff] %vm545, %v515
      %571 = vst.msk [vmem:[%s208 + $0xc8] sm:$0xff] %vm545, %v518
      %572 = vst.msk [vmem:[%s208 + $0xd0] sm:$0xff] %vm545, %v523
      %573 = vst.msk [vmem:[%s208 + $0xd8] sm:$0xff] %vm545, %v526
      %574 = vst.msk [vmem:[%s208 + $0xe0] sm:$0xff] %vm545, %v531
      %575 = vst.msk [vmem:[%s208 + $0xe8] sm:$0xff] %vm545, %v534
      %576 = vst.msk [vmem:[%s208 + $0xf0] sm:$0xff] %vm545, %v539
      %577 = vst.msk [vmem:[%s208 + $0xf8] sm:$0xff] %vm545, %v542
      %s578 = smul.u32 32, %s18
      %p579 = scmp.lt.s32.totalorder %s19, 1
      %s580 = scalar_select %p579, %s19, 1
      %p581 = scmp.lt.s32.totalorder %s578, 31
      %s582 = scalar_select %p581, %s578, 31
      %s583 = smul.addr %s580, 32
      %s584 = sadd.s32 %s582, %s583
      %s585 = smul.addr %s584, 8
      %s586 = scalar_lea.vmem %s3, %s585
      // Predicated region
      $region33: #{glo_tkdown_block_pv.8} parent=31 // pred_check
        %p587 = pneg %p116
      $region34: #{glo_tkdown_block_pv.8} parent=31 // pred_check_branch
        %589 = sbr.rel (%p587) target = $region36
      $region35: #{glo_tkdown_block_pv.8} parent=31 // pred_region
        %s590 = smul.u32 32, %s18
      $region36: #{glo_tkdown_block_pv.8} parent=31 // pred_fallthru
        _
    $region32: #{glo_tkdown_block_pv.8} parent=5 // pred_fallthru
      _
    %p591 = scmp.le.s32.totalorder 2, %s9
    // Predicated region
    $region37: #{glo_tkdown_block_pv.8} parent=5 // pred_check
      %p592 = pneg %p591
    $region38: #{glo_tkdown_block_pv.8} parent=5 // pred_check_branch
      %594 = sbr.rel (%p592) target = $region40
    $region39: #{glo_tkdown_block_pv.8} parent=5 // pred_region
      %s595 = ssub.s32 %s9, 2
      // Predicated region
      $region41: #{glo_tkdown_block_pv.8} parent=39 // pred_check
        %p596 = pneg %p122
      $region42: #{glo_tkdown_block_pv.8} parent=39 // pred_check_branch
        %598 = sbr.rel (%p596) target = $region44
      $region43: #{glo_tkdown_block_pv.8} parent=39 // pred_region
        %s599 = smul.u32 32, %s20
        %p600 = scmp.lt.s32.totalorder %s21, 1
        %s601 = scalar_select %p600, %s21, 1
        %p602 = scmp.lt.s32.totalorder %s599, 31
        %s603 = scalar_select %p602, %s599, 31
        %s604 = smul.addr %s601, 32
        %s605 = sadd.s32 %s603, %s604
        %s606 = smul.addr %s605, 8
        %s607 = scalar_lea.vmem %s3, %s606
      $region44: #{glo_tkdown_block_pv.8} parent=39 // pred_fallthru
        _
    $region40: #{glo_tkdown_block_pv.8} parent=5 // pred_fallthru
      _
  $region6: #{glo_tkdown_block_pv.8} parent=0 // loop_footer
    %s13 = sadd.s32 1, %s9
  $region7: #{glo_tkdown_block_pv.8} parent=0 // loop_footer_branch
    %8 = sbr.rel target = $region3
  $region8: #{glo_tkdown_block_pv.8} parent=0 // loop_exit
    _

// kernel: glo_tkdown_block_pv.7
$region0: #{glo_tkdown_block_pv.7}
  #allocation0 [shape = 'u32[]', space=smem, size = 0x4, offset = 0x4, fixed_abs, tag = 'smem constant byte address 0x4 - core index']
  #allocation1 [shape = 'u32[144,128]{1,0:T(1,128)}', space=vmem, size = 0x12000, scoped, tag = 'internal scratch']
  %s0 = inlined_call_operand.vmem [shape: bf16[2,256,8], index: 0, kind: input, shape index: {}]
  %s1 = inlined_call_operand.vmem [shape: bf16[2,384,8], index: 1, kind: input, shape index: {}]
  %s2 = inlined_call_operand.vmem [shape: bf16[2,384,8], index: 2, kind: input, shape index: {}]
  %s3 = inlined_call_operand.vmem [shape: bf16[2,8,8], index: 3, kind: input, shape index: {}]
  %s4 = inlined_call_operand.vmem [shape: f32[1,8], index: 4, kind: input, shape index: {}]
  %s5 = inlined_call_operand.vmem [shape: f32[2,256,8], index: 5, kind: output, shape index: {}]
  %s6 = sld [smem:[#allocation0]]
  $region53: #{glo_tkdown_block_pv.7} parent=0
    _
  %s8 = ssub.s32 1, %s6
  %s9 = scalar_select 0, %s8, %s6
  loop: start=0, step=1, limit=4
  $region2: #{glo_tkdown_block_pv.7} parent=0 // loop_pre_header
    _
  $region3: #{glo_tkdown_block_pv.7} parent=0 // loop_header
    %s11 = sphi 0, %s15
    %p12 = scmp.ge.s32.totalorder %s11, 4
    %s18 = sphi 0, %s30
    %s19 = sphi 0, %s26
    %s20 = sphi 0, %s18
    %s21 = sphi 0, %s19
    %s22 = sphi 0, %s20
    %s23 = sphi 0, %s21
    %s35 = sphi 0, %s37
    %s38 = sphi 0, %s35
    %s39 = sphi 0, %s38
    %s55 = sphi 0, %s39
    %s61 = sphi 0, %s63
    %s64 = sphi 0, %s61
    %s65 = sphi 0, %s64
    %s81 = sphi 0, %s65
    %s87 = sphi 0, %s89
    %s90 = sphi 0, %s87
    %s91 = sphi 0, %s90
    %s107 = sphi 0, %s91
    %s113 = sphi 0, %s115
    %s116 = sphi 0, %s113
    %s117 = sphi 0, %s116
    %s133 = sphi 0, %s117
    %s137 = sphi 0, %s137
    %s139 = sphi 0, %s137
    %s140 = sphi 0, %s139
    %s154 = sphi 0, %s140
    %s162 = sphi 0, %s164
    %s165 = sphi 0, %s162
    %s166 = sphi 0, %s165
    %s182 = sphi 0, %s166
  $region4: #{glo_tkdown_block_pv.7} parent=0 // loop_header_branch
    %14 = sbr.rel (%p12) target = $region8
  $region5: #{glo_tkdown_block_pv.7} parent=0 // loop_body
    %s16 = ssub.s32 %s11, 1
    %s17 = ssub.s32 %s11, 2
    %s24 = sadd.s32 1, %s19
    %p25 = scmp.ge.s32.totalorder %s24, 2
    %s26 = scalar_select %p25, 0, %s24
    %s27 = sadd.s32 1, %s18
    %s28 = scalar_select %p25, %s27, %s18
    %p29 = scmp.ge.s32.totalorder %s28, 1
    %s30 = scalar_select %p29, 0, %s28
    %s31 = ssub.s32 %s19, %s26
    %s32 = ssub.s32 %s18, %s30
    %s33 = sor.u32 %s31, %s32
    %p34 = scmp.eq.s32.totalorder %s33, 0
    %s36 = sadd.s32 %s35, 1
    %s37 = scalar_select %p34, %s35, %s36
    %p40 = pneg %p34
    %p41 = scmp.eq.s32.totalorder %s11, 1
    %p42 = por %p40, %p41
    %p43 = scmp.ne.s32.totalorder %s35, %s38
    %p44 = scmp.eq.s32.totalorder %s11, 0
    %p45 = por %p43, %p44
    %p46 = scmp.ne.s32.totalorder %s35, %s38
    %p47 = scmp.eq.s32.totalorder %s16, 1
    %p48 = por %p46, %p47
    %p49 = scmp.ne.s32.totalorder %s38, %s39
    %p50 = scmp.eq.s32.totalorder %s16, 0
    %p51 = por %p49, %p50
    %p52 = scmp.ne.s32.totalorder %s38, %s39
    %p53 = scmp.eq.s32.totalorder %s17, 1
    %p54 = por %p52, %p53
    %p56 = scmp.ne.s32.totalorder %s39, %s55
    %p57 = scmp.eq.s32.totalorder %s17, 0
    %p58 = por %p56, %p57
    %s59 = ssub.s32 %s19, %s26
    %p60 = scmp.eq.s32.totalorder %s59, 0
    %s62 = sadd.s32 %s61, 1
    %s63 = scalar_select %p60, %s61, %s62
    %p66 = pneg %p60
    %p67 = scmp.eq.s32.totalorder %s11, 1
    %p68 = por %p66, %p67
    %p69 = scmp.ne.s32.totalorder %s61, %s64
    %p70 = scmp.eq.s32.totalorder %s11, 0
    %p71 = por %p69, %p70
    %p72 = scmp.ne.s32.totalorder %s61, %s64
    %p73 = scmp.eq.s32.totalorder %s16, 1
    %p74 = por %p72, %p73
    %p75 = scmp.ne.s32.totalorder %s64, %s65
    %p76 = scmp.eq.s32.totalorder %s16, 0
    %p77 = por %p75, %p76
    %p78 = scmp.ne.s32.totalorder %s64, %s65
    %p79 = scmp.eq.s32.totalorder %s17, 1
    %p80 = por %p78, %p79
    %p82 = scmp.ne.s32.totalorder %s65, %s81
    %p83 = scmp.eq.s32.totalorder %s17, 0
    %p84 = por %p82, %p83
    %s85 = ssub.s32 %s19, %s26
    %p86 = scmp.eq.s32.totalorder %s85, 0
    %s88 = sadd.s32 %s87, 1
    %s89 = scalar_select %p86, %s87, %s88
    %p92 = pneg %p86
    %p93 = scmp.eq.s32.totalorder %s11, 1
    %p94 = por %p92, %p93
    %p95 = scmp.ne.s32.totalorder %s87, %s90
    %p96 = scmp.eq.s32.totalorder %s11, 0
    %p97 = por %p95, %p96
    %p98 = scmp.ne.s32.totalorder %s87, %s90
    %p99 = scmp.eq.s32.totalorder %s16, 1
    %p100 = por %p98, %p99
    %p101 = scmp.ne.s32.totalorder %s90, %s91
    %p102 = scmp.eq.s32.totalorder %s16, 0
    %p103 = por %p101, %p102
    %p104 = scmp.ne.s32.totalorder %s90, %s91
    %p105 = scmp.eq.s32.totalorder %s17, 1
    %p106 = por %p104, %p105
    %p108 = scmp.ne.s32.totalorder %s91, %s107
    %p109 = scmp.eq.s32.totalorder %s17, 0
    %p110 = por %p108, %p109
    %s111 = ssub.s32 %s19, %s26
    %p112 = scmp.eq.s32.totalorder %s111, 0
    %s114 = sadd.s32 %s113, 1
    %s115 = scalar_select %p112, %s113, %s114
    %p118 = pneg %p112
    %p119 = scmp.eq.s32.totalorder %s11, 1
    %p120 = por %p118, %p119
    %p121 = scmp.ne.s32.totalorder %s113, %s116
    %p122 = scmp.eq.s32.totalorder %s11, 0
    %p123 = por %p121, %p122
    %p124 = scmp.ne.s32.totalorder %s113, %s116
    %p125 = scmp.eq.s32.totalorder %s16, 1
    %p126 = por %p124, %p125
    %p127 = scmp.ne.s32.totalorder %s116, %s117
    %p128 = scmp.eq.s32.totalorder %s16, 0
    %p129 = por %p127, %p128
    %p130 = scmp.ne.s32.totalorder %s116, %s117
    %p131 = scmp.eq.s32.totalorder %s17, 1
    %p132 = por %p130, %p131
    %p134 = scmp.ne.s32.totalorder %s117, %s133
    %p135 = scmp.eq.s32.totalorder %s17, 0
    %p136 = por %p134, %p135
    %s138 = sadd.s32 %s137, 1
    %p141 = scmp.eq.s32.totalorder %s11, 1
    %p142 = scmp.ne.s32.totalorder %s137, %s139
    %p143 = scmp.eq.s32.totalorder %s11, 0
    %p144 = por %p142, %p143
    %p145 = scmp.ne.s32.totalorder %s137, %s139
    %p146 = scmp.eq.s32.totalorder %s16, 1
    %p147 = por %p145, %p146
    %p148 = scmp.ne.s32.totalorder %s139, %s140
    %p149 = scmp.eq.s32.totalorder %s16, 0
    %p150 = por %p148, %p149
    %p151 = scmp.ne.s32.totalorder %s139, %s140
    %p152 = scmp.eq.s32.totalorder %s17, 1
    %p153 = por %p151, %p152
    %p155 = scmp.ne.s32.totalorder %s140, %s154
    %p156 = scmp.eq.s32.totalorder %s17, 0
    %p157 = por %p155, %p156
    %s158 = ssub.s32 %s19, %s26
    %s159 = ssub.s32 %s18, %s30
    %s160 = sor.u32 %s158, %s159
    %p161 = scmp.eq.s32.totalorder %s160, 0
    %s163 = sadd.s32 %s162, 1
    %s164 = scalar_select %p161, %s162, %s163
    %p167 = pneg %p161
    %p168 = scmp.eq.s32.totalorder %s11, 1
    %p169 = por %p167, %p168
    %p170 = scmp.ne.s32.totalorder %s162, %s165
    %p171 = scmp.eq.s32.totalorder %s11, 0
    %p172 = por %p170, %p171
    %p173 = scmp.ne.s32.totalorder %s162, %s165
    %p174 = scmp.eq.s32.totalorder %s16, 1
    %p175 = por %p173, %p174
    %p176 = scmp.ne.s32.totalorder %s165, %s166
    %p177 = scmp.eq.s32.totalorder %s16, 0
    %p178 = por %p176, %p177
    %p179 = scmp.ne.s32.totalorder %s165, %s166
    %p180 = scmp.eq.s32.totalorder %s17, 1
    %p181 = por %p179, %p180
    %p183 = scmp.ne.s32.totalorder %s166, %s182
    %p184 = scmp.eq.s32.totalorder %s17, 0
    %p185 = por %p183, %p184
    %p186 = scmp.le.s32.totalorder 1, %s11
    %p187 = scmp.lt.s32.totalorder %s11, 3
    %p188 = pnand %p186, %p187
    %p189 = pneg %p188
    // Predicated region
    $region9: #{glo_tkdown_block_pv.7} parent=5 // pred_check
      _
    $region10: #{glo_tkdown_block_pv.7} parent=5 // pred_check_branch
      %191 = sbr.rel (%p188) target = $region12
    $region11: #{glo_tkdown_block_pv.7} parent=5 // pred_region
      %s192 = ssub.s32 %s11, 1
      // Predicated region
      $region13: #{glo_tkdown_block_pv.7} parent=11 // pred_check
        %p193 = pneg %p150
      $region14: #{glo_tkdown_block_pv.7} parent=11 // pred_check_branch
        %195 = sbr.rel (%p193) target = $region16
      $region15: #{glo_tkdown_block_pv.7} parent=11 // pred_region
        _
      $region16: #{glo_tkdown_block_pv.7} parent=11 // pred_fallthru
        _
    $region12: #{glo_tkdown_block_pv.7} parent=5 // pred_fallthru
      _
    %p196 = scmp.lt.s32.totalorder %s11, 2
    // Predicated region
    $region17: #{glo_tkdown_block_pv.7} parent=5 // pred_check
      %p197 = pneg %p196
    $region18: #{glo_tkdown_block_pv.7} parent=5 // pred_check_branch
      %199 = sbr.rel (%p197) target = $region20
    $region19: #{glo_tkdown_block_pv.7} parent=5 // pred_region
      // Predicated region
      $region21: #{glo_tkdown_block_pv.7} parent=19 // pred_check
        %p200 = pneg %p45
      $region22: #{glo_tkdown_block_pv.7} parent=19 // pred_check_branch
        %202 = sbr.rel (%p200) target = $region24
      $region23: #{glo_tkdown_block_pv.7} parent=19 // pred_region
        %s203 = smul.u32 32, %s18
        %p204 = scmp.lt.s32.totalorder %s19, 1
        %s205 = scalar_select %p204, %s19, 1
        %p206 = scmp.lt.s32.totalorder %s203, 31
        %s207 = scalar_select %p206, %s203, 31
        %s208 = smul.addr %s205, 32
        %s209 = sadd.s32 %s207, %s208
        %s210 = smul.addr %s209, 4
        %s211 = scalar_lea.vmem %s0, %s210
        %s212 = smul.u32 32, %s18
      $region24: #{glo_tkdown_block_pv.7} parent=19 // pred_fallthru
        _
      // Predicated region
      $region25: #{glo_tkdown_block_pv.7} parent=19 // pred_check
        %p213 = pneg %p71
      $region26: #{glo_tkdown_block_pv.7} parent=19 // pred_check_branch
        %215 = sbr.rel (%p213) target = $region28
      $region27: #{glo_tkdown_block_pv.7} parent=19 // pred_region
        %p216 = scmp.lt.s32.totalorder %s19, 1
        %s217 = scalar_select %p216, %s19, 1
        %s218 = smul.addr %s217, 48
        %s219 = smul.addr %s218, 4
        %s220 = scalar_lea.vmem %s1, %s219
      $region28: #{glo_tkdown_block_pv.7} parent=19 // pred_fallthru
        _
      // Predicated region
      $region29: #{glo_tkdown_block_pv.7} parent=19 // pred_check
        %p221 = pneg %p97
      $region30: #{glo_tkdown_block_pv.7} parent=19 // pred_check_branch
        %223 = sbr.rel (%p221) target = $region32
      $region31: #{glo_tkdown_block_pv.7} parent=19 // pred_region
        %p224 = scmp.lt.s32.totalorder %s19, 1
        %s225 = scalar_select %p224, %s19, 1
        %s226 = smul.addr %s225, 48
        %s227 = smul.addr %s226, 4
        %s228 = scalar_lea.vmem %s2, %s227
      $region32: #{glo_tkdown_block_pv.7} parent=19 // pred_fallthru
        _
      // Predicated region
      $region33: #{glo_tkdown_block_pv.7} parent=19 // pred_check
        %p229 = pneg %p123
      $region34: #{glo_tkdown_block_pv.7} parent=19 // pred_check_branch
        %231 = sbr.rel (%p229) target = $region36
      $region35: #{glo_tkdown_block_pv.7} parent=19 // pred_region
        %p232 = scmp.lt.s32.totalorder %s19, 1
        %s233 = scalar_select %p232, %s19, 1
        %s234 = smul.addr %s233, 4
        %s235 = scalar_lea.vmem %s3, %s234
      $region36: #{glo_tkdown_block_pv.7} parent=19 // pred_fallthru
        _
    $region20: #{glo_tkdown_block_pv.7} parent=5 // pred_fallthru
      _
    %p236 = scmp.le.s32.totalorder 1, %s11
    %p237 = scmp.lt.s32.totalorder %s11, 3
    %p238 = pnand %p236, %p237
    %p239 = pneg %p238
    // Predicated region
    $region37: #{glo_tkdown_block_pv.7} parent=5 // pred_check
      _
    $region38: #{glo_tkdown_block_pv.7} parent=5 // pred_check_branch
      %241 = sbr.rel (%p238) target = $region40
    $region39: #{glo_tkdown_block_pv.7} parent=5 // pred_region
      %s242 = ssub.s32 %s11, 1
      %s243 = smul.u32 32, %s20
      %p244 = scmp.lt.s32.totalorder %s21, 1
      %s245 = scalar_select %p244, %s21, 1
      %p246 = scmp.lt.s32.totalorder %s243, 31
      %s247 = scalar_select %p246, %s243, 31
      %s248 = smul.addr %s245, 32
      %s249 = sadd.s32 %s247, %s248
      %s250 = smul.addr %s249, 4
      %s251 = scalar_lea.vmem %s0, %s250
      %p252 = pneg %p51
      %p253 = pneg %p48
      %p254 = scmp.lt.s32.totalorder %s21, 1
      %s255 = scalar_select %p254, %s21, 1
      %s256 = smul.addr %s255, 48
      %s257 = smul.addr %s256, 4
      %s258 = scalar_lea.vmem %s1, %s257
      %p259 = pneg %p77
      %p260 = pneg %p74
      %p261 = scmp.lt.s32.totalorder %s21, 1
      %s262 = scalar_select %p261, %s21, 1
      %s263 = smul.addr %s262, 48
      %s264 = smul.addr %s263, 4
      %s265 = scalar_lea.vmem %s2, %s264
      %p266 = pneg %p103
      %p267 = pneg %p100
      %p268 = scmp.lt.s32.totalorder %s21, 1
      %s269 = scalar_select %p268, %s21, 1
      %s270 = smul.addr %s269, 4
      %s271 = scalar_lea.vmem %s3, %s270
      %p272 = pneg %p129
      %p273 = pneg %p126
      %p274 = pneg %p150
      %p275 = pneg %p147
      %p276 = pneg %p178
      %p277 = pneg %p175
      %s278 = smul.u32 32, %s20
      %p279 = scmp.lt.s32.totalorder %s21, 1
      %s280 = scalar_select %p279, %s21, 1
      %p281 = scmp.lt.s32.totalorder %s278, 31
      %s282 = scalar_select %p281, %s278, 31
      %s283 = smul.addr %s280, 32
      %s284 = sadd.s32 %s282, %s283
      %s285 = smul.addr %s284, 8
      %s286 = scalar_lea.vmem %s5, %s285
      %s287 = smul.u32 32, %s20
      %p288 = scmp.lt.s32.totalorder %s21, 1
      %s289 = scalar_select %p288, %s21, 1
      %p290 = scmp.lt.s32.totalorder %s287, 31
      %s291 = scalar_select %p290, %s287, 31
      %s292 = smul.addr %s289, 32
      %s293 = sadd.s32 %s291, %s292
      %s294 = smul.addr %s293, 4
      %s295 = scalar_lea.vmem %s0, %s294
      %s296 = smul.u32 32, %s20
      %p297 = scmp.lt.s32.totalorder %s21, 1
      %s298 = scalar_select %p297, %s21, 1
      %s299 = smul.addr %s298, 48
      %s300 = smul.addr %s299, 4
      %s301 = scalar_lea.vmem %s1, %s300
      %p302 = scmp.lt.s32.totalorder %s21, 1
      %s303 = scalar_select %p302, %s21, 1
      %s304 = smul.addr %s303, 48
      %s305 = smul.addr %s304, 4
      %s306 = scalar_lea.vmem %s2, %s305
      %p307 = scmp.lt.s32.totalorder %s21, 1
      %s308 = scalar_select %p307, %s21, 1
      %s309 = smul.addr %s308, 4
      %s310 = scalar_lea.vmem %s3, %s309
      %s311 = smul.u32 32, %s20
      %p312 = scmp.lt.s32.totalorder %s21, 1
      %s313 = scalar_select %p312, %s21, 1
      %p314 = scmp.lt.s32.totalorder %s311, 31
      %s315 = scalar_select %p314, %s311, 31
      %s316 = smul.addr %s313, 32
      %s317 = sadd.s32 %s315, %s316
      %s318 = smul.addr %s317, 8
      %s319 = scalar_lea.vmem %s5, %s318
      %s320 = smul.u32 32, %s20
      %v322 = vlaneseq
      %v323 = vand.u32 %v322, 127
      %v324 = vadd.s32 %v323, 128
      %v325 = vadd.s32 %v323, 256
      %vm326 = vcmp.lt.s32.totalorder %v323, 354
      %vm327 = vcmp.lt.s32.totalorder %v324, 354
      %vm328 = vcmp.lt.s32.totalorder %v325, 354
      %v329 = vld [vmem:[%s295] sm:$0xf]
      %v330 = vld [vmem:[%s295 + $0x4] sm:$0xf]
      %v331 = vld [vmem:[%s295 + $0x8] sm:$0xf]
      %v332 = vld [vmem:[%s295 + $0xc] sm:$0xf]
      %v333 = vld [vmem:[%s295 + $0x10] sm:$0xf]
      %v334 = vld [vmem:[%s295 + $0x14] sm:$0xf]
      %v335 = vld [vmem:[%s295 + $0x18] sm:$0xf]
      %v336 = vld [vmem:[%s295 + $0x1c] sm:$0xf]
      %v337 = vld [vmem:[%s295 + $0x20] sm:$0xf]
      %v338 = vld [vmem:[%s295 + $0x24] sm:$0xf]
      %v339 = vld [vmem:[%s295 + $0x28] sm:$0xf]
      %v340 = vld [vmem:[%s295 + $0x2c] sm:$0xf]
      %v341 = vld [vmem:[%s295 + $0x30] sm:$0xf]
      %v342 = vld [vmem:[%s295 + $0x34] sm:$0xf]
      %v343 = vld [vmem:[%s295 + $0x38] sm:$0xf]
      %v344 = vld [vmem:[%s295 + $0x3c] sm:$0xf]
      %v345 = vld [vmem:[%s295 + $0x40] sm:$0xf]
      %v346 = vld [vmem:[%s295 + $0x44] sm:$0xf]
      %v347 = vld [vmem:[%s295 + $0x48] sm:$0xf]
      %v348 = vld [vmem:[%s295 + $0x4c] sm:$0xf]
      %v349 = vld [vmem:[%s295 + $0x50] sm:$0xf]
      %v350 = vld [vmem:[%s295 + $0x54] sm:$0xf]
      %v351 = vld [vmem:[%s295 + $0x58] sm:$0xf]
      %v352 = vld [vmem:[%s295 + $0x5c] sm:$0xf]
      %v353 = vld [vmem:[%s295 + $0x60] sm:$0xf]
      %v354 = vld [vmem:[%s295 + $0x64] sm:$0xf]
      %v355 = vld [vmem:[%s295 + $0x68] sm:$0xf]
      %v356 = vld [vmem:[%s295 + $0x6c] sm:$0xf]
      %v357 = vld [vmem:[%s295 + $0x70] sm:$0xf]
      %v358 = vld [vmem:[%s295 + $0x74] sm:$0xf]
      %v359 = vld [vmem:[%s295 + $0x78] sm:$0xf]
      %v360 = vld [vmem:[%s295 + $0x7c] sm:$0xf]
      %v361 = vld [vmem:[%s301] sm:$0xf]
      %v362 = vld [vmem:[%s301 + $0x4] sm:$0xf]
      %v363 = vld [vmem:[%s301 + $0x8] sm:$0xf]
      %v364 = vld [vmem:[%s301 + $0xc] sm:$0xf]
      %v365 = vld [vmem:[%s301 + $0x10] sm:$0xf]
      %v366 = vld [vmem:[%s301 + $0x14] sm:$0xf]
      %v367 = vld [vmem:[%s301 + $0x18] sm:$0xf]
      %v368 = vld [vmem:[%s301 + $0x1c] sm:$0xf]
      %v369 = vld [vmem:[%s301 + $0x20] sm:$0xf]
      %v370 = vld [vmem:[%s301 + $0x24] sm:$0xf]
      %v371 = vld [vmem:[%s301 + $0x28] sm:$0xf]
      %v372 = vld [vmem:[%s301 + $0x2c] sm:$0xf]
      %v373 = vld [vmem:[%s301 + $0x30] sm:$0xf]
      %v374 = vld [vmem:[%s301 + $0x34] sm:$0xf]
      %v375 = vld [vmem:[%s301 + $0x38] sm:$0xf]
      %v376 = vld [vmem:[%s301 + $0x3c] sm:$0xf]
      %v377 = vld [vmem:[%s301 + $0x40] sm:$0xf]
      %v378 = vld [vmem:[%s301 + $0x44] sm:$0xf]
      %v379 = vld [vmem:[%s301 + $0x48] sm:$0xf]
      %v380 = vld [vmem:[%s301 + $0x4c] sm:$0xf]
      %v381 = vld [vmem:[%s301 + $0x50] sm:$0xf]
      %v382 = vld [vmem:[%s301 + $0x54] sm:$0xf]
      %v383 = vld [vmem:[%s301 + $0x58] sm:$0xf]
      %v384 = vld [vmem:[%s301 + $0x5c] sm:$0xf]
      %v385 = vld [vmem:[%s301 + $0x60] sm:$0xf]
      %v386 = vld [vmem:[%s301 + $0x64] sm:$0xf]
      %v387 = vld [vmem:[%s301 + $0x68] sm:$0xf]
      %v388 = vld [vmem:[%s301 + $0x6c] sm:$0xf]
      %v389 = vld [vmem:[%s301 + $0x70] sm:$0xf]
      %v390 = vld [vmem:[%s301 + $0x74] sm:$0xf]
      %v391 = vld [vmem:[%s301 + $0x78] sm:$0xf]
      %v392 = vld [vmem:[%s301 + $0x7c] sm:$0xf]
      %v393 = vld [vmem:[%s301 + $0x80] sm:$0xf]
      %v394 = vld [vmem:[%s301 + $0x84] sm:$0xf]
      %v395 = vld [vmem:[%s301 + $0x88] sm:$0xf]
      %v396 = vld [vmem:[%s301 + $0x8c] sm:$0xf]
      %v397 = vld [vmem:[%s301 + $0x90] sm:$0xf]
      %v398 = vld [vmem:[%s301 + $0x94] sm:$0xf]
      %v399 = vld [vmem:[%s301 + $0x98] sm:$0xf]
      %v400 = vld [vmem:[%s301 + $0x9c] sm:$0xf]
      %v401 = vld [vmem:[%s301 + $0xa0] sm:$0xf]
      %v402 = vld [vmem:[%s301 + $0xa4] sm:$0xf]
      %v403 = vld [vmem:[%s301 + $0xa8] sm:$0xf]
      %v404 = vld [vmem:[%s301 + $0xac] sm:$0xf]
      %v405 = vld [vmem:[%s301 + $0xb0] sm:$0xf]
      %v406 = vld [vmem:[%s301 + $0xb4] sm:$0xf]
      %v407 = vld [vmem:[%s301 + $0xb8] sm:$0xf]
      %v408 = vld [vmem:[%s301 + $0xbc] sm:$0xf]
      %v409 = vld [vmem:[%s306] sm:$0xf]
      %v410 = vld [vmem:[%s306 + $0x4] sm:$0xf]
      %v411 = vld [vmem:[%s306 + $0x8] sm:$0xf]
      %v412 = vld [vmem:[%s306 + $0xc] sm:$0xf]
      %v413 = vld [vmem:[%s306 + $0x10] sm:$0xf]
      %v414 = vld [vmem:[%s306 + $0x14] sm:$0xf]
      %v415 = vld [vmem:[%s306 + $0x18] sm:$0xf]
      %v416 = vld [vmem:[%s306 + $0x1c] sm:$0xf]
      %v417 = vld [vmem:[%s306 + $0x20] sm:$0xf]
      %v418 = vld [vmem:[%s306 + $0x24] sm:$0xf]
      %v419 = vld [vmem:[%s306 + $0x28] sm:$0xf]
      %v420 = vld [vmem:[%s306 + $0x2c] sm:$0xf]
      %v421 = vld [vmem:[%s306 + $0x30] sm:$0xf]
      %v422 = vld [vmem:[%s306 + $0x34] sm:$0xf]
      %v423 = vld [vmem:[%s306 + $0x38] sm:$0xf]
      %v424 = vld [vmem:[%s306 + $0x3c] sm:$0xf]
      %v425 = vld [vmem:[%s306 + $0x40] sm:$0xf]
      %v426 = vld [vmem:[%s306 + $0x44] sm:$0xf]
      %v427 = vld [vmem:[%s306 + $0x48] sm:$0xf]
      %v428 = vld [vmem:[%s306 + $0x4c] sm:$0xf]
      %v429 = vld [vmem:[%s306 + $0x50] sm:$0xf]
      %v430 = vld [vmem:[%s306 + $0x54] sm:$0xf]
      %v431 = vld [vmem:[%s306 + $0x58] sm:$0xf]
      %v432 = vld [vmem:[%s306 + $0x5c] sm:$0xf]
      %v433 = vld [vmem:[%s306 + $0x60] sm:$0xf]
      %v434 = vld [vmem:[%s306 + $0x64] sm:$0xf]
      %v435 = vld [vmem:[%s306 + $0x68] sm:$0xf]
      %v436 = vld [vmem:[%s306 + $0x6c] sm:$0xf]
      %v437 = vld [vmem:[%s306 + $0x70] sm:$0xf]
      %v438 = vld [vmem:[%s306 + $0x74] sm:$0xf]
      %v439 = vld [vmem:[%s306 + $0x78] sm:$0xf]
      %v440 = vld [vmem:[%s306 + $0x7c] sm:$0xf]
      %v441 = vld [vmem:[%s306 + $0x80] sm:$0xf]
      %v442 = vld [vmem:[%s306 + $0x84] sm:$0xf]
      %v443 = vld [vmem:[%s306 + $0x88] sm:$0xf]
      %v444 = vld [vmem:[%s306 + $0x8c] sm:$0xf]
      %v445 = vld [vmem:[%s306 + $0x90] sm:$0xf]
      %v446 = vld [vmem:[%s306 + $0x94] sm:$0xf]
      %v447 = vld [vmem:[%s306 + $0x98] sm:$0xf]
      %v448 = vld [vmem:[%s306 + $0x9c] sm:$0xf]
      %v449 = vld [vmem:[%s306 + $0xa0] sm:$0xf]
      %v450 = vld [vmem:[%s306 + $0xa4] sm:$0xf]
      %v451 = vld [vmem:[%s306 + $0xa8] sm:$0xf]
      %v452 = vld [vmem:[%s306 + $0xac] sm:$0xf]
      %v453 = vld [vmem:[%s306 + $0xb0] sm:$0xf]
      %v454 = vld [vmem:[%s306 + $0xb4] sm:$0xf]
      %v455 = vld [vmem:[%s306 + $0xb8] sm:$0xf]
      %v456 = vld [vmem:[%s306 + $0xbc] sm:$0xf]
      %v489 = vunpack.c.l.b16 %v329
      %v490 = vunpack.c.l.b16 %v330
      %v491 = vunpack.c.l.b16 %v331
      %v492 = vunpack.c.l.b16 %v332
      %v493 = vunpack.c.l.b16 %v333
      %v494 = vunpack.c.l.b16 %v334
      %v495 = vunpack.c.l.b16 %v335
      %v496 = vunpack.c.l.b16 %v336
      %v497 = vunpack.c.l.b16 %v337
      %v498 = vunpack.c.l.b16 %v338
      %v499 = vunpack.c.l.b16 %v339
      %v500 = vunpack.c.l.b16 %v340
      %v501 = vunpack.c.l.b16 %v341
      %v502 = vunpack.c.l.b16 %v342
      %v503 = vunpack.c.l.b16 %v343
      %v504 = vunpack.c.l.b16 %v344
      %v505 = vunpack.c.l.b16 %v345
      %v506 = vunpack.c.l.b16 %v346
      %v507 = vunpack.c.l.b16 %v347
      %v508 = vunpack.c.l.b16 %v348
      %v509 = vunpack.c.l.b16 %v349
      %v510 = vunpack.c.l.b16 %v350
      %v511 = vunpack.c.l.b16 %v351
      %v512 = vunpack.c.l.b16 %v352
      %v513 = vunpack.c.l.b16 %v353
      %v514 = vunpack.c.l.b16 %v354
      %v515 = vunpack.c.l.b16 %v355
      %v516 = vunpack.c.l.b16 %v356
      %v517 = vunpack.c.l.b16 %v357
      %v518 = vunpack.c.l.b16 %v358
      %v519 = vunpack.c.l.b16 %v359
      %v520 = vunpack.c.l.b16 %v360
      %v521 = vpack.c.b16 %v490, %v489
      %v522 = vpack.c.b16 %v492, %v491
      %v523 = vpack.c.b16 %v494, %v493
      %v524 = vpack.c.b16 %v496, %v495
      %v525 = vpack.c.b16 %v498, %v497
      %v526 = vpack.c.b16 %v500, %v499
      %v527 = vpack.c.b16 %v502, %v501
      %v528 = vpack.c.b16 %v504, %v503
      %v529 = vpack.c.b16 %v506, %v505
      %v530 = vpack.c.b16 %v508, %v507
      %v531 = vpack.c.b16 %v510, %v509
      %v532 = vpack.c.b16 %v512, %v511
      %v533 = vpack.c.b16 %v514, %v513
      %v534 = vpack.c.b16 %v516, %v515
      %v535 = vpack.c.b16 %v518, %v517
      %v536 = vpack.c.b16 %v520, %v519
      %v585 = vunpack.c.l.b16 %v361
      %v586 = vunpack.c.l.b16 %v362
      %v587 = vunpack.c.l.b16 %v363
      %v588 = vunpack.c.l.b16 %v364
      %v589 = vunpack.c.l.b16 %v365
      %v590 = vunpack.c.l.b16 %v366
      %v591 = vunpack.c.l.b16 %v367
      %v592 = vunpack.c.l.b16 %v368
      %v593 = vunpack.c.l.b16 %v369
      %v594 = vunpack.c.l.b16 %v370
      %v595 = vunpack.c.l.b16 %v371
      %v596 = vunpack.c.l.b16 %v372
      %v597 = vunpack.c.l.b16 %v373
      %v598 = vunpack.c.l.b16 %v374
      %v599 = vunpack.c.l.b16 %v375
      %v600 = vunpack.c.l.b16 %v376
      %v601 = vunpack.c.l.b16 %v377
      %v602 = vunpack.c.l.b16 %v378
      %v603 = vunpack.c.l.b16 %v379
      %v604 = vunpack.c.l.b16 %v380
      %v605 = vunpack.c.l.b16 %v381
      %v606 = vunpack.c.l.b16 %v382
      %v607 = vunpack.c.l.b16 %v383
      %v608 = vunpack.c.l.b16 %v384
      %v609 = vunpack.c.l.b16 %v385
      %v610 = vunpack.c.l.b16 %v386
      %v611 = vunpack.c.l.b16 %v387
      %v612 = vunpack.c.l.b16 %v388
      %v613 = vunpack.c.l.b16 %v389
      %v614 = vunpack.c.l.b16 %v390
      %v615 = vunpack.c.l.b16 %v391
      %v616 = vunpack.c.l.b16 %v392
      %v617 = vunpack.c.l.b16 %v393
      %v618 = vunpack.c.l.b16 %v394
      %v619 = vunpack.c.l.b16 %v395
      %v620 = vunpack.c.l.b16 %v396
      %v621 = vunpack.c.l.b16 %v397
      %v622 = vunpack.c.l.b16 %v398
      %v623 = vunpack.c.l.b16 %v399
      %v624 = vunpack.c.l.b16 %v400
      %v625 = vunpack.c.l.b16 %v401
      %v626 = vunpack.c.l.b16 %v402
      %v627 = vunpack.c.l.b16 %v403
      %v628 = vunpack.c.l.b16 %v404
      %v629 = vunpack.c.l.b16 %v405
      %v630 = vunpack.c.l.b16 %v406
      %v631 = vunpack.c.l.b16 %v407
      %v632 = vunpack.c.l.b16 %v408
      %v633 = vpack.c.b16 %v586, %v585
      %v634 = vpack.c.b16 %v588, %v587
      %v635 = vpack.c.b16 %v590, %v589
      %v636 = vpack.c.b16 %v592, %v591
      %v637 = vpack.c.b16 %v594, %v593
      %v638 = vpack.c.b16 %v596, %v595
      %v639 = vpack.c.b16 %v598, %v597
      %v640 = vpack.c.b16 %v600, %v599
      %v641 = vpack.c.b16 %v602, %v601
      %v642 = vpack.c.b16 %v604, %v603
      %v643 = vpack.c.b16 %v606, %v605
      %v644 = vpack.c.b16 %v608, %v607
      %v645 = vpack.c.b16 %v610, %v609
      %v646 = vpack.c.b16 %v612, %v611
      %v647 = vpack.c.b16 %v614, %v613
      %v648 = vpack.c.b16 %v616, %v615
      %v649 = vpack.c.b16 %v618, %v617
      %v650 = vpack.c.b16 %v620, %v619
      %v651 = vpack.c.b16 %v622, %v621
      %v652 = vpack.c.b16 %v624, %v623
      %v653 = vpack.c.b16 %v626, %v625
      %v654 = vpack.c.b16 %v628, %v627
      %v655 = vpack.c.b16 %v630, %v629
      %v656 = vpack.c.b16 %v632, %v631
      %vm657 = vcmask 31744
      %v659 = vsel %vm657, %v521, 0
      %v662 = vsel %vm657, %v522, 0
      %v665 = vsel %vm657, %v523, 0
      %v668 = vsel %vm657, %v524, 0
      %v671 = vsel %vm657, %v525, 0
      %v674 = vsel %vm657, %v526, 0
      %v677 = vsel %vm657, %v527, 0
      %v680 = vsel %vm657, %v528, 0
      %v683 = vsel %vm657, %v529, 0
      %v686 = vsel %vm657, %v530, 0
      %v689 = vsel %vm657, %v531, 0
      %v692 = vsel %vm657, %v532, 0
      %v695 = vsel %vm657, %v533, 0
      %v698 = vsel %vm657, %v534, 0
      %v701 = vsel %vm657, %v535, 0
      %v704 = vsel %vm657, %v536, 0
      %v707 = vsel %vm657, %v633, 0
      %v710 = vsel %vm657, %v634, 0
      %v713 = vsel %vm657, %v635, 0
      %v716 = vsel %vm657, %v636, 0
      %v719 = vsel %vm657, %v637, 0
      %v722 = vsel %vm657, %v638, 0
      %v725 = vsel %vm657, %v639, 0
      %v728 = vsel %vm657, %v640, 0
      %v731 = vsel %vm657, %v641, 0
      %v734 = vsel %vm657, %v642, 0
      %v737 = vsel %vm657, %v643, 0
      %v740 = vsel %vm657, %v644, 0
      %v743 = vsel %vm657, %v645, 0
      %v746 = vsel %vm657, %v646, 0
      %v749 = vsel %vm657, %v647, 0
      %v752 = vsel %vm657, %v648, 0
      %v755 = vsel %vm657, %v649, 0
      %v758 = vsel %vm657, %v650, 0
      %v761 = vsel %vm657, %v651, 0
      %v764 = vsel %vm657, %v652, 0
      %v767 = vsel %vm657, %v653, 0
      %v770 = vsel %vm657, %v654, 0
      %v773 = vsel %vm657, %v655, 0
      %v776 = vsel %vm657, %v656, 0
      %778 = vmatprep.subr.bf16.mxu0 0
      %779 = vmatpush1.bf16.xpose.msra.mxu0 %v707
      %780 = vmatprep.subr.bf16.mxu0 0
      %781 = vmatpush1.bf16.xpose.msra.mxu0 %v710
      %782 = vmatprep.subr.bf16.mxu0 0
      %783 = vmatpush1.bf16.xpose.msra.mxu0 %v713
      %784 = vmatprep.subr.bf16.mxu0 0
      %785 = vmatpush1.bf16.xpose.msra.mxu0 %v716
      %786 = vmatprep.subr.bf16.mxu0 0
      %787 = vmatpush1.bf16.xpose.msra.mxu0 %v719
      %788 = vmatprep.subr.bf16.mxu0 0
      %789 = vmatpush1.bf16.xpose.msra.mxu0 %v722
      %790 = vmatprep.subr.bf16.mxu0 0
      %791 = vmatpush1.bf16.xpose.msra.mxu0 %v725
      %792 = vmatprep.subr.bf16.mxu0 0
      %793 = vmatpush1.bf16.xpose.msra.mxu0 %v728
      %794 = vmatprep.subr.bf16.mxu0 0
      %795 = vmatpush1.bf16.xpose.msra.mxu0 %v731
      %796 = vmatprep.subr.bf16.mxu0 0
      %797 = vmatpush1.bf16.xpose.msra.mxu0 %v734
      %798 = vmatprep.subr.bf16.mxu0 0
      %799 = vmatpush1.bf16.xpose.msra.mxu0 %v737
      %800 = vmatprep.subr.bf16.mxu0 0
      %801 = vmatpush1.bf16.xpose.msra.mxu0 %v740
      %802 = vmatprep.subr.bf16.mxu0 0
      %803 = vmatpush1.bf16.xpose.msra.mxu0 %v743
      %804 = vmatprep.subr.bf16.mxu0 0
      %805 = vmatpush1.bf16.xpose.msra.mxu0 %v746
      %806 = vmatprep.subr.bf16.mxu0 0
      %807 = vmatpush1.bf16.xpose.msra.mxu0 %v749
      %808 = vmatprep.subr.bf16.mxu0 0
      %809 = vmatpush1.bf16.xpose.msra.mxu0 %v752
      %810 = vmatprep.mubr.bf16.mxu0 0
      %811 = vmatmul.mubr.bf16.gmra.mrb[0].mxu0 %v659
      %v812 = vpop.f32.mrb[0].mxu0
      %v813 = vadd.f32 0.0, %v812
      %v814 = vpop.f32.mrb[0].mxu0
      %v815 = vadd.f32 0.0, %v814
      %v816 = vpop.f32.mrb[0].mxu0
      %v817 = vadd.f32 0.0, %v816
      %v818 = vpop.f32.mrb[0].mxu0
      %v819 = vadd.f32 0.0, %v818
      %820 = vmatprep.mubr.bf16.mxu0 0
      %821 = vmatmul.mubr.bf16.gmra.mrb[0].mxu0 %v662
      %v822 = vpop.f32.mrb[0].mxu0
      %v823 = vadd.f32 0.0, %v822
      %v824 = vpop.f32.mrb[0].mxu0
      %v825 = vadd.f32 0.0, %v824
      %v826 = vpop.f32.mrb[0].mxu0
      %v827 = vadd.f32 0.0, %v826
      %v828 = vpop.f32.mrb[0].mxu0
      %v829 = vadd.f32 0.0, %v828
      %830 = vmatprep.mubr.bf16.mxu0 0
      %831 = vmatmul.mubr.bf16.gmra.mrb[0].mxu0 %v665
      %v832 = vpop.f32.mrb[0].mxu0
      %v833 = vadd.f32 0.0, %v832
      %v834 = vpop.f32.mrb[0].mxu0
      %v835 = vadd.f32 0.0, %v834
      %v836 = vpop.f32.mrb[0].mxu0
      %v837 = vadd.f32 0.0, %v836
      %v838 = vpop.f32.mrb[0].mxu0
      %v839 = vadd.f32 0.0, %v838
      %840 = vmatprep.mubr.bf16.mxu0 0
      %841 = vmatmul.mubr.bf16.gmra.mrb[0].mxu0 %v668
      %v842 = vpop.f32.mrb[0].mxu0
      %v843 = vadd.f32 0.0, %v842
      %v844 = vpop.f32.mrb[0].mxu0
      %v845 = vadd.f32 0.0, %v844
      %v846 = vpop.f32.mrb[0].mxu0
      %v847 = vadd.f32 0.0, %v846
      %v848 = vpop.f32.mrb[0].mxu0
      %v849 = vadd.f32 0.0, %v848
      %850 = vmatprep.mubr.bf16.mxu0 0
      %851 = vmatmul.mubr.bf16.gmra.mrb[0].mxu0 %v671
      %v852 = vpop.f32.mrb[0].mxu0
      %v853 = vadd.f32 0.0, %v852
      %v854 = vpop.f32.mrb[0].mxu0
      %v855 = vadd.f32 0.0, %v854
      %v856 = vpop.f32.mrb[0].mxu0
      %v857 = vadd.f32 0.0, %v856
      %v858 = vpop.f32.mrb[0].mxu0
      %v859 = vadd.f32 0.0, %v858
      %860 = vmatprep.mubr.bf16.mxu0 0
      %861 = vmatmul.mubr.bf16.gmra.mrb[0].mxu0 %v674
      %v862 = vpop.f32.mrb[0].mxu0
      %v863 = vadd.f32 0.0, %v862
      %v864 = vpop.f32.mrb[0].mxu0
      %v865 = vadd.f32 0.0, %v864
      %v866 = vpop.f32.mrb[0].mxu0
      %v867 = vadd.f32 0.0, %v866
      %v868 = vpop.f32.mrb[0].mxu0
      %v869 = vadd.f32 0.0, %v868
      %870 = vmatprep.mubr.bf16.mxu0 0
      %871 = vmatmul.mubr.bf16.gmra.mrb[0].mxu0 %v677
      %v872 = vpop.f32.mrb[0].mxu0
      %v873 = vadd.f32 0.0, %v872
      %v874 = vpop.f32.mrb[0].mxu0
      %v875 = vadd.f32 0.0, %v874
      %v876 = vpop.f32.mrb[0].mxu0
      %v877 = vadd.f32 0.0, %v876
      %v878 = vpop.f32.mrb[0].mxu0
      %v879 = vadd.f32 0.0, %v878
      %880 = vmatprep.mubr.bf16.mxu0 0
      %881 = vmatmul.mubr.bf16.gmra.mrb[0].mxu0 %v680
      %v882 = vpop.f32.mrb[0].mxu0
      %v883 = vadd.f32 0.0, %v882
      %v884 = vpop.f32.mrb[0].mxu0
      %v885 = vadd.f32 0.0, %v884
      %v886 = vpop.f32.mrb[0].mxu0
      %v887 = vadd.f32 0.0, %v886
      %v888 = vpop.f32.mrb[0].mxu0
      %v889 = vadd.f32 0.0, %v888
      %890 = vmatprep.mubr.bf16.mxu0 0
      %891 = vmatmul.mubr.bf16.gmra.mrb[0].mxu0 %v683
      %v892 = vpop.f32.mrb[0].mxu0
      %v893 = vadd.f32 0.0, %v892
      %v894 = vpop.f32.mrb[0].mxu0
      %v895 = vadd.f32 0.0, %v894
      %v896 = vpop.f32.mrb[0].mxu0
      %v897 = vadd.f32 0.0, %v896
      %v898 = vpop.f32.mrb[0].mxu0
      %v899 = vadd.f32 0.0, %v898
      %900 = vmatprep.mubr.bf16.mxu0 0
      %901 = vmatmul.mubr.bf16.gmra.mrb[0].mxu0 %v686
      %v902 = vpop.f32.mrb[0].mxu0
      %v903 = vadd.f32 0.0, %v902
      %v904 = vpop.f32.mrb[0].mxu0
      %v905 = vadd.f32 0.0, %v904
      %v906 = vpop.f32.mrb[0].mxu0
      %v907 = vadd.f32 0.0, %v906
      %v908 = vpop.f32.mrb[0].mxu0
      %v909 = vadd.f32 0.0, %v908
      %910 = vmatprep.mubr.bf16.mxu0 0
      %911 = vmatmul.mubr.bf16.gmra.mrb[0].mxu0 %v689
      %v912 = vpop.f32.mrb[0].mxu0
      %v913 = vadd.f32 0.0, %v912
      %v914 = vpop.f32.mrb[0].mxu0
      %v915 = vadd.f32 0.0, %v914
      %v916 = vpop.f32.mrb[0].mxu0
      %v917 = vadd.f32 0.0, %v916
      %v918 = vpop.f32.mrb[0].mxu0
      %v919 = vadd.f32 0.0, %v918
      %920 = vmatprep.mubr.bf16.mxu0 0
      %921 = vmatmul.mubr.bf16.gmra.mrb[0].mxu0 %v692
      %v922 = vpop.f32.mrb[0].mxu0
      %v923 = vadd.f32 0.0, %v922
      %v924 = vpop.f32.mrb[0].mxu0
      %v925 = vadd.f32 0.0, %v924
      %v926 = vpop.f32.mrb[0].mxu0
      %v927 = vadd.f32 0.0, %v926
      %v928 = vpop.f32.mrb[0].mxu0
      %v929 = vadd.f32 0.0, %v928
      %930 = vmatprep.mubr.bf16.mxu0 0
      %931 = vmatmul.mubr.bf16.gmra.mrb[0].mxu0 %v695
      %v932 = vpop.f32.mrb[0].mxu0
      %v933 = vadd.f32 0.0, %v932
      %v934 = vpop.f32.mrb[0].mxu0
      %v935 = vadd.f32 0.0, %v934
      %v936 = vpop.f32.mrb[0].mxu0
      %v937 = vadd.f32 0.0, %v936
      %v938 = vpop.f32.mrb[0].mxu0
      %v939 = vadd.f32 0.0, %v938
      %940 = vmatprep.mubr.bf16.mxu0 0
      %941 = vmatmul.mubr.bf16.gmra.mrb[0].mxu0 %v698
      %v942 = vpop.f32.mrb[0].mxu0
      %v943 = vadd.f32 0.0, %v942
      %v944 = vpop.f32.mrb[0].mxu0
      %v945 = vadd.f32 0.0, %v944
      %v946 = vpop.f32.mrb[0].mxu0
      %v947 = vadd.f32 0.0, %v946
      %v948 = vpop.f32.mrb[0].mxu0
      %v949 = vadd.f32 0.0, %v948
      %950 = vmatprep.mubr.bf16.mxu0 0
      %951 = vmatmul.mubr.bf16.gmra.mrb[0].mxu0 %v701
      %v952 = vpop.f32.mrb[0].mxu0
      %v953 = vadd.f32 0.0, %v952
      %v954 = vpop.f32.mrb[0].mxu0
      %v955 = vadd.f32 0.0, %v954
      %v956 = vpop.f32.mrb[0].mxu0
      %v957 = vadd.f32 0.0, %v956
      %v958 = vpop.f32.mrb[0].mxu0
      %v959 = vadd.f32 0.0, %v958
      %960 = vmatprep.mubr.bf16.mxu0 0
      %961 = vmatmul.mubr.bf16.gmra.mrb[0].mxu0 %v704
      %v962 = vpop.f32.mrb[0].mxu0
      %v963 = vadd.f32 0.0, %v962
      %v964 = vpop.f32.mrb[0].mxu0
      %v965 = vadd.f32 0.0, %v964
      %v966 = vpop.f32.mrb[0].mxu0
      %v967 = vadd.f32 0.0, %v966
      %v968 = vpop.f32.mrb[0].mxu0
      %v969 = vadd.f32 0.0, %v968
      %970 = vdwg.mxu0
      %971 = vmatprep.subr.bf16.mxu0 0
      %972 = vmatpush1.bf16.xpose.msra.mxu0 %v755
      %973 = vmatprep.subr.bf16.mxu0 0
      %974 = vmatpush1.bf16.xpose.msra.mxu0 %v758
      %975 = vmatprep.subr.bf16.mxu0 0
      %976 = vmatpush1.bf16.xpose.msra.mxu0 %v761
      %977 = vmatprep.subr.bf16.mxu0 0
      %978 = vmatpush1.bf16.xpose.msra.mxu0 %v764
      %979 = vmatprep.subr.bf16.mxu0 0
      %980 = vmatpush1.bf16.xpose.msra.mxu0 %v767
      %981 = vmatprep.subr.bf16.mxu0 0
      %982 = vmatpush1.bf16.xpose.msra.mxu0 %v770
      %983 = vmatprep.subr.bf16.mxu0 0
      %984 = vmatpush1.bf16.xpose.msra.mxu0 %v773
      %985 = vmatprep.subr.bf16.mxu0 0
      %986 = vmatpush1.bf16.xpose.msra.mxu0 %v776
      %987 = vmatprep.subr.bf16.mxu0 0
      %988 = vmatpush1.bf16.xpose.msra.mxu0 0
      %989 = vmatprep.subr.bf16.mxu0 0
      %990 = vmatpush1.bf16.xpose.msra.mxu0 0
      %991 = vmatprep.subr.bf16.mxu0 0
      %992 = vmatpush1.bf16.xpose.msra.mxu0 0
      %993 = vmatprep.subr.bf16.mxu0 0
      %994 = vmatpush1.bf16.xpose.msra.mxu0 0
      %995 = vmatprep.subr.bf16.mxu0 0
      %996 = vmatpush1.bf16.xpose.msra.mxu0 0
      %997 = vmatprep.subr.bf16.mxu0 0
      %998 = vmatpush1.bf16.xpose.msra.mxu0 0
      %999 = vmatprep.subr.bf16.mxu0 0
      %1000 = vmatpush1.bf16.xpose.msra.mxu0 0
      %1001 = vmatprep.subr.bf16.mxu0 0
      %1002 = vmatpush1.bf16.xpose.msra.mxu0 0
      %1003 = vmatprep.mubr.bf16.mxu0 0
      %1004 = vmatmul.mubr.bf16.gmra.mrb[0].mxu0 %v659
      %v1005 = vpop.f32.mrb[0].mxu0
      %v1006 = vadd.f32 0.0, %v1005
      %v1007 = vpop.f32.mrb[0].mxu0
      %v1008 = vpop.f32.mrb[0].mxu0
      %v1009 = vadd.f32 0.0, %v1008
      %v1010 = vpop.f32.mrb[0].mxu0
      %1011 = vmatprep.mubr.bf16.mxu0 0
      %1012 = vmatmul.mubr.bf16.gmra.mrb[0].mxu0 %v662
      %v1013 = vpop.f32.mrb[0].mxu0
      %v1014 = vadd.f32 0.0, %v1013
      %v1015 = vpop.f32.mrb[0].mxu0
      %v1016 = vpop.f32.mrb[0].mxu0
      %v1017 = vadd.f32 0.0, %v1016
      %v1018 = vpop.f32.mrb[0].mxu0
      %1019 = vmatprep.mubr.bf16.mxu0 0
      %1020 = vmatmul.mubr.bf16.gmra.mrb[0].mxu0 %v665
      %v1021 = vpop.f32.mrb[0].mxu0
      %v1022 = vadd.f32 0.0, %v1021
      %v1023 = vpop.f32.mrb[0].mxu0
      %v1024 = vpop.f32.mrb[0].mxu0
      %v1025 = vadd.f32 0.0, %v1024
      %v1026 = vpop.f32.mrb[0].mxu0
      %1027 = vmatprep.mubr.bf16.mxu0 0
      %1028 = vmatmul.mubr.bf16.gmra.mrb[0].mxu0 %v668
      %v1029 = vpop.f32.mrb[0].mxu0
      %v1030 = vadd.f32 0.0, %v1029
      %v1031 = vpop.f32.mrb[0].mxu0
      %v1032 = vpop.f32.mrb[0].mxu0
      %v1033 = vadd.f32 0.0, %v1032
      %v1034 = vpop.f32.mrb[0].mxu0
      %1035 = vmatprep.mubr.bf16.mxu0 0
      %1036 = vmatmul.mubr.bf16.gmra.mrb[0].mxu0 %v671
      %v1037 = vpop.f32.mrb[0].mxu0
      %v1038 = vadd.f32 0.0, %v1037
      %v1039 = vpop.f32.mrb[0].mxu0
      %v1040 = vpop.f32.mrb[0].mxu0
      %v1041 = vadd.f32 0.0, %v1040
      %v1042 = vpop.f32.mrb[0].mxu0
      %1043 = vmatprep.mubr.bf16.mxu0 0
      %1044 = vmatmul.mubr.bf16.gmra.mrb[0].mxu0 %v674
      %v1045 = vpop.f32.mrb[0].mxu0
      %v1046 = vadd.f32 0.0, %v1045
      %v1047 = vpop.f32.mrb[0].mxu0
      %v1048 = vpop.f32.mrb[0].mxu0
      %v1049 = vadd.f32 0.0, %v1048
      %v1050 = vpop.f32.mrb[0].mxu0
      %1051 = vmatprep.mubr.bf16.mxu0 0
      %1052 = vmatmul.mubr.bf16.gmra.mrb[0].mxu0 %v677
      %v1053 = vpop.f32.mrb[0].mxu0
      %v1054 = vadd.f32 0.0, %v1053
      %v1055 = vpop.f32.mrb[0].mxu0
      %v1056 = vpop.f32.mrb[0].mxu0
      %v1057 = vadd.f32 0.0, %v1056
      %v1058 = vpop.f32.mrb[0].mxu0
      %1059 = vmatprep.mubr.bf16.mxu0 0
      %1060 = vmatmul.mubr.bf16.gmra.mrb[0].mxu0 %v680
      %v1061 = vpop.f32.mrb[0].mxu0
      %v1062 = vadd.f32 0.0, %v1061
      %v1063 = vpop.f32.mrb[0].mxu0
      %v1064 = vpop.f32.mrb[0].mxu0
      %v1065 = vadd.f32 0.0, %v1064
      %v1066 = vpop.f32.mrb[0].mxu0
      %1067 = vmatprep.mubr.bf16.mxu0 0
      %1068 = vmatmul.mubr.bf16.gmra.mrb[0].mxu0 %v683
      %v1069 = vpop.f32.mrb[0].mxu0
      %v1070 = vadd.f32 0.0, %v1069
      %v1071 = vpop.f32.mrb[0].mxu0
      %v1072 = vpop.f32.mrb[0].mxu0
      %v1073 = vadd.f32 0.0, %v1072
      %v1074 = vpop.f32.mrb[0].mxu0
      %1075 = vmatprep.mubr.bf16.mxu0 0
      %1076 = vmatmul.mubr.bf16.gmra.mrb[0].mxu0 %v686
      %v1077 = vpop.f32.mrb[0].mxu0
      %v1078 = vadd.f32 0.0, %v1077
      %v1079 = vpop.f32.mrb[0].mxu0
      %v1080 = vpop.f32.mrb[0].mxu0
      %v1081 = vadd.f32 0.0, %v1080
      %v1082 = vpop.f32.mrb[0].mxu0
      %1083 = vmatprep.mubr.bf16.mxu0 0
      %1084 = vmatmul.mubr.bf16.gmra.mrb[0].mxu0 %v689
      %v1085 = vpop.f32.mrb[0].mxu0
      %v1086 = vadd.f32 0.0, %v1085
      %v1087 = vpop.f32.mrb[0].mxu0
      %v1088 = vpop.f32.mrb[0].mxu0
      %v1089 = vadd.f32 0.0, %v1088
      %v1090 = vpop.f32.mrb[0].mxu0
      %1091 = vmatprep.mubr.bf16.mxu0 0
      %1092 = vmatmul.mubr.bf16.gmra.mrb[0].mxu0 %v692
      %v1093 = vpop.f32.mrb[0].mxu0
      %v1094 = vadd.f32 0.0, %v1093
      %v1095 = vpop.f32.mrb[0].mxu0
      %v1096 = vpop.f32.mrb[0].mxu0
      %v1097 = vadd.f32 0.0, %v1096
      %v1098 = vpop.f32.mrb[0].mxu0
      %1099 = vmatprep.mubr.bf16.mxu0 0
      %1100 = vmatmul.mubr.bf16.gmra.mrb[0].mxu0 %v695
      %v1101 = vpop.f32.mrb[0].mxu0
      %v1102 = vadd.f32 0.0, %v1101
      %v1103 = vpop.f32.mrb[0].mxu0
      %v1104 = vpop.f32.mrb[0].mxu0
      %v1105 = vadd.f32 0.0, %v1104
      %v1106 = vpop.f32.mrb[0].mxu0
      %1107 = vmatprep.mubr.bf16.mxu0 0
      %1108 = vmatmul.mubr.bf16.gmra.mrb[0].mxu0 %v698
      %v1109 = vpop.f32.mrb[0].mxu0
      %v1110 = vadd.f32 0.0, %v1109
      %v1111 = vpop.f32.mrb[0].mxu0
      %v1112 = vpop.f32.mrb[0].mxu0
      %v1113 = vadd.f32 0.0, %v1112
      %v1114 = vpop.f32.mrb[0].mxu0
      %1115 = vmatprep.mubr.bf16.mxu0 0
      %1116 = vmatmul.mubr.bf16.gmra.mrb[0].mxu0 %v701
      %v1117 = vpop.f32.mrb[0].mxu0
      %v1118 = vadd.f32 0.0, %v1117
      %v1119 = vpop.f32.mrb[0].mxu0
      %v1120 = vpop.f32.mrb[0].mxu0
      %v1121 = vadd.f32 0.0, %v1120
      %v1122 = vpop.f32.mrb[0].mxu0
      %1123 = vmatprep.mubr.bf16.mxu0 0
      %1124 = vmatmul.mubr.bf16.gmra.mrb[0].mxu0 %v704
      %v1125 = vpop.f32.mrb[0].mxu0
      %v1126 = vadd.f32 0.0, %v1125
      %v1127 = vpop.f32.mrb[0].mxu0
      %v1128 = vpop.f32.mrb[0].mxu0
      %v1129 = vadd.f32 0.0, %v1128
      %v1130 = vpop.f32.mrb[0].mxu0
      %1131 = vdwg.mxu0
      %v1132 = vsel %vm326, 1, 0
      %v1133 = vsel %vm327, 1, 0
      %v1134 = vsel %vm328, 1, 0
      %vm1135 = vcmp.eq.s32.totalorder %v1132, 1
      %vm1136 = vcmp.eq.s32.totalorder %v1133, 1
      %vm1137 = vcmp.eq.s32.totalorder %v1134, 1
      %v1138 = vsel %vm1135, %v813, -1e+30
      %v1139 = vsel %vm1136, %v815, -1e+30
      %v1140 = vsel %vm1137, %v1006, -1e+30
      %v1141 = vsel %vm1135, %v817, -1e+30
      %v1142 = vsel %vm1136, %v819, -1e+30
      %v1143 = vsel %vm1137, %v1009, -1e+30
      %v1144 = vsel %vm1135, %v823, -1e+30
      %v1145 = vsel %vm1136, %v825, -1e+30
      %v1146 = vsel %vm1137, %v1014, -1e+30
      %v1147 = vsel %vm1135, %v827, -1e+30
      %v1148 = vsel %vm1136, %v829, -1e+30
      %v1149 = vsel %vm1137, %v1017, -1e+30
      %v1150 = vsel %vm1135, %v833, -1e+30
      %v1151 = vsel %vm1136, %v835, -1e+30
      %v1152 = vsel %vm1137, %v1022, -1e+30
      %v1153 = vsel %vm1135, %v837, -1e+30
      %v1154 = vsel %vm1136, %v839, -1e+30
      %v1155 = vsel %vm1137, %v1025, -1e+30
      %v1156 = vsel %vm1135, %v843, -1e+30
      %v1157 = vsel %vm1136, %v845, -1e+30
      %v1158 = vsel %vm1137, %v1030, -1e+30
      %v1159 = vsel %vm1135, %v847, -1e+30
      %v1160 = vsel %vm1136, %v849, -1e+30
      %v1161 = vsel %vm1137, %v1033, -1e+30
      %v1162 = vsel %vm1135, %v853, -1e+30
      %v1163 = vsel %vm1136, %v855, -1e+30
      %v1164 = vsel %vm1137, %v1038, -1e+30
      %v1165 = vsel %vm1135, %v857, -1e+30
      %v1166 = vsel %vm1136, %v859, -1e+30
      %v1167 = vsel %vm1137, %v1041, -1e+30
      %v1168 = vsel %vm1135, %v863, -1e+30
      %v1169 = vsel %vm1136, %v865, -1e+30
      %v1170 = vsel %vm1137, %v1046, -1e+30
      %v1171 = vsel %vm1135, %v867, -1e+30
      %v1172 = vsel %vm1136, %v869, -1e+30
      %v1173 = vsel %vm1137, %v1049, -1e+30
      %v1174 = vsel %vm1135, %v873, -1e+30
      %v1175 = vsel %vm1136, %v875, -1e+30
      %v1176 = vsel %vm1137, %v1054, -1e+30
      %v1177 = vsel %vm1135, %v877, -1e+30
      %v1178 = vsel %vm1136, %v879, -1e+30
      %v1179 = vsel %vm1137, %v1057, -1e+30
      %v1180 = vsel %vm1135, %v883, -1e+30
      %v1181 = vsel %vm1136, %v885, -1e+30
      %v1182 = vsel %vm1137, %v1062, -1e+30
      %v1183 = vsel %vm1135, %v887, -1e+30
      %v1184 = vsel %vm1136, %v889, -1e+30
      %v1185 = vsel %vm1137, %v1065, -1e+30
      %v1186 = vsel %vm1135, %v893, -1e+30
      %v1187 = vsel %vm1136, %v895, -1e+30
      %v1188 = vsel %vm1137, %v1070, -1e+30
      %v1189 = vsel %vm1135, %v897, -1e+30
      %v1190 = vsel %vm1136, %v899, -1e+30
      %v1191 = vsel %vm1137, %v1073, -1e+30
      %v1192 = vsel %vm1135, %v903, -1e+30
      %v1193 = vsel %vm1136, %v905, -1e+30
      %v1194 = vsel %vm1137, %v1078, -1e+30
      %v1195 = vsel %vm1135, %v907, -1e+30
      %v1196 = vsel %vm1136, %v909, -1e+30
      %v1197 = vsel %vm1137, %v1081, -1e+30
      %v1198 = vsel %vm1135, %v913, -1e+30
      %v1199 = vsel %vm1136, %v915, -1e+30
      %v1200 = vsel %vm1137, %v1086, -1e+30
      %v1201 = vsel %vm1135, %v917, -1e+30
      %v1202 = vsel %vm1136, %v919, -1e+30
      %v1203 = vsel %vm1137, %v1089, -1e+30
      %v1204 = vsel %vm1135, %v923, -1e+30
      %v1205 = vsel %vm1136, %v925, -1e+30
      %v1206 = vsel %vm1137, %v1094, -1e+30
      %v1207 = vsel %vm1135, %v927, -1e+30
      %v1208 = vsel %vm1136, %v929, -1e+30
      %v1209 = vsel %vm1137, %v1097, -1e+30
      %v1210 = vsel %vm1135, %v933, -1e+30
      %v1211 = vsel %vm1136, %v935, -1e+30
      %v1212 = vsel %vm1137, %v1102, -1e+30
      %v1213 = vsel %vm1135, %v937, -1e+30
      %v1214 = vsel %vm1136, %v939, -1e+30
      %v1215 = vsel %vm1137, %v1105, -1e+30
      %v1216 = vsel %vm1135, %v943, -1e+30
      %v1217 = vsel %vm1136, %v945, -1e+30
      %v1218 = vsel %vm1137, %v1110, -1e+30
      %v1219 = vsel %vm1135, %v947, -1e+30
      %v1220 = vsel %vm1136, %v949, -1e+30
      %v1221 = vsel %vm1137, %v1113, -1e+30
      %v1222 = vsel %vm1135, %v953, -1e+30
      %v1223 = vsel %vm1136, %v955, -1e+30
      %v1224 = vsel %vm1137, %v1118, -1e+30
      %v1225 = vsel %vm1135, %v957, -1e+30
      %v1226 = vsel %vm1136, %v959, -1e+30
      %v1227 = vsel %vm1137, %v1121, -1e+30
      %v1228 = vsel %vm1135, %v963, -1e+30
      %v1229 = vsel %vm1136, %v965, -1e+30
      %v1230 = vsel %vm1137, %v1126, -1e+30
      %v1231 = vsel %vm1135, %v967, -1e+30
      %v1232 = vsel %vm1136, %v969, -1e+30
      %v1233 = vsel %vm1137, %v1129, -1e+30
      %v1234 = vmax.f32 %v1138, %v1139
      %v1235 = vmax.f32 %v1234, %v1140
      %1236 = vmax.xlane.f32.xlu0 %v1235
      %v1237 = vpop.xlane.xlu0 %1236
      %v1238 = vmax.f32 %v1141, %v1142
      %v1239 = vmax.f32 %v1238, %v1143
      %1240 = vmax.xlane.f32.xlu0 %v1239
      %v1241 = vpop.xlane.xlu0 %1240
      %v1242 = vmax.f32 %v1144, %v1145
      %v1243 = vmax.f32 %v1242, %v1146
      %1244 = vmax.xlane.f32.xlu0 %v1243
      %v1245 = vpop.xlane.xlu0 %1244
      %v1246 = vmax.f32 %v1147, %v1148
      %v1247 = vmax.f32 %v1246, %v1149
      %1248 = vmax.xlane.f32.xlu0 %v1247
      %v1249 = vpop.xlane.xlu0 %1248
      %v1250 = vmax.f32 %v1150, %v1151
      %v1251 = vmax.f32 %v1250, %v1152
      %1252 = vmax.xlane.f32.xlu0 %v1251
      %v1253 = vpop.xlane.xlu0 %1252
      %v1254 = vmax.f32 %v1153, %v1154
      %v1255 = vmax.f32 %v1254, %v1155
      %1256 = vmax.xlane.f32.xlu0 %v1255
      %v1257 = vpop.xlane.xlu0 %1256
      %v1258 = vmax.f32 %v1156, %v1157
      %v1259 = vmax.f32 %v1258, %v1158
      %1260 = vmax.xlane.f32.xlu0 %v1259
      %v1261 = vpop.xlane.xlu0 %1260
      %v1262 = vmax.f32 %v1159, %v1160
      %v1263 = vmax.f32 %v1262, %v1161
      %1264 = vmax.xlane.f32.xlu0 %v1263
      %v1265 = vpop.xlane.xlu0 %1264
      %v1266 = vmax.f32 %v1162, %v1163
      %v1267 = vmax.f32 %v1266, %v1164
      %1268 = vmax.xlane.f32.xlu0 %v1267
      %v1269 = vpop.xlane.xlu0 %1268
      %v1270 = vmax.f32 %v1165, %v1166
      %v1271 = vmax.f32 %v1270, %v1167
      %1272 = vmax.xlane.f32.xlu0 %v1271
      %v1273 = vpop.xlane.xlu0 %1272
      %v1274 = vmax.f32 %v1168, %v1169
      %v1275 = vmax.f32 %v1274, %v1170
      %1276 = vmax.xlane.f32.xlu0 %v1275
      %v1277 = vpop.xlane.xlu0 %1276
      %v1278 = vmax.f32 %v1171, %v1172
      %v1279 = vmax.f32 %v1278, %v1173
      %1280 = vmax.xlane.f32.xlu0 %v1279
      %v1281 = vpop.xlane.xlu0 %1280
      %v1282 = vmax.f32 %v1174, %v1175
      %v1283 = vmax.f32 %v1282, %v1176
      %1284 = vmax.xlane.f32.xlu0 %v1283
      %v1285 = vpop.xlane.xlu0 %1284
      %v1286 = vmax.f32 %v1177, %v1178
      %v1287 = vmax.f32 %v1286, %v1179
      %1288 = vmax.xlane.f32.xlu0 %v1287
      %v1289 = vpop.xlane.xlu0 %1288
      %v1290 = vmax.f32 %v1180, %v1181
      %v1291 = vmax.f32 %v1290, %v1182
      %1292 = vmax.xlane.f32.xlu0 %v1291
      %v1293 = vpop.xlane.xlu0 %1292
      %v1294 = vmax.f32 %v1183, %v1184
      %v1295 = vmax.f32 %v1294, %v1185
      %1296 = vmax.xlane.f32.xlu0 %v1295
      %v1297 = vpop.xlane.xlu0 %1296
      %v1298 = vmax.f32 %v1186, %v1187
      %v1299 = vmax.f32 %v1298, %v1188
      %1300 = vmax.xlane.f32.xlu0 %v1299
      %v1301 = vpop.xlane.xlu0 %1300
      %v1302 = vmax.f32 %v1189, %v1190
      %v1303 = vmax.f32 %v1302, %v1191
      %1304 = vmax.xlane.f32.xlu0 %v1303
      %v1305 = vpop.xlane.xlu0 %1304
      %v1306 = vmax.f32 %v1192, %v1193
      %v1307 = vmax.f32 %v1306, %v1194
      %1308 = vmax.xlane.f32.xlu0 %v1307
      %v1309 = vpop.xlane.xlu0 %1308
      %v1310 = vmax.f32 %v1195, %v1196
      %v1311 = vmax.f32 %v1310, %v1197
      %1312 = vmax.xlane.f32.xlu0 %v1311
      %v1313 = vpop.xlane.xlu0 %1312
      %v1314 = vmax.f32 %v1198, %v1199
      %v1315 = vmax.f32 %v1314, %v1200
      %1316 = vmax.xlane.f32.xlu0 %v1315
      %v1317 = vpop.xlane.xlu0 %1316
      %v1318 = vmax.f32 %v1201, %v1202
      %v1319 = vmax.f32 %v1318, %v1203
      %1320 = vmax.xlane.f32.xlu0 %v1319
      %v1321 = vpop.xlane.xlu0 %1320
      %v1322 = vmax.f32 %v1204, %v1205
      %v1323 = vmax.f32 %v1322, %v1206
      %1324 = vmax.xlane.f32.xlu0 %v1323
      %v1325 = vpop.xlane.xlu0 %1324
      %v1326 = vmax.f32 %v1207, %v1208
      %v1327 = vmax.f32 %v1326, %v1209
      %1328 = vmax.xlane.f32.xlu0 %v1327
      %v1329 = vpop.xlane.xlu0 %1328
      %v1330 = vmax.f32 %v1210, %v1211
      %v1331 = vmax.f32 %v1330, %v1212
      %1332 = vmax.xlane.f32.xlu0 %v1331
      %v1333 = vpop.xlane.xlu0 %1332
      %v1334 = vmax.f32 %v1213, %v1214
      %v1335 = vmax.f32 %v1334, %v1215
      %1336 = vmax.xlane.f32.xlu0 %v1335
      %v1337 = vpop.xlane.xlu0 %1336
      %v1338 = vmax.f32 %v1216, %v1217
      %v1339 = vmax.f32 %v1338, %v1218
      %1340 = vmax.xlane.f32.xlu0 %v1339
      %v1341 = vpop.xlane.xlu0 %1340
      %v1342 = vmax.f32 %v1219, %v1220
      %v1343 = vmax.f32 %v1342, %v1221
      %1344 = vmax.xlane.f32.xlu0 %v1343
      %v1345 = vpop.xlane.xlu0 %1344
      %v1346 = vmax.f32 %v1222, %v1223
      %v1347 = vmax.f32 %v1346, %v1224
      %1348 = vmax.xlane.f32.xlu0 %v1347
      %v1349 = vpop.xlane.xlu0 %1348
      %v1350 = vmax.f32 %v1225, %v1226
      %v1351 = vmax.f32 %v1350, %v1227
      %1352 = vmax.xlane.f32.xlu0 %v1351
      %v1353 = vpop.xlane.xlu0 %1352
      %v1354 = vmax.f32 %v1228, %v1229
      %v1355 = vmax.f32 %v1354, %v1230
      %1356 = vmax.xlane.f32.xlu0 %v1355
      %v1357 = vpop.xlane.xlu0 %1356
      %v1358 = vmax.f32 %v1231, %v1232
      %v1359 = vmax.f32 %v1358, %v1233
      %1360 = vmax.xlane.f32.xlu0 %v1359
      %v1361 = vpop.xlane.xlu0 %1360
      %v1362 = vsub.f32 %v1138, %v1237
      %v1363 = vsub.f32 %v1139, %v1237
      %v1364 = vsub.f32 %v1140, %v1237
      %v1365 = vsub.f32 %v1141, %v1241
      %v1366 = vsub.f32 %v1142, %v1241
      %v1367 = vsub.f32 %v1143, %v1241
      %v1368 = vsub.f32 %v1144, %v1245
      %v1369 = vsub.f32 %v1145, %v1245
      %v1370 = vsub.f32 %v1146, %v1245
      %v1371 = vsub.f32 %v1147, %v1249
      %v1372 = vsub.f32 %v1148, %v1249
      %v1373 = vsub.f32 %v1149, %v1249
      %v1374 = vsub.f32 %v1150, %v1253
      %v1375 = vsub.f32 %v1151, %v1253
      %v1376 = vsub.f32 %v1152, %v1253
      %v1377 = vsub.f32 %v1153, %v1257
      %v1378 = vsub.f32 %v1154, %v1257
      %v1379 = vsub.f32 %v1155, %v1257
      %v1380 = vsub.f32 %v1156, %v1261
      %v1381 = vsub.f32 %v1157, %v1261
      %v1382 = vsub.f32 %v1158, %v1261
      %v1383 = vsub.f32 %v1159, %v1265
      %v1384 = vsub.f32 %v1160, %v1265
      %v1385 = vsub.f32 %v1161, %v1265
      %v1386 = vsub.f32 %v1162, %v1269
      %v1387 = vsub.f32 %v1163, %v1269
      %v1388 = vsub.f32 %v1164, %v1269
      %v1389 = vsub.f32 %v1165, %v1273
      %v1390 = vsub.f32 %v1166, %v1273
      %v1391 = vsub.f32 %v1167, %v1273
      %v1392 = vsub.f32 %v1168, %v1277
      %v1393 = vsub.f32 %v1169, %v1277
      %v1394 = vsub.f32 %v1170, %v1277
      %v1395 = vsub.f32 %v1171, %v1281
      %v1396 = vsub.f32 %v1172, %v1281
      %v1397 = vsub.f32 %v1173, %v1281
      %v1398 = vsub.f32 %v1174, %v1285
      %v1399 = vsub.f32 %v1175, %v1285
      %v1400 = vsub.f32 %v1176, %v1285
      %v1401 = vsub.f32 %v1177, %v1289
      %v1402 = vsub.f32 %v1178, %v1289
      %v1403 = vsub.f32 %v1179, %v1289
      %v1404 = vsub.f32 %v1180, %v1293
      %v1405 = vsub.f32 %v1181, %v1293
      %v1406 = vsub.f32 %v1182, %v1293
      %v1407 = vsub.f32 %v1183, %v1297
      %v1408 = vsub.f32 %v1184, %v1297
      %v1409 = vsub.f32 %v1185, %v1297
      %v1410 = vsub.f32 %v1186, %v1301
      %v1411 = vsub.f32 %v1187, %v1301
      %v1412 = vsub.f32 %v1188, %v1301
      %v1413 = vsub.f32 %v1189, %v1305
      %v1414 = vsub.f32 %v1190, %v1305
      %v1415 = vsub.f32 %v1191, %v1305
      %v1416 = vsub.f32 %v1192, %v1309
      %v1417 = vsub.f32 %v1193, %v1309
      %v1418 = vsub.f32 %v1194, %v1309
      %v1419 = vsub.f32 %v1195, %v1313
      %v1420 = vsub.f32 %v1196, %v1313
      %v1421 = vsub.f32 %v1197, %v1313
      %v1422 = vsub.f32 %v1198, %v1317
      %v1423 = vsub.f32 %v1199, %v1317
      %v1424 = vsub.f32 %v1200, %v1317
      %v1425 = vsub.f32 %v1201, %v1321
      %v1426 = vsub.f32 %v1202, %v1321
      %v1427 = vsub.f32 %v1203, %v1321
      %v1428 = vsub.f32 %v1204, %v1325
      %v1429 = vsub.f32 %v1205, %v1325
      %v1430 = vsub.f32 %v1206, %v1325
      %v1431 = vsub.f32 %v1207, %v1329
      %v1432 = vsub.f32 %v1208, %v1329
      %v1433 = vsub.f32 %v1209, %v1329
      %v1434 = vsub.f32 %v1210, %v1333
      %v1435 = vsub.f32 %v1211, %v1333
      %v1436 = vsub.f32 %v1212, %v1333
      %v1437 = vsub.f32 %v1213, %v1337
      %v1438 = vsub.f32 %v1214, %v1337
      %v1439 = vsub.f32 %v1215, %v1337
      %v1440 = vsub.f32 %v1216, %v1341
      %v1441 = vsub.f32 %v1217, %v1341
      %v1442 = vsub.f32 %v1218, %v1341
      %v1443 = vsub.f32 %v1219, %v1345
      %v1444 = vsub.f32 %v1220, %v1345
      %v1445 = vsub.f32 %v1221, %v1345
      %v1446 = vsub.f32 %v1222, %v1349
      %v1447 = vsub.f32 %v1223, %v1349
      %v1448 = vsub.f32 %v1224, %v1349
      %v1449 = vsub.f32 %v1225, %v1353
      %v1450 = vsub.f32 %v1226, %v1353
      %v1451 = vsub.f32 %v1227, %v1353
      %v1452 = vsub.f32 %v1228, %v1357
      %v1453 = vsub.f32 %v1229, %v1357
      %v1454 = vsub.f32 %v1230, %v1357
      %v1455 = vsub.f32 %v1231, %v1361
      %v1456 = vsub.f32 %v1232, %v1361
      %v1457 = vsub.f32 %v1233, %v1361
      %v1458 = vmul.f32 %v1362, 1.442695
      %v1459 = vpow.pop %v1458
      %v1460 = vmul.f32 %v1363, 1.442695
      %v1461 = vpow.pop %v1460
      %v1462 = vmul.f32 %v1364, 1.442695
      %v1463 = vpow.pop %v1462
      %v1464 = vmul.f32 %v1365, 1.442695
      %v1465 = vpow.pop %v1464
      %v1466 = vmul.f32 %v1366, 1.442695
      %v1467 = vpow.pop %v1466
      %v1468 = vmul.f32 %v1367, 1.442695
      %v1469 = vpow.pop %v1468
      %v1470 = vmul.f32 %v1368, 1.442695
      %v1471 = vpow.pop %v1470
      %v1472 = vmul.f32 %v1369, 1.442695
      %v1473 = vpow.pop %v1472
      %v1474 = vmul.f32 %v1370, 1.442695
      %v1475 = vpow.pop %v1474
      %v1476 = vmul.f32 %v1371, 1.442695
      %v1477 = vpow.pop %v1476
      %v1478 = vmul.f32 %v1372, 1.442695
      %v1479 = vpow.pop %v1478
      %v1480 = vmul.f32 %v1373, 1.442695
      %v1481 = vpow.pop %v1480
      %v1482 = vmul.f32 %v1374, 1.442695
      %v1483 = vpow.pop %v1482
      %v1484 = vmul.f32 %v1375, 1.442695
      %v1485 = vpow.pop %v1484
      %v1486 = vmul.f32 %v1376, 1.442695
      %v1487 = vpow.pop %v1486
      %v1488 = vmul.f32 %v1377, 1.442695
      %v1489 = vpow.pop %v1488
      %v1490 = vmul.f32 %v1378, 1.442695
      %v1491 = vpow.pop %v1490
      %v1492 = vmul.f32 %v1379, 1.442695
      %v1493 = vpow.pop %v1492
      %v1494 = vmul.f32 %v1380, 1.442695
      %v1495 = vpow.pop %v1494
      %v1496 = vmul.f32 %v1381, 1.442695
      %v1497 = vpow.pop %v1496
      %v1498 = vmul.f32 %v1382, 1.442695
      %v1499 = vpow.pop %v1498
      %v1500 = vmul.f32 %v1383, 1.442695
      %v1501 = vpow.pop %v1500
      %v1502 = vmul.f32 %v1384, 1.442695
      %v1503 = vpow.pop %v1502
      %v1504 = vmul.f32 %v1385, 1.442695
      %v1505 = vpow.pop %v1504
      %v1506 = vmul.f32 %v1386, 1.442695
      %v1507 = vpow.pop %v1506
      %v1508 = vmul.f32 %v1387, 1.442695
      %v1509 = vpow.pop %v1508
      %v1510 = vmul.f32 %v1388, 1.442695
      %v1511 = vpow.pop %v1510
      %v1512 = vmul.f32 %v1389, 1.442695
      %v1513 = vpow.pop %v1512
      %v1514 = vmul.f32 %v1390, 1.442695
      %v1515 = vpow.pop %v1514
      %v1516 = vmul.f32 %v1391, 1.442695
      %v1517 = vpow.pop %v1516
      %v1518 = vmul.f32 %v1392, 1.442695
      %v1519 = vpow.pop %v1518
      %v1520 = vmul.f32 %v1393, 1.442695
      %v1521 = vpow.pop %v1520
      %v1522 = vmul.f32 %v1394, 1.442695
      %v1523 = vpow.pop %v1522
      %v1524 = vmul.f32 %v1395, 1.442695
      %v1525 = vpow.pop %v1524
      %v1526 = vmul.f32 %v1396, 1.442695
      %v1527 = vpow.pop %v1526
      %v1528 = vmul.f32 %v1397, 1.442695
      %v1529 = vpow.pop %v1528
      %v1530 = vmul.f32 %v1398, 1.442695
      %v1531 = vpow.pop %v1530
      %v1532 = vmul.f32 %v1399, 1.442695
      %v1533 = vpow.pop %v1532
      %v1534 = vmul.f32 %v1400, 1.442695
      %v1535 = vpow.pop %v1534
      %v1536 = vmul.f32 %v1401, 1.442695
      %v1537 = vpow.pop %v1536
      %v1538 = vmul.f32 %v1402, 1.442695
      %v1539 = vpow.pop %v1538
      %v1540 = vmul.f32 %v1403, 1.442695
      %v1541 = vpow.pop %v1540
      %v1542 = vmul.f32 %v1404, 1.442695
      %v1543 = vpow.pop %v1542
      %v1544 = vmul.f32 %v1405, 1.442695
      %v1545 = vpow.pop %v1544
      %v1546 = vmul.f32 %v1406, 1.442695
      %v1547 = vpow.pop %v1546
      %v1548 = vmul.f32 %v1407, 1.442695
      %v1549 = vpow.pop %v1548
      %v1550 = vmul.f32 %v1408, 1.442695
      %v1551 = vpow.pop %v1550
      %v1552 = vmul.f32 %v1409, 1.442695
      %v1553 = vpow.pop %v1552
      %v1554 = vmul.f32 %v1410, 1.442695
      %v1555 = vpow.pop %v1554
      %v1556 = vmul.f32 %v1411, 1.442695
      %v1557 = vpow.pop %v1556
      %v1558 = vmul.f32 %v1412, 1.442695
      %v1559 = vpow.pop %v1558
      %v1560 = vmul.f32 %v1413, 1.442695
      %v1561 = vpow.pop %v1560
      %v1562 = vmul.f32 %v1414, 1.442695
      %v1563 = vpow.pop %v1562
      %v1564 = vmul.f32 %v1415, 1.442695
      %v1565 = vpow.pop %v1564
      %v1566 = vmul.f32 %v1416, 1.442695
      %v1567 = vpow.pop %v1566
      %v1568 = vmul.f32 %v1417, 1.442695
      %v1569 = vpow.pop %v1568
      %v1570 = vmul.f32 %v1418, 1.442695
      %v1571 = vpow.pop %v1570
      %v1572 = vmul.f32 %v1419, 1.442695
      %v1573 = vpow.pop %v1572
      %v1574 = vmul.f32 %v1420, 1.442695
      %v1575 = vpow.pop %v1574
      %v1576 = vmul.f32 %v1421, 1.442695
      %v1577 = vpow.pop %v1576
      %v1578 = vmul.f32 %v1422, 1.442695
      %v1579 = vpow.pop %v1578
      %v1580 = vmul.f32 %v1423, 1.442695
      %v1581 = vpow.pop %v1580
      %v1582 = vmul.f32 %v1424, 1.442695
      %v1583 = vpow.pop %v1582
      %v1584 = vmul.f32 %v1425, 1.442695
      %v1585 = vpow.pop %v1584
      %v1586 = vmul.f32 %v1426, 1.442695
      %v1587 = vpow.pop %v1586
      %v1588 = vmul.f32 %v1427, 1.442695
      %v1589 = vpow.pop %v1588
      %v1590 = vmul.f32 %v1428, 1.442695
      %v1591 = vpow.pop %v1590
      %v1592 = vmul.f32 %v1429, 1.442695
      %v1593 = vpow.pop %v1592
      %v1594 = vmul.f32 %v1430, 1.442695
      %v1595 = vpow.pop %v1594
      %v1596 = vmul.f32 %v1431, 1.442695
      %v1597 = vpow.pop %v1596
      %v1598 = vmul.f32 %v1432, 1.442695
      %v1599 = vpow.pop %v1598
      %v1600 = vmul.f32 %v1433, 1.442695
      %v1601 = vpow.pop %v1600
      %v1602 = vmul.f32 %v1434, 1.442695
      %v1603 = vpow.pop %v1602
      %v1604 = vmul.f32 %v1435, 1.442695
      %v1605 = vpow.pop %v1604
      %v1606 = vmul.f32 %v1436, 1.442695
      %v1607 = vpow.pop %v1606
      %v1608 = vmul.f32 %v1437, 1.442695
      %v1609 = vpow.pop %v1608
      %v1610 = vmul.f32 %v1438, 1.442695
      %v1611 = vpow.pop %v1610
      %v1612 = vmul.f32 %v1439, 1.442695
      %v1613 = vpow.pop %v1612
      %v1614 = vmul.f32 %v1440, 1.442695
      %v1615 = vpow.pop %v1614
      %v1616 = vmul.f32 %v1441, 1.442695
      %v1617 = vpow.pop %v1616
      %v1618 = vmul.f32 %v1442, 1.442695
      %v1619 = vpow.pop %v1618
      %v1620 = vmul.f32 %v1443, 1.442695
      %v1621 = vpow.pop %v1620
      %v1622 = vmul.f32 %v1444, 1.442695
      %v1623 = vpow.pop %v1622
      %v1624 = vmul.f32 %v1445, 1.442695
      %v1625 = vpow.pop %v1624
      %v1626 = vmul.f32 %v1446, 1.442695
      %v1627 = vpow.pop %v1626
      %v1628 = vmul.f32 %v1447, 1.442695
      %v1629 = vpow.pop %v1628
      %v1630 = vmul.f32 %v1448, 1.442695
      %v1631 = vpow.pop %v1630
      %v1632 = vmul.f32 %v1449, 1.442695
      %v1633 = vpow.pop %v1632
      %v1634 = vmul.f32 %v1450, 1.442695
      %v1635 = vpow.pop %v1634
      %v1636 = vmul.f32 %v1451, 1.442695
      %v1637 = vpow.pop %v1636
      %v1638 = vmul.f32 %v1452, 1.442695
      %v1639 = vpow.pop %v1638
      %v1640 = vmul.f32 %v1453, 1.442695
      %v1641 = vpow.pop %v1640
      %v1642 = vmul.f32 %v1454, 1.442695
      %v1643 = vpow.pop %v1642
      %v1644 = vmul.f32 %v1455, 1.442695
      %v1645 = vpow.pop %v1644
      %v1646 = vmul.f32 %v1456, 1.442695
      %v1647 = vpow.pop %v1646
      %v1648 = vmul.f32 %v1457, 1.442695
      %v1649 = vpow.pop %v1648
      %v1650 = vadd.f32 %v1459, %v1461
      %v1651 = vadd.f32 %v1650, %v1463
      %1652 = vadd.xlane.f32.xlu0 %v1651
      %v1653 = vpop.xlane.xlu0 %1652
      %v1654 = vadd.f32 %v1465, %v1467
      %v1655 = vadd.f32 %v1654, %v1469
      %1656 = vadd.xlane.f32.xlu0 %v1655
      %v1657 = vpop.xlane.xlu0 %1656
      %v1658 = vadd.f32 %v1471, %v1473
      %v1659 = vadd.f32 %v1658, %v1475
      %1660 = vadd.xlane.f32.xlu0 %v1659
      %v1661 = vpop.xlane.xlu0 %1660
      %v1662 = vadd.f32 %v1477, %v1479
      %v1663 = vadd.f32 %v1662, %v1481
      %1664 = vadd.xlane.f32.xlu0 %v1663
      %v1665 = vpop.xlane.xlu0 %1664
      %v1666 = vadd.f32 %v1483, %v1485
      %v1667 = vadd.f32 %v1666, %v1487
      %1668 = vadd.xlane.f32.xlu0 %v1667
      %v1669 = vpop.xlane.xlu0 %1668
      %v1670 = vadd.f32 %v1489, %v1491
      %v1671 = vadd.f32 %v1670, %v1493
      %1672 = vadd.xlane.f32.xlu0 %v1671
      %v1673 = vpop.xlane.xlu0 %1672
      %v1674 = vadd.f32 %v1495, %v1497
      %v1675 = vadd.f32 %v1674, %v1499
      %1676 = vadd.xlane.f32.xlu0 %v1675
      %v1677 = vpop.xlane.xlu0 %1676
      %v1678 = vadd.f32 %v1501, %v1503
      %v1679 = vadd.f32 %v1678, %v1505
      %1680 = vadd.xlane.f32.xlu0 %v1679
      %v1681 = vpop.xlane.xlu0 %1680
      %v1682 = vadd.f32 %v1507, %v1509
      %v1683 = vadd.f32 %v1682, %v1511
      %1684 = vadd.xlane.f32.xlu0 %v1683
      %v1685 = vpop.xlane.xlu0 %1684
      %v1686 = vadd.f32 %v1513, %v1515
      %v1687 = vadd.f32 %v1686, %v1517
      %1688 = vadd.xlane.f32.xlu0 %v1687
      %v1689 = vpop.xlane.xlu0 %1688
      %v1690 = vadd.f32 %v1519, %v1521
      %v1691 = vadd.f32 %v1690, %v1523
      %1692 = vadd.xlane.f32.xlu0 %v1691
      %v1693 = vpop.xlane.xlu0 %1692
      %v1694 = vadd.f32 %v1525, %v1527
      %v1695 = vadd.f32 %v1694, %v1529
      %1696 = vadd.xlane.f32.xlu0 %v1695
      %v1697 = vpop.xlane.xlu0 %1696
      %v1698 = vadd.f32 %v1531, %v1533
      %v1699 = vadd.f32 %v1698, %v1535
      %1700 = vadd.xlane.f32.xlu0 %v1699
      %v1701 = vpop.xlane.xlu0 %1700
      %v1702 = vadd.f32 %v1537, %v1539
      %v1703 = vadd.f32 %v1702, %v1541
      %1704 = vadd.xlane.f32.xlu0 %v1703
      %v1705 = vpop.xlane.xlu0 %1704
      %v1706 = vadd.f32 %v1543, %v1545
      %v1707 = vadd.f32 %v1706, %v1547
      %1708 = vadd.xlane.f32.xlu0 %v1707
      %v1709 = vpop.xlane.xlu0 %1708
      %v1710 = vadd.f32 %v1549, %v1551
      %v1711 = vadd.f32 %v1710, %v1553
      %1712 = vadd.xlane.f32.xlu0 %v1711
      %v1713 = vpop.xlane.xlu0 %1712
      %v1714 = vadd.f32 %v1555, %v1557
      %v1715 = vadd.f32 %v1714, %v1559
      %1716 = vadd.xlane.f32.xlu0 %v1715
      %v1717 = vpop.xlane.xlu0 %1716
      %v1718 = vadd.f32 %v1561, %v1563
      %v1719 = vadd.f32 %v1718, %v1565
      %1720 = vadd.xlane.f32.xlu0 %v1719
      %v1721 = vpop.xlane.xlu0 %1720
      %v1722 = vadd.f32 %v1567, %v1569
      %v1723 = vadd.f32 %v1722, %v1571
      %1724 = vadd.xlane.f32.xlu0 %v1723
      %v1725 = vpop.xlane.xlu0 %1724
      %v1726 = vadd.f32 %v1573, %v1575
      %v1727 = vadd.f32 %v1726, %v1577
      %1728 = vadd.xlane.f32.xlu0 %v1727
      %v1729 = vpop.xlane.xlu0 %1728
      %v1730 = vadd.f32 %v1579, %v1581
      %v1731 = vadd.f32 %v1730, %v1583
      %1732 = vadd.xlane.f32.xlu0 %v1731
      %v1733 = vpop.xlane.xlu0 %1732
      %v1734 = vadd.f32 %v1585, %v1587
      %v1735 = vadd.f32 %v1734, %v1589
      %1736 = vadd.xlane.f32.xlu0 %v1735
      %v1737 = vpop.xlane.xlu0 %1736
      %v1738 = vadd.f32 %v1591, %v1593
      %v1739 = vadd.f32 %v1738, %v1595
      %1740 = vadd.xlane.f32.xlu0 %v1739
      %v1741 = vpop.xlane.xlu0 %1740
      %v1742 = vadd.f32 %v1597, %v1599
      %v1743 = vadd.f32 %v1742, %v1601
      %1744 = vadd.xlane.f32.xlu0 %v1743
      %v1745 = vpop.xlane.xlu0 %1744
      %v1746 = vadd.f32 %v1603, %v1605
      %v1747 = vadd.f32 %v1746, %v1607
      %1748 = vadd.xlane.f32.xlu0 %v1747
      %v1749 = vpop.xlane.xlu0 %1748
      %v1750 = vadd.f32 %v1609, %v1611
      %v1751 = vadd.f32 %v1750, %v1613
      %1752 = vadd.xlane.f32.xlu0 %v1751
      %v1753 = vpop.xlane.xlu0 %1752
      %v1754 = vadd.f32 %v1615, %v1617
      %v1755 = vadd.f32 %v1754, %v1619
      %1756 = vadd.xlane.f32.xlu0 %v1755
      %v1757 = vpop.xlane.xlu0 %1756
      %v1758 = vadd.f32 %v1621, %v1623
      %v1759 = vadd.f32 %v1758, %v1625
      %1760 = vadd.xlane.f32.xlu0 %v1759
      %v1761 = vpop.xlane.xlu0 %1760
      %v1762 = vadd.f32 %v1627, %v1629
      %v1763 = vadd.f32 %v1762, %v1631
      %1764 = vadd.xlane.f32.xlu0 %v1763
      %v1765 = vpop.xlane.xlu0 %1764
      %v1766 = vadd.f32 %v1633, %v1635
      %v1767 = vadd.f32 %v1766, %v1637
      %1768 = vadd.xlane.f32.xlu0 %v1767
      %v1769 = vpop.xlane.xlu0 %1768
      %v1770 = vadd.f32 %v1639, %v1641
      %v1771 = vadd.f32 %v1770, %v1643
      %1772 = vadd.xlane.f32.xlu0 %v1771
      %v1773 = vpop.xlane.xlu0 %1772
      %v1774 = vadd.f32 %v1645, %v1647
      %v1775 = vadd.f32 %v1774, %v1649
      %1776 = vadd.xlane.f32.xlu0 %v1775
      %v1777 = vpop.xlane.xlu0 %1776
      %v1778 = vrcp.pop %v1653
      %v1779 = vrcp.pop %v1657
      %v1780 = vrcp.pop %v1661
      %v1781 = vrcp.pop %v1665
      %v1782 = vrcp.pop %v1669
      %v1783 = vrcp.pop %v1673
      %v1784 = vrcp.pop %v1677
      %v1785 = vrcp.pop %v1681
      %v1786 = vrcp.pop %v1685
      %v1787 = vrcp.pop %v1689
      %v1788 = vrcp.pop %v1693
      %v1789 = vrcp.pop %v1697
      %v1790 = vrcp.pop %v1701
      %v1791 = vrcp.pop %v1705
      %v1792 = vrcp.pop %v1709
      %v1793 = vrcp.pop %v1713
      %v1794 = vrcp.pop %v1717
      %v1795 = vrcp.pop %v1721
      %v1796 = vrcp.pop %v1725
      %v1797 = vrcp.pop %v1729
      %v1798 = vrcp.pop %v1733
      %v1799 = vrcp.pop %v1737
      %v1800 = vrcp.pop %v1741
      %v1801 = vrcp.pop %v1745
      %v1802 = vrcp.pop %v1749
      %v1803 = vrcp.pop %v1753
      %v1804 = vrcp.pop %v1757
      %v1805 = vrcp.pop %v1761
      %v1806 = vrcp.pop %v1765
      %v1807 = vrcp.pop %v1769
      %v1808 = vrcp.pop %v1773
      %v1809 = vrcp.pop %v1777
      %v1810 = vmul.f32 %v1459, %v1778
      %v1811 = vmul.f32 %v1461, %v1778
      %v1812 = vmul.f32 %v1463, %v1778
      %v1813 = vmul.f32 %v1465, %v1779
      %v1814 = vmul.f32 %v1467, %v1779
      %v1815 = vmul.f32 %v1469, %v1779
      %v1816 = vmul.f32 %v1471, %v1780
      %v1817 = vmul.f32 %v1473, %v1780
      %v1818 = vmul.f32 %v1475, %v1780
      %v1819 = vmul.f32 %v1477, %v1781
      %v1820 = vmul.f32 %v1479, %v1781
      %v1821 = vmul.f32 %v1481, %v1781
      %v1822 = vmul.f32 %v1483, %v1782
      %v1823 = vmul.f32 %v1485, %v1782
      %v1824 = vmul.f32 %v1487, %v1782
      %v1825 = vmul.f32 %v1489, %v1783
      %v1826 = vmul.f32 %v1491, %v1783
      %v1827 = vmul.f32 %v1493, %v1783
      %v1828 = vmul.f32 %v1495, %v1784
      %v1829 = vmul.f32 %v1497, %v1784
      %v1830 = vmul.f32 %v1499, %v1784
      %v1831 = vmul.f32 %v1501, %v1785
      %v1832 = vmul.f32 %v1503, %v1785
      %v1833 = vmul.f32 %v1505, %v1785
      %v1834 = vmul.f32 %v1507, %v1786
      %v1835 = vmul.f32 %v1509, %v1786
      %v1836 = vmul.f32 %v1511, %v1786
      %v1837 = vmul.f32 %v1513, %v1787
      %v1838 = vmul.f32 %v1515, %v1787
      %v1839 = vmul.f32 %v1517, %v1787
      %v1840 = vmul.f32 %v1519, %v1788
      %v1841 = vmul.f32 %v1521, %v1788
      %v1842 = vmul.f32 %v1523, %v1788
      %v1843 = vmul.f32 %v1525, %v1789
      %v1844 = vmul.f32 %v1527, %v1789
      %v1845 = vmul.f32 %v1529, %v1789
      %v1846 = vmul.f32 %v1531, %v1790
      %v1847 = vmul.f32 %v1533, %v1790
      %v1848 = vmul.f32 %v1535, %v1790
      %v1849 = vmul.f32 %v1537, %v1791
      %v1850 = vmul.f32 %v1539, %v1791
      %v1851 = vmul.f32 %v1541, %v1791
      %v1852 = vmul.f32 %v1543, %v1792
      %v1853 = vmul.f32 %v1545, %v1792
      %v1854 = vmul.f32 %v1547, %v1792
      %v1855 = vmul.f32 %v1549, %v1793
      %v1856 = vmul.f32 %v1551, %v1793
      %v1857 = vmul.f32 %v1553, %v1793
      %v1858 = vmul.f32 %v1555, %v1794
      %v1859 = vmul.f32 %v1557, %v1794
      %v1860 = vmul.f32 %v1559, %v1794
      %v1861 = vmul.f32 %v1561, %v1795
      %v1862 = vmul.f32 %v1563, %v1795
      %v1863 = vmul.f32 %v1565, %v1795
      %v1864 = vmul.f32 %v1567, %v1796
      %v1865 = vmul.f32 %v1569, %v1796
      %v1866 = vmul.f32 %v1571, %v1796
      %v1867 = vmul.f32 %v1573, %v1797
      %v1868 = vmul.f32 %v1575, %v1797
      %v1869 = vmul.f32 %v1577, %v1797
      %v1870 = vmul.f32 %v1579, %v1798
      %v1871 = vmul.f32 %v1581, %v1798
      %v1872 = vmul.f32 %v1583, %v1798
      %v1873 = vmul.f32 %v1585, %v1799
      %v1874 = vmul.f32 %v1587, %v1799
      %v1875 = vmul.f32 %v1589, %v1799
      %v1876 = vmul.f32 %v1591, %v1800
      %v1877 = vmul.f32 %v1593, %v1800
      %v1878 = vmul.f32 %v1595, %v1800
      %v1879 = vmul.f32 %v1597, %v1801
      %v1880 = vmul.f32 %v1599, %v1801
      %v1881 = vmul.f32 %v1601, %v1801
      %v1882 = vmul.f32 %v1603, %v1802
      %v1883 = vmul.f32 %v1605, %v1802
      %v1884 = vmul.f32 %v1607, %v1802
      %v1885 = vmul.f32 %v1609, %v1803
      %v1886 = vmul.f32 %v1611, %v1803
      %v1887 = vmul.f32 %v1613, %v1803
      %v1888 = vmul.f32 %v1615, %v1804
      %v1889 = vmul.f32 %v1617, %v1804
      %v1890 = vmul.f32 %v1619, %v1804
      %v1891 = vmul.f32 %v1621, %v1805
      %v1892 = vmul.f32 %v1623, %v1805
      %v1893 = vmul.f32 %v1625, %v1805
      %v1894 = vmul.f32 %v1627, %v1806
      %v1895 = vmul.f32 %v1629, %v1806
      %v1896 = vmul.f32 %v1631, %v1806
      %v1897 = vmul.f32 %v1633, %v1807
      %v1898 = vmul.f32 %v1635, %v1807
      %v1899 = vmul.f32 %v1637, %v1807
      %v1900 = vmul.f32 %v1639, %v1808
      %v1901 = vmul.f32 %v1641, %v1808
      %v1902 = vmul.f32 %v1643, %v1808
      %v1903 = vmul.f32 %v1645, %v1809
      %v1904 = vmul.f32 %v1647, %v1809
      %v1905 = vmul.f32 %v1649, %v1809
      %v1906 = vpack.c.bf16 %v1813, %v1810
      %v1907 = vpack.c.bf16 %v1814, %v1811
      %v1908 = vpack.c.bf16 %v1815, %v1812
      %v1909 = vpack.c.bf16 %v1819, %v1816
      %v1910 = vpack.c.bf16 %v1820, %v1817
      %v1911 = vpack.c.bf16 %v1821, %v1818
      %v1912 = vpack.c.bf16 %v1825, %v1822
      %v1913 = vpack.c.bf16 %v1826, %v1823
      %v1914 = vpack.c.bf16 %v1827, %v1824
      %v1915 = vpack.c.bf16 %v1831, %v1828
      %v1916 = vpack.c.bf16 %v1832, %v1829
      %v1917 = vpack.c.bf16 %v1833, %v1830
      %v1918 = vpack.c.bf16 %v1837, %v1834
      %v1919 = vpack.c.bf16 %v1838, %v1835
      %v1920 = vpack.c.bf16 %v1839, %v1836
      %v1921 = vpack.c.bf16 %v1843, %v1840
      %v1922 = vpack.c.bf16 %v1844, %v1841
      %v1923 = vpack.c.bf16 %v1845, %v1842
      %v1924 = vpack.c.bf16 %v1849, %v1846
      %v1925 = vpack.c.bf16 %v1850, %v1847
      %v1926 = vpack.c.bf16 %v1851, %v1848
      %v1927 = vpack.c.bf16 %v1855, %v1852
      %v1928 = vpack.c.bf16 %v1856, %v1853
      %v1929 = vpack.c.bf16 %v1857, %v1854
      %v1930 = vpack.c.bf16 %v1861, %v1858
      %v1931 = vpack.c.bf16 %v1862, %v1859
      %v1932 = vpack.c.bf16 %v1863, %v1860
      %v1933 = vpack.c.bf16 %v1867, %v1864
      %v1934 = vpack.c.bf16 %v1868, %v1865
      %v1935 = vpack.c.bf16 %v1869, %v1866
      %v1936 = vpack.c.bf16 %v1873, %v1870
      %v1937 = vpack.c.bf16 %v1874, %v1871
      %v1938 = vpack.c.bf16 %v1875, %v1872
      %v1939 = vpack.c.bf16 %v1879, %v1876
      %v1940 = vpack.c.bf16 %v1880, %v1877
      %v1941 = vpack.c.bf16 %v1881, %v1878
      %v1942 = vpack.c.bf16 %v1885, %v1882
      %v1943 = vpack.c.bf16 %v1886, %v1883
      %v1944 = vpack.c.bf16 %v1887, %v1884
      %v1945 = vpack.c.bf16 %v1891, %v1888
      %v1946 = vpack.c.bf16 %v1892, %v1889
      %v1947 = vpack.c.bf16 %v1893, %v1890
      %v1948 = vpack.c.bf16 %v1897, %v1894
      %v1949 = vpack.c.bf16 %v1898, %v1895
      %v1950 = vpack.c.bf16 %v1899, %v1896
      %v1951 = vpack.c.bf16 %v1903, %v1900
      %v1952 = vpack.c.bf16 %v1904, %v1901
      %v1953 = vpack.c.bf16 %v1905, %v1902
      %v2002 = vunpack.c.l.b16 %v409
      %v2003 = vunpack.c.l.b16 %v410
      %v2004 = vunpack.c.l.b16 %v411
      %v2005 = vunpack.c.l.b16 %v412
      %v2006 = vunpack.c.l.b16 %v413
      %v2007 = vunpack.c.l.b16 %v414
      %v2008 = vunpack.c.l.b16 %v415
      %v2009 = vunpack.c.l.b16 %v416
      %v2010 = vunpack.c.l.b16 %v417
      %v2011 = vunpack.c.l.b16 %v418
      %v2012 = vunpack.c.l.b16 %v419
      %v2013 = vunpack.c.l.b16 %v420
      %v2014 = vunpack.c.l.b16 %v421
      %v2015 = vunpack.c.l.b16 %v422
      %v2016 = vunpack.c.l.b16 %v423
      %v2017 = vunpack.c.l.b16 %v424
      %v2018 = vunpack.c.l.b16 %v425
      %v2019 = vunpack.c.l.b16 %v426
      %v2020 = vunpack.c.l.b16 %v427
      %v2021 = vunpack.c.l.b16 %v428
      %v2022 = vunpack.c.l.b16 %v429
      %v2023 = vunpack.c.l.b16 %v430
      %v2024 = vunpack.c.l.b16 %v431
      %v2025 = vunpack.c.l.b16 %v432
      %v2026 = vunpack.c.l.b16 %v433
      %v2027 = vunpack.c.l.b16 %v434
      %v2028 = vunpack.c.l.b16 %v435
      %v2029 = vunpack.c.l.b16 %v436
      %v2030 = vunpack.c.l.b16 %v437
      %v2031 = vunpack.c.l.b16 %v438
      %v2032 = vunpack.c.l.b16 %v439
      %v2033 = vunpack.c.l.b16 %v440
      %v2034 = vunpack.c.l.b16 %v441
      %v2035 = vunpack.c.l.b16 %v442
      %v2036 = vunpack.c.l.b16 %v443
      %v2037 = vunpack.c.l.b16 %v444
      %v2038 = vunpack.c.l.b16 %v445
      %v2039 = vunpack.c.l.b16 %v446
      %v2040 = vunpack.c.l.b16 %v447
      %v2041 = vunpack.c.l.b16 %v448
      %v2042 = vunpack.c.l.b16 %v449
      %v2043 = vunpack.c.l.b16 %v450
      %v2044 = vunpack.c.l.b16 %v451
      %v2045 = vunpack.c.l.b16 %v452
      %v2046 = vunpack.c.l.b16 %v453
      %v2047 = vunpack.c.l.b16 %v454
      %v2048 = vunpack.c.l.b16 %v455
      %v2049 = vunpack.c.l.b16 %v456
      %v2050 = vpack.c.b16 %v2003, %v2002
      %v2051 = vpack.c.b16 %v2005, %v2004
      %v2052 = vpack.c.b16 %v2007, %v2006
      %v2053 = vpack.c.b16 %v2009, %v2008
      %v2054 = vpack.c.b16 %v2011, %v2010
      %v2055 = vpack.c.b16 %v2013, %v2012
      %v2056 = vpack.c.b16 %v2015, %v2014
      %v2057 = vpack.c.b16 %v2017, %v2016
      %v2058 = vpack.c.b16 %v2019, %v2018
      %v2059 = vpack.c.b16 %v2021, %v2020
      %v2060 = vpack.c.b16 %v2023, %v2022
      %v2061 = vpack.c.b16 %v2025, %v2024
      %v2062 = vpack.c.b16 %v2027, %v2026
      %v2063 = vpack.c.b16 %v2029, %v2028
      %v2064 = vpack.c.b16 %v2031, %v2030
      %v2065 = vpack.c.b16 %v2033, %v2032
      %v2066 = vpack.c.b16 %v2035, %v2034
      %v2067 = vpack.c.b16 %v2037, %v2036
      %v2068 = vpack.c.b16 %v2039, %v2038
      %v2069 = vpack.c.b16 %v2041, %v2040
      %v2070 = vpack.c.b16 %v2043, %v2042
      %v2071 = vpack.c.b16 %v2045, %v2044
      %v2072 = vpack.c.b16 %v2047, %v2046
      %v2073 = vpack.c.b16 %v2049, %v2048
      %2098 = vmatprep.subr.bf16.mxu0 0
      %2099 = vmatpush1.bf16.msra.mxu0 %v2050
      %2100 = vmatprep.subr.bf16.mxu0 0
      %2101 = vmatpush1.bf16.msra.mxu0 %v2051
      %2102 = vmatprep.subr.bf16.mxu0 0
      %2103 = vmatpush1.bf16.msra.mxu0 %v2052
      %2104 = vmatprep.subr.bf16.mxu0 0
      %2105 = vmatpush1.bf16.msra.mxu0 %v2053
      %2106 = vmatprep.subr.bf16.mxu0 0
      %2107 = vmatpush1.bf16.msra.mxu0 %v2054
      %2108 = vmatprep.subr.bf16.mxu0 0
      %2109 = vmatpush1.bf16.msra.mxu0 %v2055
      %2110 = vmatprep.subr.bf16.mxu0 0
      %2111 = vmatpush1.bf16.msra.mxu0 %v2056
      %2112 = vmatprep.subr.bf16.mxu0 0
      %2113 = vmatpush1.bf16.msra.mxu0 %v2057
      %2114 = vmatprep.subr.bf16.mxu0 0
      %2115 = vmatpush1.bf16.msra.mxu0 %v2058
      %2116 = vmatprep.subr.bf16.mxu0 0
      %2117 = vmatpush1.bf16.msra.mxu0 %v2059
      %2118 = vmatprep.subr.bf16.mxu0 0
      %2119 = vmatpush1.bf16.msra.mxu0 %v2060
      %2120 = vmatprep.subr.bf16.mxu0 0
      %2121 = vmatpush1.bf16.msra.mxu0 %v2061
      %2122 = vmatprep.subr.bf16.mxu0 0
      %2123 = vmatpush1.bf16.msra.mxu0 %v2062
      %2124 = vmatprep.subr.bf16.mxu0 0
      %2125 = vmatpush1.bf16.msra.mxu0 %v2063
      %2126 = vmatprep.subr.bf16.mxu0 0
      %2127 = vmatpush1.bf16.msra.mxu0 %v2064
      %2128 = vmatprep.subr.bf16.mxu0 0
      %2129 = vmatpush1.bf16.msra.mxu0 %v2065
      %2130 = vmatprep.mubr.bf16.mxu0 %v1907
      %2131 = vmatmul.mubr.bf16.gmra.mrb[0].mxu0 %v1906
      %v2132 = vpop.f32.mrb[0].mxu0
      %v2133 = vadd.f32 0.0, %v2132
      %v2134 = vpop.f32.mrb[0].mxu0
      %v2135 = vpop.f32.mrb[0].mxu0
      %v2136 = vadd.f32 0.0, %v2135
      %v2137 = vpop.f32.mrb[0].mxu0
      %2138 = vmatprep.mubr.bf16.mxu0 %v1910
      %2139 = vmatmul.mubr.bf16.gmra.mrb[0].mxu0 %v1909
      %v2140 = vpop.f32.mrb[0].mxu0
      %v2141 = vadd.f32 0.0, %v2140
      %v2142 = vpop.f32.mrb[0].mxu0
      %v2143 = vpop.f32.mrb[0].mxu0
      %v2144 = vadd.f32 0.0, %v2143
      %v2145 = vpop.f32.mrb[0].mxu0
      %2146 = vmatprep.mubr.bf16.mxu0 %v1913
      %2147 = vmatmul.mubr.bf16.gmra.mrb[0].mxu0 %v1912
      %v2148 = vpop.f32.mrb[0].mxu0
      %v2149 = vadd.f32 0.0, %v2148
      %v2150 = vpop.f32.mrb[0].mxu0
      %v2151 = vpop.f32.mrb[0].mxu0
      %v2152 = vadd.f32 0.0, %v2151
      %v2153 = vpop.f32.mrb[0].mxu0
      %2154 = vmatprep.mubr.bf16.mxu0 %v1916
      %2155 = vmatmul.mubr.bf16.gmra.mrb[0].mxu0 %v1915
      %v2156 = vpop.f32.mrb[0].mxu0
      %v2157 = vadd.f32 0.0, %v2156
      %v2158 = vpop.f32.mrb[0].mxu0
      %v2159 = vpop.f32.mrb[0].mxu0
      %v2160 = vadd.f32 0.0, %v2159
      %v2161 = vpop.f32.mrb[0].mxu0
      %2162 = vmatprep.mubr.bf16.mxu0 %v1919
      %2163 = vmatmul.mubr.bf16.gmra.mrb[0].mxu0 %v1918
      %v2164 = vpop.f32.mrb[0].mxu0
      %v2165 = vadd.f32 0.0, %v2164
      %v2166 = vpop.f32.mrb[0].mxu0
      %v2167 = vpop.f32.mrb[0].mxu0
      %v2168 = vadd.f32 0.0, %v2167
      %v2169 = vpop.f32.mrb[0].mxu0
      %2170 = vmatprep.mubr.bf16.mxu0 %v1922
      %2171 = vmatmul.mubr.bf16.gmra.mrb[0].mxu0 %v1921
      %v2172 = vpop.f32.mrb[0].mxu0
      %v2173 = vadd.f32 0.0, %v2172
      %v2174 = vpop.f32.mrb[0].mxu0
      %v2175 = vpop.f32.mrb[0].mxu0
      %v2176 = vadd.f32 0.0, %v2175
      %v2177 = vpop.f32.mrb[0].mxu0
      %2178 = vmatprep.mubr.bf16.mxu0 %v1925
      %2179 = vmatmul.mubr.bf16.gmra.mrb[0].mxu0 %v1924
      %v2180 = vpop.f32.mrb[0].mxu0
      %v2181 = vadd.f32 0.0, %v2180
      %v2182 = vpop.f32.mrb[0].mxu0
      %v2183 = vpop.f32.mrb[0].mxu0
      %v2184 = vadd.f32 0.0, %v2183
      %v2185 = vpop.f32.mrb[0].mxu0
      %2186 = vmatprep.mubr.bf16.mxu0 %v1928
      %2187 = vmatmul.mubr.bf16.gmra.mrb[0].mxu0 %v1927
      %v2188 = vpop.f32.mrb[0].mxu0
      %v2189 = vadd.f32 0.0, %v2188
      %v2190 = vpop.f32.mrb[0].mxu0
      %v2191 = vpop.f32.mrb[0].mxu0
      %v2192 = vadd.f32 0.0, %v2191
      %v2193 = vpop.f32.mrb[0].mxu0
      %2194 = vmatprep.mubr.bf16.mxu0 %v1931
      %2195 = vmatmul.mubr.bf16.gmra.mrb[0].mxu0 %v1930
      %v2196 = vpop.f32.mrb[0].mxu0
      %v2197 = vadd.f32 0.0, %v2196
      %v2198 = vpop.f32.mrb[0].mxu0
      %v2199 = vpop.f32.mrb[0].mxu0
      %v2200 = vadd.f32 0.0, %v2199
      %v2201 = vpop.f32.mrb[0].mxu0
      %2202 = vmatprep.mubr.bf16.mxu0 %v1934
      %2203 = vmatmul.mubr.bf16.gmra.mrb[0].mxu0 %v1933
      %v2204 = vpop.f32.mrb[0].mxu0
      %v2205 = vadd.f32 0.0, %v2204
      %v2206 = vpop.f32.mrb[0].mxu0
      %v2207 = vpop.f32.mrb[0].mxu0
      %v2208 = vadd.f32 0.0, %v2207
      %v2209 = vpop.f32.mrb[0].mxu0
      %2210 = vmatprep.mubr.bf16.mxu0 %v1937
      %2211 = vmatmul.mubr.bf16.gmra.mrb[0].mxu0 %v1936
      %v2212 = vpop.f32.mrb[0].mxu0
      %v2213 = vadd.f32 0.0, %v2212
      %v2214 = vpop.f32.mrb[0].mxu0
      %v2215 = vpop.f32.mrb[0].mxu0
      %v2216 = vadd.f32 0.0, %v2215
      %v2217 = vpop.f32.mrb[0].mxu0
      %2218 = vmatprep.mubr.bf16.mxu0 %v1940
      %2219 = vmatmul.mubr.bf16.gmra.mrb[0].mxu0 %v1939
      %v2220 = vpop.f32.mrb[0].mxu0
      %v2221 = vadd.f32 0.0, %v2220
      %v2222 = vpop.f32.mrb[0].mxu0
      %v2223 = vpop.f32.mrb[0].mxu0
      %v2224 = vadd.f32 0.0, %v2223
      %v2225 = vpop.f32.mrb[0].mxu0
      %2226 = vmatprep.mubr.bf16.mxu0 %v1943
      %2227 = vmatmul.mubr.bf16.gmra.mrb[0].mxu0 %v1942
      %v2228 = vpop.f32.mrb[0].mxu0
      %v2229 = vadd.f32 0.0, %v2228
      %v2230 = vpop.f32.mrb[0].mxu0
      %v2231 = vpop.f32.mrb[0].mxu0
      %v2232 = vadd.f32 0.0, %v2231
      %v2233 = vpop.f32.mrb[0].mxu0
      %2234 = vmatprep.mubr.bf16.mxu0 %v1946
      %2235 = vmatmul.mubr.bf16.gmra.mrb[0].mxu0 %v1945
      %v2236 = vpop.f32.mrb[0].mxu0
      %v2237 = vadd.f32 0.0, %v2236
      %v2238 = vpop.f32.mrb[0].mxu0
      %v2239 = vpop.f32.mrb[0].mxu0
      %v2240 = vadd.f32 0.0, %v2239
      %v2241 = vpop.f32.mrb[0].mxu0
      %2242 = vmatprep.mubr.bf16.mxu0 %v1949
      %2243 = vmatmul.mubr.bf16.gmra.mrb[0].mxu0 %v1948
      %v2244 = vpop.f32.mrb[0].mxu0
      %v2245 = vadd.f32 0.0, %v2244
      %v2246 = vpop.f32.mrb[0].mxu0
      %v2247 = vpop.f32.mrb[0].mxu0
      %v2248 = vadd.f32 0.0, %v2247
      %v2249 = vpop.f32.mrb[0].mxu0
      %2250 = vmatprep.mubr.bf16.mxu0 %v1952
      %2251 = vmatmul.mubr.bf16.gmra.mrb[0].mxu0 %v1951
      %v2252 = vpop.f32.mrb[0].mxu0
      %v2253 = vadd.f32 0.0, %v2252
      %v2254 = vpop.f32.mrb[0].mxu0
      %v2255 = vpop.f32.mrb[0].mxu0
      %v2256 = vadd.f32 0.0, %v2255
      %v2257 = vpop.f32.mrb[0].mxu0
      %2258 = vdwg.mxu0
      %2259 = vmatprep.subr.bf16.mxu0 0
      %2260 = vmatpush1.bf16.msra.mxu0 %v2066
      %2261 = vmatprep.subr.bf16.mxu0 0
      %2262 = vmatpush1.bf16.msra.mxu0 %v2067
      %2263 = vmatprep.subr.bf16.mxu0 0
      %2264 = vmatpush1.bf16.msra.mxu0 %v2068
      %2265 = vmatprep.subr.bf16.mxu0 0
      %2266 = vmatpush1.bf16.msra.mxu0 %v2069
      %2267 = vmatprep.subr.bf16.mxu0 0
      %2268 = vmatpush1.bf16.msra.mxu0 %v2070
      %2269 = vmatprep.subr.bf16.mxu0 0
      %2270 = vmatpush1.bf16.msra.mxu0 %v2071
      %2271 = vmatprep.subr.bf16.mxu0 0
      %2272 = vmatpush1.bf16.msra.mxu0 %v2072
      %2273 = vmatprep.subr.bf16.mxu0 0
      %2274 = vmatpush1.bf16.msra.mxu0 %v2073
      %2275 = vmatprep.subr.bf16.mxu0 0
      %2276 = vmatpush1.bf16.msra.mxu0 0
      %2277 = vmatprep.subr.bf16.mxu0 0
      %2278 = vmatpush1.bf16.msra.mxu0 0
      %2279 = vmatprep.subr.bf16.mxu0 0
      %2280 = vmatpush1.bf16.msra.mxu0 0
      %2281 = vmatprep.subr.bf16.mxu0 0
      %2282 = vmatpush1.bf16.msra.mxu0 0
      %2283 = vmatprep.subr.bf16.mxu0 0
      %2284 = vmatpush1.bf16.msra.mxu0 0
      %2285 = vmatprep.subr.bf16.mxu0 0
      %2286 = vmatpush1.bf16.msra.mxu0 0
      %2287 = vmatprep.subr.bf16.mxu0 0
      %2288 = vmatpush1.bf16.msra.mxu0 0
      %2289 = vmatprep.subr.bf16.mxu0 0
      %2290 = vmatpush1.bf16.msra.mxu0 0
      %2291 = vmatprep.mubr.bf16.mxu0 0
      %2292 = vmatmul.mubr.bf16.gmra.mrb[0].mxu0 %v1908
      %v2293 = vpop.f32.mrb[0].mxu0
      %v2294 = vadd.f32 %v2133, %v2293
      %v2295 = vpop.f32.mrb[0].mxu0
      %v2296 = vpop.f32.mrb[0].mxu0
      %v2297 = vadd.f32 %v2136, %v2296
      %v2298 = vpop.f32.mrb[0].mxu0
      %2299 = vmatprep.mubr.bf16.mxu0 0
      %2300 = vmatmul.mubr.bf16.gmra.mrb[0].mxu0 %v1911
      %v2301 = vpop.f32.mrb[0].mxu0
      %v2302 = vadd.f32 %v2141, %v2301
      %v2303 = vpop.f32.mrb[0].mxu0
      %v2304 = vpop.f32.mrb[0].mxu0
      %v2305 = vadd.f32 %v2144, %v2304
      %v2306 = vpop.f32.mrb[0].mxu0
      %2307 = vmatprep.mubr.bf16.mxu0 0
      %2308 = vmatmul.mubr.bf16.gmra.mrb[0].mxu0 %v1914
      %v2309 = vpop.f32.mrb[0].mxu0
      %v2310 = vadd.f32 %v2149, %v2309
      %v2311 = vpop.f32.mrb[0].mxu0
      %v2312 = vpop.f32.mrb[0].mxu0
      %v2313 = vadd.f32 %v2152, %v2312
      %v2314 = vpop.f32.mrb[0].mxu0
      %2315 = vmatprep.mubr.bf16.mxu0 0
      %2316 = vmatmul.mubr.bf16.gmra.mrb[0].mxu0 %v1917
      %v2317 = vpop.f32.mrb[0].mxu0
      %v2318 = vadd.f32 %v2157, %v2317
      %v2319 = vpop.f32.mrb[0].mxu0
      %v2320 = vpop.f32.mrb[0].mxu0
      %v2321 = vadd.f32 %v2160, %v2320
      %v2322 = vpop.f32.mrb[0].mxu0
      %2323 = vmatprep.mubr.bf16.mxu0 0
      %2324 = vmatmul.mubr.bf16.gmra.mrb[0].mxu0 %v1920
      %v2325 = vpop.f32.mrb[0].mxu0
      %v2326 = vadd.f32 %v2165, %v2325
      %v2327 = vpop.f32.mrb[0].mxu0
      %v2328 = vpop.f32.mrb[0].mxu0
      %v2329 = vadd.f32 %v2168, %v2328
      %v2330 = vpop.f32.mrb[0].mxu0
      %2331 = vmatprep.mubr.bf16.mxu0 0
      %2332 = vmatmul.mubr.bf16.gmra.mrb[0].mxu0 %v1923
      %v2333 = vpop.f32.mrb[0].mxu0
      %v2334 = vadd.f32 %v2173, %v2333
      %v2335 = vpop.f32.mrb[0].mxu0
      %v2336 = vpop.f32.mrb[0].mxu0
      %v2337 = vadd.f32 %v2176, %v2336
      %v2338 = vpop.f32.mrb[0].mxu0
      %2339 = vmatprep.mubr.bf16.mxu0 0
      %2340 = vmatmul.mubr.bf16.gmra.mrb[0].mxu0 %v1926
      %v2341 = vpop.f32.mrb[0].mxu0
      %v2342 = vadd.f32 %v2181, %v2341
      %v2343 = vpop.f32.mrb[0].mxu0
      %v2344 = vpop.f32.mrb[0].mxu0
      %v2345 = vadd.f32 %v2184, %v2344
      %v2346 = vpop.f32.mrb[0].mxu0
      %2347 = vmatprep.mubr.bf16.mxu0 0
      %2348 = vmatmul.mubr.bf16.gmra.mrb[0].mxu0 %v1929
      %v2349 = vpop.f32.mrb[0].mxu0
      %v2350 = vadd.f32 %v2189, %v2349
      %v2351 = vpop.f32.mrb[0].mxu0
      %v2352 = vpop.f32.mrb[0].mxu0
      %v2353 = vadd.f32 %v2192, %v2352
      %v2354 = vpop.f32.mrb[0].mxu0
      %2355 = vmatprep.mubr.bf16.mxu0 0
      %2356 = vmatmul.mubr.bf16.gmra.mrb[0].mxu0 %v1932
      %v2357 = vpop.f32.mrb[0].mxu0
      %v2358 = vadd.f32 %v2197, %v2357
      %v2359 = vpop.f32.mrb[0].mxu0
      %v2360 = vpop.f32.mrb[0].mxu0
      %v2361 = vadd.f32 %v2200, %v2360
      %v2362 = vpop.f32.mrb[0].mxu0
      %2363 = vmatprep.mubr.bf16.mxu0 0
      %2364 = vmatmul.mubr.bf16.gmra.mrb[0].mxu0 %v1935
      %v2365 = vpop.f32.mrb[0].mxu0
      %v2366 = vadd.f32 %v2205, %v2365
      %v2367 = vpop.f32.mrb[0].mxu0
      %v2368 = vpop.f32.mrb[0].mxu0
      %v2369 = vadd.f32 %v2208, %v2368
      %v2370 = vpop.f32.mrb[0].mxu0
      %2371 = vmatprep.mubr.bf16.mxu0 0
      %2372 = vmatmul.mubr.bf16.gmra.mrb[0].mxu0 %v1938
      %v2373 = vpop.f32.mrb[0].mxu0
      %v2374 = vadd.f32 %v2213, %v2373
      %v2375 = vpop.f32.mrb[0].mxu0
      %v2376 = vpop.f32.mrb[0].mxu0
      %v2377 = vadd.f32 %v2216, %v2376
      %v2378 = vpop.f32.mrb[0].mxu0
      %2379 = vmatprep.mubr.bf16.mxu0 0
      %2380 = vmatmul.mubr.bf16.gmra.mrb[0].mxu0 %v1941
      %v2381 = vpop.f32.mrb[0].mxu0
      %v2382 = vadd.f32 %v2221, %v2381
      %v2383 = vpop.f32.mrb[0].mxu0
      %v2384 = vpop.f32.mrb[0].mxu0
      %v2385 = vadd.f32 %v2224, %v2384
      %v2386 = vpop.f32.mrb[0].mxu0
      %2387 = vmatprep.mubr.bf16.mxu0 0
      %2388 = vmatmul.mubr.bf16.gmra.mrb[0].mxu0 %v1944
      %v2389 = vpop.f32.mrb[0].mxu0
      %v2390 = vadd.f32 %v2229, %v2389
      %v2391 = vpop.f32.mrb[0].mxu0
      %v2392 = vpop.f32.mrb[0].mxu0
      %v2393 = vadd.f32 %v2232, %v2392
      %v2394 = vpop.f32.mrb[0].mxu0
      %2395 = vmatprep.mubr.bf16.mxu0 0
      %2396 = vmatmul.mubr.bf16.gmra.mrb[0].mxu0 %v1947
      %v2397 = vpop.f32.mrb[0].mxu0
      %v2398 = vadd.f32 %v2237, %v2397
      %v2399 = vpop.f32.mrb[0].mxu0
      %v2400 = vpop.f32.mrb[0].mxu0
      %v2401 = vadd.f32 %v2240, %v2400
      %v2402 = vpop.f32.mrb[0].mxu0
      %2403 = vmatprep.mubr.bf16.mxu0 0
      %2404 = vmatmul.mubr.bf16.gmra.mrb[0].mxu0 %v1950
      %v2405 = vpop.f32.mrb[0].mxu0
      %v2406 = vadd.f32 %v2245, %v2405
      %v2407 = vpop.f32.mrb[0].mxu0
      %v2408 = vpop.f32.mrb[0].mxu0
      %v2409 = vadd.f32 %v2248, %v2408
      %v2410 = vpop.f32.mrb[0].mxu0
      %2411 = vmatprep.mubr.bf16.mxu0 0
      %2412 = vmatmul.mubr.bf16.gmra.mrb[0].mxu0 %v1953
      %v2413 = vpop.f32.mrb[0].mxu0
      %v2414 = vadd.f32 %v2253, %v2413
      %v2415 = vpop.f32.mrb[0].mxu0
      %v2416 = vpop.f32.mrb[0].mxu0
      %v2417 = vadd.f32 %v2256, %v2416
      %v2418 = vpop.f32.mrb[0].mxu0
      %2419 = vdwg.mxu0
      %v2420 = vpack.c.bf16 %v2297, %v2294
      %v2421 = vpack.c.bf16 %v2305, %v2302
      %v2422 = vpack.c.bf16 %v2313, %v2310
      %v2423 = vpack.c.bf16 %v2321, %v2318
      %v2424 = vpack.c.bf16 %v2329, %v2326
      %v2425 = vpack.c.bf16 %v2337, %v2334
      %v2426 = vpack.c.bf16 %v2345, %v2342
      %v2427 = vpack.c.bf16 %v2353, %v2350
      %v2428 = vpack.c.bf16 %v2361, %v2358
      %v2429 = vpack.c.bf16 %v2369, %v2366
      %v2430 = vpack.c.bf16 %v2377, %v2374
      %v2431 = vpack.c.bf16 %v2385, %v2382
      %v2432 = vpack.c.bf16 %v2393, %v2390
      %v2433 = vpack.c.bf16 %v2401, %v2398
      %v2434 = vpack.c.bf16 %v2409, %v2406
      %v2435 = vpack.c.bf16 %v2417, %v2414
      %v2436 = vld [vmem:[%s310] sm:$0x3]
      %2437 = vrot.lane.b32.xlu0 %v521, 124
      %v2438 = vpop.permute.xlu0 %2437
      %2439 = vrot.lane.b32.xlu0 %v522, 124
      %v2440 = vpop.permute.xlu0 %2439
      %2441 = vrot.lane.b32.xlu0 %v523, 124
      %v2442 = vpop.permute.xlu0 %2441
      %2443 = vrot.lane.b32.xlu0 %v524, 124
      %v2444 = vpop.permute.xlu0 %2443
      %2445 = vrot.lane.b32.xlu0 %v525, 124
      %v2446 = vpop.permute.xlu0 %2445
      %2447 = vrot.lane.b32.xlu0 %v526, 124
      %v2448 = vpop.permute.xlu0 %2447
      %2449 = vrot.lane.b32.xlu0 %v527, 124
      %v2450 = vpop.permute.xlu0 %2449
      %2451 = vrot.lane.b32.xlu0 %v528, 124
      %v2452 = vpop.permute.xlu0 %2451
      %2453 = vrot.lane.b32.xlu0 %v529, 124
      %v2454 = vpop.permute.xlu0 %2453
      %2455 = vrot.lane.b32.xlu0 %v530, 124
      %v2456 = vpop.permute.xlu0 %2455
      %2457 = vrot.lane.b32.xlu0 %v531, 124
      %v2458 = vpop.permute.xlu0 %2457
      %2459 = vrot.lane.b32.xlu0 %v532, 124
      %v2460 = vpop.permute.xlu0 %2459
      %2461 = vrot.lane.b32.xlu0 %v533, 124
      %v2462 = vpop.permute.xlu0 %2461
      %2463 = vrot.lane.b32.xlu0 %v534, 124
      %v2464 = vpop.permute.xlu0 %2463
      %2465 = vrot.lane.b32.xlu0 %v535, 124
      %v2466 = vpop.permute.xlu0 %2465
      %2467 = vrot.lane.b32.xlu0 %v536, 124
      %v2468 = vpop.permute.xlu0 %2467
      %2469 = vrot.lane.b32.xlu0 %v633, 124
      %v2470 = vpop.permute.xlu0 %2469
      %2471 = vrot.lane.b32.xlu0 %v634, 124
      %v2472 = vpop.permute.xlu0 %2471
      %2473 = vrot.lane.b32.xlu0 %v635, 124
      %v2474 = vpop.permute.xlu0 %2473
      %2475 = vrot.lane.b32.xlu0 %v636, 124
      %v2476 = vpop.permute.xlu0 %2475
      %2477 = vrot.lane.b32.xlu0 %v637, 124
      %v2478 = vpop.permute.xlu0 %2477
      %2479 = vrot.lane.b32.xlu0 %v638, 124
      %v2480 = vpop.permute.xlu0 %2479
      %2481 = vrot.lane.b32.xlu0 %v639, 124
      %v2482 = vpop.permute.xlu0 %2481
      %2483 = vrot.lane.b32.xlu0 %v640, 124
      %v2484 = vpop.permute.xlu0 %2483
      %2485 = vrot.lane.b32.xlu0 %v641, 124
      %v2486 = vpop.permute.xlu0 %2485
      %2487 = vrot.lane.b32.xlu0 %v642, 124
      %v2488 = vpop.permute.xlu0 %2487
      %2489 = vrot.lane.b32.xlu0 %v643, 124
      %v2490 = vpop.permute.xlu0 %2489
      %2491 = vrot.lane.b32.xlu0 %v644, 124
      %v2492 = vpop.permute.xlu0 %2491
      %2493 = vrot.lane.b32.xlu0 %v645, 124
      %v2494 = vpop.permute.xlu0 %2493
      %2495 = vrot.lane.b32.xlu0 %v646, 124
      %v2496 = vpop.permute.xlu0 %2495
      %2497 = vrot.lane.b32.xlu0 %v647, 124
      %v2498 = vpop.permute.xlu0 %2497
      %2499 = vrot.lane.b32.xlu0 %v648, 124
      %v2500 = vpop.permute.xlu0 %2499
      %2501 = vrot.lane.b32.xlu0 %v649, 124
      %v2502 = vpop.permute.xlu0 %2501
      %2503 = vrot.lane.b32.xlu0 %v650, 124
      %v2504 = vpop.permute.xlu0 %2503
      %2505 = vrot.lane.b32.xlu0 %v651, 124
      %v2506 = vpop.permute.xlu0 %2505
      %2507 = vrot.lane.b32.xlu0 %v652, 124
      %v2508 = vpop.permute.xlu0 %2507
      %2509 = vrot.lane.b32.xlu0 %v653, 124
      %v2510 = vpop.permute.xlu0 %2509
      %2511 = vrot.lane.b32.xlu0 %v654, 124
      %v2512 = vpop.permute.xlu0 %2511
      %2513 = vrot.lane.b32.xlu0 %v655, 124
      %v2514 = vpop.permute.xlu0 %2513
      %2515 = vrot.lane.b32.xlu0 %v656, 124
      %v2516 = vpop.permute.xlu0 %2515
      %v2518 = vsel %vm657, %v2438, 0
      %v2521 = vsel %vm657, %v2440, 0
      %v2524 = vsel %vm657, %v2442, 0
      %v2527 = vsel %vm657, %v2444, 0
      %v2530 = vsel %vm657, %v2446, 0
      %v2533 = vsel %vm657, %v2448, 0
      %v2536 = vsel %vm657, %v2450, 0
      %v2539 = vsel %vm657, %v2452, 0
      %v2542 = vsel %vm657, %v2454, 0
      %v2545 = vsel %vm657, %v2456, 0
      %v2548 = vsel %vm657, %v2458, 0
      %v2551 = vsel %vm657, %v2460, 0
      %v2554 = vsel %vm657, %v2462, 0
      %v2557 = vsel %vm657, %v2464, 0
      %v2560 = vsel %vm657, %v2466, 0
      %v2563 = vsel %vm657, %v2468, 0
      %v2566 = vsel %vm657, %v2470, 0
      %v2569 = vsel %vm657, %v2472, 0
      %v2572 = vsel %vm657, %v2474, 0
      %v2575 = vsel %vm657, %v2476, 0
      %v2578 = vsel %vm657, %v2478, 0
      %v2581 = vsel %vm657, %v2480, 0
      %v2584 = vsel %vm657, %v2482, 0
      %v2587 = vsel %vm657, %v2484, 0
      %v2590 = vsel %vm657, %v2486, 0
      %v2593 = vsel %vm657, %v2488, 0
      %v2596 = vsel %vm657, %v2490, 0
      %v2599 = vsel %vm657, %v2492, 0
      %v2602 = vsel %vm657, %v2494, 0
      %v2605 = vsel %vm657, %v2496, 0
      %v2608 = vsel %vm657, %v2498, 0
      %v2611 = vsel %vm657, %v2500, 0
      %v2614 = vsel %vm657, %v2502, 0
      %v2617 = vsel %vm657, %v2504, 0
      %v2620 = vsel %vm657, %v2506, 0
      %v2623 = vsel %vm657, %v2508, 0
      %v2626 = vsel %vm657, %v2510, 0
      %v2629 = vsel %vm657, %v2512, 0
      %v2632 = vsel %vm657, %v2514, 0
      %v2635 = vsel %vm657, %v2516, 0
      %2637 = vmatprep.subr.bf16.mxu0 0
      %2638 = vmatpush1.bf16.xpose.msra.mxu0 %v2566
      %2639 = vmatprep.subr.bf16.mxu0 0
      %2640 = vmatpush1.bf16.xpose.msra.mxu0 %v2569
      %2641 = vmatprep.subr.bf16.mxu0 0
      %2642 = vmatpush1.bf16.xpose.msra.mxu0 %v2572
      %2643 = vmatprep.subr.bf16.mxu0 0
      %2644 = vmatpush1.bf16.xpose.msra.mxu0 %v2575
      %2645 = vmatprep.subr.bf16.mxu0 0
      %2646 = vmatpush1.bf16.xpose.msra.mxu0 %v2578
      %2647 = vmatprep.subr.bf16.mxu0 0
      %2648 = vmatpush1.bf16.xpose.msra.mxu0 %v2581
      %2649 = vmatprep.subr.bf16.mxu0 0
      %2650 = vmatpush1.bf16.xpose.msra.mxu0 %v2584
      %2651 = vmatprep.subr.bf16.mxu0 0
      %2652 = vmatpush1.bf16.xpose.msra.mxu0 %v2587
      %2653 = vmatprep.subr.bf16.mxu0 0
      %2654 = vmatpush1.bf16.xpose.msra.mxu0 %v2590
      %2655 = vmatprep.subr.bf16.mxu0 0
      %2656 = vmatpush1.bf16.xpose.msra.mxu0 %v2593
      %2657 = vmatprep.subr.bf16.mxu0 0
      %2658 = vmatpush1.bf16.xpose.msra.mxu0 %v2596
      %2659 = vmatprep.subr.bf16.mxu0 0
      %2660 = vmatpush1.bf16.xpose.msra.mxu0 %v2599
      %2661 = vmatprep.subr.bf16.mxu0 0
      %2662 = vmatpush1.bf16.xpose.msra.mxu0 %v2602
      %2663 = vmatprep.subr.bf16.mxu0 0
      %2664 = vmatpush1.bf16.xpose.msra.mxu0 %v2605
      %2665 = vmatprep.subr.bf16.mxu0 0
      %2666 = vmatpush1.bf16.xpose.msra.mxu0 %v2608
      %2667 = vmatprep.subr.bf16.mxu0 0
      %2668 = vmatpush1.bf16.xpose.msra.mxu0 %v2611
      %2669 = vmatprep.mubr.bf16.mxu0 0
      %2670 = vmatmul.mubr.bf16.gmra.mrb[0].mxu0 %v2518
      %v2671 = vpop.f32.mrb[0].mxu0
      %v2672 = vadd.f32 0.0, %v2671
      %v2673 = vpop.f32.mrb[0].mxu0
      %v2674 = vadd.f32 0.0, %v2673
      %v2675 = vpop.f32.mrb[0].mxu0
      %v2676 = vadd.f32 0.0, %v2675
      %v2677 = vpop.f32.mrb[0].mxu0
      %v2678 = vadd.f32 0.0, %v2677
      %2679 = vmatprep.mubr.bf16.mxu0 0
      %2680 = vmatmul.mubr.bf16.gmra.mrb[0].mxu0 %v2521
      %v2681 = vpop.f32.mrb[0].mxu0
      %v2682 = vadd.f32 0.0, %v2681
      %v2683 = vpop.f32.mrb[0].mxu0
      %v2684 = vadd.f32 0.0, %v2683
      %v2685 = vpop.f32.mrb[0].mxu0
      %v2686 = vadd.f32 0.0, %v2685
      %v2687 = vpop.f32.mrb[0].mxu0
      %v2688 = vadd.f32 0.0, %v2687
      %2689 = vmatprep.mubr.bf16.mxu0 0
      %2690 = vmatmul.mubr.bf16.gmra.mrb[0].mxu0 %v2524
      %v2691 = vpop.f32.mrb[0].mxu0
      %v2692 = vadd.f32 0.0, %v2691
      %v2693 = vpop.f32.mrb[0].mxu0
      %v2694 = vadd.f32 0.0, %v2693
      %v2695 = vpop.f32.mrb[0].mxu0
      %v2696 = vadd.f32 0.0, %v2695
      %v2697 = vpop.f32.mrb[0].mxu0
      %v2698 = vadd.f32 0.0, %v2697
      %2699 = vmatprep.mubr.bf16.mxu0 0
      %2700 = vmatmul.mubr.bf16.gmra.mrb[0].mxu0 %v2527
      %v2701 = vpop.f32.mrb[0].mxu0
      %v2702 = vadd.f32 0.0, %v2701
      %v2703 = vpop.f32.mrb[0].mxu0
      %v2704 = vadd.f32 0.0, %v2703
      %v2705 = vpop.f32.mrb[0].mxu0
      %v2706 = vadd.f32 0.0, %v2705
      %v2707 = vpop.f32.mrb[0].mxu0
      %v2708 = vadd.f32 0.0, %v2707
      %2709 = vmatprep.mubr.bf16.mxu0 0
      %2710 = vmatmul.mubr.bf16.gmra.mrb[0].mxu0 %v2530
      %v2711 = vpop.f32.mrb[0].mxu0
      %v2712 = vadd.f32 0.0, %v2711
      %v2713 = vpop.f32.mrb[0].mxu0
      %v2714 = vadd.f32 0.0, %v2713
      %v2715 = vpop.f32.mrb[0].mxu0
      %v2716 = vadd.f32 0.0, %v2715
      %v2717 = vpop.f32.mrb[0].mxu0
      %v2718 = vadd.f32 0.0, %v2717
      %2719 = vmatprep.mubr.bf16.mxu0 0
      %2720 = vmatmul.mubr.bf16.gmra.mrb[0].mxu0 %v2533
      %v2721 = vpop.f32.mrb[0].mxu0
      %v2722 = vadd.f32 0.0, %v2721
      %v2723 = vpop.f32.mrb[0].mxu0
      %v2724 = vadd.f32 0.0, %v2723
      %v2725 = vpop.f32.mrb[0].mxu0
      %v2726 = vadd.f32 0.0, %v2725
      %v2727 = vpop.f32.mrb[0].mxu0
      %v2728 = vadd.f32 0.0, %v2727
      %2729 = vmatprep.mubr.bf16.mxu0 0
      %2730 = vmatmul.mubr.bf16.gmra.mrb[0].mxu0 %v2536
      %v2731 = vpop.f32.mrb[0].mxu0
      %v2732 = vadd.f32 0.0, %v2731
      %v2733 = vpop.f32.mrb[0].mxu0
      %v2734 = vadd.f32 0.0, %v2733
      %v2735 = vpop.f32.mrb[0].mxu0
      %v2736 = vadd.f32 0.0, %v2735
      %v2737 = vpop.f32.mrb[0].mxu0
      %v2738 = vadd.f32 0.0, %v2737
      %2739 = vmatprep.mubr.bf16.mxu0 0
      %2740 = vmatmul.mubr.bf16.gmra.mrb[0].mxu0 %v2539
      %v2741 = vpop.f32.mrb[0].mxu0
      %v2742 = vadd.f32 0.0, %v2741
      %v2743 = vpop.f32.mrb[0].mxu0
      %v2744 = vadd.f32 0.0, %v2743
      %v2745 = vpop.f32.mrb[0].mxu0
      %v2746 = vadd.f32 0.0, %v2745
      %v2747 = vpop.f32.mrb[0].mxu0
      %v2748 = vadd.f32 0.0, %v2747
      %2749 = vmatprep.mubr.bf16.mxu0 0
      %2750 = vmatmul.mubr.bf16.gmra.mrb[0].mxu0 %v2542
      %v2751 = vpop.f32.mrb[0].mxu0
      %v2752 = vadd.f32 0.0, %v2751
      %v2753 = vpop.f32.mrb[0].mxu0
      %v2754 = vadd.f32 0.0, %v2753
      %v2755 = vpop.f32.mrb[0].mxu0
      %v2756 = vadd.f32 0.0, %v2755
      %v2757 = vpop.f32.mrb[0].mxu0
      %v2758 = vadd.f32 0.0, %v2757
      %2759 = vmatprep.mubr.bf16.mxu0 0
      %2760 = vmatmul.mubr.bf16.gmra.mrb[0].mxu0 %v2545
      %v2761 = vpop.f32.mrb[0].mxu0
      %v2762 = vadd.f32 0.0, %v2761
      %v2763 = vpop.f32.mrb[0].mxu0
      %v2764 = vadd.f32 0.0, %v2763
      %v2765 = vpop.f32.mrb[0].mxu0
      %v2766 = vadd.f32 0.0, %v2765
      %v2767 = vpop.f32.mrb[0].mxu0
      %v2768 = vadd.f32 0.0, %v2767
      %2769 = vmatprep.mubr.bf16.mxu0 0
      %2770 = vmatmul.mubr.bf16.gmra.mrb[0].mxu0 %v2548
      %v2771 = vpop.f32.mrb[0].mxu0
      %v2772 = vadd.f32 0.0, %v2771
      %v2773 = vpop.f32.mrb[0].mxu0
      %v2774 = vadd.f32 0.0, %v2773
      %v2775 = vpop.f32.mrb[0].mxu0
      %v2776 = vadd.f32 0.0, %v2775
      %v2777 = vpop.f32.mrb[0].mxu0
      %v2778 = vadd.f32 0.0, %v2777
      %2779 = vmatprep.mubr.bf16.mxu0 0
      %2780 = vmatmul.mubr.bf16.gmra.mrb[0].mxu0 %v2551
      %v2781 = vpop.f32.mrb[0].mxu0
      %v2782 = vadd.f32 0.0, %v2781
      %v2783 = vpop.f32.mrb[0].mxu0
      %v2784 = vadd.f32 0.0, %v2783
      %v2785 = vpop.f32.mrb[0].mxu0
      %v2786 = vadd.f32 0.0, %v2785
      %v2787 = vpop.f32.mrb[0].mxu0
      %v2788 = vadd.f32 0.0, %v2787
      %2789 = vmatprep.mubr.bf16.mxu0 0
      %2790 = vmatmul.mubr.bf16.gmra.mrb[0].mxu0 %v2554
      %v2791 = vpop.f32.mrb[0].mxu0
      %v2792 = vadd.f32 0.0, %v2791
      %v2793 = vpop.f32.mrb[0].mxu0
      %v2794 = vadd.f32 0.0, %v2793
      %v2795 = vpop.f32.mrb[0].mxu0
      %v2796 = vadd.f32 0.0, %v2795
      %v2797 = vpop.f32.mrb[0].mxu0
      %v2798 = vadd.f32 0.0, %v2797
      %2799 = vmatprep.mubr.bf16.mxu0 0
      %2800 = vmatmul.mubr.bf16.gmra.mrb[0].mxu0 %v2557
      %v2801 = vpop.f32.mrb[0].mxu0
      %v2802 = vadd.f32 0.0, %v2801
      %v2803 = vpop.f32.mrb[0].mxu0
      %v2804 = vadd.f32 0.0, %v2803
      %v2805 = vpop.f32.mrb[0].mxu0
      %v2806 = vadd.f32 0.0, %v2805
      %v2807 = vpop.f32.mrb[0].mxu0
      %v2808 = vadd.f32 0.0, %v2807
      %2809 = vmatprep.mubr.bf16.mxu0 0
      %2810 = vmatmul.mubr.bf16.gmra.mrb[0].mxu0 %v2560
      %v2811 = vpop.f32.mrb[0].mxu0
      %v2812 = vadd.f32 0.0, %v2811
      %v2813 = vpop.f32.mrb[0].mxu0
      %v2814 = vadd.f32 0.0, %v2813
      %v2815 = vpop.f32.mrb[0].mxu0
      %v2816 = vadd.f32 0.0, %v2815
      %v2817 = vpop.f32.mrb[0].mxu0
      %v2818 = vadd.f32 0.0, %v2817
      %2819 = vmatprep.mubr.bf16.mxu0 0
      %2820 = vmatmul.mubr.bf16.gmra.mrb[0].mxu0 %v2563
      %v2821 = vpop.f32.mrb[0].mxu0
      %v2822 = vadd.f32 0.0, %v2821
      %v2823 = vpop.f32.mrb[0].mxu0
      %v2824 = vadd.f32 0.0, %v2823
      %v2825 = vpop.f32.mrb[0].mxu0
      %v2826 = vadd.f32 0.0, %v2825
      %v2827 = vpop.f32.mrb[0].mxu0
      %v2828 = vadd.f32 0.0, %v2827
      %2829 = vdwg.mxu0
      %2830 = vmatprep.subr.bf16.mxu0 0
      %2831 = vmatpush1.bf16.xpose.msra.mxu0 %v2614
      %2832 = vmatprep.subr.bf16.mxu0 0
      %2833 = vmatpush1.bf16.xpose.msra.mxu0 %v2617
      %2834 = vmatprep.subr.bf16.mxu0 0
      %2835 = vmatpush1.bf16.xpose.msra.mxu0 %v2620
      %2836 = vmatprep.subr.bf16.mxu0 0
      %2837 = vmatpush1.bf16.xpose.msra.mxu0 %v2623
      %2838 = vmatprep.subr.bf16.mxu0 0
      %2839 = vmatpush1.bf16.xpose.msra.mxu0 %v2626
      %2840 = vmatprep.subr.bf16.mxu0 0
      %2841 = vmatpush1.bf16.xpose.msra.mxu0 %v2629
      %2842 = vmatprep.subr.bf16.mxu0 0
      %2843 = vmatpush1.bf16.xpose.msra.mxu0 %v2632
      %2844 = vmatprep.subr.bf16.mxu0 0
      %2845 = vmatpush1.bf16.xpose.msra.mxu0 %v2635
      %2846 = vmatprep.subr.bf16.mxu0 0
      %2847 = vmatpush1.bf16.xpose.msra.mxu0 0
      %2848 = vmatprep.subr.bf16.mxu0 0
      %2849 = vmatpush1.bf16.xpose.msra.mxu0 0
      %2850 = vmatprep.subr.bf16.mxu0 0
      %2851 = vmatpush1.bf16.xpose.msra.mxu0 0
      %2852 = vmatprep.subr.bf16.mxu0 0
      %2853 = vmatpush1.bf16.xpose.msra.mxu0 0
      %2854 = vmatprep.subr.bf16.mxu0 0
      %2855 = vmatpush1.bf16.xpose.msra.mxu0 0
      %2856 = vmatprep.subr.bf16.mxu0 0
      %2857 = vmatpush1.bf16.xpose.msra.mxu0 0
      %2858 = vmatprep.subr.bf16.mxu0 0
      %2859 = vmatpush1.bf16.xpose.msra.mxu0 0
      %2860 = vmatprep.subr.bf16.mxu0 0
      %2861 = vmatpush1.bf16.xpose.msra.mxu0 0
      %2862 = vmatprep.mubr.bf16.mxu0 0
      %2863 = vmatmul.mubr.bf16.gmra.mrb[0].mxu0 %v2518
      %v2864 = vpop.f32.mrb[0].mxu0
      %v2865 = vadd.f32 0.0, %v2864
      %v2866 = vpop.f32.mrb[0].mxu0
      %v2867 = vpop.f32.mrb[0].mxu0
      %v2868 = vadd.f32 0.0, %v2867
      %v2869 = vpop.f32.mrb[0].mxu0
      %2870 = vmatprep.mubr.bf16.mxu0 0
      %2871 = vmatmul.mubr.bf16.gmra.mrb[0].mxu0 %v2521
      %v2872 = vpop.f32.mrb[0].mxu0
      %v2873 = vadd.f32 0.0, %v2872
      %v2874 = vpop.f32.mrb[0].mxu0
      %v2875 = vpop.f32.mrb[0].mxu0
      %v2876 = vadd.f32 0.0, %v2875
      %v2877 = vpop.f32.mrb[0].mxu0
      %2878 = vmatprep.mubr.bf16.mxu0 0
      %2879 = vmatmul.mubr.bf16.gmra.mrb[0].mxu0 %v2524
      %v2880 = vpop.f32.mrb[0].mxu0
      %v2881 = vadd.f32 0.0, %v2880
      %v2882 = vpop.f32.mrb[0].mxu0
      %v2883 = vpop.f32.mrb[0].mxu0
      %v2884 = vadd.f32 0.0, %v2883
      %v2885 = vpop.f32.mrb[0].mxu0
      %2886 = vmatprep.mubr.bf16.mxu0 0
      %2887 = vmatmul.mubr.bf16.gmra.mrb[0].mxu0 %v2527
      %v2888 = vpop.f32.mrb[0].mxu0
      %v2889 = vadd.f32 0.0, %v2888
      %v2890 = vpop.f32.mrb[0].mxu0
      %v2891 = vpop.f32.mrb[0].mxu0
      %v2892 = vadd.f32 0.0, %v2891
      %v2893 = vpop.f32.mrb[0].mxu0
      %2894 = vmatprep.mubr.bf16.mxu0 0
      %2895 = vmatmul.mubr.bf16.gmra.mrb[0].mxu0 %v2530
      %v2896 = vpop.f32.mrb[0].mxu0
      %v2897 = vadd.f32 0.0, %v2896
      %v2898 = vpop.f32.mrb[0].mxu0
      %v2899 = vpop.f32.mrb[0].mxu0
      %v2900 = vadd.f32 0.0, %v2899
      %v2901 = vpop.f32.mrb[0].mxu0
      %2902 = vmatprep.mubr.bf16.mxu0 0
      %2903 = vmatmul.mubr.bf16.gmra.mrb[0].mxu0 %v2533
      %v2904 = vpop.f32.mrb[0].mxu0
      %v2905 = vadd.f32 0.0, %v2904
      %v2906 = vpop.f32.mrb[0].mxu0
      %v2907 = vpop.f32.mrb[0].mxu0
      %v2908 = vadd.f32 0.0, %v2907
      %v2909 = vpop.f32.mrb[0].mxu0
      %2910 = vmatprep.mubr.bf16.mxu0 0
      %2911 = vmatmul.mubr.bf16.gmra.mrb[0].mxu0 %v2536
      %v2912 = vpop.f32.mrb[0].mxu0
      %v2913 = vadd.f32 0.0, %v2912
      %v2914 = vpop.f32.mrb[0].mxu0
      %v2915 = vpop.f32.mrb[0].mxu0
      %v2916 = vadd.f32 0.0, %v2915
      %v2917 = vpop.f32.mrb[0].mxu0
      %2918 = vmatprep.mubr.bf16.mxu0 0
      %2919 = vmatmul.mubr.bf16.gmra.mrb[0].mxu0 %v2539
      %v2920 = vpop.f32.mrb[0].mxu0
      %v2921 = vadd.f32 0.0, %v2920
      %v2922 = vpop.f32.mrb[0].mxu0
      %v2923 = vpop.f32.mrb[0].mxu0
      %v2924 = vadd.f32 0.0, %v2923
      %v2925 = vpop.f32.mrb[0].mxu0
      %2926 = vmatprep.mubr.bf16.mxu0 0
      %2927 = vmatmul.mubr.bf16.gmra.mrb[0].mxu0 %v2542
      %v2928 = vpop.f32.mrb[0].mxu0
      %v2929 = vadd.f32 0.0, %v2928
      %v2930 = vpop.f32.mrb[0].mxu0
      %v2931 = vpop.f32.mrb[0].mxu0
      %v2932 = vadd.f32 0.0, %v2931
      %v2933 = vpop.f32.mrb[0].mxu0
      %2934 = vmatprep.mubr.bf16.mxu0 0
      %2935 = vmatmul.mubr.bf16.gmra.mrb[0].mxu0 %v2545
      %v2936 = vpop.f32.mrb[0].mxu0
      %v2937 = vadd.f32 0.0, %v2936
      %v2938 = vpop.f32.mrb[0].mxu0
      %v2939 = vpop.f32.mrb[0].mxu0
      %v2940 = vadd.f32 0.0, %v2939
      %v2941 = vpop.f32.mrb[0].mxu0
      %2942 = vmatprep.mubr.bf16.mxu0 0
      %2943 = vmatmul.mubr.bf16.gmra.mrb[0].mxu0 %v2548
      %v2944 = vpop.f32.mrb[0].mxu0
      %v2945 = vadd.f32 0.0, %v2944
      %v2946 = vpop.f32.mrb[0].mxu0
      %v2947 = vpop.f32.mrb[0].mxu0
      %v2948 = vadd.f32 0.0, %v2947
      %v2949 = vpop.f32.mrb[0].mxu0
      %2950 = vmatprep.mubr.bf16.mxu0 0
      %2951 = vmatmul.mubr.bf16.gmra.mrb[0].mxu0 %v2551
      %v2952 = vpop.f32.mrb[0].mxu0
      %v2953 = vadd.f32 0.0, %v2952
      %v2954 = vpop.f32.mrb[0].mxu0
      %v2955 = vpop.f32.mrb[0].mxu0
      %v2956 = vadd.f32 0.0, %v2955
      %v2957 = vpop.f32.mrb[0].mxu0
      %2958 = vmatprep.mubr.bf16.mxu0 0
      %2959 = vmatmul.mubr.bf16.gmra.mrb[0].mxu0 %v2554
      %v2960 = vpop.f32.mrb[0].mxu0
      %v2961 = vadd.f32 0.0, %v2960
      %v2962 = vpop.f32.mrb[0].mxu0
      %v2963 = vpop.f32.mrb[0].mxu0
      %v2964 = vadd.f32 0.0, %v2963
      %v2965 = vpop.f32.mrb[0].mxu0
      %2966 = vmatprep.mubr.bf16.mxu0 0
      %2967 = vmatmul.mubr.bf16.gmra.mrb[0].mxu0 %v2557
      %v2968 = vpop.f32.mrb[0].mxu0
      %v2969 = vadd.f32 0.0, %v2968
      %v2970 = vpop.f32.mrb[0].mxu0
      %v2971 = vpop.f32.mrb[0].mxu0
      %v2972 = vadd.f32 0.0, %v2971
      %v2973 = vpop.f32.mrb[0].mxu0
      %2974 = vmatprep.mubr.bf16.mxu0 0
      %2975 = vmatmul.mubr.bf16.gmra.mrb[0].mxu0 %v2560
      %v2976 = vpop.f32.mrb[0].mxu0
      %v2977 = vadd.f32 0.0, %v2976
      %v2978 = vpop.f32.mrb[0].mxu0
      %v2979 = vpop.f32.mrb[0].mxu0
      %v2980 = vadd.f32 0.0, %v2979
      %v2981 = vpop.f32.mrb[0].mxu0
      %2982 = vmatprep.mubr.bf16.mxu0 0
      %2983 = vmatmul.mubr.bf16.gmra.mrb[0].mxu0 %v2563
      %v2984 = vpop.f32.mrb[0].mxu0
      %v2985 = vadd.f32 0.0, %v2984
      %v2986 = vpop.f32.mrb[0].mxu0
      %v2987 = vpop.f32.mrb[0].mxu0
      %v2988 = vadd.f32 0.0, %v2987
      %v2989 = vpop.f32.mrb[0].mxu0
      %2990 = vdwg.mxu0
      %v2991 = vsel %vm1135, %v2672, -1e+30
      %v2992 = vsel %vm1136, %v2674, -1e+30
      %v2993 = vsel %vm1137, %v2865, -1e+30
      %v2994 = vsel %vm1135, %v2676, -1e+30
      %v2995 = vsel %vm1136, %v2678, -1e+30
      %v2996 = vsel %vm1137, %v2868, -1e+30
      %v2997 = vsel %vm1135, %v2682, -1e+30
      %v2998 = vsel %vm1136, %v2684, -1e+30
      %v2999 = vsel %vm1137, %v2873, -1e+30
      %v3000 = vsel %vm1135, %v2686, -1e+30
      %v3001 = vsel %vm1136, %v2688, -1e+30
      %v3002 = vsel %vm1137, %v2876, -1e+30
      %v3003 = vsel %vm1135, %v2692, -1e+30
      %v3004 = vsel %vm1136, %v2694, -1e+30
      %v3005 = vsel %vm1137, %v2881, -1e+30
      %v3006 = vsel %vm1135, %v2696, -1e+30
      %v3007 = vsel %vm1136, %v2698, -1e+30
      %v3008 = vsel %vm1137, %v2884, -1e+30
      %v3009 = vsel %vm1135, %v2702, -1e+30
      %v3010 = vsel %vm1136, %v2704, -1e+30
      %v3011 = vsel %vm1137, %v2889, -1e+30
      %v3012 = vsel %vm1135, %v2706, -1e+30
      %v3013 = vsel %vm1136, %v2708, -1e+30
      %v3014 = vsel %vm1137, %v2892, -1e+30
      %v3015 = vsel %vm1135, %v2712, -1e+30
      %v3016 = vsel %vm1136, %v2714, -1e+30
      %v3017 = vsel %vm1137, %v2897, -1e+30
      %v3018 = vsel %vm1135, %v2716, -1e+30
      %v3019 = vsel %vm1136, %v2718, -1e+30
      %v3020 = vsel %vm1137, %v2900, -1e+30
      %v3021 = vsel %vm1135, %v2722, -1e+30
      %v3022 = vsel %vm1136, %v2724, -1e+30
      %v3023 = vsel %vm1137, %v2905, -1e+30
      %v3024 = vsel %vm1135, %v2726, -1e+30
      %v3025 = vsel %vm1136, %v2728, -1e+30
      %v3026 = vsel %vm1137, %v2908, -1e+30
      %v3027 = vsel %vm1135, %v2732, -1e+30
      %v3028 = vsel %vm1136, %v2734, -1e+30
      %v3029 = vsel %vm1137, %v2913, -1e+30
      %v3030 = vsel %vm1135, %v2736, -1e+30
      %v3031 = vsel %vm1136, %v2738, -1e+30
      %v3032 = vsel %vm1137, %v2916, -1e+30
      %v3033 = vsel %vm1135, %v2742, -1e+30
      %v3034 = vsel %vm1136, %v2744, -1e+30
      %v3035 = vsel %vm1137, %v2921, -1e+30
      %v3036 = vsel %vm1135, %v2746, -1e+30
      %v3037 = vsel %vm1136, %v2748, -1e+30
      %v3038 = vsel %vm1137, %v2924, -1e+30
      %v3039 = vsel %vm1135, %v2752, -1e+30
      %v3040 = vsel %vm1136, %v2754, -1e+30
      %v3041 = vsel %vm1137, %v2929, -1e+30
      %v3042 = vsel %vm1135, %v2756, -1e+30
      %v3043 = vsel %vm1136, %v2758, -1e+30
      %v3044 = vsel %vm1137, %v2932, -1e+30
      %v3045 = vsel %vm1135, %v2762, -1e+30
      %v3046 = vsel %vm1136, %v2764, -1e+30
      %v3047 = vsel %vm1137, %v2937, -1e+30
      %v3048 = vsel %vm1135, %v2766, -1e+30
      %v3049 = vsel %vm1136, %v2768, -1e+30
      %v3050 = vsel %vm1137, %v2940, -1e+30
      %v3051 = vsel %vm1135, %v2772, -1e+30
      %v3052 = vsel %vm1136, %v2774, -1e+30
      %v3053 = vsel %vm1137, %v2945, -1e+30
      %v3054 = vsel %vm1135, %v2776, -1e+30
      %v3055 = vsel %vm1136, %v2778, -1e+30
      %v3056 = vsel %vm1137, %v2948, -1e+30
      %v3057 = vsel %vm1135, %v2782, -1e+30
      %v3058 = vsel %vm1136, %v2784, -1e+30
      %v3059 = vsel %vm1137, %v2953, -1e+30
      %v3060 = vsel %vm1135, %v2786, -1e+30
      %v3061 = vsel %vm1136, %v2788, -1e+30
      %v3062 = vsel %vm1137, %v2956, -1e+30
      %v3063 = vsel %vm1135, %v2792, -1e+30
      %v3064 = vsel %vm1136, %v2794, -1e+30
      %v3065 = vsel %vm1137, %v2961, -1e+30
      %v3066 = vsel %vm1135, %v2796, -1e+30
      %v3067 = vsel %vm1136, %v2798, -1e+30
      %v3068 = vsel %vm1137, %v2964, -1e+30
      %v3069 = vsel %vm1135, %v2802, -1e+30
      %v3070 = vsel %vm1136, %v2804, -1e+30
      %v3071 = vsel %vm1137, %v2969, -1e+30
      %v3072 = vsel %vm1135, %v2806, -1e+30
      %v3073 = vsel %vm1136, %v2808, -1e+30
      %v3074 = vsel %vm1137, %v2972, -1e+30
      %v3075 = vsel %vm1135, %v2812, -1e+30
      %v3076 = vsel %vm1136, %v2814, -1e+30
      %v3077 = vsel %vm1137, %v2977, -1e+30
      %v3078 = vsel %vm1135, %v2816, -1e+30
      %v3079 = vsel %vm1136, %v2818, -1e+30
      %v3080 = vsel %vm1137, %v2980, -1e+30
      %v3081 = vsel %vm1135, %v2822, -1e+30
      %v3082 = vsel %vm1136, %v2824, -1e+30
      %v3083 = vsel %vm1137, %v2985, -1e+30
      %v3084 = vsel %vm1135, %v2826, -1e+30
      %v3085 = vsel %vm1136, %v2828, -1e+30
      %v3086 = vsel %vm1137, %v2988, -1e+30
      %v3087 = vmax.f32 %v2991, %v2992
      %v3088 = vmax.f32 %v3087, %v2993
      %3089 = vmax.xlane.f32.xlu0 %v3088
      %v3090 = vpop.xlane.xlu0 %3089
      %v3091 = vmax.f32 %v2994, %v2995
      %v3092 = vmax.f32 %v3091, %v2996
      %3093 = vmax.xlane.f32.xlu0 %v3092
      %v3094 = vpop.xlane.xlu0 %3093
      %v3095 = vmax.f32 %v2997, %v2998
      %v3096 = vmax.f32 %v3095, %v2999
      %3097 = vmax.xlane.f32.xlu0 %v3096
      %v3098 = vpop.xlane.xlu0 %3097
      %v3099 = vmax.f32 %v3000, %v3001
      %v3100 = vmax.f32 %v3099, %v3002
      %3101 = vmax.xlane.f32.xlu0 %v3100
      %v3102 = vpop.xlane.xlu0 %3101
      %v3103 = vmax.f32 %v3003, %v3004
      %v3104 = vmax.f32 %v3103, %v3005
      %3105 = vmax.xlane.f32.xlu0 %v3104
      %v3106 = vpop.xlane.xlu0 %3105
      %v3107 = vmax.f32 %v3006, %v3007
      %v3108 = vmax.f32 %v3107, %v3008
      %3109 = vmax.xlane.f32.xlu0 %v3108
      %v3110 = vpop.xlane.xlu0 %3109
      %v3111 = vmax.f32 %v3009, %v3010
      %v3112 = vmax.f32 %v3111, %v3011
      %3113 = vmax.xlane.f32.xlu0 %v3112
      %v3114 = vpop.xlane.xlu0 %3113
      %v3115 = vmax.f32 %v3012, %v3013
      %v3116 = vmax.f32 %v3115, %v3014
      %3117 = vmax.xlane.f32.xlu0 %v3116
      %v3118 = vpop.xlane.xlu0 %3117
      %v3119 = vmax.f32 %v3015, %v3016
      %v3120 = vmax.f32 %v3119, %v3017
      %3121 = vmax.xlane.f32.xlu0 %v3120
      %v3122 = vpop.xlane.xlu0 %3121
      %v3123 = vmax.f32 %v3018, %v3019
      %v3124 = vmax.f32 %v3123, %v3020
      %3125 = vmax.xlane.f32.xlu0 %v3124
      %v3126 = vpop.xlane.xlu0 %3125
      %v3127 = vmax.f32 %v3021, %v3022
      %v3128 = vmax.f32 %v3127, %v3023
      %3129 = vmax.xlane.f32.xlu0 %v3128
      %v3130 = vpop.xlane.xlu0 %3129
      %v3131 = vmax.f32 %v3024, %v3025
      %v3132 = vmax.f32 %v3131, %v3026
      %3133 = vmax.xlane.f32.xlu0 %v3132
      %v3134 = vpop.xlane.xlu0 %3133
      %v3135 = vmax.f32 %v3027, %v3028
      %v3136 = vmax.f32 %v3135, %v3029
      %3137 = vmax.xlane.f32.xlu0 %v3136
      %v3138 = vpop.xlane.xlu0 %3137
      %v3139 = vmax.f32 %v3030, %v3031
      %v3140 = vmax.f32 %v3139, %v3032
      %3141 = vmax.xlane.f32.xlu0 %v3140
      %v3142 = vpop.xlane.xlu0 %3141
      %v3143 = vmax.f32 %v3033, %v3034
      %v3144 = vmax.f32 %v3143, %v3035
      %3145 = vmax.xlane.f32.xlu0 %v3144
      %v3146 = vpop.xlane.xlu0 %3145
      %v3147 = vmax.f32 %v3036, %v3037
      %v3148 = vmax.f32 %v3147, %v3038
      %3149 = vmax.xlane.f32.xlu0 %v3148
      %v3150 = vpop.xlane.xlu0 %3149
      %v3151 = vmax.f32 %v3039, %v3040
      %v3152 = vmax.f32 %v3151, %v3041
      %3153 = vmax.xlane.f32.xlu0 %v3152
      %v3154 = vpop.xlane.xlu0 %3153
      %v3155 = vmax.f32 %v3042, %v3043
      %v3156 = vmax.f32 %v3155, %v3044
      %3157 = vmax.xlane.f32.xlu0 %v3156
      %v3158 = vpop.xlane.xlu0 %3157
      %v3159 = vmax.f32 %v3045, %v3046
      %v3160 = vmax.f32 %v3159, %v3047
      %3161 = vmax.xlane.f32.xlu0 %v3160
      %v3162 = vpop.xlane.xlu0 %3161
      %v3163 = vmax.f32 %v3048, %v3049
      %v3164 = vmax.f32 %v3163, %v3050
      %3165 = vmax.xlane.f32.xlu0 %v3164
      %v3166 = vpop.xlane.xlu0 %3165
      %v3167 = vmax.f32 %v3051, %v3052
      %v3168 = vmax.f32 %v3167, %v3053
      %3169 = vmax.xlane.f32.xlu0 %v3168
      %v3170 = vpop.xlane.xlu0 %3169
      %v3171 = vmax.f32 %v3054, %v3055
      %v3172 = vmax.f32 %v3171, %v3056
      %3173 = vmax.xlane.f32.xlu0 %v3172
      %v3174 = vpop.xlane.xlu0 %3173
      %v3175 = vmax.f32 %v3057, %v3058
      %v3176 = vmax.f32 %v3175, %v3059
      %3177 = vmax.xlane.f32.xlu0 %v3176
      %v3178 = vpop.xlane.xlu0 %3177
      %v3179 = vmax.f32 %v3060, %v3061
      %v3180 = vmax.f32 %v3179, %v3062
      %3181 = vmax.xlane.f32.xlu0 %v3180
      %v3182 = vpop.xlane.xlu0 %3181
      %v3183 = vmax.f32 %v3063, %v3064
      %v3184 = vmax.f32 %v3183, %v3065
      %3185 = vmax.xlane.f32.xlu0 %v3184
      %v3186 = vpop.xlane.xlu0 %3185
      %v3187 = vmax.f32 %v3066, %v3067
      %v3188 = vmax.f32 %v3187, %v3068
      %3189 = vmax.xlane.f32.xlu0 %v3188
      %v3190 = vpop.xlane.xlu0 %3189
      %v3191 = vmax.f32 %v3069, %v3070
      %v3192 = vmax.f32 %v3191, %v3071
      %3193 = vmax.xlane.f32.xlu0 %v3192
      %v3194 = vpop.xlane.xlu0 %3193
      %v3195 = vmax.f32 %v3072, %v3073
      %v3196 = vmax.f32 %v3195, %v3074
      %3197 = vmax.xlane.f32.xlu0 %v3196
      %v3198 = vpop.xlane.xlu0 %3197
      %v3199 = vmax.f32 %v3075, %v3076
      %v3200 = vmax.f32 %v3199, %v3077
      %3201 = vmax.xlane.f32.xlu0 %v3200
      %v3202 = vpop.xlane.xlu0 %3201
      %v3203 = vmax.f32 %v3078, %v3079
      %v3204 = vmax.f32 %v3203, %v3080
      %3205 = vmax.xlane.f32.xlu0 %v3204
      %v3206 = vpop.xlane.xlu0 %3205
      %v3207 = vmax.f32 %v3081, %v3082
      %v3208 = vmax.f32 %v3207, %v3083
      %3209 = vmax.xlane.f32.xlu0 %v3208
      %v3210 = vpop.xlane.xlu0 %3209
      %v3211 = vmax.f32 %v3084, %v3085
      %v3212 = vmax.f32 %v3211, %v3086
      %3213 = vmax.xlane.f32.xlu0 %v3212
      %v3214 = vpop.xlane.xlu0 %3213
      %v3215 = vsub.f32 %v2991, %v3090
      %v3216 = vsub.f32 %v2992, %v3090
      %v3217 = vsub.f32 %v2993, %v3090
      %v3218 = vsub.f32 %v2994, %v3094
      %v3219 = vsub.f32 %v2995, %v3094
      %v3220 = vsub.f32 %v2996, %v3094
      %v3221 = vsub.f32 %v2997, %v3098
      %v3222 = vsub.f32 %v2998, %v3098
      %v3223 = vsub.f32 %v2999, %v3098
      %v3224 = vsub.f32 %v3000, %v3102
      %v3225 = vsub.f32 %v3001, %v3102
      %v3226 = vsub.f32 %v3002, %v3102
      %v3227 = vsub.f32 %v3003, %v3106
      %v3228 = vsub.f32 %v3004, %v3106
      %v3229 = vsub.f32 %v3005, %v3106
      %v3230 = vsub.f32 %v3006, %v3110
      %v3231 = vsub.f32 %v3007, %v3110
      %v3232 = vsub.f32 %v3008, %v3110
      %v3233 = vsub.f32 %v3009, %v3114
      %v3234 = vsub.f32 %v3010, %v3114
      %v3235 = vsub.f32 %v3011, %v3114
      %v3236 = vsub.f32 %v3012, %v3118
      %v3237 = vsub.f32 %v3013, %v3118
      %v3238 = vsub.f32 %v3014, %v3118
      %v3239 = vsub.f32 %v3015, %v3122
      %v3240 = vsub.f32 %v3016, %v3122
      %v3241 = vsub.f32 %v3017, %v3122
      %v3242 = vsub.f32 %v3018, %v3126
      %v3243 = vsub.f32 %v3019, %v3126
      %v3244 = vsub.f32 %v3020, %v3126
      %v3245 = vsub.f32 %v3021, %v3130
      %v3246 = vsub.f32 %v3022, %v3130
      %v3247 = vsub.f32 %v3023, %v3130
      %v3248 = vsub.f32 %v3024, %v3134
      %v3249 = vsub.f32 %v3025, %v3134
      %v3250 = vsub.f32 %v3026, %v3134
      %v3251 = vsub.f32 %v3027, %v3138
      %v3252 = vsub.f32 %v3028, %v3138
      %v3253 = vsub.f32 %v3029, %v3138
      %v3254 = vsub.f32 %v3030, %v3142
      %v3255 = vsub.f32 %v3031, %v3142
      %v3256 = vsub.f32 %v3032, %v3142
      %v3257 = vsub.f32 %v3033, %v3146
      %v3258 = vsub.f32 %v3034, %v3146
      %v3259 = vsub.f32 %v3035, %v3146
      %v3260 = vsub.f32 %v3036, %v3150
      %v3261 = vsub.f32 %v3037, %v3150
      %v3262 = vsub.f32 %v3038, %v3150
      %v3263 = vsub.f32 %v3039, %v3154
      %v3264 = vsub.f32 %v3040, %v3154
      %v3265 = vsub.f32 %v3041, %v3154
      %v3266 = vsub.f32 %v3042, %v3158
      %v3267 = vsub.f32 %v3043, %v3158
      %v3268 = vsub.f32 %v3044, %v3158
      %v3269 = vsub.f32 %v3045, %v3162
      %v3270 = vsub.f32 %v3046, %v3162
      %v3271 = vsub.f32 %v3047, %v3162
      %v3272 = vsub.f32 %v3048, %v3166
      %v3273 = vsub.f32 %v3049, %v3166
      %v3274 = vsub.f32 %v3050, %v3166
      %v3275 = vsub.f32 %v3051, %v3170
      %v3276 = vsub.f32 %v3052, %v3170
      %v3277 = vsub.f32 %v3053, %v3170
      %v3278 = vsub.f32 %v3054, %v3174
      %v3279 = vsub.f32 %v3055, %v3174
      %v3280 = vsub.f32 %v3056, %v3174
      %v3281 = vsub.f32 %v3057, %v3178
      %v3282 = vsub.f32 %v3058, %v3178
      %v3283 = vsub.f32 %v3059, %v3178
      %v3284 = vsub.f32 %v3060, %v3182
      %v3285 = vsub.f32 %v3061, %v3182
      %v3286 = vsub.f32 %v3062, %v3182
      %v3287 = vsub.f32 %v3063, %v3186
      %v3288 = vsub.f32 %v3064, %v3186
      %v3289 = vsub.f32 %v3065, %v3186
      %v3290 = vsub.f32 %v3066, %v3190
      %v3291 = vsub.f32 %v3067, %v3190
      %v3292 = vsub.f32 %v3068, %v3190
      %v3293 = vsub.f32 %v3069, %v3194
      %v3294 = vsub.f32 %v3070, %v3194
      %v3295 = vsub.f32 %v3071, %v3194
      %v3296 = vsub.f32 %v3072, %v3198
      %v3297 = vsub.f32 %v3073, %v3198
      %v3298 = vsub.f32 %v3074, %v3198
      %v3299 = vsub.f32 %v3075, %v3202
      %v3300 = vsub.f32 %v3076, %v3202
      %v3301 = vsub.f32 %v3077, %v3202
      %v3302 = vsub.f32 %v3078, %v3206
      %v3303 = vsub.f32 %v3079, %v3206
      %v3304 = vsub.f32 %v3080, %v3206
      %v3305 = vsub.f32 %v3081, %v3210
      %v3306 = vsub.f32 %v3082, %v3210
      %v3307 = vsub.f32 %v3083, %v3210
      %v3308 = vsub.f32 %v3084, %v3214
      %v3309 = vsub.f32 %v3085, %v3214
      %v3310 = vsub.f32 %v3086, %v3214
      %v3311 = vmul.f32 %v3215, 1.442695
      %v3312 = vpow.pop %v3311
      %v3313 = vmul.f32 %v3216, 1.442695
      %v3314 = vpow.pop %v3313
      %v3315 = vmul.f32 %v3217, 1.442695
      %v3316 = vpow.pop %v3315
      %v3317 = vmul.f32 %v3218, 1.442695
      %v3318 = vpow.pop %v3317
      %v3319 = vmul.f32 %v3219, 1.442695
      %v3320 = vpow.pop %v3319
      %v3321 = vmul.f32 %v3220, 1.442695
      %v3322 = vpow.pop %v3321
      %v3323 = vmul.f32 %v3221, 1.442695
      %v3324 = vpow.pop %v3323
      %v3325 = vmul.f32 %v3222, 1.442695
      %v3326 = vpow.pop %v3325
      %v3327 = vmul.f32 %v3223, 1.442695
      %v3328 = vpow.pop %v3327
      %v3329 = vmul.f32 %v3224, 1.442695
      %v3330 = vpow.pop %v3329
      %v3331 = vmul.f32 %v3225, 1.442695
      %v3332 = vpow.pop %v3331
      %v3333 = vmul.f32 %v3226, 1.442695
      %v3334 = vpow.pop %v3333
      %v3335 = vmul.f32 %v3227, 1.442695
      %v3336 = vpow.pop %v3335
      %v3337 = vmul.f32 %v3228, 1.442695
      %v3338 = vpow.pop %v3337
      %v3339 = vmul.f32 %v3229, 1.442695
      %v3340 = vpow.pop %v3339
      %v3341 = vmul.f32 %v3230, 1.442695
      %v3342 = vpow.pop %v3341
      %v3343 = vmul.f32 %v3231, 1.442695
      %v3344 = vpow.pop %v3343
      %v3345 = vmul.f32 %v3232, 1.442695
      %v3346 = vpow.pop %v3345
      %v3347 = vmul.f32 %v3233, 1.442695
      %v3348 = vpow.pop %v3347
      %v3349 = vmul.f32 %v3234, 1.442695
      %v3350 = vpow.pop %v3349
      %v3351 = vmul.f32 %v3235, 1.442695
      %v3352 = vpow.pop %v3351
      %v3353 = vmul.f32 %v3236, 1.442695
      %v3354 = vpow.pop %v3353
      %v3355 = vmul.f32 %v3237, 1.442695
      %v3356 = vpow.pop %v3355
      %v3357 = vmul.f32 %v3238, 1.442695
      %v3358 = vpow.pop %v3357
      %v3359 = vmul.f32 %v3239, 1.442695
      %v3360 = vpow.pop %v3359
      %v3361 = vmul.f32 %v3240, 1.442695
      %v3362 = vpow.pop %v3361
      %v3363 = vmul.f32 %v3241, 1.442695
      %v3364 = vpow.pop %v3363
      %v3365 = vmul.f32 %v3242, 1.442695
      %v3366 = vpow.pop %v3365
      %v3367 = vmul.f32 %v3243, 1.442695
      %v3368 = vpow.pop %v3367
      %v3369 = vmul.f32 %v3244, 1.442695
      %v3370 = vpow.pop %v3369
      %v3371 = vmul.f32 %v3245, 1.442695
      %v3372 = vpow.pop %v3371
      %v3373 = vmul.f32 %v3246, 1.442695
      %v3374 = vpow.pop %v3373
      %v3375 = vmul.f32 %v3247, 1.442695
      %v3376 = vpow.pop %v3375
      %v3377 = vmul.f32 %v3248, 1.442695
      %v3378 = vpow.pop %v3377
      %v3379 = vmul.f32 %v3249, 1.442695
      %v3380 = vpow.pop %v3379
      %v3381 = vmul.f32 %v3250, 1.442695
      %v3382 = vpow.pop %v3381
      %v3383 = vmul.f32 %v3251, 1.442695
      %v3384 = vpow.pop %v3383
      %v3385 = vmul.f32 %v3252, 1.442695
      %v3386 = vpow.pop %v3385
      %v3387 = vmul.f32 %v3253, 1.442695
      %v3388 = vpow.pop %v3387
      %v3389 = vmul.f32 %v3254, 1.442695
      %v3390 = vpow.pop %v3389
      %v3391 = vmul.f32 %v3255, 1.442695
      %v3392 = vpow.pop %v3391
      %v3393 = vmul.f32 %v3256, 1.442695
      %v3394 = vpow.pop %v3393
      %v3395 = vmul.f32 %v3257, 1.442695
      %v3396 = vpow.pop %v3395
      %v3397 = vmul.f32 %v3258, 1.442695
      %v3398 = vpow.pop %v3397
      %v3399 = vmul.f32 %v3259, 1.442695
      %v3400 = vpow.pop %v3399
      %v3401 = vmul.f32 %v3260, 1.442695
      %v3402 = vpow.pop %v3401
      %v3403 = vmul.f32 %v3261, 1.442695
      %v3404 = vpow.pop %v3403
      %v3405 = vmul.f32 %v3262, 1.442695
      %v3406 = vpow.pop %v3405
      %v3407 = vmul.f32 %v3263, 1.442695
      %v3408 = vpow.pop %v3407
      %v3409 = vmul.f32 %v3264, 1.442695
      %v3410 = vpow.pop %v3409
      %v3411 = vmul.f32 %v3265, 1.442695
      %v3412 = vpow.pop %v3411
      %v3413 = vmul.f32 %v3266, 1.442695
      %v3414 = vpow.pop %v3413
      %v3415 = vmul.f32 %v3267, 1.442695
      %v3416 = vpow.pop %v3415
      %v3417 = vmul.f32 %v3268, 1.442695
      %v3418 = vpow.pop %v3417
      %v3419 = vmul.f32 %v3269, 1.442695
      %v3420 = vpow.pop %v3419
      %v3421 = vmul.f32 %v3270, 1.442695
      %v3422 = vpow.pop %v3421
      %v3423 = vmul.f32 %v3271, 1.442695
      %v3424 = vpow.pop %v3423
      %v3425 = vmul.f32 %v3272, 1.442695
      %v3426 = vpow.pop %v3425
      %v3427 = vmul.f32 %v3273, 1.442695
      %v3428 = vpow.pop %v3427
      %v3429 = vmul.f32 %v3274, 1.442695
      %v3430 = vpow.pop %v3429
      %v3431 = vmul.f32 %v3275, 1.442695
      %v3432 = vpow.pop %v3431
      %v3433 = vmul.f32 %v3276, 1.442695
      %v3434 = vpow.pop %v3433
      %v3435 = vmul.f32 %v3277, 1.442695
      %v3436 = vpow.pop %v3435
      %v3437 = vmul.f32 %v3278, 1.442695
      %v3438 = vpow.pop %v3437
      %v3439 = vmul.f32 %v3279, 1.442695
      %v3440 = vpow.pop %v3439
      %v3441 = vmul.f32 %v3280, 1.442695
      %v3442 = vpow.pop %v3441
      %v3443 = vmul.f32 %v3281, 1.442695
      %v3444 = vpow.pop %v3443
      %v3445 = vmul.f32 %v3282, 1.442695
      %v3446 = vpow.pop %v3445
      %v3447 = vmul.f32 %v3283, 1.442695
      %v3448 = vpow.pop %v3447
      %v3449 = vmul.f32 %v3284, 1.442695
      %v3450 = vpow.pop %v3449
      %v3451 = vmul.f32 %v3285, 1.442695
      %v3452 = vpow.pop %v3451
      %v3453 = vmul.f32 %v3286, 1.442695
      %v3454 = vpow.pop %v3453
      %v3455 = vmul.f32 %v3287, 1.442695
      %v3456 = vpow.pop %v3455
      %v3457 = vmul.f32 %v3288, 1.442695
      %v3458 = vpow.pop %v3457
      %v3459 = vmul.f32 %v3289, 1.442695
      %v3460 = vpow.pop %v3459
      %v3461 = vmul.f32 %v3290, 1.442695
      %v3462 = vpow.pop %v3461
      %v3463 = vmul.f32 %v3291, 1.442695
      %v3464 = vpow.pop %v3463
      %v3465 = vmul.f32 %v3292, 1.442695
      %v3466 = vpow.pop %v3465
      %v3467 = vmul.f32 %v3293, 1.442695
      %v3468 = vpow.pop %v3467
      %v3469 = vmul.f32 %v3294, 1.442695
      %v3470 = vpow.pop %v3469
      %v3471 = vmul.f32 %v3295, 1.442695
      %v3472 = vpow.pop %v3471
      %v3473 = vmul.f32 %v3296, 1.442695
      %v3474 = vpow.pop %v3473
      %v3475 = vmul.f32 %v3297, 1.442695
      %v3476 = vpow.pop %v3475
      %v3477 = vmul.f32 %v3298, 1.442695
      %v3478 = vpow.pop %v3477
      %v3479 = vmul.f32 %v3299, 1.442695
      %v3480 = vpow.pop %v3479
      %v3481 = vmul.f32 %v3300, 1.442695
      %v3482 = vpow.pop %v3481
      %v3483 = vmul.f32 %v3301, 1.442695
      %v3484 = vpow.pop %v3483
      %v3485 = vmul.f32 %v3302, 1.442695
      %v3486 = vpow.pop %v3485
      %v3487 = vmul.f32 %v3303, 1.442695
      %v3488 = vpow.pop %v3487
      %v3489 = vmul.f32 %v3304, 1.442695
      %v3490 = vpow.pop %v3489
      %v3491 = vmul.f32 %v3305, 1.442695
      %v3492 = vpow.pop %v3491
      %v3493 = vmul.f32 %v3306, 1.442695
      %v3494 = vpow.pop %v3493
      %v3495 = vmul.f32 %v3307, 1.442695
      %v3496 = vpow.pop %v3495
      %v3497 = vmul.f32 %v3308, 1.442695
      %v3498 = vpow.pop %v3497
      %v3499 = vmul.f32 %v3309, 1.442695
      %v3500 = vpow.pop %v3499
      %v3501 = vmul.f32 %v3310, 1.442695
      %v3502 = vpow.pop %v3501
      %v3503 = vadd.f32 %v3312, %v3314
      %v3504 = vadd.f32 %v3503, %v3316
      %3505 = vadd.xlane.f32.xlu0 %v3504
      %v3506 = vpop.xlane.xlu0 %3505
      %v3507 = vadd.f32 %v3318, %v3320
      %v3508 = vadd.f32 %v3507, %v3322
      %3509 = vadd.xlane.f32.xlu0 %v3508
      %v3510 = vpop.xlane.xlu0 %3509
      %v3511 = vadd.f32 %v3324, %v3326
      %v3512 = vadd.f32 %v3511, %v3328
      %3513 = vadd.xlane.f32.xlu0 %v3512
      %v3514 = vpop.xlane.xlu0 %3513
      %v3515 = vadd.f32 %v3330, %v3332
      %v3516 = vadd.f32 %v3515, %v3334
      %3517 = vadd.xlane.f32.xlu0 %v3516
      %v3518 = vpop.xlane.xlu0 %3517
      %v3519 = vadd.f32 %v3336, %v3338
      %v3520 = vadd.f32 %v3519, %v3340
      %3521 = vadd.xlane.f32.xlu0 %v3520
      %v3522 = vpop.xlane.xlu0 %3521
      %v3523 = vadd.f32 %v3342, %v3344
      %v3524 = vadd.f32 %v3523, %v3346
      %3525 = vadd.xlane.f32.xlu0 %v3524
      %v3526 = vpop.xlane.xlu0 %3525
      %v3527 = vadd.f32 %v3348, %v3350
      %v3528 = vadd.f32 %v3527, %v3352
      %3529 = vadd.xlane.f32.xlu0 %v3528
      %v3530 = vpop.xlane.xlu0 %3529
      %v3531 = vadd.f32 %v3354, %v3356
      %v3532 = vadd.f32 %v3531, %v3358
      %3533 = vadd.xlane.f32.xlu0 %v3532
      %v3534 = vpop.xlane.xlu0 %3533
      %v3535 = vadd.f32 %v3360, %v3362
      %v3536 = vadd.f32 %v3535, %v3364
      %3537 = vadd.xlane.f32.xlu0 %v3536
      %v3538 = vpop.xlane.xlu0 %3537
      %v3539 = vadd.f32 %v3366, %v3368
      %v3540 = vadd.f32 %v3539, %v3370
      %3541 = vadd.xlane.f32.xlu0 %v3540
      %v3542 = vpop.xlane.xlu0 %3541
      %v3543 = vadd.f32 %v3372, %v3374
      %v3544 = vadd.f32 %v3543, %v3376
      %3545 = vadd.xlane.f32.xlu0 %v3544
      %v3546 = vpop.xlane.xlu0 %3545
      %v3547 = vadd.f32 %v3378, %v3380
      %v3548 = vadd.f32 %v3547, %v3382
      %3549 = vadd.xlane.f32.xlu0 %v3548
      %v3550 = vpop.xlane.xlu0 %3549
      %v3551 = vadd.f32 %v3384, %v3386
      %v3552 = vadd.f32 %v3551, %v3388
      %3553 = vadd.xlane.f32.xlu0 %v3552
      %v3554 = vpop.xlane.xlu0 %3553
      %v3555 = vadd.f32 %v3390, %v3392
      %v3556 = vadd.f32 %v3555, %v3394
      %3557 = vadd.xlane.f32.xlu0 %v3556
      %v3558 = vpop.xlane.xlu0 %3557
      %v3559 = vadd.f32 %v3396, %v3398
      %v3560 = vadd.f32 %v3559, %v3400
      %3561 = vadd.xlane.f32.xlu0 %v3560
      %v3562 = vpop.xlane.xlu0 %3561
      %v3563 = vadd.f32 %v3402, %v3404
      %v3564 = vadd.f32 %v3563, %v3406
      %3565 = vadd.xlane.f32.xlu0 %v3564
      %v3566 = vpop.xlane.xlu0 %3565
      %v3567 = vadd.f32 %v3408, %v3410
      %v3568 = vadd.f32 %v3567, %v3412
      %3569 = vadd.xlane.f32.xlu0 %v3568
      %v3570 = vpop.xlane.xlu0 %3569
      %v3571 = vadd.f32 %v3414, %v3416
      %v3572 = vadd.f32 %v3571, %v3418
      %3573 = vadd.xlane.f32.xlu0 %v3572
      %v3574 = vpop.xlane.xlu0 %3573
      %v3575 = vadd.f32 %v3420, %v3422
      %v3576 = vadd.f32 %v3575, %v3424
      %3577 = vadd.xlane.f32.xlu0 %v3576
      %v3578 = vpop.xlane.xlu0 %3577
      %v3579 = vadd.f32 %v3426, %v3428
      %v3580 = vadd.f32 %v3579, %v3430
      %3581 = vadd.xlane.f32.xlu0 %v3580
      %v3582 = vpop.xlane.xlu0 %3581
      %v3583 = vadd.f32 %v3432, %v3434
      %v3584 = vadd.f32 %v3583, %v3436
      %3585 = vadd.xlane.f32.xlu0 %v3584
      %v3586 = vpop.xlane.xlu0 %3585
      %v3587 = vadd.f32 %v3438, %v3440
      %v3588 = vadd.f32 %v3587, %v3442
      %3589 = vadd.xlane.f32.xlu0 %v3588
      %v3590 = vpop.xlane.xlu0 %3589
      %v3591 = vadd.f32 %v3444, %v3446
      %v3592 = vadd.f32 %v3591, %v3448
      %3593 = vadd.xlane.f32.xlu0 %v3592
      %v3594 = vpop.xlane.xlu0 %3593
      %v3595 = vadd.f32 %v3450, %v3452
      %v3596 = vadd.f32 %v3595, %v3454
      %3597 = vadd.xlane.f32.xlu0 %v3596
      %v3598 = vpop.xlane.xlu0 %3597
      %v3599 = vadd.f32 %v3456, %v3458
      %v3600 = vadd.f32 %v3599, %v3460
      %3601 = vadd.xlane.f32.xlu0 %v3600
      %v3602 = vpop.xlane.xlu0 %3601
      %v3603 = vadd.f32 %v3462, %v3464
      %v3604 = vadd.f32 %v3603, %v3466
      %3605 = vadd.xlane.f32.xlu0 %v3604
      %v3606 = vpop.xlane.xlu0 %3605
      %v3607 = vadd.f32 %v3468, %v3470
      %v3608 = vadd.f32 %v3607, %v3472
      %3609 = vadd.xlane.f32.xlu0 %v3608
      %v3610 = vpop.xlane.xlu0 %3609
      %v3611 = vadd.f32 %v3474, %v3476
      %v3612 = vadd.f32 %v3611, %v3478
      %3613 = vadd.xlane.f32.xlu0 %v3612
      %v3614 = vpop.xlane.xlu0 %3613
      %v3615 = vadd.f32 %v3480, %v3482
      %v3616 = vadd.f32 %v3615, %v3484
      %3617 = vadd.xlane.f32.xlu0 %v3616
      %v3618 = vpop.xlane.xlu0 %3617
      %v3619 = vadd.f32 %v3486, %v3488
      %v3620 = vadd.f32 %v3619, %v3490
      %3621 = vadd.xlane.f32.xlu0 %v3620
      %v3622 = vpop.xlane.xlu0 %3621
      %v3623 = vadd.f32 %v3492, %v3494
      %v3624 = vadd.f32 %v3623, %v3496
      %3625 = vadd.xlane.f32.xlu0 %v3624
      %v3626 = vpop.xlane.xlu0 %3625
      %v3627 = vadd.f32 %v3498, %v3500
      %v3628 = vadd.f32 %v3627, %v3502
      %3629 = vadd.xlane.f32.xlu0 %v3628
      %v3630 = vpop.xlane.xlu0 %3629
      %v3631 = vrcp.pop %v3506
      %v3632 = vrcp.pop %v3510
      %v3633 = vrcp.pop %v3514
      %v3634 = vrcp.pop %v3518
      %v3635 = vrcp.pop %v3522
      %v3636 = vrcp.pop %v3526
      %v3637 = vrcp.pop %v3530
      %v3638 = vrcp.pop %v3534
      %v3639 = vrcp.pop %v3538
      %v3640 = vrcp.pop %v3542
      %v3641 = vrcp.pop %v3546
      %v3642 = vrcp.pop %v3550
      %v3643 = vrcp.pop %v3554
      %v3644 = vrcp.pop %v3558
      %v3645 = vrcp.pop %v3562
      %v3646 = vrcp.pop %v3566
      %v3647 = vrcp.pop %v3570
      %v3648 = vrcp.pop %v3574
      %v3649 = vrcp.pop %v3578
      %v3650 = vrcp.pop %v3582
      %v3651 = vrcp.pop %v3586
      %v3652 = vrcp.pop %v3590
      %v3653 = vrcp.pop %v3594
      %v3654 = vrcp.pop %v3598
      %v3655 = vrcp.pop %v3602
      %v3656 = vrcp.pop %v3606
      %v3657 = vrcp.pop %v3610
      %v3658 = vrcp.pop %v3614
      %v3659 = vrcp.pop %v3618
      %v3660 = vrcp.pop %v3622
      %v3661 = vrcp.pop %v3626
      %v3662 = vrcp.pop %v3630
      %v3663 = vmul.f32 %v3312, %v3631
      %v3664 = vmul.f32 %v3314, %v3631
      %v3665 = vmul.f32 %v3316, %v3631
      %v3666 = vmul.f32 %v3318, %v3632
      %v3667 = vmul.f32 %v3320, %v3632
      %v3668 = vmul.f32 %v3322, %v3632
      %v3669 = vmul.f32 %v3324, %v3633
      %v3670 = vmul.f32 %v3326, %v3633
      %v3671 = vmul.f32 %v3328, %v3633
      %v3672 = vmul.f32 %v3330, %v3634
      %v3673 = vmul.f32 %v3332, %v3634
      %v3674 = vmul.f32 %v3334, %v3634
      %v3675 = vmul.f32 %v3336, %v3635
      %v3676 = vmul.f32 %v3338, %v3635
      %v3677 = vmul.f32 %v3340, %v3635
      %v3678 = vmul.f32 %v3342, %v3636
      %v3679 = vmul.f32 %v3344, %v3636
      %v3680 = vmul.f32 %v3346, %v3636
      %v3681 = vmul.f32 %v3348, %v3637
      %v3682 = vmul.f32 %v3350, %v3637
      %v3683 = vmul.f32 %v3352, %v3637
      %v3684 = vmul.f32 %v3354, %v3638
      %v3685 = vmul.f32 %v3356, %v3638
      %v3686 = vmul.f32 %v3358, %v3638
      %v3687 = vmul.f32 %v3360, %v3639
      %v3688 = vmul.f32 %v3362, %v3639
      %v3689 = vmul.f32 %v3364, %v3639
      %v3690 = vmul.f32 %v3366, %v3640
      %v3691 = vmul.f32 %v3368, %v3640
      %v3692 = vmul.f32 %v3370, %v3640
      %v3693 = vmul.f32 %v3372, %v3641
      %v3694 = vmul.f32 %v3374, %v3641
      %v3695 = vmul.f32 %v3376, %v3641
      %v3696 = vmul.f32 %v3378, %v3642
      %v3697 = vmul.f32 %v3380, %v3642
      %v3698 = vmul.f32 %v3382, %v3642
      %v3699 = vmul.f32 %v3384, %v3643
      %v3700 = vmul.f32 %v3386, %v3643
      %v3701 = vmul.f32 %v3388, %v3643
      %v3702 = vmul.f32 %v3390, %v3644
      %v3703 = vmul.f32 %v3392, %v3644
      %v3704 = vmul.f32 %v3394, %v3644
      %v3705 = vmul.f32 %v3396, %v3645
      %v3706 = vmul.f32 %v3398, %v3645
      %v3707 = vmul.f32 %v3400, %v3645
      %v3708 = vmul.f32 %v3402, %v3646
      %v3709 = vmul.f32 %v3404, %v3646
      %v3710 = vmul.f32 %v3406, %v3646
      %v3711 = vmul.f32 %v3408, %v3647
      %v3712 = vmul.f32 %v3410, %v3647
      %v3713 = vmul.f32 %v3412, %v3647
      %v3714 = vmul.f32 %v3414, %v3648
      %v3715 = vmul.f32 %v3416, %v3648
      %v3716 = vmul.f32 %v3418, %v3648
      %v3717 = vmul.f32 %v3420, %v3649
      %v3718 = vmul.f32 %v3422, %v3649
      %v3719 = vmul.f32 %v3424, %v3649
      %v3720 = vmul.f32 %v3426, %v3650
      %v3721 = vmul.f32 %v3428, %v3650
      %v3722 = vmul.f32 %v3430, %v3650
      %v3723 = vmul.f32 %v3432, %v3651
      %v3724 = vmul.f32 %v3434, %v3651
      %v3725 = vmul.f32 %v3436, %v3651
      %v3726 = vmul.f32 %v3438, %v3652
      %v3727 = vmul.f32 %v3440, %v3652
      %v3728 = vmul.f32 %v3442, %v3652
      %v3729 = vmul.f32 %v3444, %v3653
      %v3730 = vmul.f32 %v3446, %v3653
      %v3731 = vmul.f32 %v3448, %v3653
      %v3732 = vmul.f32 %v3450, %v3654
      %v3733 = vmul.f32 %v3452, %v3654
      %v3734 = vmul.f32 %v3454, %v3654
      %v3735 = vmul.f32 %v3456, %v3655
      %v3736 = vmul.f32 %v3458, %v3655
      %v3737 = vmul.f32 %v3460, %v3655
      %v3738 = vmul.f32 %v3462, %v3656
      %v3739 = vmul.f32 %v3464, %v3656
      %v3740 = vmul.f32 %v3466, %v3656
      %v3741 = vmul.f32 %v3468, %v3657
      %v3742 = vmul.f32 %v3470, %v3657
      %v3743 = vmul.f32 %v3472, %v3657
      %v3744 = vmul.f32 %v3474, %v3658
      %v3745 = vmul.f32 %v3476, %v3658
      %v3746 = vmul.f32 %v3478, %v3658
      %v3747 = vmul.f32 %v3480, %v3659
      %v3748 = vmul.f32 %v3482, %v3659
      %v3749 = vmul.f32 %v3484, %v3659
      %v3750 = vmul.f32 %v3486, %v3660
      %v3751 = vmul.f32 %v3488, %v3660
      %v3752 = vmul.f32 %v3490, %v3660
      %v3753 = vmul.f32 %v3492, %v3661
      %v3754 = vmul.f32 %v3494, %v3661
      %v3755 = vmul.f32 %v3496, %v3661
      %v3756 = vmul.f32 %v3498, %v3662
      %v3757 = vmul.f32 %v3500, %v3662
      %v3758 = vmul.f32 %v3502, %v3662
      %v3759 = vpack.c.bf16 %v3666, %v3663
      %v3760 = vpack.c.bf16 %v3667, %v3664
      %v3761 = vpack.c.bf16 %v3668, %v3665
      %v3762 = vpack.c.bf16 %v3672, %v3669
      %v3763 = vpack.c.bf16 %v3673, %v3670
      %v3764 = vpack.c.bf16 %v3674, %v3671
      %v3765 = vpack.c.bf16 %v3678, %v3675
      %v3766 = vpack.c.bf16 %v3679, %v3676
      %v3767 = vpack.c.bf16 %v3680, %v3677
      %v3768 = vpack.c.bf16 %v3684, %v3681
      %v3769 = vpack.c.bf16 %v3685, %v3682
      %v3770 = vpack.c.bf16 %v3686, %v3683
      %v3771 = vpack.c.bf16 %v3690, %v3687
      %v3772 = vpack.c.bf16 %v3691, %v3688
      %v3773 = vpack.c.bf16 %v3692, %v3689
      %v3774 = vpack.c.bf16 %v3696, %v3693
      %v3775 = vpack.c.bf16 %v3697, %v3694
      %v3776 = vpack.c.bf16 %v3698, %v3695
      %v3777 = vpack.c.bf16 %v3702, %v3699
      %v3778 = vpack.c.bf16 %v3703, %v3700
      %v3779 = vpack.c.bf16 %v3704, %v3701
      %v3780 = vpack.c.bf16 %v3708, %v3705
      %v3781 = vpack.c.bf16 %v3709, %v3706
      %v3782 = vpack.c.bf16 %v3710, %v3707
      %v3783 = vpack.c.bf16 %v3714, %v3711
      %v3784 = vpack.c.bf16 %v3715, %v3712
      %v3785 = vpack.c.bf16 %v3716, %v3713
      %v3786 = vpack.c.bf16 %v3720, %v3717
      %v3787 = vpack.c.bf16 %v3721, %v3718
      %v3788 = vpack.c.bf16 %v3722, %v3719
      %v3789 = vpack.c.bf16 %v3726, %v3723
      %v3790 = vpack.c.bf16 %v3727, %v3724
      %v3791 = vpack.c.bf16 %v3728, %v3725
      %v3792 = vpack.c.bf16 %v3732, %v3729
      %v3793 = vpack.c.bf16 %v3733, %v3730
      %v3794 = vpack.c.bf16 %v3734, %v3731
      %v3795 = vpack.c.bf16 %v3738, %v3735
      %v3796 = vpack.c.bf16 %v3739, %v3736
      %v3797 = vpack.c.bf16 %v3740, %v3737
      %v3798 = vpack.c.bf16 %v3744, %v3741
      %v3799 = vpack.c.bf16 %v3745, %v3742
      %v3800 = vpack.c.bf16 %v3746, %v3743
      %v3801 = vpack.c.bf16 %v3750, %v3747
      %v3802 = vpack.c.bf16 %v3751, %v3748
      %v3803 = vpack.c.bf16 %v3752, %v3749
      %v3804 = vpack.c.bf16 %v3756, %v3753
      %v3805 = vpack.c.bf16 %v3757, %v3754
      %v3806 = vpack.c.bf16 %v3758, %v3755
      %3807 = vrot.lane.b32.xlu0 %v2050, 124
      %v3808 = vpop.permute.xlu0 %3807
      %3809 = vrot.lane.b32.xlu0 %v2051, 124
      %v3810 = vpop.permute.xlu0 %3809
      %3811 = vrot.lane.b32.xlu0 %v2052, 124
      %v3812 = vpop.permute.xlu0 %3811
      %3813 = vrot.lane.b32.xlu0 %v2053, 124
      %v3814 = vpop.permute.xlu0 %3813
      %3815 = vrot.lane.b32.xlu0 %v2054, 124
      %v3816 = vpop.permute.xlu0 %3815
      %3817 = vrot.lane.b32.xlu0 %v2055, 124
      %v3818 = vpop.permute.xlu0 %3817
      %3819 = vrot.lane.b32.xlu0 %v2056, 124
      %v3820 = vpop.permute.xlu0 %3819
      %3821 = vrot.lane.b32.xlu0 %v2057, 124
      %v3822 = vpop.permute.xlu0 %3821
      %3823 = vrot.lane.b32.xlu0 %v2058, 124
      %v3824 = vpop.permute.xlu0 %3823
      %3825 = vrot.lane.b32.xlu0 %v2059, 124
      %v3826 = vpop.permute.xlu0 %3825
      %3827 = vrot.lane.b32.xlu0 %v2060, 124
      %v3828 = vpop.permute.xlu0 %3827
      %3829 = vrot.lane.b32.xlu0 %v2061, 124
      %v3830 = vpop.permute.xlu0 %3829
      %3831 = vrot.lane.b32.xlu0 %v2062, 124
      %v3832 = vpop.permute.xlu0 %3831
      %3833 = vrot.lane.b32.xlu0 %v2063, 124
      %v3834 = vpop.permute.xlu0 %3833
      %3835 = vrot.lane.b32.xlu0 %v2064, 124
      %v3836 = vpop.permute.xlu0 %3835
      %3837 = vrot.lane.b32.xlu0 %v2065, 124
      %v3838 = vpop.permute.xlu0 %3837
      %3839 = vrot.lane.b32.xlu0 %v2066, 124
      %v3840 = vpop.permute.xlu0 %3839
      %3841 = vrot.lane.b32.xlu0 %v2067, 124
      %v3842 = vpop.permute.xlu0 %3841
      %3843 = vrot.lane.b32.xlu0 %v2068, 124
      %v3844 = vpop.permute.xlu0 %3843
      %3845 = vrot.lane.b32.xlu0 %v2069, 124
      %v3846 = vpop.permute.xlu0 %3845
      %3847 = vrot.lane.b32.xlu0 %v2070, 124
      %v3848 = vpop.permute.xlu0 %3847
      %3849 = vrot.lane.b32.xlu0 %v2071, 124
      %v3850 = vpop.permute.xlu0 %3849
      %3851 = vrot.lane.b32.xlu0 %v2072, 124
      %v3852 = vpop.permute.xlu0 %3851
      %3853 = vrot.lane.b32.xlu0 %v2073, 124
      %v3854 = vpop.permute.xlu0 %3853
      %3879 = vmatprep.subr.bf16.mxu0 0
      %3880 = vmatpush1.bf16.msra.mxu0 %v3808
      %3881 = vmatprep.subr.bf16.mxu0 0
      %3882 = vmatpush1.bf16.msra.mxu0 %v3810
      %3883 = vmatprep.subr.bf16.mxu0 0
      %3884 = vmatpush1.bf16.msra.mxu0 %v3812
      %3885 = vmatprep.subr.bf16.mxu0 0
      %3886 = vmatpush1.bf16.msra.mxu0 %v3814
      %3887 = vmatprep.subr.bf16.mxu0 0
      %3888 = vmatpush1.bf16.msra.mxu0 %v3816
      %3889 = vmatprep.subr.bf16.mxu0 0
      %3890 = vmatpush1.bf16.msra.mxu0 %v3818
      %3891 = vmatprep.subr.bf16.mxu0 0
      %3892 = vmatpush1.bf16.msra.mxu0 %v3820
      %3893 = vmatprep.subr.bf16.mxu0 0
      %3894 = vmatpush1.bf16.msra.mxu0 %v3822
      %3895 = vmatprep.subr.bf16.mxu0 0
      %3896 = vmatpush1.bf16.msra.mxu0 %v3824
      %3897 = vmatprep.subr.bf16.mxu0 0
      %3898 = vmatpush1.bf16.msra.mxu0 %v3826
      %3899 = vmatprep.subr.bf16.mxu0 0
      %3900 = vmatpush1.bf16.msra.mxu0 %v3828
      %3901 = vmatprep.subr.bf16.mxu0 0
      %3902 = vmatpush1.bf16.msra.mxu0 %v3830
      %3903 = vmatprep.subr.bf16.mxu0 0
      %3904 = vmatpush1.bf16.msra.mxu0 %v3832
      %3905 = vmatprep.subr.bf16.mxu0 0
      %3906 = vmatpush1.bf16.msra.mxu0 %v3834
      %3907 = vmatprep.subr.bf16.mxu0 0
      %3908 = vmatpush1.bf16.msra.mxu0 %v3836
      %3909 = vmatprep.subr.bf16.mxu0 0
      %3910 = vmatpush1.bf16.msra.mxu0 %v3838
      %3911 = vmatprep.mubr.bf16.mxu0 %v3760
      %3912 = vmatmul.mubr.bf16.gmra.mrb[0].mxu0 %v3759
      %v3913 = vpop.f32.mrb[0].mxu0
      %v3914 = vadd.f32 0.0, %v3913
      %v3915 = vpop.f32.mrb[0].mxu0
      %v3916 = vpop.f32.mrb[0].mxu0
      %v3917 = vadd.f32 0.0, %v3916
      %v3918 = vpop.f32.mrb[0].mxu0
      %3919 = vmatprep.mubr.bf16.mxu0 %v3763
      %3920 = vmatmul.mubr.bf16.gmra.mrb[0].mxu0 %v3762
      %v3921 = vpop.f32.mrb[0].mxu0
      %v3922 = vadd.f32 0.0, %v3921
      %v3923 = vpop.f32.mrb[0].mxu0
      %v3924 = vpop.f32.mrb[0].mxu0
      %v3925 = vadd.f32 0.0, %v3924
      %v3926 = vpop.f32.mrb[0].mxu0
      %3927 = vmatprep.mubr.bf16.mxu0 %v3766
      %3928 = vmatmul.mubr.bf16.gmra.mrb[0].mxu0 %v3765
      %v3929 = vpop.f32.mrb[0].mxu0
      %v3930 = vadd.f32 0.0, %v3929
      %v3931 = vpop.f32.mrb[0].mxu0
      %v3932 = vpop.f32.mrb[0].mxu0
      %v3933 = vadd.f32 0.0, %v3932
      %v3934 = vpop.f32.mrb[0].mxu0
      %3935 = vmatprep.mubr.bf16.mxu0 %v3769
      %3936 = vmatmul.mubr.bf16.gmra.mrb[0].mxu0 %v3768
      %v3937 = vpop.f32.mrb[0].mxu0
      %v3938 = vadd.f32 0.0, %v3937
      %v3939 = vpop.f32.mrb[0].mxu0
      %v3940 = vpop.f32.mrb[0].mxu0
      %v3941 = vadd.f32 0.0, %v3940
      %v3942 = vpop.f32.mrb[0].mxu0
      %3943 = vmatprep.mubr.bf16.mxu0 %v3772
      %3944 = vmatmul.mubr.bf16.gmra.mrb[0].mxu0 %v3771
      %v3945 = vpop.f32.mrb[0].mxu0
      %v3946 = vadd.f32 0.0, %v3945
      %v3947 = vpop.f32.mrb[0].mxu0
      %v3948 = vpop.f32.mrb[0].mxu0
      %v3949 = vadd.f32 0.0, %v3948
      %v3950 = vpop.f32.mrb[0].mxu0
      %3951 = vmatprep.mubr.bf16.mxu0 %v3775
      %3952 = vmatmul.mubr.bf16.gmra.mrb[0].mxu0 %v3774
      %v3953 = vpop.f32.mrb[0].mxu0
      %v3954 = vadd.f32 0.0, %v3953
      %v3955 = vpop.f32.mrb[0].mxu0
      %v3956 = vpop.f32.mrb[0].mxu0
      %v3957 = vadd.f32 0.0, %v3956
      %v3958 = vpop.f32.mrb[0].mxu0
      %3959 = vmatprep.mubr.bf16.mxu0 %v3778
      %3960 = vmatmul.mubr.bf16.gmra.mrb[0].mxu0 %v3777
      %v3961 = vpop.f32.mrb[0].mxu0
      %v3962 = vadd.f32 0.0, %v3961
      %v3963 = vpop.f32.mrb[0].mxu0
      %v3964 = vpop.f32.mrb[0].mxu0
      %v3965 = vadd.f32 0.0, %v3964
      %v3966 = vpop.f32.mrb[0].mxu0
      %3967 = vmatprep.mubr.bf16.mxu0 %v3781
      %3968 = vmatmul.mubr.bf16.gmra.mrb[0].mxu0 %v3780
      %v3969 = vpop.f32.mrb[0].mxu0
      %v3970 = vadd.f32 0.0, %v3969
      %v3971 = vpop.f32.mrb[0].mxu0
      %v3972 = vpop.f32.mrb[0].mxu0
      %v3973 = vadd.f32 0.0, %v3972
      %v3974 = vpop.f32.mrb[0].mxu0
      %3975 = vmatprep.mubr.bf16.mxu0 %v3784
      %3976 = vmatmul.mubr.bf16.gmra.mrb[0].mxu0 %v3783
      %v3977 = vpop.f32.mrb[0].mxu0
      %v3978 = vadd.f32 0.0, %v3977
      %v3979 = vpop.f32.mrb[0].mxu0
      %v3980 = vpop.f32.mrb[0].mxu0
      %v3981 = vadd.f32 0.0, %v3980
      %v3982 = vpop.f32.mrb[0].mxu0
      %3983 = vmatprep.mubr.bf16.mxu0 %v3787
      %3984 = vmatmul.mubr.bf16.gmra.mrb[0].mxu0 %v3786
      %v3985 = vpop.f32.mrb[0].mxu0
      %v3986 = vadd.f32 0.0, %v3985
      %v3987 = vpop.f32.mrb[0].mxu0
      %v3988 = vpop.f32.mrb[0].mxu0
      %v3989 = vadd.f32 0.0, %v3988
      %v3990 = vpop.f32.mrb[0].mxu0
      %3991 = vmatprep.mubr.bf16.mxu0 %v3790
      %3992 = vmatmul.mubr.bf16.gmra.mrb[0].mxu0 %v3789
      %v3993 = vpop.f32.mrb[0].mxu0
      %v3994 = vadd.f32 0.0, %v3993
      %v3995 = vpop.f32.mrb[0].mxu0
      %v3996 = vpop.f32.mrb[0].mxu0
      %v3997 = vadd.f32 0.0, %v3996
      %v3998 = vpop.f32.mrb[0].mxu0
      %3999 = vmatprep.mubr.bf16.mxu0 %v3793
      %4000 = vmatmul.mubr.bf16.gmra.mrb[0].mxu0 %v3792
      %v4001 = vpop.f32.mrb[0].mxu0
      %v4002 = vadd.f32 0.0, %v4001
      %v4003 = vpop.f32.mrb[0].mxu0
      %v4004 = vpop.f32.mrb[0].mxu0
      %v4005 = vadd.f32 0.0, %v4004
      %v4006 = vpop.f32.mrb[0].mxu0
      %4007 = vmatprep.mubr.bf16.mxu0 %v3796
      %4008 = vmatmul.mubr.bf16.gmra.mrb[0].mxu0 %v3795
      %v4009 = vpop.f32.mrb[0].mxu0
      %v4010 = vadd.f32 0.0, %v4009
      %v4011 = vpop.f32.mrb[0].mxu0
      %v4012 = vpop.f32.mrb[0].mxu0
      %v4013 = vadd.f32 0.0, %v4012
      %v4014 = vpop.f32.mrb[0].mxu0
      %4015 = vmatprep.mubr.bf16.mxu0 %v3799
      %4016 = vmatmul.mubr.bf16.gmra.mrb[0].mxu0 %v3798
      %v4017 = vpop.f32.mrb[0].mxu0
      %v4018 = vadd.f32 0.0, %v4017
      %v4019 = vpop.f32.mrb[0].mxu0
      %v4020 = vpop.f32.mrb[0].mxu0
      %v4021 = vadd.f32 0.0, %v4020
      %v4022 = vpop.f32.mrb[0].mxu0
      %4023 = vmatprep.mubr.bf16.mxu0 %v3802
      %4024 = vmatmul.mubr.bf16.gmra.mrb[0].mxu0 %v3801
      %v4025 = vpop.f32.mrb[0].mxu0
      %v4026 = vadd.f32 0.0, %v4025
      %v4027 = vpop.f32.mrb[0].mxu0
      %v4028 = vpop.f32.mrb[0].mxu0
      %v4029 = vadd.f32 0.0, %v4028
      %v4030 = vpop.f32.mrb[0].mxu0
      %4031 = vmatprep.mubr.bf16.mxu0 %v3805
      %4032 = vmatmul.mubr.bf16.gmra.mrb[0].mxu0 %v3804
      %v4033 = vpop.f32.mrb[0].mxu0
      %v4034 = vadd.f32 0.0, %v4033
      %v4035 = vpop.f32.mrb[0].mxu0
      %v4036 = vpop.f32.mrb[0].mxu0
      %v4037 = vadd.f32 0.0, %v4036
      %v4038 = vpop.f32.mrb[0].mxu0
      %4039 = vdwg.mxu0
      %4040 = vmatprep.subr.bf16.mxu0 0
      %4041 = vmatpush1.bf16.msra.mxu0 %v3840
      %4042 = vmatprep.subr.bf16.mxu0 0
      %4043 = vmatpush1.bf16.msra.mxu0 %v3842
      %4044 = vmatprep.subr.bf16.mxu0 0
      %4045 = vmatpush1.bf16.msra.mxu0 %v3844
      %4046 = vmatprep.subr.bf16.mxu0 0
      %4047 = vmatpush1.bf16.msra.mxu0 %v3846
      %4048 = vmatprep.subr.bf16.mxu0 0
      %4049 = vmatpush1.bf16.msra.mxu0 %v3848
      %4050 = vmatprep.subr.bf16.mxu0 0
      %4051 = vmatpush1.bf16.msra.mxu0 %v3850
      %4052 = vmatprep.subr.bf16.mxu0 0
      %4053 = vmatpush1.bf16.msra.mxu0 %v3852
      %4054 = vmatprep.subr.bf16.mxu0 0
      %4055 = vmatpush1.bf16.msra.mxu0 %v3854
      %4056 = vmatprep.subr.bf16.mxu0 0
      %4057 = vmatpush1.bf16.msra.mxu0 0
      %4058 = vmatprep.subr.bf16.mxu0 0
      %4059 = vmatpush1.bf16.msra.mxu0 0
      %4060 = vmatprep.subr.bf16.mxu0 0
      %4061 = vmatpush1.bf16.msra.mxu0 0
      %4062 = vmatprep.subr.bf16.mxu0 0
      %4063 = vmatpush1.bf16.msra.mxu0 0
      %4064 = vmatprep.subr.bf16.mxu0 0
      %4065 = vmatpush1.bf16.msra.mxu0 0
      %4066 = vmatprep.subr.bf16.mxu0 0
      %4067 = vmatpush1.bf16.msra.mxu0 0
      %4068 = vmatprep.subr.bf16.mxu0 0
      %4069 = vmatpush1.bf16.msra.mxu0 0
      %4070 = vmatprep.subr.bf16.mxu0 0
      %4071 = vmatpush1.bf16.msra.mxu0 0
      %4072 = vmatprep.mubr.bf16.mxu0 0
      %4073 = vmatmul.mubr.bf16.gmra.mrb[0].mxu0 %v3761
      %v4074 = vpop.f32.mrb[0].mxu0
      %v4075 = vadd.f32 %v3914, %v4074
      %v4076 = vpop.f32.mrb[0].mxu0
      %v4077 = vpop.f32.mrb[0].mxu0
      %v4078 = vadd.f32 %v3917, %v4077
      %v4079 = vpop.f32.mrb[0].mxu0
      %4080 = vmatprep.mubr.bf16.mxu0 0
      %4081 = vmatmul.mubr.bf16.gmra.mrb[0].mxu0 %v3764
      %v4082 = vpop.f32.mrb[0].mxu0
      %v4083 = vadd.f32 %v3922, %v4082
      %v4084 = vpop.f32.mrb[0].mxu0
      %v4085 = vpop.f32.mrb[0].mxu0
      %v4086 = vadd.f32 %v3925, %v4085
      %v4087 = vpop.f32.mrb[0].mxu0
      %4088 = vmatprep.mubr.bf16.mxu0 0
      %4089 = vmatmul.mubr.bf16.gmra.mrb[0].mxu0 %v3767
      %v4090 = vpop.f32.mrb[0].mxu0
      %v4091 = vadd.f32 %v3930, %v4090
      %v4092 = vpop.f32.mrb[0].mxu0
      %v4093 = vpop.f32.mrb[0].mxu0
      %v4094 = vadd.f32 %v3933, %v4093
      %v4095 = vpop.f32.mrb[0].mxu0
      %4096 = vmatprep.mubr.bf16.mxu0 0
      %4097 = vmatmul.mubr.bf16.gmra.mrb[0].mxu0 %v3770
      %v4098 = vpop.f32.mrb[0].mxu0
      %v4099 = vadd.f32 %v3938, %v4098
      %v4100 = vpop.f32.mrb[0].mxu0
      %v4101 = vpop.f32.mrb[0].mxu0
      %v4102 = vadd.f32 %v3941, %v4101
      %v4103 = vpop.f32.mrb[0].mxu0
      %4104 = vmatprep.mubr.bf16.mxu0 0
      %4105 = vmatmul.mubr.bf16.gmra.mrb[0].mxu0 %v3773
      %v4106 = vpop.f32.mrb[0].mxu0
      %v4107 = vadd.f32 %v3946, %v4106
      %v4108 = vpop.f32.mrb[0].mxu0
      %v4109 = vpop.f32.mrb[0].mxu0
      %v4110 = vadd.f32 %v3949, %v4109
      %v4111 = vpop.f32.mrb[0].mxu0
      %4112 = vmatprep.mubr.bf16.mxu0 0
      %4113 = vmatmul.mubr.bf16.gmra.mrb[0].mxu0 %v3776
      %v4114 = vpop.f32.mrb[0].mxu0
      %v4115 = vadd.f32 %v3954, %v4114
      %v4116 = vpop.f32.mrb[0].mxu0
      %v4117 = vpop.f32.mrb[0].mxu0
      %v4118 = vadd.f32 %v3957, %v4117
      %v4119 = vpop.f32.mrb[0].mxu0
      %4120 = vmatprep.mubr.bf16.mxu0 0
      %4121 = vmatmul.mubr.bf16.gmra.mrb[0].mxu0 %v3779
      %v4122 = vpop.f32.mrb[0].mxu0
      %v4123 = vadd.f32 %v3962, %v4122
      %v4124 = vpop.f32.mrb[0].mxu0
      %v4125 = vpop.f32.mrb[0].mxu0
      %v4126 = vadd.f32 %v3965, %v4125
      %v4127 = vpop.f32.mrb[0].mxu0
      %4128 = vmatprep.mubr.bf16.mxu0 0
      %4129 = vmatmul.mubr.bf16.gmra.mrb[0].mxu0 %v3782
      %v4130 = vpop.f32.mrb[0].mxu0
      %v4131 = vadd.f32 %v3970, %v4130
      %v4132 = vpop.f32.mrb[0].mxu0
      %v4133 = vpop.f32.mrb[0].mxu0
      %v4134 = vadd.f32 %v3973, %v4133
      %v4135 = vpop.f32.mrb[0].mxu0
      %4136 = vmatprep.mubr.bf16.mxu0 0
      %4137 = vmatmul.mubr.bf16.gmra.mrb[0].mxu0 %v3785
      %v4138 = vpop.f32.mrb[0].mxu0
      %v4139 = vadd.f32 %v3978, %v4138
      %v4140 = vpop.f32.mrb[0].mxu0
      %v4141 = vpop.f32.mrb[0].mxu0
      %v4142 = vadd.f32 %v3981, %v4141
      %v4143 = vpop.f32.mrb[0].mxu0
      %4144 = vmatprep.mubr.bf16.mxu0 0
      %4145 = vmatmul.mubr.bf16.gmra.mrb[0].mxu0 %v3788
      %v4146 = vpop.f32.mrb[0].mxu0
      %v4147 = vadd.f32 %v3986, %v4146
      %v4148 = vpop.f32.mrb[0].mxu0
      %v4149 = vpop.f32.mrb[0].mxu0
      %v4150 = vadd.f32 %v3989, %v4149
      %v4151 = vpop.f32.mrb[0].mxu0
      %4152 = vmatprep.mubr.bf16.mxu0 0
      %4153 = vmatmul.mubr.bf16.gmra.mrb[0].mxu0 %v3791
      %v4154 = vpop.f32.mrb[0].mxu0
      %v4155 = vadd.f32 %v3994, %v4154
      %v4156 = vpop.f32.mrb[0].mxu0
      %v4157 = vpop.f32.mrb[0].mxu0
      %v4158 = vadd.f32 %v3997, %v4157
      %v4159 = vpop.f32.mrb[0].mxu0
      %4160 = vmatprep.mubr.bf16.mxu0 0
      %4161 = vmatmul.mubr.bf16.gmra.mrb[0].mxu0 %v3794
      %v4162 = vpop.f32.mrb[0].mxu0
      %v4163 = vadd.f32 %v4002, %v4162
      %v4164 = vpop.f32.mrb[0].mxu0
      %v4165 = vpop.f32.mrb[0].mxu0
      %v4166 = vadd.f32 %v4005, %v4165
      %v4167 = vpop.f32.mrb[0].mxu0
      %4168 = vmatprep.mubr.bf16.mxu0 0
      %4169 = vmatmul.mubr.bf16.gmra.mrb[0].mxu0 %v3797
      %v4170 = vpop.f32.mrb[0].mxu0
      %v4171 = vadd.f32 %v4010, %v4170
      %v4172 = vpop.f32.mrb[0].mxu0
      %v4173 = vpop.f32.mrb[0].mxu0
      %v4174 = vadd.f32 %v4013, %v4173
      %v4175 = vpop.f32.mrb[0].mxu0
      %4176 = vmatprep.mubr.bf16.mxu0 0
      %4177 = vmatmul.mubr.bf16.gmra.mrb[0].mxu0 %v3800
      %v4178 = vpop.f32.mrb[0].mxu0
      %v4179 = vadd.f32 %v4018, %v4178
      %v4180 = vpop.f32.mrb[0].mxu0
      %v4181 = vpop.f32.mrb[0].mxu0
      %v4182 = vadd.f32 %v4021, %v4181
      %v4183 = vpop.f32.mrb[0].mxu0
      %4184 = vmatprep.mubr.bf16.mxu0 0
      %4185 = vmatmul.mubr.bf16.gmra.mrb[0].mxu0 %v3803
      %v4186 = vpop.f32.mrb[0].mxu0
      %v4187 = vadd.f32 %v4026, %v4186
      %v4188 = vpop.f32.mrb[0].mxu0
      %v4189 = vpop.f32.mrb[0].mxu0
      %v4190 = vadd.f32 %v4029, %v4189
      %v4191 = vpop.f32.mrb[0].mxu0
      %4192 = vmatprep.mubr.bf16.mxu0 0
      %4193 = vmatmul.mubr.bf16.gmra.mrb[0].mxu0 %v3806
      %v4194 = vpop.f32.mrb[0].mxu0
      %v4195 = vadd.f32 %v4034, %v4194
      %v4196 = vpop.f32.mrb[0].mxu0
      %v4197 = vpop.f32.mrb[0].mxu0
      %v4198 = vadd.f32 %v4037, %v4197
      %v4199 = vpop.f32.mrb[0].mxu0
      %4200 = vdwg.mxu0
      %v4201 = vpack.c.bf16 %v4078, %v4075
      %v4202 = vpack.c.bf16 %v4086, %v4083
      %v4203 = vpack.c.bf16 %v4094, %v4091
      %v4204 = vpack.c.bf16 %v4102, %v4099
      %v4205 = vpack.c.bf16 %v4110, %v4107
      %v4206 = vpack.c.bf16 %v4118, %v4115
      %v4207 = vpack.c.bf16 %v4126, %v4123
      %v4208 = vpack.c.bf16 %v4134, %v4131
      %v4209 = vpack.c.bf16 %v4142, %v4139
      %v4210 = vpack.c.bf16 %v4150, %v4147
      %v4211 = vpack.c.bf16 %v4158, %v4155
      %v4212 = vpack.c.bf16 %v4166, %v4163
      %v4213 = vpack.c.bf16 %v4174, %v4171
      %v4214 = vpack.c.bf16 %v4182, %v4179
      %v4215 = vpack.c.bf16 %v4190, %v4187
      %v4216 = vpack.c.bf16 %v4198, %v4195
      %v4217 = vld [vmem:[%s310] sm:$0xc]
      %v4219 = vunpack.c.l.b16 %v4217
      %v4220 = vpack.c.b16 %v4219, %v4219
      %v4221 = vrot.slane %v4220, 2
      %v4223 = vsel %vm657, %v4201, 0
      %v4226 = vsel %vm657, %v4202, 0
      %v4229 = vsel %vm657, %v4203, 0
      %v4232 = vsel %vm657, %v4204, 0
      %v4235 = vsel %vm657, %v4205, 0
      %v4238 = vsel %vm657, %v4206, 0
      %v4241 = vsel %vm657, %v4207, 0
      %v4244 = vsel %vm657, %v4208, 0
      %v4247 = vsel %vm657, %v4209, 0
      %v4250 = vsel %vm657, %v4210, 0
      %v4253 = vsel %vm657, %v4211, 0
      %v4256 = vsel %vm657, %v4212, 0
      %v4259 = vsel %vm657, %v4213, 0
      %v4262 = vsel %vm657, %v4214, 0
      %v4265 = vsel %vm657, %v4215, 0
      %v4268 = vsel %vm657, %v4216, 0
      %vm4270 = vcmask 1041408
      %v4272 = vsel %vm4270, %v4221, 0
      %4274 = vmatprep.subr.bf16.mxu0 0
      %4275 = vmatpush1.bf16.msra.mxu0 %v4272
      %4276 = vmatprep.subr.bf16.mxu0 0
      %4277 = vmatpush1.bf16.msra.mxu0 0
      %4278 = vmatprep.subr.bf16.mxu0 0
      %4279 = vmatpush1.bf16.msra.mxu0 0
      %4280 = vmatprep.subr.bf16.mxu0 0
      %4281 = vmatpush1.bf16.msra.mxu0 0
      %4282 = vmatprep.subr.bf16.mxu0 0
      %4283 = vmatpush1.bf16.msra.mxu0 0
      %4284 = vmatprep.subr.bf16.mxu0 0
      %4285 = vmatpush1.bf16.msra.mxu0 0
      %4286 = vmatprep.subr.bf16.mxu0 0
      %4287 = vmatpush1.bf16.msra.mxu0 0
      %4288 = vmatprep.subr.bf16.mxu0 0
      %4289 = vmatpush1.bf16.msra.mxu0 0
      %4290 = vmatprep.subr.bf16.mxu0 0
      %4291 = vmatpush1.bf16.msra.mxu0 0
      %4292 = vmatprep.subr.bf16.mxu0 0
      %4293 = vmatpush1.bf16.msra.mxu0 0
      %4294 = vmatprep.subr.bf16.mxu0 0
      %4295 = vmatpush1.bf16.msra.mxu0 0
      %4296 = vmatprep.subr.bf16.mxu0 0
      %4297 = vmatpush1.bf16.msra.mxu0 0
      %4298 = vmatprep.subr.bf16.mxu0 0
      %4299 = vmatpush1.bf16.msra.mxu0 0
      %4300 = vmatprep.subr.bf16.mxu0 0
      %4301 = vmatpush1.bf16.msra.mxu0 0
      %4302 = vmatprep.subr.bf16.mxu0 0
      %4303 = vmatpush1.bf16.msra.mxu0 0
      %4304 = vmatprep.subr.bf16.mxu0 0
      %4305 = vmatpush1.bf16.msra.mxu0 0
      %4306 = vmatprep.mubr.bf16.mxu0 0
      %4307 = vmatmul.mubr.bf16.gmra.mrb[0].mxu0 %v4223
      %v4308 = vpop.f32.mrb[0].mxu0
      %v4309 = vadd.f32 0.0, %v4308
      %v4310 = vpop.f32.mrb[0].mxu0
      %v4311 = vpop.f32.mrb[0].mxu0
      %v4312 = vadd.f32 0.0, %v4311
      %v4313 = vpop.f32.mrb[0].mxu0
      %4314 = vmatprep.mubr.bf16.mxu0 0
      %4315 = vmatmul.mubr.bf16.gmra.mrb[0].mxu0 %v4226
      %v4316 = vpop.f32.mrb[0].mxu0
      %v4317 = vadd.f32 0.0, %v4316
      %v4318 = vpop.f32.mrb[0].mxu0
      %v4319 = vpop.f32.mrb[0].mxu0
      %v4320 = vadd.f32 0.0, %v4319
      %v4321 = vpop.f32.mrb[0].mxu0
      %4322 = vmatprep.mubr.bf16.mxu0 0
      %4323 = vmatmul.mubr.bf16.gmra.mrb[0].mxu0 %v4229
      %v4324 = vpop.f32.mrb[0].mxu0
      %v4325 = vadd.f32 0.0, %v4324
      %v4326 = vpop.f32.mrb[0].mxu0
      %v4327 = vpop.f32.mrb[0].mxu0
      %v4328 = vadd.f32 0.0, %v4327
      %v4329 = vpop.f32.mrb[0].mxu0
      %4330 = vmatprep.mubr.bf16.mxu0 0
      %4331 = vmatmul.mubr.bf16.gmra.mrb[0].mxu0 %v4232
      %v4332 = vpop.f32.mrb[0].mxu0
      %v4333 = vadd.f32 0.0, %v4332
      %v4334 = vpop.f32.mrb[0].mxu0
      %v4335 = vpop.f32.mrb[0].mxu0
      %v4336 = vadd.f32 0.0, %v4335
      %v4337 = vpop.f32.mrb[0].mxu0
      %4338 = vmatprep.mubr.bf16.mxu0 0
      %4339 = vmatmul.mubr.bf16.gmra.mrb[0].mxu0 %v4235
      %v4340 = vpop.f32.mrb[0].mxu0
      %v4341 = vadd.f32 0.0, %v4340
      %v4342 = vpop.f32.mrb[0].mxu0
      %v4343 = vpop.f32.mrb[0].mxu0
      %v4344 = vadd.f32 0.0, %v4343
      %v4345 = vpop.f32.mrb[0].mxu0
      %4346 = vmatprep.mubr.bf16.mxu0 0
      %4347 = vmatmul.mubr.bf16.gmra.mrb[0].mxu0 %v4238
      %v4348 = vpop.f32.mrb[0].mxu0
      %v4349 = vadd.f32 0.0, %v4348
      %v4350 = vpop.f32.mrb[0].mxu0
      %v4351 = vpop.f32.mrb[0].mxu0
      %v4352 = vadd.f32 0.0, %v4351
      %v4353 = vpop.f32.mrb[0].mxu0
      %4354 = vmatprep.mubr.bf16.mxu0 0
      %4355 = vmatmul.mubr.bf16.gmra.mrb[0].mxu0 %v4241
      %v4356 = vpop.f32.mrb[0].mxu0
      %v4357 = vadd.f32 0.0, %v4356
      %v4358 = vpop.f32.mrb[0].mxu0
      %v4359 = vpop.f32.mrb[0].mxu0
      %v4360 = vadd.f32 0.0, %v4359
      %v4361 = vpop.f32.mrb[0].mxu0
      %4362 = vmatprep.mubr.bf16.mxu0 0
      %4363 = vmatmul.mubr.bf16.gmra.mrb[0].mxu0 %v4244
      %v4364 = vpop.f32.mrb[0].mxu0
      %v4365 = vadd.f32 0.0, %v4364
      %v4366 = vpop.f32.mrb[0].mxu0
      %v4367 = vpop.f32.mrb[0].mxu0
      %v4368 = vadd.f32 0.0, %v4367
      %v4369 = vpop.f32.mrb[0].mxu0
      %4370 = vmatprep.mubr.bf16.mxu0 0
      %4371 = vmatmul.mubr.bf16.gmra.mrb[0].mxu0 %v4247
      %v4372 = vpop.f32.mrb[0].mxu0
      %v4373 = vadd.f32 0.0, %v4372
      %v4374 = vpop.f32.mrb[0].mxu0
      %v4375 = vpop.f32.mrb[0].mxu0
      %v4376 = vadd.f32 0.0, %v4375
      %v4377 = vpop.f32.mrb[0].mxu0
      %4378 = vmatprep.mubr.bf16.mxu0 0
      %4379 = vmatmul.mubr.bf16.gmra.mrb[0].mxu0 %v4250
      %v4380 = vpop.f32.mrb[0].mxu0
      %v4381 = vadd.f32 0.0, %v4380
      %v4382 = vpop.f32.mrb[0].mxu0
      %v4383 = vpop.f32.mrb[0].mxu0
      %v4384 = vadd.f32 0.0, %v4383
      %v4385 = vpop.f32.mrb[0].mxu0
      %4386 = vmatprep.mubr.bf16.mxu0 0
      %4387 = vmatmul.mubr.bf16.gmra.mrb[0].mxu0 %v4253
      %v4388 = vpop.f32.mrb[0].mxu0
      %v4389 = vadd.f32 0.0, %v4388
      %v4390 = vpop.f32.mrb[0].mxu0
      %v4391 = vpop.f32.mrb[0].mxu0
      %v4392 = vadd.f32 0.0, %v4391
      %v4393 = vpop.f32.mrb[0].mxu0
      %4394 = vmatprep.mubr.bf16.mxu0 0
      %4395 = vmatmul.mubr.bf16.gmra.mrb[0].mxu0 %v4256
      %v4396 = vpop.f32.mrb[0].mxu0
      %v4397 = vadd.f32 0.0, %v4396
      %v4398 = vpop.f32.mrb[0].mxu0
      %v4399 = vpop.f32.mrb[0].mxu0
      %v4400 = vadd.f32 0.0, %v4399
      %v4401 = vpop.f32.mrb[0].mxu0
      %4402 = vmatprep.mubr.bf16.mxu0 0
      %4403 = vmatmul.mubr.bf16.gmra.mrb[0].mxu0 %v4259
      %v4404 = vpop.f32.mrb[0].mxu0
      %v4405 = vadd.f32 0.0, %v4404
      %v4406 = vpop.f32.mrb[0].mxu0
      %v4407 = vpop.f32.mrb[0].mxu0
      %v4408 = vadd.f32 0.0, %v4407
      %v4409 = vpop.f32.mrb[0].mxu0
      %4410 = vmatprep.mubr.bf16.mxu0 0
      %4411 = vmatmul.mubr.bf16.gmra.mrb[0].mxu0 %v4262
      %v4412 = vpop.f32.mrb[0].mxu0
      %v4413 = vadd.f32 0.0, %v4412
      %v4414 = vpop.f32.mrb[0].mxu0
      %v4415 = vpop.f32.mrb[0].mxu0
      %v4416 = vadd.f32 0.0, %v4415
      %v4417 = vpop.f32.mrb[0].mxu0
      %4418 = vmatprep.mubr.bf16.mxu0 0
      %4419 = vmatmul.mubr.bf16.gmra.mrb[0].mxu0 %v4265
      %v4420 = vpop.f32.mrb[0].mxu0
      %v4421 = vadd.f32 0.0, %v4420
      %v4422 = vpop.f32.mrb[0].mxu0
      %v4423 = vpop.f32.mrb[0].mxu0
      %v4424 = vadd.f32 0.0, %v4423
      %v4425 = vpop.f32.mrb[0].mxu0
      %4426 = vmatprep.mubr.bf16.mxu0 0
      %4427 = vmatmul.mubr.bf16.gmra.mrb[0].mxu0 %v4268
      %v4428 = vpop.f32.mrb[0].mxu0
      %v4429 = vadd.f32 0.0, %v4428
      %v4430 = vpop.f32.mrb[0].mxu0
      %v4431 = vpop.f32.mrb[0].mxu0
      %v4432 = vadd.f32 0.0, %v4431
      %v4433 = vpop.f32.mrb[0].mxu0
      %4434 = vdwg.mxu0
      %v4436 = vsel %vm657, %v2420, 0
      %v4439 = vsel %vm657, %v2421, 0
      %v4442 = vsel %vm657, %v2422, 0
      %v4445 = vsel %vm657, %v2423, 0
      %v4448 = vsel %vm657, %v2424, 0
      %v4451 = vsel %vm657, %v2425, 0
      %v4454 = vsel %vm657, %v2426, 0
      %v4457 = vsel %vm657, %v2427, 0
      %v4460 = vsel %vm657, %v2428, 0
      %v4463 = vsel %vm657, %v2429, 0
      %v4466 = vsel %vm657, %v2430, 0
      %v4469 = vsel %vm657, %v2431, 0
      %v4472 = vsel %vm657, %v2432, 0
      %v4475 = vsel %vm657, %v2433, 0
      %v4478 = vsel %vm657, %v2434, 0
      %v4481 = vsel %vm657, %v2435, 0
      %v4484 = vsel %vm4270, %v2436, 0
      %4486 = vmatprep.subr.bf16.mxu0 0
      %4487 = vmatpush1.bf16.msra.mxu0 %v4484
      %4488 = vmatprep.subr.bf16.mxu0 0
      %4489 = vmatpush1.bf16.msra.mxu0 0
      %4490 = vmatprep.subr.bf16.mxu0 0
      %4491 = vmatpush1.bf16.msra.mxu0 0
      %4492 = vmatprep.subr.bf16.mxu0 0
      %4493 = vmatpush1.bf16.msra.mxu0 0
      %4494 = vmatprep.subr.bf16.mxu0 0
      %4495 = vmatpush1.bf16.msra.mxu0 0
      %4496 = vmatprep.subr.bf16.mxu0 0
      %4497 = vmatpush1.bf16.msra.mxu0 0
      %4498 = vmatprep.subr.bf16.mxu0 0
      %4499 = vmatpush1.bf16.msra.mxu0 0
      %4500 = vmatprep.subr.bf16.mxu0 0
      %4501 = vmatpush1.bf16.msra.mxu0 0
      %4502 = vmatprep.subr.bf16.mxu0 0
      %4503 = vmatpush1.bf16.msra.mxu0 0
      %4504 = vmatprep.subr.bf16.mxu0 0
      %4505 = vmatpush1.bf16.msra.mxu0 0
      %4506 = vmatprep.subr.bf16.mxu0 0
      %4507 = vmatpush1.bf16.msra.mxu0 0
      %4508 = vmatprep.subr.bf16.mxu0 0
      %4509 = vmatpush1.bf16.msra.mxu0 0
      %4510 = vmatprep.subr.bf16.mxu0 0
      %4511 = vmatpush1.bf16.msra.mxu0 0
      %4512 = vmatprep.subr.bf16.mxu0 0
      %4513 = vmatpush1.bf16.msra.mxu0 0
      %4514 = vmatprep.subr.bf16.mxu0 0
      %4515 = vmatpush1.bf16.msra.mxu0 0
      %4516 = vmatprep.subr.bf16.mxu0 0
      %4517 = vmatpush1.bf16.msra.mxu0 0
      %4518 = vmatprep.mubr.bf16.mxu0 0
      %4519 = vmatmul.mubr.bf16.gmra.mrb[0].mxu0 %v4436
      %v4520 = vpop.f32.mrb[0].mxu0
      %v4521 = vadd.f32 %v4309, %v4520
      %v4522 = vpop.f32.mrb[0].mxu0
      %v4523 = vpop.f32.mrb[0].mxu0
      %v4524 = vadd.f32 %v4312, %v4523
      %v4525 = vpop.f32.mrb[0].mxu0
      %4526 = vmatprep.mubr.bf16.mxu0 0
      %4527 = vmatmul.mubr.bf16.gmra.mrb[0].mxu0 %v4439
      %v4528 = vpop.f32.mrb[0].mxu0
      %v4529 = vadd.f32 %v4317, %v4528
      %v4530 = vpop.f32.mrb[0].mxu0
      %v4531 = vpop.f32.mrb[0].mxu0
      %v4532 = vadd.f32 %v4320, %v4531
      %v4533 = vpop.f32.mrb[0].mxu0
      %4534 = vmatprep.mubr.bf16.mxu0 0
      %4535 = vmatmul.mubr.bf16.gmra.mrb[0].mxu0 %v4442
      %v4536 = vpop.f32.mrb[0].mxu0
      %v4537 = vadd.f32 %v4325, %v4536
      %v4538 = vpop.f32.mrb[0].mxu0
      %v4539 = vpop.f32.mrb[0].mxu0
      %v4540 = vadd.f32 %v4328, %v4539
      %v4541 = vpop.f32.mrb[0].mxu0
      %4542 = vmatprep.mubr.bf16.mxu0 0
      %4543 = vmatmul.mubr.bf16.gmra.mrb[0].mxu0 %v4445
      %v4544 = vpop.f32.mrb[0].mxu0
      %v4545 = vadd.f32 %v4333, %v4544
      %v4546 = vpop.f32.mrb[0].mxu0
      %v4547 = vpop.f32.mrb[0].mxu0
      %v4548 = vadd.f32 %v4336, %v4547
      %v4549 = vpop.f32.mrb[0].mxu0
      %4550 = vmatprep.mubr.bf16.mxu0 0
      %4551 = vmatmul.mubr.bf16.gmra.mrb[0].mxu0 %v4448
      %v4552 = vpop.f32.mrb[0].mxu0
      %v4553 = vadd.f32 %v4341, %v4552
      %v4554 = vpop.f32.mrb[0].mxu0
      %v4555 = vpop.f32.mrb[0].mxu0
      %v4556 = vadd.f32 %v4344, %v4555
      %v4557 = vpop.f32.mrb[0].mxu0
      %4558 = vmatprep.mubr.bf16.mxu0 0
      %4559 = vmatmul.mubr.bf16.gmra.mrb[0].mxu0 %v4451
      %v4560 = vpop.f32.mrb[0].mxu0
      %v4561 = vadd.f32 %v4349, %v4560
      %v4562 = vpop.f32.mrb[0].mxu0
      %v4563 = vpop.f32.mrb[0].mxu0
      %v4564 = vadd.f32 %v4352, %v4563
      %v4565 = vpop.f32.mrb[0].mxu0
      %4566 = vmatprep.mubr.bf16.mxu0 0
      %4567 = vmatmul.mubr.bf16.gmra.mrb[0].mxu0 %v4454
      %v4568 = vpop.f32.mrb[0].mxu0
      %v4569 = vadd.f32 %v4357, %v4568
      %v4570 = vpop.f32.mrb[0].mxu0
      %v4571 = vpop.f32.mrb[0].mxu0
      %v4572 = vadd.f32 %v4360, %v4571
      %v4573 = vpop.f32.mrb[0].mxu0
      %4574 = vmatprep.mubr.bf16.mxu0 0
      %4575 = vmatmul.mubr.bf16.gmra.mrb[0].mxu0 %v4457
      %v4576 = vpop.f32.mrb[0].mxu0
      %v4577 = vadd.f32 %v4365, %v4576
      %v4578 = vpop.f32.mrb[0].mxu0
      %v4579 = vpop.f32.mrb[0].mxu0
      %v4580 = vadd.f32 %v4368, %v4579
      %v4581 = vpop.f32.mrb[0].mxu0
      %4582 = vmatprep.mubr.bf16.mxu0 0
      %4583 = vmatmul.mubr.bf16.gmra.mrb[0].mxu0 %v4460
      %v4584 = vpop.f32.mrb[0].mxu0
      %v4585 = vadd.f32 %v4373, %v4584
      %v4586 = vpop.f32.mrb[0].mxu0
      %v4587 = vpop.f32.mrb[0].mxu0
      %v4588 = vadd.f32 %v4376, %v4587
      %v4589 = vpop.f32.mrb[0].mxu0
      %4590 = vmatprep.mubr.bf16.mxu0 0
      %4591 = vmatmul.mubr.bf16.gmra.mrb[0].mxu0 %v4463
      %v4592 = vpop.f32.mrb[0].mxu0
      %v4593 = vadd.f32 %v4381, %v4592
      %v4594 = vpop.f32.mrb[0].mxu0
      %v4595 = vpop.f32.mrb[0].mxu0
      %v4596 = vadd.f32 %v4384, %v4595
      %v4597 = vpop.f32.mrb[0].mxu0
      %4598 = vmatprep.mubr.bf16.mxu0 0
      %4599 = vmatmul.mubr.bf16.gmra.mrb[0].mxu0 %v4466
      %v4600 = vpop.f32.mrb[0].mxu0
      %v4601 = vadd.f32 %v4389, %v4600
      %v4602 = vpop.f32.mrb[0].mxu0
      %v4603 = vpop.f32.mrb[0].mxu0
      %v4604 = vadd.f32 %v4392, %v4603
      %v4605 = vpop.f32.mrb[0].mxu0
      %4606 = vmatprep.mubr.bf16.mxu0 0
      %4607 = vmatmul.mubr.bf16.gmra.mrb[0].mxu0 %v4469
      %v4608 = vpop.f32.mrb[0].mxu0
      %v4609 = vadd.f32 %v4397, %v4608
      %v4610 = vpop.f32.mrb[0].mxu0
      %v4611 = vpop.f32.mrb[0].mxu0
      %v4612 = vadd.f32 %v4400, %v4611
      %v4613 = vpop.f32.mrb[0].mxu0
      %4614 = vmatprep.mubr.bf16.mxu0 0
      %4615 = vmatmul.mubr.bf16.gmra.mrb[0].mxu0 %v4472
      %v4616 = vpop.f32.mrb[0].mxu0
      %v4617 = vadd.f32 %v4405, %v4616
      %v4618 = vpop.f32.mrb[0].mxu0
      %v4619 = vpop.f32.mrb[0].mxu0
      %v4620 = vadd.f32 %v4408, %v4619
      %v4621 = vpop.f32.mrb[0].mxu0
      %4622 = vmatprep.mubr.bf16.mxu0 0
      %4623 = vmatmul.mubr.bf16.gmra.mrb[0].mxu0 %v4475
      %v4624 = vpop.f32.mrb[0].mxu0
      %v4625 = vadd.f32 %v4413, %v4624
      %v4626 = vpop.f32.mrb[0].mxu0
      %v4627 = vpop.f32.mrb[0].mxu0
      %v4628 = vadd.f32 %v4416, %v4627
      %v4629 = vpop.f32.mrb[0].mxu0
      %4630 = vmatprep.mubr.bf16.mxu0 0
      %4631 = vmatmul.mubr.bf16.gmra.mrb[0].mxu0 %v4478
      %v4632 = vpop.f32.mrb[0].mxu0
      %v4633 = vadd.f32 %v4421, %v4632
      %v4634 = vpop.f32.mrb[0].mxu0
      %v4635 = vpop.f32.mrb[0].mxu0
      %v4636 = vadd.f32 %v4424, %v4635
      %v4637 = vpop.f32.mrb[0].mxu0
      %4638 = vmatprep.mubr.bf16.mxu0 0
      %4639 = vmatmul.mubr.bf16.gmra.mrb[0].mxu0 %v4481
      %v4640 = vpop.f32.mrb[0].mxu0
      %v4641 = vadd.f32 %v4429, %v4640
      %v4642 = vpop.f32.mrb[0].mxu0
      %v4643 = vpop.f32.mrb[0].mxu0
      %v4644 = vadd.f32 %v4432, %v4643
      %v4645 = vpop.f32.mrb[0].mxu0
      %4646 = vdwg.mxu0
      %v4647 = vld [vmem:[%s4] sm:$0x1]
      %v4649 = vlaneseq
      %v4650 = vshrl.u32 %v4649, 7
      %v4651 = vsub.s32 0, %v4650
      %v4652 = vrot.slane %v4647, %v4651
      %v4654 = vadd.f32 %v4521, %v4652
      %v4655 = vadd.f32 %v4524, %v4652
      %v4656 = vadd.f32 %v4529, %v4652
      %v4657 = vadd.f32 %v4532, %v4652
      %v4658 = vadd.f32 %v4537, %v4652
      %v4659 = vadd.f32 %v4540, %v4652
      %v4660 = vadd.f32 %v4545, %v4652
      %v4661 = vadd.f32 %v4548, %v4652
      %v4662 = vadd.f32 %v4553, %v4652
      %v4663 = vadd.f32 %v4556, %v4652
      %v4664 = vadd.f32 %v4561, %v4652
      %v4665 = vadd.f32 %v4564, %v4652
      %v4666 = vadd.f32 %v4569, %v4652
      %v4667 = vadd.f32 %v4572, %v4652
      %v4668 = vadd.f32 %v4577, %v4652
      %v4669 = vadd.f32 %v4580, %v4652
      %v4670 = vadd.f32 %v4585, %v4652
      %v4671 = vadd.f32 %v4588, %v4652
      %v4672 = vadd.f32 %v4593, %v4652
      %v4673 = vadd.f32 %v4596, %v4652
      %v4674 = vadd.f32 %v4601, %v4652
      %v4675 = vadd.f32 %v4604, %v4652
      %v4676 = vadd.f32 %v4609, %v4652
      %v4677 = vadd.f32 %v4612, %v4652
      %v4678 = vadd.f32 %v4617, %v4652
      %v4679 = vadd.f32 %v4620, %v4652
      %v4680 = vadd.f32 %v4625, %v4652
      %v4681 = vadd.f32 %v4628, %v4652
      %v4682 = vadd.f32 %v4633, %v4652
      %v4683 = vadd.f32 %v4636, %v4652
      %v4684 = vadd.f32 %v4641, %v4652
      %v4685 = vadd.f32 %v4644, %v4652
      %vm4686 = vcmask 64512
      %4687 = vst.msk [vmem:[%s319] sm:$0xff] %vm4686, %v4654
      %4688 = vst.msk [vmem:[%s319 + $0x8] sm:$0xff] %vm4686, %v4655
      %4689 = vst.msk [vmem:[%s319 + $0x10] sm:$0xff] %vm4686, %v4656
      %4690 = vst.msk [vmem:[%s319 + $0x18] sm:$0xff] %vm4686, %v4657
      %4691 = vst.msk [vmem:[%s319 + $0x20] sm:$0xff] %vm4686, %v4658
      %4692 = vst.msk [vmem:[%s319 + $0x28] sm:$0xff] %vm4686, %v4659
      %4693 = vst.msk [vmem:[%s319 + $0x30] sm:$0xff] %vm4686, %v4660
      %4694 = vst.msk [vmem:[%s319 + $0x38] sm:$0xff] %vm4686, %v4661
      %4695 = vst.msk [vmem:[%s319 + $0x40] sm:$0xff] %vm4686, %v4662
      %4696 = vst.msk [vmem:[%s319 + $0x48] sm:$0xff] %vm4686, %v4663
      %4697 = vst.msk [vmem:[%s319 + $0x50] sm:$0xff] %vm4686, %v4664
      %4698 = vst.msk [vmem:[%s319 + $0x58] sm:$0xff] %vm4686, %v4665
      %4699 = vst.msk [vmem:[%s319 + $0x60] sm:$0xff] %vm4686, %v4666
      %4700 = vst.msk [vmem:[%s319 + $0x68] sm:$0xff] %vm4686, %v4667
      %4701 = vst.msk [vmem:[%s319 + $0x70] sm:$0xff] %vm4686, %v4668
      %4702 = vst.msk [vmem:[%s319 + $0x78] sm:$0xff] %vm4686, %v4669
      %4703 = vst.msk [vmem:[%s319 + $0x80] sm:$0xff] %vm4686, %v4670
      %4704 = vst.msk [vmem:[%s319 + $0x88] sm:$0xff] %vm4686, %v4671
      %4705 = vst.msk [vmem:[%s319 + $0x90] sm:$0xff] %vm4686, %v4672
      %4706 = vst.msk [vmem:[%s319 + $0x98] sm:$0xff] %vm4686, %v4673
      %4707 = vst.msk [vmem:[%s319 + $0xa0] sm:$0xff] %vm4686, %v4674
      %4708 = vst.msk [vmem:[%s319 + $0xa8] sm:$0xff] %vm4686, %v4675
      %4709 = vst.msk [vmem:[%s319 + $0xb0] sm:$0xff] %vm4686, %v4676
      %4710 = vst.msk [vmem:[%s319 + $0xb8] sm:$0xff] %vm4686, %v4677
      %4711 = vst.msk [vmem:[%s319 + $0xc0] sm:$0xff] %vm4686, %v4678
      %4712 = vst.msk [vmem:[%s319 + $0xc8] sm:$0xff] %vm4686, %v4679
      %4713 = vst.msk [vmem:[%s319 + $0xd0] sm:$0xff] %vm4686, %v4680
      %4714 = vst.msk [vmem:[%s319 + $0xd8] sm:$0xff] %vm4686, %v4681
      %4715 = vst.msk [vmem:[%s319 + $0xe0] sm:$0xff] %vm4686, %v4682
      %4716 = vst.msk [vmem:[%s319 + $0xe8] sm:$0xff] %vm4686, %v4683
      %4717 = vst.msk [vmem:[%s319 + $0xf0] sm:$0xff] %vm4686, %v4684
      %4718 = vst.msk [vmem:[%s319 + $0xf8] sm:$0xff] %vm4686, %v4685
      %s4719 = smul.u32 32, %s20
      %p4720 = scmp.lt.s32.totalorder %s21, 1
      %s4721 = scalar_select %p4720, %s21, 1
      %p4722 = scmp.lt.s32.totalorder %s4719, 31
      %s4723 = scalar_select %p4722, %s4719, 31
      %s4724 = smul.addr %s4721, 32
      %s4725 = sadd.s32 %s4723, %s4724
      %s4726 = smul.addr %s4725, 8
      %s4727 = scalar_lea.vmem %s5, %s4726
      // Predicated region
      $region41: #{glo_tkdown_block_pv.7} parent=39 // pred_check
        %p4728 = pneg %p175
      $region42: #{glo_tkdown_block_pv.7} parent=39 // pred_check_branch
        %4730 = sbr.rel (%p4728) target = $region44
      $region43: #{glo_tkdown_block_pv.7} parent=39 // pred_region
        %s4731 = smul.u32 32, %s20
      $region44: #{glo_tkdown_block_pv.7} parent=39 // pred_fallthru
        _
    $region40: #{glo_tkdown_block_pv.7} parent=5 // pred_fallthru
      _
    %p4732 = scmp.le.s32.totalorder 2, %s11
    // Predicated region
    $region45: #{glo_tkdown_block_pv.7} parent=5 // pred_check
      %p4733 = pneg %p4732
    $region46: #{glo_tkdown_block_pv.7} parent=5 // pred_check_branch
      %4735 = sbr.rel (%p4733) target = $region48
    $region47: #{glo_tkdown_block_pv.7} parent=5 // pred_region
      %s4736 = ssub.s32 %s11, 2
      // Predicated region
      $region49: #{glo_tkdown_block_pv.7} parent=47 // pred_check
        %p4737 = pneg %p181
      $region50: #{glo_tkdown_block_pv.7} parent=47 // pred_check_branch
        %4739 = sbr.rel (%p4737) target = $region52
      $region51: #{glo_tkdown_block_pv.7} parent=47 // pred_region
        %s4740 = smul.u32 32, %s22
        %p4741 = scmp.lt.s32.totalorder %s23, 1
        %s4742 = scalar_select %p4741, %s23, 1
        %p4743 = scmp.lt.s32.totalorder %s4740, 31
        %s4744 = scalar_select %p4743, %s4740, 31
        %s4745 = smul.addr %s4742, 32
        %s4746 = sadd.s32 %s4744, %s4745
        %s4747 = smul.addr %s4746, 8
        %s4748 = scalar_lea.vmem %s5, %s4747
      $region52: #{glo_tkdown_block_pv.7} parent=47 // pred_fallthru
        _
    $region48: #{glo_tkdown_block_pv.7} parent=5 // pred_fallthru
      _
  $region6: #{glo_tkdown_block_pv.7} parent=0 // loop_footer
    %s15 = sadd.s32 1, %s11
  $region7: #{glo_tkdown_block_pv.7} parent=0 // loop_footer_branch
    %10 = sbr.rel target = $region3
  $region8: #{glo_tkdown_block_pv.7} parent=0 // loop_exit
    _

// kernel: glo_tkdown_block_pv.9
$region0: #{glo_tkdown_block_pv.9}
  #allocation0 [shape = 'u32[]', space=smem, size = 0x4, offset = 0x4, fixed_abs, tag = 'smem constant byte address 0x4 - core index']
  #allocation1 [shape = 'u32[144,128]{1,0:T(1,128)}', space=vmem, size = 0x12000, scoped, tag = 'internal scratch']
  %s0 = inlined_call_operand.vmem [shape: bf16[2,256,32], index: 0, kind: input, shape index: {}]
  %s1 = inlined_call_operand.vmem [shape: bf16[32,8], index: 1, kind: input, shape index: {}]
  %s2 = inlined_call_operand.vmem [shape: f32[1,8], index: 2, kind: input, shape index: {}]
  %s3 = inlined_call_operand.vmem [shape: f32[2,256,8], index: 3, kind: output, shape index: {}]
  %s4 = sld [smem:[#allocation0]]
  $region45: #{glo_tkdown_block_pv.9} parent=0
    _
  %s6 = ssub.s32 1, %s4
  %s7 = scalar_select 0, %s6, %s4
  loop: start=0, step=1, limit=4
  $region2: #{glo_tkdown_block_pv.9} parent=0 // loop_pre_header
    _
  $region3: #{glo_tkdown_block_pv.9} parent=0 // loop_header
    %s9 = sphi 0, %s13
    %p10 = scmp.ge.s32.totalorder %s9, 4
    %s16 = sphi 0, %s28
    %s17 = sphi 0, %s24
    %s18 = sphi 0, %s16
    %s19 = sphi 0, %s17
    %s20 = sphi 0, %s18
    %s21 = sphi 0, %s19
    %s33 = sphi 0, %s35
    %s36 = sphi 0, %s33
    %s37 = sphi 0, %s36
    %s53 = sphi 0, %s37
    %s57 = sphi 0, %s57
    %s59 = sphi 0, %s57
    %s60 = sphi 0, %s59
    %s74 = sphi 0, %s60
    %s78 = sphi 0, %s78
    %s80 = sphi 0, %s78
    %s81 = sphi 0, %s80
    %s95 = sphi 0, %s81
    %s103 = sphi 0, %s105
    %s106 = sphi 0, %s103
    %s107 = sphi 0, %s106
    %s123 = sphi 0, %s107
  $region4: #{glo_tkdown_block_pv.9} parent=0 // loop_header_branch
    %12 = sbr.rel (%p10) target = $region8
  $region5: #{glo_tkdown_block_pv.9} parent=0 // loop_body
    %s14 = ssub.s32 %s9, 1
    %s15 = ssub.s32 %s9, 2
    %s22 = sadd.s32 1, %s17
    %p23 = scmp.ge.s32.totalorder %s22, 2
    %s24 = scalar_select %p23, 0, %s22
    %s25 = sadd.s32 1, %s16
    %s26 = scalar_select %p23, %s25, %s16
    %p27 = scmp.ge.s32.totalorder %s26, 1
    %s28 = scalar_select %p27, 0, %s26
    %s29 = ssub.s32 %s17, %s24
    %s30 = ssub.s32 %s16, %s28
    %s31 = sor.u32 %s29, %s30
    %p32 = scmp.eq.s32.totalorder %s31, 0
    %s34 = sadd.s32 %s33, 1
    %s35 = scalar_select %p32, %s33, %s34
    %p38 = pneg %p32
    %p39 = scmp.eq.s32.totalorder %s9, 1
    %p40 = por %p38, %p39
    %p41 = scmp.ne.s32.totalorder %s33, %s36
    %p42 = scmp.eq.s32.totalorder %s9, 0
    %p43 = por %p41, %p42
    %p44 = scmp.ne.s32.totalorder %s33, %s36
    %p45 = scmp.eq.s32.totalorder %s14, 1
    %p46 = por %p44, %p45
    %p47 = scmp.ne.s32.totalorder %s36, %s37
    %p48 = scmp.eq.s32.totalorder %s14, 0
    %p49 = por %p47, %p48
    %p50 = scmp.ne.s32.totalorder %s36, %s37
    %p51 = scmp.eq.s32.totalorder %s15, 1
    %p52 = por %p50, %p51
    %p54 = scmp.ne.s32.totalorder %s37, %s53
    %p55 = scmp.eq.s32.totalorder %s15, 0
    %p56 = por %p54, %p55
    %s58 = sadd.s32 %s57, 1
    %p61 = scmp.eq.s32.totalorder %s9, 1
    %p62 = scmp.ne.s32.totalorder %s57, %s59
    %p63 = scmp.eq.s32.totalorder %s9, 0
    %p64 = por %p62, %p63
    %p65 = scmp.ne.s32.totalorder %s57, %s59
    %p66 = scmp.eq.s32.totalorder %s14, 1
    %p67 = por %p65, %p66
    %p68 = scmp.ne.s32.totalorder %s59, %s60
    %p69 = scmp.eq.s32.totalorder %s14, 0
    %p70 = por %p68, %p69
    %p71 = scmp.ne.s32.totalorder %s59, %s60
    %p72 = scmp.eq.s32.totalorder %s15, 1
    %p73 = por %p71, %p72
    %p75 = scmp.ne.s32.totalorder %s60, %s74
    %p76 = scmp.eq.s32.totalorder %s15, 0
    %p77 = por %p75, %p76
    %s79 = sadd.s32 %s78, 1
    %p82 = scmp.eq.s32.totalorder %s9, 1
    %p83 = scmp.ne.s32.totalorder %s78, %s80
    %p84 = scmp.eq.s32.totalorder %s9, 0
    %p85 = por %p83, %p84
    %p86 = scmp.ne.s32.totalorder %s78, %s80
    %p87 = scmp.eq.s32.totalorder %s14, 1
    %p88 = por %p86, %p87
    %p89 = scmp.ne.s32.totalorder %s80, %s81
    %p90 = scmp.eq.s32.totalorder %s14, 0
    %p91 = por %p89, %p90
    %p92 = scmp.ne.s32.totalorder %s80, %s81
    %p93 = scmp.eq.s32.totalorder %s15, 1
    %p94 = por %p92, %p93
    %p96 = scmp.ne.s32.totalorder %s81, %s95
    %p97 = scmp.eq.s32.totalorder %s15, 0
    %p98 = por %p96, %p97
    %s99 = ssub.s32 %s17, %s24
    %s100 = ssub.s32 %s16, %s28
    %s101 = sor.u32 %s99, %s100
    %p102 = scmp.eq.s32.totalorder %s101, 0
    %s104 = sadd.s32 %s103, 1
    %s105 = scalar_select %p102, %s103, %s104
    %p108 = pneg %p102
    %p109 = scmp.eq.s32.totalorder %s9, 1
    %p110 = por %p108, %p109
    %p111 = scmp.ne.s32.totalorder %s103, %s106
    %p112 = scmp.eq.s32.totalorder %s9, 0
    %p113 = por %p111, %p112
    %p114 = scmp.ne.s32.totalorder %s103, %s106
    %p115 = scmp.eq.s32.totalorder %s14, 1
    %p116 = por %p114, %p115
    %p117 = scmp.ne.s32.totalorder %s106, %s107
    %p118 = scmp.eq.s32.totalorder %s14, 0
    %p119 = por %p117, %p118
    %p120 = scmp.ne.s32.totalorder %s106, %s107
    %p121 = scmp.eq.s32.totalorder %s15, 1
    %p122 = por %p120, %p121
    %p124 = scmp.ne.s32.totalorder %s107, %s123
    %p125 = scmp.eq.s32.totalorder %s15, 0
    %p126 = por %p124, %p125
    %p127 = scmp.le.s32.totalorder 1, %s9
    %p128 = scmp.lt.s32.totalorder %s9, 3
    %p129 = pnand %p127, %p128
    %p130 = pneg %p129
    // Predicated region
    $region9: #{glo_tkdown_block_pv.9} parent=5 // pred_check
      _
    $region10: #{glo_tkdown_block_pv.9} parent=5 // pred_check_branch
      %132 = sbr.rel (%p129) target = $region12
    $region11: #{glo_tkdown_block_pv.9} parent=5 // pred_region
      %s133 = ssub.s32 %s9, 1
      // Predicated region
      $region13: #{glo_tkdown_block_pv.9} parent=11 // pred_check
        %p134 = pneg %p70
      $region14: #{glo_tkdown_block_pv.9} parent=11 // pred_check_branch
        %136 = sbr.rel (%p134) target = $region16
      $region15: #{glo_tkdown_block_pv.9} parent=11 // pred_region
        _
      $region16: #{glo_tkdown_block_pv.9} parent=11 // pred_fallthru
        _
      // Predicated region
      $region17: #{glo_tkdown_block_pv.9} parent=11 // pred_check
        %p137 = pneg %p91
      $region18: #{glo_tkdown_block_pv.9} parent=11 // pred_check_branch
        %139 = sbr.rel (%p137) target = $region20
      $region19: #{glo_tkdown_block_pv.9} parent=11 // pred_region
        _
      $region20: #{glo_tkdown_block_pv.9} parent=11 // pred_fallthru
        _
    $region12: #{glo_tkdown_block_pv.9} parent=5 // pred_fallthru
      _
    %p140 = scmp.lt.s32.totalorder %s9, 2
    // Predicated region
    $region21: #{glo_tkdown_block_pv.9} parent=5 // pred_check
      %p141 = pneg %p140
    $region22: #{glo_tkdown_block_pv.9} parent=5 // pred_check_branch
      %143 = sbr.rel (%p141) target = $region24
    $region23: #{glo_tkdown_block_pv.9} parent=5 // pred_region
      // Predicated region
      $region25: #{glo_tkdown_block_pv.9} parent=23 // pred_check
        %p144 = pneg %p43
      $region26: #{glo_tkdown_block_pv.9} parent=23 // pred_check_branch
        %146 = sbr.rel (%p144) target = $region28
      $region27: #{glo_tkdown_block_pv.9} parent=23 // pred_region
        %s147 = smul.u32 32, %s16
        %p148 = scmp.lt.s32.totalorder %s17, 1
        %s149 = scalar_select %p148, %s17, 1
        %p150 = scmp.lt.s32.totalorder %s147, 31
        %s151 = scalar_select %p150, %s147, 31
        %s152 = smul.addr %s149, 32
        %s153 = sadd.s32 %s151, %s152
        %s154 = smul.addr %s153, 4
        %s155 = scalar_lea.vmem %s0, %s154
        %s156 = smul.u32 32, %s16
      $region28: #{glo_tkdown_block_pv.9} parent=23 // pred_fallthru
        _
    $region24: #{glo_tkdown_block_pv.9} parent=5 // pred_fallthru
      _
    %p157 = scmp.le.s32.totalorder 1, %s9
    %p158 = scmp.lt.s32.totalorder %s9, 3
    %p159 = pnand %p157, %p158
    %p160 = pneg %p159
    // Predicated region
    $region29: #{glo_tkdown_block_pv.9} parent=5 // pred_check
      _
    $region30: #{glo_tkdown_block_pv.9} parent=5 // pred_check_branch
      %162 = sbr.rel (%p159) target = $region32
    $region31: #{glo_tkdown_block_pv.9} parent=5 // pred_region
      %s163 = ssub.s32 %s9, 1
      %s164 = smul.u32 32, %s18
      %p165 = scmp.lt.s32.totalorder %s19, 1
      %s166 = scalar_select %p165, %s19, 1
      %p167 = scmp.lt.s32.totalorder %s164, 31
      %s168 = scalar_select %p167, %s164, 31
      %s169 = smul.addr %s166, 32
      %s170 = sadd.s32 %s168, %s169
      %s171 = smul.addr %s170, 4
      %s172 = scalar_lea.vmem %s0, %s171
      %p173 = pneg %p49
      %p174 = pneg %p46
      %p175 = pneg %p70
      %p176 = pneg %p67
      %p177 = pneg %p91
      %p178 = pneg %p88
      %p179 = pneg %p119
      %p180 = pneg %p116
      %s181 = smul.u32 32, %s18
      %p182 = scmp.lt.s32.totalorder %s19, 1
      %s183 = scalar_select %p182, %s19, 1
      %p184 = scmp.lt.s32.totalorder %s181, 31
      %s185 = scalar_select %p184, %s181, 31
      %s186 = smul.addr %s183, 32
      %s187 = sadd.s32 %s185, %s186
      %s188 = smul.addr %s187, 8
      %s189 = scalar_lea.vmem %s3, %s188
      %s190 = smul.u32 32, %s18
      %p191 = scmp.lt.s32.totalorder %s19, 1
      %s192 = scalar_select %p191, %s19, 1
      %p193 = scmp.lt.s32.totalorder %s190, 31
      %s194 = scalar_select %p193, %s190, 31
      %s195 = smul.addr %s192, 32
      %s196 = sadd.s32 %s194, %s195
      %s197 = smul.addr %s196, 4
      %s198 = scalar_lea.vmem %s0, %s197
      %s199 = smul.u32 32, %s18
      %s200 = smul.u32 32, %s18
      %p201 = scmp.lt.s32.totalorder %s19, 1
      %s202 = scalar_select %p201, %s19, 1
      %p203 = scmp.lt.s32.totalorder %s200, 31
      %s204 = scalar_select %p203, %s200, 31
      %s205 = smul.addr %s202, 32
      %s206 = sadd.s32 %s204, %s205
      %s207 = smul.addr %s206, 8
      %s208 = scalar_lea.vmem %s3, %s207
      %s209 = smul.u32 32, %s18
      %v211 = vld [vmem:[%s198] sm:$0xf]
      %v212 = vld [vmem:[%s198 + $0x4] sm:$0xf]
      %v213 = vld [vmem:[%s198 + $0x8] sm:$0xf]
      %v214 = vld [vmem:[%s198 + $0xc] sm:$0xf]
      %v215 = vld [vmem:[%s198 + $0x10] sm:$0xf]
      %v216 = vld [vmem:[%s198 + $0x14] sm:$0xf]
      %v217 = vld [vmem:[%s198 + $0x18] sm:$0xf]
      %v218 = vld [vmem:[%s198 + $0x1c] sm:$0xf]
      %v219 = vld [vmem:[%s198 + $0x20] sm:$0xf]
      %v220 = vld [vmem:[%s198 + $0x24] sm:$0xf]
      %v221 = vld [vmem:[%s198 + $0x28] sm:$0xf]
      %v222 = vld [vmem:[%s198 + $0x2c] sm:$0xf]
      %v223 = vld [vmem:[%s198 + $0x30] sm:$0xf]
      %v224 = vld [vmem:[%s198 + $0x34] sm:$0xf]
      %v225 = vld [vmem:[%s198 + $0x38] sm:$0xf]
      %v226 = vld [vmem:[%s198 + $0x3c] sm:$0xf]
      %v227 = vld [vmem:[%s198 + $0x40] sm:$0xf]
      %v228 = vld [vmem:[%s198 + $0x44] sm:$0xf]
      %v229 = vld [vmem:[%s198 + $0x48] sm:$0xf]
      %v230 = vld [vmem:[%s198 + $0x4c] sm:$0xf]
      %v231 = vld [vmem:[%s198 + $0x50] sm:$0xf]
      %v232 = vld [vmem:[%s198 + $0x54] sm:$0xf]
      %v233 = vld [vmem:[%s198 + $0x58] sm:$0xf]
      %v234 = vld [vmem:[%s198 + $0x5c] sm:$0xf]
      %v235 = vld [vmem:[%s198 + $0x60] sm:$0xf]
      %v236 = vld [vmem:[%s198 + $0x64] sm:$0xf]
      %v237 = vld [vmem:[%s198 + $0x68] sm:$0xf]
      %v238 = vld [vmem:[%s198 + $0x6c] sm:$0xf]
      %v239 = vld [vmem:[%s198 + $0x70] sm:$0xf]
      %v240 = vld [vmem:[%s198 + $0x74] sm:$0xf]
      %v241 = vld [vmem:[%s198 + $0x78] sm:$0xf]
      %v242 = vld [vmem:[%s198 + $0x7c] sm:$0xf]
      %v243 = vld [vmem:[%s1] sm:$0xf]
      %v244 = vld [vmem:[%s1 + $0x4] sm:$0xf]
      %v245 = vld [vmem:[%s1 + $0x8] sm:$0xf]
      %v246 = vld [vmem:[%s1 + $0xc] sm:$0xf]
      %v247 = vld [vmem:[%s2] sm:$0x1]
      %v249 = vlaneseq
      %v250 = vshrl.u32 %v249, 7
      %v251 = vsub.s32 0, %v250
      %v252 = vrot.slane %v247, %v251
      %v286 = vunpack.c.l.b16 %v211
      %v287 = vunpack.c.l.b16 %v212
      %v288 = vunpack.c.l.b16 %v213
      %v289 = vunpack.c.l.b16 %v214
      %v290 = vunpack.c.l.b16 %v215
      %v291 = vunpack.c.l.b16 %v216
      %v292 = vunpack.c.l.b16 %v217
      %v293 = vunpack.c.l.b16 %v218
      %v294 = vunpack.c.l.b16 %v219
      %v295 = vunpack.c.l.b16 %v220
      %v296 = vunpack.c.l.b16 %v221
      %v297 = vunpack.c.l.b16 %v222
      %v298 = vunpack.c.l.b16 %v223
      %v299 = vunpack.c.l.b16 %v224
      %v300 = vunpack.c.l.b16 %v225
      %v301 = vunpack.c.l.b16 %v226
      %v302 = vunpack.c.l.b16 %v227
      %v303 = vunpack.c.l.b16 %v228
      %v304 = vunpack.c.l.b16 %v229
      %v305 = vunpack.c.l.b16 %v230
      %v306 = vunpack.c.l.b16 %v231
      %v307 = vunpack.c.l.b16 %v232
      %v308 = vunpack.c.l.b16 %v233
      %v309 = vunpack.c.l.b16 %v234
      %v310 = vunpack.c.l.b16 %v235
      %v311 = vunpack.c.l.b16 %v236
      %v312 = vunpack.c.l.b16 %v237
      %v313 = vunpack.c.l.b16 %v238
      %v314 = vunpack.c.l.b16 %v239
      %v315 = vunpack.c.l.b16 %v240
      %v316 = vunpack.c.l.b16 %v241
      %v317 = vunpack.c.l.b16 %v242
      %v318 = vpack.c.b16 %v287, %v286
      %v319 = vpack.c.b16 %v289, %v288
      %v320 = vpack.c.b16 %v291, %v290
      %v321 = vpack.c.b16 %v293, %v292
      %v322 = vpack.c.b16 %v295, %v294
      %v323 = vpack.c.b16 %v297, %v296
      %v324 = vpack.c.b16 %v299, %v298
      %v325 = vpack.c.b16 %v301, %v300
      %v326 = vpack.c.b16 %v303, %v302
      %v327 = vpack.c.b16 %v305, %v304
      %v328 = vpack.c.b16 %v307, %v306
      %v329 = vpack.c.b16 %v309, %v308
      %v330 = vpack.c.b16 %v311, %v310
      %v331 = vpack.c.b16 %v313, %v312
      %v332 = vpack.c.b16 %v315, %v314
      %v333 = vpack.c.b16 %v317, %v316
      %v338 = vunpack.c.l.b16 %v243
      %v339 = vunpack.c.l.b16 %v244
      %v340 = vunpack.c.l.b16 %v245
      %v341 = vunpack.c.l.b16 %v246
      %v342 = vpack.c.b16 %v339, %v338
      %v343 = vpack.c.b16 %v341, %v340
      %vm346 = vcmask 261120
      %v348 = vsel %vm346, %v318, 0
      %v351 = vsel %vm346, %v319, 0
      %v354 = vsel %vm346, %v320, 0
      %v357 = vsel %vm346, %v321, 0
      %v360 = vsel %vm346, %v322, 0
      %v363 = vsel %vm346, %v323, 0
      %v366 = vsel %vm346, %v324, 0
      %v369 = vsel %vm346, %v325, 0
      %v372 = vsel %vm346, %v326, 0
      %v375 = vsel %vm346, %v327, 0
      %v378 = vsel %vm346, %v328, 0
      %v381 = vsel %vm346, %v329, 0
      %v384 = vsel %vm346, %v330, 0
      %v387 = vsel %vm346, %v331, 0
      %v390 = vsel %vm346, %v332, 0
      %v393 = vsel %vm346, %v333, 0
      %395 = vmatprep.subr.bf16.mxu0 0
      %396 = vmatpush1.bf16.msra.mxu0 %v342
      %397 = vmatprep.subr.bf16.mxu0 0
      %398 = vmatpush1.bf16.msra.mxu0 %v343
      %399 = vmatprep.subr.bf16.mxu0 0
      %400 = vmatpush1.bf16.msra.mxu0 0
      %401 = vmatprep.subr.bf16.mxu0 0
      %402 = vmatpush1.bf16.msra.mxu0 0
      %403 = vmatprep.subr.bf16.mxu0 0
      %404 = vmatpush1.bf16.msra.mxu0 0
      %405 = vmatprep.subr.bf16.mxu0 0
      %406 = vmatpush1.bf16.msra.mxu0 0
      %407 = vmatprep.subr.bf16.mxu0 0
      %408 = vmatpush1.bf16.msra.mxu0 0
      %409 = vmatprep.subr.bf16.mxu0 0
      %410 = vmatpush1.bf16.msra.mxu0 0
      %411 = vmatprep.subr.bf16.mxu0 0
      %412 = vmatpush1.bf16.msra.mxu0 0
      %413 = vmatprep.subr.bf16.mxu0 0
      %414 = vmatpush1.bf16.msra.mxu0 0
      %415 = vmatprep.subr.bf16.mxu0 0
      %416 = vmatpush1.bf16.msra.mxu0 0
      %417 = vmatprep.subr.bf16.mxu0 0
      %418 = vmatpush1.bf16.msra.mxu0 0
      %419 = vmatprep.subr.bf16.mxu0 0
      %420 = vmatpush1.bf16.msra.mxu0 0
      %421 = vmatprep.subr.bf16.mxu0 0
      %422 = vmatpush1.bf16.msra.mxu0 0
      %423 = vmatprep.subr.bf16.mxu0 0
      %424 = vmatpush1.bf16.msra.mxu0 0
      %425 = vmatprep.subr.bf16.mxu0 0
      %426 = vmatpush1.bf16.msra.mxu0 0
      %427 = vmatprep.mubr.bf16.mxu0 0
      %428 = vmatmul.mubr.bf16.gmra.mrb[0].mxu0 %v348
      %v429 = vpop.f32.mrb[0].mxu0
      %v430 = vadd.f32 %v252, %v429
      %v431 = vpop.f32.mrb[0].mxu0
      %v432 = vpop.f32.mrb[0].mxu0
      %v433 = vadd.f32 %v252, %v432
      %v434 = vpop.f32.mrb[0].mxu0
      %435 = vmatprep.mubr.bf16.mxu0 0
      %436 = vmatmul.mubr.bf16.gmra.mrb[0].mxu0 %v351
      %v437 = vpop.f32.mrb[0].mxu0
      %v438 = vadd.f32 %v252, %v437
      %v439 = vpop.f32.mrb[0].mxu0
      %v440 = vpop.f32.mrb[0].mxu0
      %v441 = vadd.f32 %v252, %v440
      %v442 = vpop.f32.mrb[0].mxu0
      %443 = vmatprep.mubr.bf16.mxu0 0
      %444 = vmatmul.mubr.bf16.gmra.mrb[0].mxu0 %v354
      %v445 = vpop.f32.mrb[0].mxu0
      %v446 = vadd.f32 %v252, %v445
      %v447 = vpop.f32.mrb[0].mxu0
      %v448 = vpop.f32.mrb[0].mxu0
      %v449 = vadd.f32 %v252, %v448
      %v450 = vpop.f32.mrb[0].mxu0
      %451 = vmatprep.mubr.bf16.mxu0 0
      %452 = vmatmul.mubr.bf16.gmra.mrb[0].mxu0 %v357
      %v453 = vpop.f32.mrb[0].mxu0
      %v454 = vadd.f32 %v252, %v453
      %v455 = vpop.f32.mrb[0].mxu0
      %v456 = vpop.f32.mrb[0].mxu0
      %v457 = vadd.f32 %v252, %v456
      %v458 = vpop.f32.mrb[0].mxu0
      %459 = vmatprep.mubr.bf16.mxu0 0
      %460 = vmatmul.mubr.bf16.gmra.mrb[0].mxu0 %v360
      %v461 = vpop.f32.mrb[0].mxu0
      %v462 = vadd.f32 %v252, %v461
      %v463 = vpop.f32.mrb[0].mxu0
      %v464 = vpop.f32.mrb[0].mxu0
      %v465 = vadd.f32 %v252, %v464
      %v466 = vpop.f32.mrb[0].mxu0
      %467 = vmatprep.mubr.bf16.mxu0 0
      %468 = vmatmul.mubr.bf16.gmra.mrb[0].mxu0 %v363
      %v469 = vpop.f32.mrb[0].mxu0
      %v470 = vadd.f32 %v252, %v469
      %v471 = vpop.f32.mrb[0].mxu0
      %v472 = vpop.f32.mrb[0].mxu0
      %v473 = vadd.f32 %v252, %v472
      %v474 = vpop.f32.mrb[0].mxu0
      %475 = vmatprep.mubr.bf16.mxu0 0
      %476 = vmatmul.mubr.bf16.gmra.mrb[0].mxu0 %v366
      %v477 = vpop.f32.mrb[0].mxu0
      %v478 = vadd.f32 %v252, %v477
      %v479 = vpop.f32.mrb[0].mxu0
      %v480 = vpop.f32.mrb[0].mxu0
      %v481 = vadd.f32 %v252, %v480
      %v482 = vpop.f32.mrb[0].mxu0
      %483 = vmatprep.mubr.bf16.mxu0 0
      %484 = vmatmul.mubr.bf16.gmra.mrb[0].mxu0 %v369
      %v485 = vpop.f32.mrb[0].mxu0
      %v486 = vadd.f32 %v252, %v485
      %v487 = vpop.f32.mrb[0].mxu0
      %v488 = vpop.f32.mrb[0].mxu0
      %v489 = vadd.f32 %v252, %v488
      %v490 = vpop.f32.mrb[0].mxu0
      %491 = vmatprep.mubr.bf16.mxu0 0
      %492 = vmatmul.mubr.bf16.gmra.mrb[0].mxu0 %v372
      %v493 = vpop.f32.mrb[0].mxu0
      %v494 = vadd.f32 %v252, %v493
      %v495 = vpop.f32.mrb[0].mxu0
      %v496 = vpop.f32.mrb[0].mxu0
      %v497 = vadd.f32 %v252, %v496
      %v498 = vpop.f32.mrb[0].mxu0
      %499 = vmatprep.mubr.bf16.mxu0 0
      %500 = vmatmul.mubr.bf16.gmra.mrb[0].mxu0 %v375
      %v501 = vpop.f32.mrb[0].mxu0
      %v502 = vadd.f32 %v252, %v501
      %v503 = vpop.f32.mrb[0].mxu0
      %v504 = vpop.f32.mrb[0].mxu0
      %v505 = vadd.f32 %v252, %v504
      %v506 = vpop.f32.mrb[0].mxu0
      %507 = vmatprep.mubr.bf16.mxu0 0
      %508 = vmatmul.mubr.bf16.gmra.mrb[0].mxu0 %v378
      %v509 = vpop.f32.mrb[0].mxu0
      %v510 = vadd.f32 %v252, %v509
      %v511 = vpop.f32.mrb[0].mxu0
      %v512 = vpop.f32.mrb[0].mxu0
      %v513 = vadd.f32 %v252, %v512
      %v514 = vpop.f32.mrb[0].mxu0
      %515 = vmatprep.mubr.bf16.mxu0 0
      %516 = vmatmul.mubr.bf16.gmra.mrb[0].mxu0 %v381
      %v517 = vpop.f32.mrb[0].mxu0
      %v518 = vadd.f32 %v252, %v517
      %v519 = vpop.f32.mrb[0].mxu0
      %v520 = vpop.f32.mrb[0].mxu0
      %v521 = vadd.f32 %v252, %v520
      %v522 = vpop.f32.mrb[0].mxu0
      %523 = vmatprep.mubr.bf16.mxu0 0
      %524 = vmatmul.mubr.bf16.gmra.mrb[0].mxu0 %v384
      %v525 = vpop.f32.mrb[0].mxu0
      %v526 = vadd.f32 %v252, %v525
      %v527 = vpop.f32.mrb[0].mxu0
      %v528 = vpop.f32.mrb[0].mxu0
      %v529 = vadd.f32 %v252, %v528
      %v530 = vpop.f32.mrb[0].mxu0
      %531 = vmatprep.mubr.bf16.mxu0 0
      %532 = vmatmul.mubr.bf16.gmra.mrb[0].mxu0 %v387
      %v533 = vpop.f32.mrb[0].mxu0
      %v534 = vadd.f32 %v252, %v533
      %v535 = vpop.f32.mrb[0].mxu0
      %v536 = vpop.f32.mrb[0].mxu0
      %v537 = vadd.f32 %v252, %v536
      %v538 = vpop.f32.mrb[0].mxu0
      %539 = vmatprep.mubr.bf16.mxu0 0
      %540 = vmatmul.mubr.bf16.gmra.mrb[0].mxu0 %v390
      %v541 = vpop.f32.mrb[0].mxu0
      %v542 = vadd.f32 %v252, %v541
      %v543 = vpop.f32.mrb[0].mxu0
      %v544 = vpop.f32.mrb[0].mxu0
      %v545 = vadd.f32 %v252, %v544
      %v546 = vpop.f32.mrb[0].mxu0
      %547 = vmatprep.mubr.bf16.mxu0 0
      %548 = vmatmul.mubr.bf16.gmra.mrb[0].mxu0 %v393
      %v549 = vpop.f32.mrb[0].mxu0
      %v550 = vadd.f32 %v252, %v549
      %v551 = vpop.f32.mrb[0].mxu0
      %v552 = vpop.f32.mrb[0].mxu0
      %v553 = vadd.f32 %v252, %v552
      %v554 = vpop.f32.mrb[0].mxu0
      %555 = vdwg.mxu0
      %vm556 = vcmask 64512
      %557 = vst.msk [vmem:[%s208] sm:$0xff] %vm556, %v430
      %558 = vst.msk [vmem:[%s208 + $0x8] sm:$0xff] %vm556, %v433
      %559 = vst.msk [vmem:[%s208 + $0x10] sm:$0xff] %vm556, %v438
      %560 = vst.msk [vmem:[%s208 + $0x18] sm:$0xff] %vm556, %v441
      %561 = vst.msk [vmem:[%s208 + $0x20] sm:$0xff] %vm556, %v446
      %562 = vst.msk [vmem:[%s208 + $0x28] sm:$0xff] %vm556, %v449
      %563 = vst.msk [vmem:[%s208 + $0x30] sm:$0xff] %vm556, %v454
      %564 = vst.msk [vmem:[%s208 + $0x38] sm:$0xff] %vm556, %v457
      %565 = vst.msk [vmem:[%s208 + $0x40] sm:$0xff] %vm556, %v462
      %566 = vst.msk [vmem:[%s208 + $0x48] sm:$0xff] %vm556, %v465
      %567 = vst.msk [vmem:[%s208 + $0x50] sm:$0xff] %vm556, %v470
      %568 = vst.msk [vmem:[%s208 + $0x58] sm:$0xff] %vm556, %v473
      %569 = vst.msk [vmem:[%s208 + $0x60] sm:$0xff] %vm556, %v478
      %570 = vst.msk [vmem:[%s208 + $0x68] sm:$0xff] %vm556, %v481
      %571 = vst.msk [vmem:[%s208 + $0x70] sm:$0xff] %vm556, %v486
      %572 = vst.msk [vmem:[%s208 + $0x78] sm:$0xff] %vm556, %v489
      %573 = vst.msk [vmem:[%s208 + $0x80] sm:$0xff] %vm556, %v494
      %574 = vst.msk [vmem:[%s208 + $0x88] sm:$0xff] %vm556, %v497
      %575 = vst.msk [vmem:[%s208 + $0x90] sm:$0xff] %vm556, %v502
      %576 = vst.msk [vmem:[%s208 + $0x98] sm:$0xff] %vm556, %v505
      %577 = vst.msk [vmem:[%s208 + $0xa0] sm:$0xff] %vm556, %v510
      %578 = vst.msk [vmem:[%s208 + $0xa8] sm:$0xff] %vm556, %v513
      %579 = vst.msk [vmem:[%s208 + $0xb0] sm:$0xff] %vm556, %v518
      %580 = vst.msk [vmem:[%s208 + $0xb8] sm:$0xff] %vm556, %v521
      %581 = vst.msk [vmem:[%s208 + $0xc0] sm:$0xff] %vm556, %v526
      %582 = vst.msk [vmem:[%s208 + $0xc8] sm:$0xff] %vm556, %v529
      %583 = vst.msk [vmem:[%s208 + $0xd0] sm:$0xff] %vm556, %v534
      %584 = vst.msk [vmem:[%s208 + $0xd8] sm:$0xff] %vm556, %v537
      %585 = vst.msk [vmem:[%s208 + $0xe0] sm:$0xff] %vm556, %v542
      %586 = vst.msk [vmem:[%s208 + $0xe8] sm:$0xff] %vm556, %v545
      %587 = vst.msk [vmem:[%s208 + $0xf0] sm:$0xff] %vm556, %v550
      %588 = vst.msk [vmem:[%s208 + $0xf8] sm:$0xff] %vm556, %v553
      %s589 = smul.u32 32, %s18
      %p590 = scmp.lt.s32.totalorder %s19, 1
      %s591 = scalar_select %p590, %s19, 1
      %p592 = scmp.lt.s32.totalorder %s589, 31
      %s593 = scalar_select %p592, %s589, 31
      %s594 = smul.addr %s591, 32
      %s595 = sadd.s32 %s593, %s594
      %s596 = smul.addr %s595, 8
      %s597 = scalar_lea.vmem %s3, %s596
      // Predicated region
      $region33: #{glo_tkdown_block_pv.9} parent=31 // pred_check
        %p598 = pneg %p116
      $region34: #{glo_tkdown_block_pv.9} parent=31 // pred_check_branch
        %600 = sbr.rel (%p598) target = $region36
      $region35: #{glo_tkdown_block_pv.9} parent=31 // pred_region
        %s601 = smul.u32 32, %s18
      $region36: #{glo_tkdown_block_pv.9} parent=31 // pred_fallthru
        _
    $region32: #{glo_tkdown_block_pv.9} parent=5 // pred_fallthru
      _
    %p602 = scmp.le.s32.totalorder 2, %s9
    // Predicated region
    $region37: #{glo_tkdown_block_pv.9} parent=5 // pred_check
      %p603 = pneg %p602
    $region38: #{glo_tkdown_block_pv.9} parent=5 // pred_check_branch
      %605 = sbr.rel (%p603) target = $region40
    $region39: #{glo_tkdown_block_pv.9} parent=5 // pred_region
      %s606 = ssub.s32 %s9, 2
      // Predicated region
      $region41: #{glo_tkdown_block_pv.9} parent=39 // pred_check
        %p607 = pneg %p122
      $region42: #{glo_tkdown_block_pv.9} parent=39 // pred_check_branch
        %609 = sbr.rel (%p607) target = $region44
      $region43: #{glo_tkdown_block_pv.9} parent=39 // pred_region
        %s610 = smul.u32 32, %s20
        %p611 = scmp.lt.s32.totalorder %s21, 1
        %s612 = scalar_select %p611, %s21, 1
        %p613 = scmp.lt.s32.totalorder %s610, 31
        %s614 = scalar_select %p613, %s610, 31
        %s615 = smul.addr %s612, 32
        %s616 = sadd.s32 %s614, %s615
        %s617 = smul.addr %s616, 8
        %s618 = scalar_lea.vmem %s3, %s617
      $region44: #{glo_tkdown_block_pv.9} parent=39 // pred_fallthru
        _
    $region40: #{glo_tkdown_block_pv.9} parent=5 // pred_fallthru
      _
  $region6: #{glo_tkdown_block_pv.9} parent=0 // loop_footer
    %s13 = sadd.s32 1, %s9
  $region7: #{glo_tkdown_block_pv.9} parent=0 // loop_footer_branch
    %8 = sbr.rel target = $region3
  $region8: #{glo_tkdown_block_pv.9} parent=0 // loop_exit
    _

</llo_original>
